<compile_context>
chip_gen: v6e
topology: v6e:2x2x1
jax: 0.10.0
libtpu: 0.0.40
codegen_flags: <defaults>
</compile_context>

<pallas_src>
import numpy as np
import jax
import jax.numpy as jnp
from jax import lax
from jax.experimental import pallas as pl
from jax.experimental.pallas import tpu as pltpu


NC_PAD = 128   # pad num_classes to a full lane so the output store is lane-dense


# --------------------------------------------------------------------------
# Kernel helpers (operate on values, not refs)
# --------------------------------------------------------------------------
def _pad_hw(x):
    """Zero-pad spatial axes 1 (P) and 2 (Q) of an (N, P, Q, C) value by 1 each side."""
    N, P, Q, C = x.shape
    zq = jnp.zeros((N, P, 1, C), x.dtype)
    x = jnp.concatenate([zq, x, zq], axis=2)          # (N, P, Q+2, C)
    zp = jnp.zeros((N, 1, Q + 2, C), x.dtype)
    return jnp.concatenate([zp, x, zp], axis=1)       # (N, P+2, Q+2, C)


def _conv3x3_relu(x, w_flat, b):
    """3x3 'same' conv (stride 1, pad 1) + bias + ReLU on an NHWC value.

    x: (N, P, Q, Ci); w_flat: (9*Ci, Co) rows ordered (dy, dx, ci); b: (1, Co)."""
    N, P, Q, Ci = x.shape
    Co = w_flat.shape[-1]
    xp = _pad_hw(x)
    if Ci == 1:
        # K=1 per tap is an MXU outer product (~1% util); use 9 VPU broadcast FMAs.
        acc = jnp.zeros((N, P, Q, Co), jnp.float32)
        for dy in range(3):
            for dx in range(3):
                tap = xp[:, dy:dy + P, dx:dx + Q, :]                   # (N, P, Q, 1)
                w_row = w_flat[dy * 3 + dx:dy * 3 + dx + 1, :]         # (1, Co)
                acc = acc + tap * w_row
        y = acc + b
    else:
        # im2col: one (N*P*Q, 9*Ci) x (9*Ci, Co) MXU matmul.
        taps = [xp[:, dy:dy + P, dx:dx + Q, :]
                for dy in range(3) for dx in range(3)]
        patches = jnp.concatenate(taps, axis=-1)                       # (N, P, Q, 9*Ci)
        patches = patches.reshape(N * P * Q, 9 * Ci)                   # lane dim preserved
        y = jnp.dot(patches, w_flat, preferred_element_type=jnp.float32) + b
        y = y.reshape(N, P, Q, Co)
    return jnp.maximum(y, 0.0)


def _pool_flatten_fc(y2, fw1, fb1, fw2, fb2):
    """2x2 maxpool -> flatten -> fc1+ReLU -> fc2 (Dropout(0.25) identity in eval)."""
    N, P, Q, C = y2.shape
    P2, Q2 = P // 2, Q // 2
    # Vectorized pool over P (non-minor split) then Q (sublane split); lane dim untouched.
    rp = y2.reshape(N, P2, 2, Q, C)
    hp = jnp.maximum(rp[:, :, 0], rp[:, :, 1])                         # (N, P2, Q, C)
    rq = hp.reshape(N, P2, Q2, 2, C)
    pooled = jnp.maximum(rq[:, :, :, 0, :], rq[:, :, :, 1, :])         # (N, P2, Q2, C)
    # Flatten (p2, q2, c) onto the lane dim with one concatenate, then ONE fc1 matmul.
    flat = jnp.concatenate(
        [pooled[:, p2, q2, :] for p2 in range(P2) for q2 in range(Q2)],
        axis=-1)                                                       # (N, P2*Q2*C)
    # TODO(synk): training-mode Dropout(0.25) not implemented (eval identity).
    h1 = jnp.maximum(
        jnp.dot(flat, fw1, preferred_element_type=jnp.float32) + fb1, 0.0)
    return jnp.dot(h1, fw2, preferred_element_type=jnp.float32) + fb2  # (N, NC_PAD)


def line_cnn_kernel(xw_ref, w1_ref, b1_ref, w2_ref, b2_ref,
                    fw1_ref, fb1_ref, fw2_ref, fb2_ref, out_ref):
    x = xw_ref[...].astype(jnp.float32)                                # (NB, P, Q, Cin)
    y1 = _conv3x3_relu(x, w1_ref[...], b1_ref[...])                    # (NB, P, Q, C1)
    y2 = _conv3x3_relu(y1, w2_ref[...], b2_ref[...])                   # (NB, P, Q, C1)
    out = _pool_flatten_fc(y2, fw1_ref[...], fb1_ref[...],
                           fw2_ref[...], fb2_ref[...])                 # (NB, NC_PAD)
    out_ref[...] = out.astype(out_ref.dtype)                           # lane-dense store


# --------------------------------------------------------------------------
# Parameters (deterministic, synthetic; shapes follow the PyTorch modules)
# --------------------------------------------------------------------------
def make_params(key, cin, height, window_width, conv_dim, fc_dim, num_classes):
    p2, q2 = window_width // 2, height // 2
    fc_in = conv_dim * p2 * q2
    ks = jax.random.split(key, 8)

    def u(k, shape, fan_in):
        bound = 1.0 / np.sqrt(fan_in)
        return jax.random.uniform(k, shape, jnp.float32, -bound, bound)

    # PyTorch layouts: Conv2d weight (Cout, Cin, kH, kW), Linear weight (out, in).
    return dict(
        conv1_w=u(ks[0], (conv_dim, cin, 3, 3), cin * 9),
        conv1_b=u(ks[1], (conv_dim,), cin * 9),
        conv2_w=u(ks[2], (conv_dim, conv_dim, 3, 3), conv_dim * 9),
        conv2_b=u(ks[3], (conv_dim,), conv_dim * 9),
        fc1_w=u(ks[4], (fc_dim, fc_in), fc_in),
        fc1_b=u(ks[5], (fc_dim,), fc_in),
        fc2_w=u(ks[6], (num_classes, fc_dim), fc_dim),
        fc2_b=u(ks[7], (num_classes,), fc_dim),
    )


def _to_kernel_layout(params, cin, conv_dim, p2, q2, nc_pad):
    fc_dim = params['fc1_b'].shape[0]
    nc = params['fc2_b'].shape[0]
    # Conv weights (Co,Ci,kH,kW) -> (kH,kW,Ci,Co) -> (9*Ci, Co)  (rows ordered dy,dx,ci).
    w1 = jnp.transpose(params['conv1_w'], (2, 3, 1, 0)).reshape(9 * cin, conv_dim)
    w2 = jnp.transpose(params['conv2_w'], (2, 3, 1, 0)).reshape(9 * conv_dim, conv_dim)
    # torch.flatten order is (C1, P2, Q2); permute rows so the kernel can contract
    # against features flattened as (p2, q2, c).
    fw1 = jnp.transpose(params['fc1_w'].reshape(fc_dim, conv_dim, p2, q2),
                        (2, 3, 1, 0)).reshape(p2 * q2 * conv_dim, fc_dim)
    # Pad fc2 to NC_PAD output columns so the kernel's final store is lane-dense.
    fw2 = jnp.zeros((fc_dim, nc_pad), jnp.float32).at[:, :nc].set(params['fc2_w'].T)
    fb2 = jnp.zeros((1, nc_pad), jnp.float32).at[:, :nc].set(params['fc2_b'][None, :])
    return dict(
        w1=w1, b1=params['conv1_b'][None, :],
        w2=w2, b2=params['conv2_b'][None, :],
        fw1=fw1, fb1=params['fc1_b'][None, :],
        fw2=fw2, fb2=fb2,
    )


# --------------------------------------------------------------------------
# Wrapper (glue: window extraction, layout plumbing, pallas_call)
# --------------------------------------------------------------------------
def line_cnn_simple_ivan_forward(x, params, *, window_width, window_stride):
    B, Cin, H, W = x.shape
    C1 = params['conv1_w'].shape[0]
    NC = params['fc2_b'].shape[0]
    P, Q = window_width, H
    P2, Q2 = P // 2, Q // 2

    w_starts = np.arange(0, W, window_stride)
    assert all(ws + window_width <= W for ws in w_starts), \
        "all windows must be full width (PyTorch CNN flatten requires it)"
    S = len(w_starts)

    # glue: slice windows, torch.transpose(im, 2, 3), then NCHW -> NHWC (B, Wt, H, Cin).
    wins = [jnp.transpose(x[:, :, :, ws:ws + window_width], (0, 3, 2, 1))
            for ws in w_starts]
    xw = jnp.stack(wins, axis=0).astype(jnp.float32)       # (S, B, P, Q, Cin)

    # Fold all window-images into one image axis; split it into a parallel grid
    # of width 2 when possible (keeps both v7x TCs busy; amortizes per-step
    # overhead on v5e/v6e which have a single sequential TC).
    N_img = S * B
    G = 2 if (N_img >= 2 and N_img % 2 == 0) else 1
    NB = N_img // G
    xw = xw.reshape(G, NB, P, Q, Cin)

    kp = _to_kernel_layout(params, Cin, C1, P2, Q2, NC_PAD)

    def full(a):
        return pl.BlockSpec(a.shape, lambda g, _nd=a.ndim: (0,) * _nd)

    grid_spec = pltpu.PrefetchScalarGridSpec(
        num_scalar_prefetch=0,
        grid=(G,),
        in_specs=[
            pl.BlockSpec((None, NB, P, Q, Cin), lambda g: (g, 0, 0, 0, 0)),
            full(kp['w1']), full(kp['b1']),
            full(kp['w2']), full(kp['b2']),
            full(kp['fw1']), full(kp['fb1']),
            full(kp['fw2']), full(kp['fb2']),
        ],
        out_specs=pl.BlockSpec((None, NB, NC_PAD), lambda g: (g, 0, 0)),
    )

    out = pl.pallas_call(
        line_cnn_kernel,
        out_shape=jax.ShapeDtypeStruct((G, NB, NC_PAD), jnp.float32),
        grid_spec=grid_spec,
        compiler_params=pltpu.CompilerParams(
            dimension_semantics=("parallel",)),
    )(xw, kp['w1'], kp['b1'], kp['w2'], kp['b2'],
      kp['fw1'], kp['fb1'], kp['fw2'], kp['fb2'])

    # (G, NB, NC_PAD) -> (S, B, NC) -> (B, NC, S) == torch.cat([... .unsqueeze(2)], dim=2)
    out = out.reshape(S, B, NC_PAD)[:, :, :NC]
    return jnp.transpose(out, (1, 2, 0))


# --------------------------------------------------------------------------
# Pure-JAX/XLA reference mirroring the PyTorch forward exactly (for checking)
# --------------------------------------------------------------------------
def reference_forward(x, params, *, window_width, window_stride):
    B, Cin, H, W = x.shape
    dn = ('NCHW', 'OIHW', 'NCHW')
    outs = []
    for ws in range(0, W, window_stride):
        im = x[:, :, :, ws:ws + window_width]
        im = jnp.transpose(im, (0, 1, 3, 2))
        y = lax.conv_general_dilated(im, params['conv1_w'], (1, 1), 'SAME',
                                     dimension_numbers=dn,
                                     precision=lax.Precision.HIGHEST)
        y = jnp.maximum(y + params['conv1_b'][None, :, None, None], 0.0)
        y = lax.conv_general_dilated(y, params['conv2_w'], (1, 1), 'SAME',
                                     dimension_numbers=dn,
                                     precision=lax.Precision.HIGHEST)
        y = jnp.maximum(y + params['conv2_b'][None, :, None, None], 0.0)
        y = lax.reduce_window(y, -jnp.inf, lax.max,
                              (1, 1, 2, 2), (1, 1, 2, 2), 'VALID')
        y = y.reshape(B, -1)                                  # torch.flatten(x, 1)
        y = jnp.maximum(jnp.dot(y, params['fc1_w'].T,
                                precision=lax.Precision.HIGHEST)
                        + params['fc1_b'], 0.0)
        y = jnp.dot(y, params['fc2_w'].T,
                    precision=lax.Precision.HIGHEST) + params['fc2_b']
        outs.append(y[:, :, None])
    return jnp.concatenate(outs, axis=2)


if __name__ == "__main__":
    # Small shapes consistent with the module's forward:
    B, Cin, H, W = 2, 1, 16, 32
    window_width, window_stride = 16, 16          # -> S = 2 windows
    conv_dim, fc_dim, num_classes = 8, 32, 10

    key = jax.random.PRNGKey(0)
    kx, kparams = jax.random.split(key)
    x = jax.random.normal(kx, (B, Cin, H, W), jnp.float32)
    params = make_params(kparams, Cin, H, window_width,
                         conv_dim, fc_dim, num_classes)

    out = line_cnn_simple_ivan_forward(
        x, params, window_width=window_width, window_stride=window_stride)
    out = jax.block_until_ready(out)

    ref = jax.block_until_ready(
        reference_forward(x, params, window_width=window_width,
                          window_stride=window_stride))

    assert out.shape == (B, num_classes, W // window_stride), out.shape
    max_err = float(jnp.max(jnp.abs(out - ref)))
    assert jnp.allclose(out, ref, atol=1e-2, rtol=1e-2), max_err
    print("KERNEL_OK")
</pallas_src>

<mosaic_0001>
module attributes {stable_mosaic.version = 11 : i64} {
  func.func @line_cnn_kernel(%arg0: i32, %arg1: memref<1x2x16x16x1xf32, #tpu.memory_space<vmem>>, %arg2: memref<9x8xf32, #tpu.memory_space<vmem>>, %arg3: memref<1x8xf32, #tpu.memory_space<vmem>>, %arg4: memref<72x8xf32, #tpu.memory_space<vmem>>, %arg5: memref<1x8xf32, #tpu.memory_space<vmem>>, %arg6: memref<512x32xf32, #tpu.memory_space<vmem>>, %arg7: memref<1x32xf32, #tpu.memory_space<vmem>>, %arg8: memref<32x128xf32, #tpu.memory_space<vmem>>, %arg9: memref<1x128xf32, #tpu.memory_space<vmem>>, %arg10: memref<1x2x128xf32, #tpu.memory_space<vmem>>) attributes {dimension_semantics = [#tpu.dimension_semantics<parallel>], iteration_bounds = array<i64: 2>, scalar_prefetch = 0 : i64, scratch_operands = 0 : i64, tpu.core_type = #tpu.core_type<tc>, window_params = [{transform_indices = @transform_0, window_bounds = array<i64: 1, 2, 16, 16, 1>}, {pipeline_mode = #tpu.pipeline_mode<synchronous>, transform_indices = @transform_1, window_bounds = array<i64: 9, 8>}, {pipeline_mode = #tpu.pipeline_mode<synchronous>, transform_indices = @transform_2, window_bounds = array<i64: 1, 8>}, {pipeline_mode = #tpu.pipeline_mode<synchronous>, transform_indices = @transform_3, window_bounds = array<i64: 72, 8>}, {pipeline_mode = #tpu.pipeline_mode<synchronous>, transform_indices = @transform_4, window_bounds = array<i64: 1, 8>}, {pipeline_mode = #tpu.pipeline_mode<synchronous>, transform_indices = @transform_5, window_bounds = array<i64: 512, 32>}, {pipeline_mode = #tpu.pipeline_mode<synchronous>, transform_indices = @transform_6, window_bounds = array<i64: 1, 32>}, {pipeline_mode = #tpu.pipeline_mode<synchronous>, transform_indices = @transform_7, window_bounds = array<i64: 32, 128>}, {pipeline_mode = #tpu.pipeline_mode<synchronous>, transform_indices = @transform_8, window_bounds = array<i64: 1, 128>}, {transform_indices = @transform_9, window_bounds = array<i64: 1, 2, 128>}]} {
    %c0 = arith.constant 0 : index
    %c0_0 = arith.constant 0 : index
    %c0_1 = arith.constant 0 : index
    %c0_2 = arith.constant 0 : index
    %c0_3 = arith.constant 0 : index
    %0 = vector.load %arg1[%c0, %c0_0, %c0_1, %c0_2, %c0_3] : memref<1x2x16x16x1xf32, #tpu.memory_space<vmem>>, vector<1x2x16x16x1xf32>
    %1 = vector.shape_cast %0 : vector<1x2x16x16x1xf32> to vector<2x16x16x1xf32>
    %c0_4 = arith.constant 0 : index
    %c0_5 = arith.constant 0 : index
    %2 = vector.load %arg2[%c0_4, %c0_5] : memref<9x8xf32, #tpu.memory_space<vmem>>, vector<9x8xf32>
    %c0_6 = arith.constant 0 : index
    %c0_7 = arith.constant 0 : index
    %3 = vector.load %arg3[%c0_6, %c0_7] : memref<1x8xf32, #tpu.memory_space<vmem>>, vector<1x8xf32>
    %cst = arith.constant 0.000000e+00 : f32
    %4 = vector.broadcast %cst : f32 to vector<2x16x1x1xf32>
    %5 = tpu.concatenate %4, %1, %4 in 2 : vector<2x16x1x1xf32>, vector<2x16x16x1xf32>, vector<2x16x1x1xf32> -> vector<2x16x18x1xf32>
    %cst_8 = arith.constant 0.000000e+00 : f32
    %6 = vector.broadcast %cst_8 : f32 to vector<2x1x18x1xf32>
    %7 = tpu.concatenate %6, %5, %6 in 1 : vector<2x1x18x1xf32>, vector<2x16x18x1xf32>, vector<2x1x18x1xf32> -> vector<2x18x18x1xf32>
    %cst_9 = arith.constant 0.000000e+00 : f32
    %8 = vector.broadcast %cst_9 : f32 to vector<2x16x16x8xf32>
    %9 = vector.extract_strided_slice %7 {offsets = [0, 0, 0, 0], sizes = [2, 16, 16, 1], strides = [1, 1, 1, 1]} : vector<2x18x18x1xf32> to vector<2x16x16x1xf32>
    %10 = vector.extract_strided_slice %2 {offsets = [0, 0], sizes = [1, 8], strides = [1, 1]} : vector<9x8xf32> to vector<1x8xf32>
    %11 = vector.shape_cast %10 : vector<1x8xf32> to vector<1x1x1x8xf32>
    %12 = vector.broadcast %9 : vector<2x16x16x1xf32> to vector<2x16x16x8xf32>
    %13 = vector.broadcast %11 : vector<1x1x1x8xf32> to vector<2x16x16x8xf32>
    %14 = arith.mulf %12, %13 : vector<2x16x16x8xf32>
    %15 = arith.addf %8, %14 : vector<2x16x16x8xf32>
    %16 = vector.extract_strided_slice %7 {offsets = [0, 0, 1, 0], sizes = [2, 16, 16, 1], strides = [1, 1, 1, 1]} : vector<2x18x18x1xf32> to vector<2x16x16x1xf32>
    %17 = vector.extract_strided_slice %2 {offsets = [1, 0], sizes = [1, 8], strides = [1, 1]} : vector<9x8xf32> to vector<1x8xf32>
    %18 = vector.shape_cast %17 : vector<1x8xf32> to vector<1x1x1x8xf32>
    %19 = vector.broadcast %16 : vector<2x16x16x1xf32> to vector<2x16x16x8xf32>
    %20 = vector.broadcast %18 : vector<1x1x1x8xf32> to vector<2x16x16x8xf32>
    %21 = arith.mulf %19, %20 : vector<2x16x16x8xf32>
    %22 = arith.addf %15, %21 : vector<2x16x16x8xf32>
    %23 = vector.extract_strided_slice %7 {offsets = [0, 0, 2, 0], sizes = [2, 16, 16, 1], strides = [1, 1, 1, 1]} : vector<2x18x18x1xf32> to vector<2x16x16x1xf32>
    %24 = vector.extract_strided_slice %2 {offsets = [2, 0], sizes = [1, 8], strides = [1, 1]} : vector<9x8xf32> to vector<1x8xf32>
    %25 = vector.shape_cast %24 : vector<1x8xf32> to vector<1x1x1x8xf32>
    %26 = vector.broadcast %23 : vector<2x16x16x1xf32> to vector<2x16x16x8xf32>
    %27 = vector.broadcast %25 : vector<1x1x1x8xf32> to vector<2x16x16x8xf32>
    %28 = arith.mulf %26, %27 : vector<2x16x16x8xf32>
    %29 = arith.addf %22, %28 : vector<2x16x16x8xf32>
    %30 = vector.extract_strided_slice %7 {offsets = [0, 1, 0, 0], sizes = [2, 16, 16, 1], strides = [1, 1, 1, 1]} : vector<2x18x18x1xf32> to vector<2x16x16x1xf32>
    %31 = vector.extract_strided_slice %2 {offsets = [3, 0], sizes = [1, 8], strides = [1, 1]} : vector<9x8xf32> to vector<1x8xf32>
    %32 = vector.shape_cast %31 : vector<1x8xf32> to vector<1x1x1x8xf32>
    %33 = vector.broadcast %30 : vector<2x16x16x1xf32> to vector<2x16x16x8xf32>
    %34 = vector.broadcast %32 : vector<1x1x1x8xf32> to vector<2x16x16x8xf32>
    %35 = arith.mulf %33, %34 : vector<2x16x16x8xf32>
    %36 = arith.addf %29, %35 : vector<2x16x16x8xf32>
    %37 = vector.extract_strided_slice %7 {offsets = [0, 1, 1, 0], sizes = [2, 16, 16, 1], strides = [1, 1, 1, 1]} : vector<2x18x18x1xf32> to vector<2x16x16x1xf32>
    %38 = vector.extract_strided_slice %2 {offsets = [4, 0], sizes = [1, 8], strides = [1, 1]} : vector<9x8xf32> to vector<1x8xf32>
    %39 = vector.shape_cast %38 : vector<1x8xf32> to vector<1x1x1x8xf32>
    %40 = vector.broadcast %37 : vector<2x16x16x1xf32> to vector<2x16x16x8xf32>
    %41 = vector.broadcast %39 : vector<1x1x1x8xf32> to vector<2x16x16x8xf32>
    %42 = arith.mulf %40, %41 : vector<2x16x16x8xf32>
    %43 = arith.addf %36, %42 : vector<2x16x16x8xf32>
    %44 = vector.extract_strided_slice %7 {offsets = [0, 1, 2, 0], sizes = [2, 16, 16, 1], strides = [1, 1, 1, 1]} : vector<2x18x18x1xf32> to vector<2x16x16x1xf32>
    %45 = vector.extract_strided_slice %2 {offsets = [5, 0], sizes = [1, 8], strides = [1, 1]} : vector<9x8xf32> to vector<1x8xf32>
    %46 = vector.shape_cast %45 : vector<1x8xf32> to vector<1x1x1x8xf32>
    %47 = vector.broadcast %44 : vector<2x16x16x1xf32> to vector<2x16x16x8xf32>
    %48 = vector.broadcast %46 : vector<1x1x1x8xf32> to vector<2x16x16x8xf32>
    %49 = arith.mulf %47, %48 : vector<2x16x16x8xf32>
    %50 = arith.addf %43, %49 : vector<2x16x16x8xf32>
    %51 = vector.extract_strided_slice %7 {offsets = [0, 2, 0, 0], sizes = [2, 16, 16, 1], strides = [1, 1, 1, 1]} : vector<2x18x18x1xf32> to vector<2x16x16x1xf32>
    %52 = vector.extract_strided_slice %2 {offsets = [6, 0], sizes = [1, 8], strides = [1, 1]} : vector<9x8xf32> to vector<1x8xf32>
    %53 = vector.shape_cast %52 : vector<1x8xf32> to vector<1x1x1x8xf32>
    %54 = vector.broadcast %51 : vector<2x16x16x1xf32> to vector<2x16x16x8xf32>
    %55 = vector.broadcast %53 : vector<1x1x1x8xf32> to vector<2x16x16x8xf32>
    %56 = arith.mulf %54, %55 : vector<2x16x16x8xf32>
    %57 = arith.addf %50, %56 : vector<2x16x16x8xf32>
    %58 = vector.extract_strided_slice %7 {offsets = [0, 2, 1, 0], sizes = [2, 16, 16, 1], strides = [1, 1, 1, 1]} : vector<2x18x18x1xf32> to vector<2x16x16x1xf32>
    %59 = vector.extract_strided_slice %2 {offsets = [7, 0], sizes = [1, 8], strides = [1, 1]} : vector<9x8xf32> to vector<1x8xf32>
    %60 = vector.shape_cast %59 : vector<1x8xf32> to vector<1x1x1x8xf32>
    %61 = vector.broadcast %58 : vector<2x16x16x1xf32> to vector<2x16x16x8xf32>
    %62 = vector.broadcast %60 : vector<1x1x1x8xf32> to vector<2x16x16x8xf32>
    %63 = arith.mulf %61, %62 : vector<2x16x16x8xf32>
    %64 = arith.addf %57, %63 : vector<2x16x16x8xf32>
    %65 = vector.extract_strided_slice %7 {offsets = [0, 2, 2, 0], sizes = [2, 16, 16, 1], strides = [1, 1, 1, 1]} : vector<2x18x18x1xf32> to vector<2x16x16x1xf32>
    %66 = vector.extract_strided_slice %2 {offsets = [8, 0], sizes = [1, 8], strides = [1, 1]} : vector<9x8xf32> to vector<1x8xf32>
    %67 = vector.shape_cast %66 : vector<1x8xf32> to vector<1x1x1x8xf32>
    %68 = vector.broadcast %65 : vector<2x16x16x1xf32> to vector<2x16x16x8xf32>
    %69 = vector.broadcast %67 : vector<1x1x1x8xf32> to vector<2x16x16x8xf32>
    %70 = arith.mulf %68, %69 : vector<2x16x16x8xf32>
    %71 = arith.addf %64, %70 : vector<2x16x16x8xf32>
    %72 = vector.shape_cast %3 : vector<1x8xf32> to vector<1x1x1x8xf32>
    %73 = vector.broadcast %72 : vector<1x1x1x8xf32> to vector<2x16x16x8xf32>
    %74 = arith.addf %71, %73 : vector<2x16x16x8xf32>
    %cst_10 = arith.constant 0.000000e+00 : f32
    %75 = vector.broadcast %cst_10 : f32 to vector<2x16x16x8xf32>
    %76 = arith.maximumf %74, %75 : vector<2x16x16x8xf32>
    %c0_11 = arith.constant 0 : index
    %c0_12 = arith.constant 0 : index
    %77 = vector.load %arg4[%c0_11, %c0_12] : memref<72x8xf32, #tpu.memory_space<vmem>>, vector<72x8xf32>
    %c0_13 = arith.constant 0 : index
    %c0_14 = arith.constant 0 : index
    %78 = vector.load %arg5[%c0_13, %c0_14] : memref<1x8xf32, #tpu.memory_space<vmem>>, vector<1x8xf32>
    %cst_15 = arith.constant 0.000000e+00 : f32
    %79 = vector.broadcast %cst_15 : f32 to vector<2x16x1x8xf32>
    %80 = tpu.concatenate %79, %76, %79 in 2 : vector<2x16x1x8xf32>, vector<2x16x16x8xf32>, vector<2x16x1x8xf32> -> vector<2x16x18x8xf32>
    %cst_16 = arith.constant 0.000000e+00 : f32
    %81 = vector.broadcast %cst_16 : f32 to vector<2x1x18x8xf32>
    %82 = tpu.concatenate %81, %80, %81 in 1 : vector<2x1x18x8xf32>, vector<2x16x18x8xf32>, vector<2x1x18x8xf32> -> vector<2x18x18x8xf32>
    %83 = vector.extract_strided_slice %82 {offsets = [0, 0, 0, 0], sizes = [2, 16, 16, 8], strides = [1, 1, 1, 1]} : vector<2x18x18x8xf32> to vector<2x16x16x8xf32>
    %84 = vector.extract_strided_slice %82 {offsets = [0, 0, 1, 0], sizes = [2, 16, 16, 8], strides = [1, 1, 1, 1]} : vector<2x18x18x8xf32> to vector<2x16x16x8xf32>
    %85 = vector.extract_strided_slice %82 {offsets = [0, 0, 2, 0], sizes = [2, 16, 16, 8], strides = [1, 1, 1, 1]} : vector<2x18x18x8xf32> to vector<2x16x16x8xf32>
    %86 = vector.extract_strided_slice %82 {offsets = [0, 1, 0, 0], sizes = [2, 16, 16, 8], strides = [1, 1, 1, 1]} : vector<2x18x18x8xf32> to vector<2x16x16x8xf32>
    %87 = vector.extract_strided_slice %82 {offsets = [0, 1, 1, 0], sizes = [2, 16, 16, 8], strides = [1, 1, 1, 1]} : vector<2x18x18x8xf32> to vector<2x16x16x8xf32>
    %88 = vector.extract_strided_slice %82 {offsets = [0, 1, 2, 0], sizes = [2, 16, 16, 8], strides = [1, 1, 1, 1]} : vector<2x18x18x8xf32> to vector<2x16x16x8xf32>
    %89 = vector.extract_strided_slice %82 {offsets = [0, 2, 0, 0], sizes = [2, 16, 16, 8], strides = [1, 1, 1, 1]} : vector<2x18x18x8xf32> to vector<2x16x16x8xf32>
    %90 = vector.extract_strided_slice %82 {offsets = [0, 2, 1, 0], sizes = [2, 16, 16, 8], strides = [1, 1, 1, 1]} : vector<2x18x18x8xf32> to vector<2x16x16x8xf32>
    %91 = vector.extract_strided_slice %82 {offsets = [0, 2, 2, 0], sizes = [2, 16, 16, 8], strides = [1, 1, 1, 1]} : vector<2x18x18x8xf32> to vector<2x16x16x8xf32>
    %92 = tpu.concatenate %83, %84, %85, %86, %87, %88, %89, %90, %91 in 3 : vector<2x16x16x8xf32>, vector<2x16x16x8xf32>, vector<2x16x16x8xf32>, vector<2x16x16x8xf32>, vector<2x16x16x8xf32>, vector<2x16x16x8xf32>, vector<2x16x16x8xf32>, vector<2x16x16x8xf32>, vector<2x16x16x8xf32> -> vector<2x16x16x72xf32>
    %93 = vector.shape_cast %92 : vector<2x16x16x72xf32> to vector<512x72xf32>
    %cst_17 = arith.constant dense<0.000000e+00> : vector<512x8xf32>
    %94 = tpu.matmul %93, %77, %cst_17 {dimension_numbers = #tpu.dot_dimension_numbers<[1], [0], [0], [1], [0, 0, 1, 1], [], []>} : vector<512x72xf32>, vector<72x8xf32>, vector<512x8xf32> -> vector<512x8xf32>
    %95 = vector.broadcast %78 : vector<1x8xf32> to vector<512x8xf32>
    %96 = arith.addf %94, %95 : vector<512x8xf32>
    %97 = vector.shape_cast %96 : vector<512x8xf32> to vector<2x16x16x8xf32>
    %cst_18 = arith.constant 0.000000e+00 : f32
    %98 = vector.broadcast %cst_18 : f32 to vector<2x16x16x8xf32>
    %99 = arith.maximumf %97, %98 : vector<2x16x16x8xf32>
    %c0_19 = arith.constant 0 : index
    %c0_20 = arith.constant 0 : index
    %100 = vector.load %arg6[%c0_19, %c0_20] : memref<512x32xf32, #tpu.memory_space<vmem>>, vector<512x32xf32>
    %c0_21 = arith.constant 0 : index
    %c0_22 = arith.constant 0 : index
    %101 = vector.load %arg7[%c0_21, %c0_22] : memref<1x32xf32, #tpu.memory_space<vmem>>, vector<1x32xf32>
    %c0_23 = arith.constant 0 : index
    %c0_24 = arith.constant 0 : index
    %102 = vector.load %arg8[%c0_23, %c0_24] : memref<32x128xf32, #tpu.memory_space<vmem>>, vector<32x128xf32>
    %c0_25 = arith.constant 0 : index
    %c0_26 = arith.constant 0 : index
    %103 = vector.load %arg9[%c0_25, %c0_26] : memref<1x128xf32, #tpu.memory_space<vmem>>, vector<1x128xf32>
    %104 = vector.shape_cast %99 : vector<2x16x16x8xf32> to vector<2x8x2x16x8xf32>
    %105 = vector.extract_strided_slice %104 {offsets = [0, 0, 0, 0, 0], sizes = [2, 8, 1, 16, 8], strides = [1, 1, 1, 1, 1]} : vector<2x8x2x16x8xf32> to vector<2x8x1x16x8xf32>
    %106 = vector.shape_cast %105 : vector<2x8x1x16x8xf32> to vector<2x8x16x8xf32>
    %107 = vector.extract_strided_slice %104 {offsets = [0, 0, 1, 0, 0], sizes = [2, 8, 1, 16, 8], strides = [1, 1, 1, 1, 1]} : vector<2x8x2x16x8xf32> to vector<2x8x1x16x8xf32>
    %108 = vector.shape_cast %107 : vector<2x8x1x16x8xf32> to vector<2x8x16x8xf32>
    %109 = arith.maximumf %106, %108 : vector<2x8x16x8xf32>
    %110 = vector.shape_cast %109 : vector<2x8x16x8xf32> to vector<2x8x8x2x8xf32>
    %111 = vector.extract_strided_slice %110 {offsets = [0, 0, 0, 0, 0], sizes = [2, 8, 8, 1, 8], strides = [1, 1, 1, 1, 1]} : vector<2x8x8x2x8xf32> to vector<2x8x8x1x8xf32>
    %112 = vector.shape_cast %111 : vector<2x8x8x1x8xf32> to vector<2x8x8x8xf32>
    %113 = vector.extract_strided_slice %110 {offsets = [0, 0, 0, 1, 0], sizes = [2, 8, 8, 1, 8], strides = [1, 1, 1, 1, 1]} : vector<2x8x8x2x8xf32> to vector<2x8x8x1x8xf32>
    %114 = vector.shape_cast %113 : vector<2x8x8x1x8xf32> to vector<2x8x8x8xf32>
    %115 = arith.maximumf %112, %114 : vector<2x8x8x8xf32>
    %116 = vector.extract_strided_slice %115 {offsets = [0, 0, 0, 0], sizes = [2, 1, 1, 8], strides = [1, 1, 1, 1]} : vector<2x8x8x8xf32> to vector<2x1x1x8xf32>
    %117 = vector.shape_cast %116 : vector<2x1x1x8xf32> to vector<2x8xf32>
    %118 = vector.extract_strided_slice %115 {offsets = [0, 0, 1, 0], sizes = [2, 1, 1, 8], strides = [1, 1, 1, 1]} : vector<2x8x8x8xf32> to vector<2x1x1x8xf32>
    %119 = vector.shape_cast %118 : vector<2x1x1x8xf32> to vector<2x8xf32>
    %120 = vector.extract_strided_slice %115 {offsets = [0, 0, 2, 0], sizes = [2, 1, 1, 8], strides = [1, 1, 1, 1]} : vector<2x8x8x8xf32> to vector<2x1x1x8xf32>
    %121 = vector.shape_cast %120 : vector<2x1x1x8xf32> to vector<2x8xf32>
    %122 = vector.extract_strided_slice %115 {offsets = [0, 0, 3, 0], sizes = [2, 1, 1, 8], strides = [1, 1, 1, 1]} : vector<2x8x8x8xf32> to vector<2x1x1x8xf32>
    %123 = vector.shape_cast %122 : vector<2x1x1x8xf32> to vector<2x8xf32>
    %124 = vector.extract_strided_slice %115 {offsets = [0, 0, 4, 0], sizes = [2, 1, 1, 8], strides = [1, 1, 1, 1]} : vector<2x8x8x8xf32> to vector<2x1x1x8xf32>
    %125 = vector.shape_cast %124 : vector<2x1x1x8xf32> to vector<2x8xf32>
    %126 = vector.extract_strided_slice %115 {offsets = [0, 0, 5, 0], sizes = [2, 1, 1, 8], strides = [1, 1, 1, 1]} : vector<2x8x8x8xf32> to vector<2x1x1x8xf32>
    %127 = vector.shape_cast %126 : vector<2x1x1x8xf32> to vector<2x8xf32>
    %128 = vector.extract_strided_slice %115 {offsets = [0, 0, 6, 0], sizes = [2, 1, 1, 8], strides = [1, 1, 1, 1]} : vector<2x8x8x8xf32> to vector<2x1x1x8xf32>
    %129 = vector.shape_cast %128 : vector<2x1x1x8xf32> to vector<2x8xf32>
    %130 = vector.extract_strided_slice %115 {offsets = [0, 0, 7, 0], sizes = [2, 1, 1, 8], strides = [1, 1, 1, 1]} : vector<2x8x8x8xf32> to vector<2x1x1x8xf32>
    %131 = vector.shape_cast %130 : vector<2x1x1x8xf32> to vector<2x8xf32>
    %132 = vector.extract_strided_slice %115 {offsets = [0, 1, 0, 0], sizes = [2, 1, 1, 8], strides = [1, 1, 1, 1]} : vector<2x8x8x8xf32> to vector<2x1x1x8xf32>
    %133 = vector.shape_cast %132 : vector<2x1x1x8xf32> to vector<2x8xf32>
    %134 = vector.extract_strided_slice %115 {offsets = [0, 1, 1, 0], sizes = [2, 1, 1, 8], strides = [1, 1, 1, 1]} : vector<2x8x8x8xf32> to vector<2x1x1x8xf32>
    %135 = vector.shape_cast %134 : vector<2x1x1x8xf32> to vector<2x8xf32>
    %136 = vector.extract_strided_slice %115 {offsets = [0, 1, 2, 0], sizes = [2, 1, 1, 8], strides = [1, 1, 1, 1]} : vector<2x8x8x8xf32> to vector<2x1x1x8xf32>
    %137 = vector.shape_cast %136 : vector<2x1x1x8xf32> to vector<2x8xf32>
    %138 = vector.extract_strided_slice %115 {offsets = [0, 1, 3, 0], sizes = [2, 1, 1, 8], strides = [1, 1, 1, 1]} : vector<2x8x8x8xf32> to vector<2x1x1x8xf32>
    %139 = vector.shape_cast %138 : vector<2x1x1x8xf32> to vector<2x8xf32>
    %140 = vector.extract_strided_slice %115 {offsets = [0, 1, 4, 0], sizes = [2, 1, 1, 8], strides = [1, 1, 1, 1]} : vector<2x8x8x8xf32> to vector<2x1x1x8xf32>
    %141 = vector.shape_cast %140 : vector<2x1x1x8xf32> to vector<2x8xf32>
    %142 = vector.extract_strided_slice %115 {offsets = [0, 1, 5, 0], sizes = [2, 1, 1, 8], strides = [1, 1, 1, 1]} : vector<2x8x8x8xf32> to vector<2x1x1x8xf32>
    %143 = vector.shape_cast %142 : vector<2x1x1x8xf32> to vector<2x8xf32>
    %144 = vector.extract_strided_slice %115 {offsets = [0, 1, 6, 0], sizes = [2, 1, 1, 8], strides = [1, 1, 1, 1]} : vector<2x8x8x8xf32> to vector<2x1x1x8xf32>
    %145 = vector.shape_cast %144 : vector<2x1x1x8xf32> to vector<2x8xf32>
    %146 = vector.extract_strided_slice %115 {offsets = [0, 1, 7, 0], sizes = [2, 1, 1, 8], strides = [1, 1, 1, 1]} : vector<2x8x8x8xf32> to vector<2x1x1x8xf32>
    %147 = vector.shape_cast %146 : vector<2x1x1x8xf32> to vector<2x8xf32>
    %148 = vector.extract_strided_slice %115 {offsets = [0, 2, 0, 0], sizes = [2, 1, 1, 8], strides = [1, 1, 1, 1]} : vector<2x8x8x8xf32> to vector<2x1x1x8xf32>
    %149 = vector.shape_cast %148 : vector<2x1x1x8xf32> to vector<2x8xf32>
    %150 = vector.extract_strided_slice %115 {offsets = [0, 2, 1, 0], sizes = [2, 1, 1, 8], strides = [1, 1, 1, 1]} : vector<2x8x8x8xf32> to vector<2x1x1x8xf32>
    %151 = vector.shape_cast %150 : vector<2x1x1x8xf32> to vector<2x8xf32>
    %152 = vector.extract_strided_slice %115 {offsets = [0, 2, 2, 0], sizes = [2, 1, 1, 8], strides = [1, 1, 1, 1]} : vector<2x8x8x8xf32> to vector<2x1x1x8xf32>
    %153 = vector.shape_cast %152 : vector<2x1x1x8xf32> to vector<2x8xf32>
    %154 = vector.extract_strided_slice %115 {offsets = [0, 2, 3, 0], sizes = [2, 1, 1, 8], strides = [1, 1, 1, 1]} : vector<2x8x8x8xf32> to vector<2x1x1x8xf32>
    %155 = vector.shape_cast %154 : vector<2x1x1x8xf32> to vector<2x8xf32>
    %156 = vector.extract_strided_slice %115 {offsets = [0, 2, 4, 0], sizes = [2, 1, 1, 8], strides = [1, 1, 1, 1]} : vector<2x8x8x8xf32> to vector<2x1x1x8xf32>
    %157 = vector.shape_cast %156 : vector<2x1x1x8xf32> to vector<2x8xf32>
    %158 = vector.extract_strided_slice %115 {offsets = [0, 2, 5, 0], sizes = [2, 1, 1, 8], strides = [1, 1, 1, 1]} : vector<2x8x8x8xf32> to vector<2x1x1x8xf32>
    %159 = vector.shape_cast %158 : vector<2x1x1x8xf32> to vector<2x8xf32>
    %160 = vector.extract_strided_slice %115 {offsets = [0, 2, 6, 0], sizes = [2, 1, 1, 8], strides = [1, 1, 1, 1]} : vector<2x8x8x8xf32> to vector<2x1x1x8xf32>
    %161 = vector.shape_cast %160 : vector<2x1x1x8xf32> to vector<2x8xf32>
    %162 = vector.extract_strided_slice %115 {offsets = [0, 2, 7, 0], sizes = [2, 1, 1, 8], strides = [1, 1, 1, 1]} : vector<2x8x8x8xf32> to vector<2x1x1x8xf32>
    %163 = vector.shape_cast %162 : vector<2x1x1x8xf32> to vector<2x8xf32>
    %164 = vector.extract_strided_slice %115 {offsets = [0, 3, 0, 0], sizes = [2, 1, 1, 8], strides = [1, 1, 1, 1]} : vector<2x8x8x8xf32> to vector<2x1x1x8xf32>
    %165 = vector.shape_cast %164 : vector<2x1x1x8xf32> to vector<2x8xf32>
    %166 = vector.extract_strided_slice %115 {offsets = [0, 3, 1, 0], sizes = [2, 1, 1, 8], strides = [1, 1, 1, 1]} : vector<2x8x8x8xf32> to vector<2x1x1x8xf32>
    %167 = vector.shape_cast %166 : vector<2x1x1x8xf32> to vector<2x8xf32>
    %168 = vector.extract_strided_slice %115 {offsets = [0, 3, 2, 0], sizes = [2, 1, 1, 8], strides = [1, 1, 1, 1]} : vector<2x8x8x8xf32> to vector<2x1x1x8xf32>
    %169 = vector.shape_cast %168 : vector<2x1x1x8xf32> to vector<2x8xf32>
    %170 = vector.extract_strided_slice %115 {offsets = [0, 3, 3, 0], sizes = [2, 1, 1, 8], strides = [1, 1, 1, 1]} : vector<2x8x8x8xf32> to vector<2x1x1x8xf32>
    %171 = vector.shape_cast %170 : vector<2x1x1x8xf32> to vector<2x8xf32>
    %172 = vector.extract_strided_slice %115 {offsets = [0, 3, 4, 0], sizes = [2, 1, 1, 8], strides = [1, 1, 1, 1]} : vector<2x8x8x8xf32> to vector<2x1x1x8xf32>
    %173 = vector.shape_cast %172 : vector<2x1x1x8xf32> to vector<2x8xf32>
    %174 = vector.extract_strided_slice %115 {offsets = [0, 3, 5, 0], sizes = [2, 1, 1, 8], strides = [1, 1, 1, 1]} : vector<2x8x8x8xf32> to vector<2x1x1x8xf32>
    %175 = vector.shape_cast %174 : vector<2x1x1x8xf32> to vector<2x8xf32>
    %176 = vector.extract_strided_slice %115 {offsets = [0, 3, 6, 0], sizes = [2, 1, 1, 8], strides = [1, 1, 1, 1]} : vector<2x8x8x8xf32> to vector<2x1x1x8xf32>
    %177 = vector.shape_cast %176 : vector<2x1x1x8xf32> to vector<2x8xf32>
    %178 = vector.extract_strided_slice %115 {offsets = [0, 3, 7, 0], sizes = [2, 1, 1, 8], strides = [1, 1, 1, 1]} : vector<2x8x8x8xf32> to vector<2x1x1x8xf32>
    %179 = vector.shape_cast %178 : vector<2x1x1x8xf32> to vector<2x8xf32>
    %180 = vector.extract_strided_slice %115 {offsets = [0, 4, 0, 0], sizes = [2, 1, 1, 8], strides = [1, 1, 1, 1]} : vector<2x8x8x8xf32> to vector<2x1x1x8xf32>
    %181 = vector.shape_cast %180 : vector<2x1x1x8xf32> to vector<2x8xf32>
    %182 = vector.extract_strided_slice %115 {offsets = [0, 4, 1, 0], sizes = [2, 1, 1, 8], strides = [1, 1, 1, 1]} : vector<2x8x8x8xf32> to vector<2x1x1x8xf32>
    %183 = vector.shape_cast %182 : vector<2x1x1x8xf32> to vector<2x8xf32>
    %184 = vector.extract_strided_slice %115 {offsets = [0, 4, 2, 0], sizes = [2, 1, 1, 8], strides = [1, 1, 1, 1]} : vector<2x8x8x8xf32> to vector<2x1x1x8xf32>
    %185 = vector.shape_cast %184 : vector<2x1x1x8xf32> to vector<2x8xf32>
    %186 = vector.extract_strided_slice %115 {offsets = [0, 4, 3, 0], sizes = [2, 1, 1, 8], strides = [1, 1, 1, 1]} : vector<2x8x8x8xf32> to vector<2x1x1x8xf32>
    %187 = vector.shape_cast %186 : vector<2x1x1x8xf32> to vector<2x8xf32>
    %188 = vector.extract_strided_slice %115 {offsets = [0, 4, 4, 0], sizes = [2, 1, 1, 8], strides = [1, 1, 1, 1]} : vector<2x8x8x8xf32> to vector<2x1x1x8xf32>
    %189 = vector.shape_cast %188 : vector<2x1x1x8xf32> to vector<2x8xf32>
    %190 = vector.extract_strided_slice %115 {offsets = [0, 4, 5, 0], sizes = [2, 1, 1, 8], strides = [1, 1, 1, 1]} : vector<2x8x8x8xf32> to vector<2x1x1x8xf32>
    %191 = vector.shape_cast %190 : vector<2x1x1x8xf32> to vector<2x8xf32>
    %192 = vector.extract_strided_slice %115 {offsets = [0, 4, 6, 0], sizes = [2, 1, 1, 8], strides = [1, 1, 1, 1]} : vector<2x8x8x8xf32> to vector<2x1x1x8xf32>
    %193 = vector.shape_cast %192 : vector<2x1x1x8xf32> to vector<2x8xf32>
    %194 = vector.extract_strided_slice %115 {offsets = [0, 4, 7, 0], sizes = [2, 1, 1, 8], strides = [1, 1, 1, 1]} : vector<2x8x8x8xf32> to vector<2x1x1x8xf32>
    %195 = vector.shape_cast %194 : vector<2x1x1x8xf32> to vector<2x8xf32>
    %196 = vector.extract_strided_slice %115 {offsets = [0, 5, 0, 0], sizes = [2, 1, 1, 8], strides = [1, 1, 1, 1]} : vector<2x8x8x8xf32> to vector<2x1x1x8xf32>
    %197 = vector.shape_cast %196 : vector<2x1x1x8xf32> to vector<2x8xf32>
    %198 = vector.extract_strided_slice %115 {offsets = [0, 5, 1, 0], sizes = [2, 1, 1, 8], strides = [1, 1, 1, 1]} : vector<2x8x8x8xf32> to vector<2x1x1x8xf32>
    %199 = vector.shape_cast %198 : vector<2x1x1x8xf32> to vector<2x8xf32>
    %200 = vector.extract_strided_slice %115 {offsets = [0, 5, 2, 0], sizes = [2, 1, 1, 8], strides = [1, 1, 1, 1]} : vector<2x8x8x8xf32> to vector<2x1x1x8xf32>
    %201 = vector.shape_cast %200 : vector<2x1x1x8xf32> to vector<2x8xf32>
    %202 = vector.extract_strided_slice %115 {offsets = [0, 5, 3, 0], sizes = [2, 1, 1, 8], strides = [1, 1, 1, 1]} : vector<2x8x8x8xf32> to vector<2x1x1x8xf32>
    %203 = vector.shape_cast %202 : vector<2x1x1x8xf32> to vector<2x8xf32>
    %204 = vector.extract_strided_slice %115 {offsets = [0, 5, 4, 0], sizes = [2, 1, 1, 8], strides = [1, 1, 1, 1]} : vector<2x8x8x8xf32> to vector<2x1x1x8xf32>
    %205 = vector.shape_cast %204 : vector<2x1x1x8xf32> to vector<2x8xf32>
    %206 = vector.extract_strided_slice %115 {offsets = [0, 5, 5, 0], sizes = [2, 1, 1, 8], strides = [1, 1, 1, 1]} : vector<2x8x8x8xf32> to vector<2x1x1x8xf32>
    %207 = vector.shape_cast %206 : vector<2x1x1x8xf32> to vector<2x8xf32>
    %208 = vector.extract_strided_slice %115 {offsets = [0, 5, 6, 0], sizes = [2, 1, 1, 8], strides = [1, 1, 1, 1]} : vector<2x8x8x8xf32> to vector<2x1x1x8xf32>
    %209 = vector.shape_cast %208 : vector<2x1x1x8xf32> to vector<2x8xf32>
    %210 = vector.extract_strided_slice %115 {offsets = [0, 5, 7, 0], sizes = [2, 1, 1, 8], strides = [1, 1, 1, 1]} : vector<2x8x8x8xf32> to vector<2x1x1x8xf32>
    %211 = vector.shape_cast %210 : vector<2x1x1x8xf32> to vector<2x8xf32>
    %212 = vector.extract_strided_slice %115 {offsets = [0, 6, 0, 0], sizes = [2, 1, 1, 8], strides = [1, 1, 1, 1]} : vector<2x8x8x8xf32> to vector<2x1x1x8xf32>
    %213 = vector.shape_cast %212 : vector<2x1x1x8xf32> to vector<2x8xf32>
    %214 = vector.extract_strided_slice %115 {offsets = [0, 6, 1, 0], sizes = [2, 1, 1, 8], strides = [1, 1, 1, 1]} : vector<2x8x8x8xf32> to vector<2x1x1x8xf32>
    %215 = vector.shape_cast %214 : vector<2x1x1x8xf32> to vector<2x8xf32>
    %216 = vector.extract_strided_slice %115 {offsets = [0, 6, 2, 0], sizes = [2, 1, 1, 8], strides = [1, 1, 1, 1]} : vector<2x8x8x8xf32> to vector<2x1x1x8xf32>
    %217 = vector.shape_cast %216 : vector<2x1x1x8xf32> to vector<2x8xf32>
    %218 = vector.extract_strided_slice %115 {offsets = [0, 6, 3, 0], sizes = [2, 1, 1, 8], strides = [1, 1, 1, 1]} : vector<2x8x8x8xf32> to vector<2x1x1x8xf32>
    %219 = vector.shape_cast %218 : vector<2x1x1x8xf32> to vector<2x8xf32>
    %220 = vector.extract_strided_slice %115 {offsets = [0, 6, 4, 0], sizes = [2, 1, 1, 8], strides = [1, 1, 1, 1]} : vector<2x8x8x8xf32> to vector<2x1x1x8xf32>
    %221 = vector.shape_cast %220 : vector<2x1x1x8xf32> to vector<2x8xf32>
    %222 = vector.extract_strided_slice %115 {offsets = [0, 6, 5, 0], sizes = [2, 1, 1, 8], strides = [1, 1, 1, 1]} : vector<2x8x8x8xf32> to vector<2x1x1x8xf32>
    %223 = vector.shape_cast %222 : vector<2x1x1x8xf32> to vector<2x8xf32>
    %224 = vector.extract_strided_slice %115 {offsets = [0, 6, 6, 0], sizes = [2, 1, 1, 8], strides = [1, 1, 1, 1]} : vector<2x8x8x8xf32> to vector<2x1x1x8xf32>
    %225 = vector.shape_cast %224 : vector<2x1x1x8xf32> to vector<2x8xf32>
    %226 = vector.extract_strided_slice %115 {offsets = [0, 6, 7, 0], sizes = [2, 1, 1, 8], strides = [1, 1, 1, 1]} : vector<2x8x8x8xf32> to vector<2x1x1x8xf32>
    %227 = vector.shape_cast %226 : vector<2x1x1x8xf32> to vector<2x8xf32>
    %228 = vector.extract_strided_slice %115 {offsets = [0, 7, 0, 0], sizes = [2, 1, 1, 8], strides = [1, 1, 1, 1]} : vector<2x8x8x8xf32> to vector<2x1x1x8xf32>
    %229 = vector.shape_cast %228 : vector<2x1x1x8xf32> to vector<2x8xf32>
    %230 = vector.extract_strided_slice %115 {offsets = [0, 7, 1, 0], sizes = [2, 1, 1, 8], strides = [1, 1, 1, 1]} : vector<2x8x8x8xf32> to vector<2x1x1x8xf32>
    %231 = vector.shape_cast %230 : vector<2x1x1x8xf32> to vector<2x8xf32>
    %232 = vector.extract_strided_slice %115 {offsets = [0, 7, 2, 0], sizes = [2, 1, 1, 8], strides = [1, 1, 1, 1]} : vector<2x8x8x8xf32> to vector<2x1x1x8xf32>
    %233 = vector.shape_cast %232 : vector<2x1x1x8xf32> to vector<2x8xf32>
    %234 = vector.extract_strided_slice %115 {offsets = [0, 7, 3, 0], sizes = [2, 1, 1, 8], strides = [1, 1, 1, 1]} : vector<2x8x8x8xf32> to vector<2x1x1x8xf32>
    %235 = vector.shape_cast %234 : vector<2x1x1x8xf32> to vector<2x8xf32>
    %236 = vector.extract_strided_slice %115 {offsets = [0, 7, 4, 0], sizes = [2, 1, 1, 8], strides = [1, 1, 1, 1]} : vector<2x8x8x8xf32> to vector<2x1x1x8xf32>
    %237 = vector.shape_cast %236 : vector<2x1x1x8xf32> to vector<2x8xf32>
    %238 = vector.extract_strided_slice %115 {offsets = [0, 7, 5, 0], sizes = [2, 1, 1, 8], strides = [1, 1, 1, 1]} : vector<2x8x8x8xf32> to vector<2x1x1x8xf32>
    %239 = vector.shape_cast %238 : vector<2x1x1x8xf32> to vector<2x8xf32>
    %240 = vector.extract_strided_slice %115 {offsets = [0, 7, 6, 0], sizes = [2, 1, 1, 8], strides = [1, 1, 1, 1]} : vector<2x8x8x8xf32> to vector<2x1x1x8xf32>
    %241 = vector.shape_cast %240 : vector<2x1x1x8xf32> to vector<2x8xf32>
    %242 = vector.extract_strided_slice %115 {offsets = [0, 7, 7, 0], sizes = [2, 1, 1, 8], strides = [1, 1, 1, 1]} : vector<2x8x8x8xf32> to vector<2x1x1x8xf32>
    %243 = vector.shape_cast %242 : vector<2x1x1x8xf32> to vector<2x8xf32>
    %244 = tpu.concatenate %117, %119, %121, %123, %125, %127, %129, %131, %133, %135, %137, %139, %141, %143, %145, %147 in 1 : vector<2x8xf32>, vector<2x8xf32>, vector<2x8xf32>, vector<2x8xf32>, vector<2x8xf32>, vector<2x8xf32>, vector<2x8xf32>, vector<2x8xf32>, vector<2x8xf32>, vector<2x8xf32>, vector<2x8xf32>, vector<2x8xf32>, vector<2x8xf32>, vector<2x8xf32>, vector<2x8xf32>, vector<2x8xf32> -> vector<2x128xf32>
    %245 = tpu.concatenate %149, %151, %153, %155, %157, %159, %161, %163, %165, %167, %169, %171, %173, %175, %177, %179 in 1 : vector<2x8xf32>, vector<2x8xf32>, vector<2x8xf32>, vector<2x8xf32>, vector<2x8xf32>, vector<2x8xf32>, vector<2x8xf32>, vector<2x8xf32>, vector<2x8xf32>, vector<2x8xf32>, vector<2x8xf32>, vector<2x8xf32>, vector<2x8xf32>, vector<2x8xf32>, vector<2x8xf32>, vector<2x8xf32> -> vector<2x128xf32>
    %246 = tpu.concatenate %181, %183, %185, %187, %189, %191, %193, %195, %197, %199, %201, %203, %205, %207, %209, %211 in 1 : vector<2x8xf32>, vector<2x8xf32>, vector<2x8xf32>, vector<2x8xf32>, vector<2x8xf32>, vector<2x8xf32>, vector<2x8xf32>, vector<2x8xf32>, vector<2x8xf32>, vector<2x8xf32>, vector<2x8xf32>, vector<2x8xf32>, vector<2x8xf32>, vector<2x8xf32>, vector<2x8xf32>, vector<2x8xf32> -> vector<2x128xf32>
    %247 = tpu.concatenate %213, %215, %217, %219, %221, %223, %225, %227, %229, %231, %233, %235, %237, %239, %241, %243 in 1 : vector<2x8xf32>, vector<2x8xf32>, vector<2x8xf32>, vector<2x8xf32>, vector<2x8xf32>, vector<2x8xf32>, vector<2x8xf32>, vector<2x8xf32>, vector<2x8xf32>, vector<2x8xf32>, vector<2x8xf32>, vector<2x8xf32>, vector<2x8xf32>, vector<2x8xf32>, vector<2x8xf32>, vector<2x8xf32> -> vector<2x128xf32>
    %248 = tpu.concatenate %244, %245, %246, %247 in 1 : vector<2x128xf32>, vector<2x128xf32>, vector<2x128xf32>, vector<2x128xf32> -> vector<2x512xf32>
    %cst_27 = arith.constant dense<0.000000e+00> : vector<2x32xf32>
    %249 = tpu.matmul %248, %100, %cst_27 {dimension_numbers = #tpu.dot_dimension_numbers<[1], [0], [0], [1], [0, 0, 1, 1], [], []>} : vector<2x512xf32>, vector<512x32xf32>, vector<2x32xf32> -> vector<2x32xf32>
    %250 = vector.broadcast %101 : vector<1x32xf32> to vector<2x32xf32>
    %251 = arith.addf %249, %250 : vector<2x32xf32>
    %cst_28 = arith.constant 0.000000e+00 : f32
    %252 = vector.broadcast %cst_28 : f32 to vector<2x32xf32>
    %253 = arith.maximumf %251, %252 : vector<2x32xf32>
    %cst_29 = arith.constant dense<0.000000e+00> : vector<2x128xf32>
    %254 = tpu.matmul %253, %102, %cst_29 {dimension_numbers = #tpu.dot_dimension_numbers<[1], [0], [0], [1], [0, 0, 1, 1], [], []>} : vector<2x32xf32>, vector<32x128xf32>, vector<2x128xf32> -> vector<2x128xf32>
    %255 = vector.broadcast %103 : vector<1x128xf32> to vector<2x128xf32>
    %256 = arith.addf %254, %255 : vector<2x128xf32>
    %c0_30 = arith.constant 0 : index
    %c0_31 = arith.constant 0 : index
    %c0_32 = arith.constant 0 : index
    %257 = vector.load %arg10[%c0_30, %c0_31, %c0_32] : memref<1x2x128xf32, #tpu.memory_space<vmem>>, vector<1x2x128xf32>
    %258 = vector.shape_cast %257 : vector<1x2x128xf32> to vector<2x128xf32>
    %259 = vector.shape_cast %256 : vector<2x128xf32> to vector<1x2x128xf32>
    tpu.vector_store %arg10[%c0_30, %c0_31, %c0_32], %259 {strides = array<i32>} : memref<1x2x128xf32, #tpu.memory_space<vmem>>, vector<1x2x128xf32>,
    return
  }
  func.func @transform_0(%arg0: i32) -> (i32, i32, i32, i32, i32) {
    %c0_i32 = arith.constant 0 : i32
    %c0_i32_0 = arith.constant 0 : i32
    %c0_i32_1 = arith.constant 0 : i32
    %c0_i32_2 = arith.constant 0 : i32
    %c0_i32_3 = arith.constant 0 : i32
    return %arg0, %c0_i32, %c0_i32_0, %c0_i32_1, %c0_i32_2 : i32, i32, i32, i32, i32
  }
  func.func @transform_1(%arg0: i32) -> (i32, i32) {
    %c0_i32 = arith.constant 0 : i32
    %c0_i32_0 = arith.constant 0 : i32
    %c0_i32_1 = arith.constant 0 : i32
    return %c0_i32, %c0_i32_0 : i32, i32
  }
  func.func @transform_2(%arg0: i32) -> (i32, i32) {
    %c0_i32 = arith.constant 0 : i32
    %c0_i32_0 = arith.constant 0 : i32
    %c0_i32_1 = arith.constant 0 : i32
    return %c0_i32, %c0_i32_0 : i32, i32
  }
  func.func @transform_3(%arg0: i32) -> (i32, i32) {
    %c0_i32 = arith.constant 0 : i32
    %c0_i32_0 = arith.constant 0 : i32
    %c0_i32_1 = arith.constant 0 : i32
    return %c0_i32, %c0_i32_0 : i32, i32
  }
  func.func @transform_4(%arg0: i32) -> (i32, i32) {
    %c0_i32 = arith.constant 0 : i32
    %c0_i32_0 = arith.constant 0 : i32
    %c0_i32_1 = arith.constant 0 : i32
    return %c0_i32, %c0_i32_0 : i32, i32
  }
  func.func @transform_5(%arg0: i32) -> (i32, i32) {
    %c0_i32 = arith.constant 0 : i32
    %c0_i32_0 = arith.constant 0 : i32
    %c0_i32_1 = arith.constant 0 : i32
    return %c0_i32, %c0_i32_0 : i32, i32
  }
  func.func @transform_6(%arg0: i32) -> (i32, i32) {
    %c0_i32 = arith.constant 0 : i32
    %c0_i32_0 = arith.constant 0 : i32
    %c0_i32_1 = arith.constant 0 : i32
    return %c0_i32, %c0_i32_0 : i32, i32
  }
  func.func @transform_7(%arg0: i32) -> (i32, i32) {
    %c0_i32 = arith.constant 0 : i32
    %c0_i32_0 = arith.constant 0 : i32
    %c0_i32_1 = arith.constant 0 : i32
    return %c0_i32, %c0_i32_0 : i32, i32
  }
  func.func @transform_8(%arg0: i32) -> (i32, i32) {
    %c0_i32 = arith.constant 0 : i32
    %c0_i32_0 = arith.constant 0 : i32
    %c0_i32_1 = arith.constant 0 : i32
    return %c0_i32, %c0_i32_0 : i32, i32
  }
  func.func @transform_9(%arg0: i32) -> (i32, i32, i32) {
    %c0_i32 = arith.constant 0 : i32
    %c0_i32_0 = arith.constant 0 : i32
    %c0_i32_1 = arith.constant 0 : i32
    return %arg0, %c0_i32, %c0_i32_0 : i32, i32, i32
  }
}

</mosaic_0001>

<llo_original>
// kernel: tpu_custom_call.1
$region0: #{tpu_custom_call.1}
  #allocation0 [shape = 'u32[]', space=smem, size = 0x4, offset = 0x4, fixed_abs, tag = 'smem constant byte address 0x4 - core index']
  #allocation1 [shape = 'u32[144,128]{1,0:T(1,128)}', space=vmem, size = 0x12000, scoped, tag = 'internal scratch']
  %s0 = inlined_call_operand.vmem [shape: f32[2,2,16,16,1], index: 0, kind: input, shape index: {}]
  %s1 = inlined_call_operand.vmem [shape: f32[9,8], index: 1, kind: input, shape index: {}]
  %s2 = inlined_call_operand.vmem [shape: f32[1,8], index: 2, kind: input, shape index: {}]
  %s3 = inlined_call_operand.vmem [shape: f32[72,8], index: 3, kind: input, shape index: {}]
  %s4 = inlined_call_operand.vmem [shape: f32[1,8], index: 4, kind: input, shape index: {}]
  %s5 = inlined_call_operand.vmem [shape: f32[512,32], index: 5, kind: input, shape index: {}]
  %s6 = inlined_call_operand.vmem [shape: f32[1,32], index: 6, kind: input, shape index: {}]
  %s7 = inlined_call_operand.vmem [shape: f32[32,128], index: 7, kind: input, shape index: {}]
  %s8 = inlined_call_operand.vmem [shape: f32[1,128], index: 8, kind: input, shape index: {}]
  %s9 = inlined_call_operand.hbm [shape: f32[2,2,128], index: 9, kind: output, shape index: {}]
  %s10 = sld [smem:[#allocation0]]
  $region69: #{tpu_custom_call.1} parent=0
    _
  %s12 = ssub.s32 1, %s10
  %s13 = scalar_select 0, %s12, %s10
  $region1: #{tpu_custom_call.1} parent=0
    #allocation2 [shape = 'u8[2048]{0}', space=vmem, size = 0x800, scoped, tag = 'output window, operand 0']
    #allocation3 [shape = 's32[2]{0}', space=sflag, size = 0x8, scoped, tag = 'scoped memory for tpu_custom_call.1']
    %14 = vsyncpa [#allocation3], 0
    %s15 = scalar_lea.sflag [#allocation3], 1
    %16 = vsyncpa %s15, 0
    loop: start=0, step=1, limit=4
    $region2: #{tpu_custom_call.1} parent=1 // loop_pre_header
      _
    $region3: #{tpu_custom_call.1} parent=1 // loop_header
      %s18 = sphi 0, %s22
      %p19 = scmp.ge.s32.totalorder %s18, 4
      %s28 = sphi 0, %s30
      %s31 = sphi 0, %s28
      %s32 = sphi 0, %s31
      %s48 = sphi 0, %s32
      %s52 = sphi 0, %s52
      %s54 = sphi 0, %s52
      %s55 = sphi 0, %s54
      %s69 = sphi 0, %s55
      %s73 = sphi 0, %s73
      %s75 = sphi 0, %s73
      %s76 = sphi 0, %s75
      %s90 = sphi 0, %s76
      %s94 = sphi 0, %s94
      %s96 = sphi 0, %s94
      %s97 = sphi 0, %s96
      %s111 = sphi 0, %s97
      %s115 = sphi 0, %s115
      %s117 = sphi 0, %s115
      %s118 = sphi 0, %s117
      %s132 = sphi 0, %s118
      %s136 = sphi 0, %s136
      %s138 = sphi 0, %s136
      %s139 = sphi 0, %s138
      %s153 = sphi 0, %s139
      %s157 = sphi 0, %s157
      %s159 = sphi 0, %s157
      %s160 = sphi 0, %s159
      %s174 = sphi 0, %s160
      %s178 = sphi 0, %s178
      %s180 = sphi 0, %s178
      %s181 = sphi 0, %s180
      %s195 = sphi 0, %s181
      %s199 = sphi 0, %s199
      %s201 = sphi 0, %s199
      %s202 = sphi 0, %s201
      %s216 = sphi 0, %s202
      %s222 = sphi 0, %s224
      %s225 = sphi 0, %s222
      %s226 = sphi 0, %s225
      %s242 = sphi 0, %s226
    $region4: #{tpu_custom_call.1} parent=1 // loop_header_branch
      %21 = sbr.rel (%p19) target = $region8
    $region5: #{tpu_custom_call.1} parent=1 // loop_body
      %s23 = ssub.s32 %s18, 1
      %s24 = ssub.s32 %s18, 2
      %s25 = sadd.s32 %s18, 1
      %s26 = ssub.s32 %s18, %s25
      %p27 = scmp.eq.s32.totalorder %s26, 0
      %s29 = sadd.s32 %s28, 1
      %s30 = scalar_select %p27, %s28, %s29
      %p33 = pneg %p27
      %p34 = scmp.eq.s32.totalorder %s18, 1
      %p35 = por %p33, %p34
      %p36 = scmp.ne.s32.totalorder %s28, %s31
      %p37 = scmp.eq.s32.totalorder %s18, 0
      %p38 = por %p36, %p37
      %p39 = scmp.ne.s32.totalorder %s28, %s31
      %p40 = scmp.eq.s32.totalorder %s23, 1
      %p41 = por %p39, %p40
      %p42 = scmp.ne.s32.totalorder %s31, %s32
      %p43 = scmp.eq.s32.totalorder %s23, 0
      %p44 = por %p42, %p43
      %p45 = scmp.ne.s32.totalorder %s31, %s32
      %p46 = scmp.eq.s32.totalorder %s24, 1
      %p47 = por %p45, %p46
      %p49 = scmp.ne.s32.totalorder %s32, %s48
      %p50 = scmp.eq.s32.totalorder %s24, 0
      %p51 = por %p49, %p50
      %s53 = sadd.s32 %s52, 1
      %p56 = scmp.eq.s32.totalorder %s18, 1
      %p57 = scmp.ne.s32.totalorder %s52, %s54
      %p58 = scmp.eq.s32.totalorder %s18, 0
      %p59 = por %p57, %p58
      %p60 = scmp.ne.s32.totalorder %s52, %s54
      %p61 = scmp.eq.s32.totalorder %s23, 1
      %p62 = por %p60, %p61
      %p63 = scmp.ne.s32.totalorder %s54, %s55
      %p64 = scmp.eq.s32.totalorder %s23, 0
      %p65 = por %p63, %p64
      %p66 = scmp.ne.s32.totalorder %s54, %s55
      %p67 = scmp.eq.s32.totalorder %s24, 1
      %p68 = por %p66, %p67
      %p70 = scmp.ne.s32.totalorder %s55, %s69
      %p71 = scmp.eq.s32.totalorder %s24, 0
      %p72 = por %p70, %p71
      %s74 = sadd.s32 %s73, 1
      %p77 = scmp.eq.s32.totalorder %s18, 1
      %p78 = scmp.ne.s32.totalorder %s73, %s75
      %p79 = scmp.eq.s32.totalorder %s18, 0
      %p80 = por %p78, %p79
      %p81 = scmp.ne.s32.totalorder %s73, %s75
      %p82 = scmp.eq.s32.totalorder %s23, 1
      %p83 = por %p81, %p82
      %p84 = scmp.ne.s32.totalorder %s75, %s76
      %p85 = scmp.eq.s32.totalorder %s23, 0
      %p86 = por %p84, %p85
      %p87 = scmp.ne.s32.totalorder %s75, %s76
      %p88 = scmp.eq.s32.totalorder %s24, 1
      %p89 = por %p87, %p88
      %p91 = scmp.ne.s32.totalorder %s76, %s90
      %p92 = scmp.eq.s32.totalorder %s24, 0
      %p93 = por %p91, %p92
      %s95 = sadd.s32 %s94, 1
      %p98 = scmp.eq.s32.totalorder %s18, 1
      %p99 = scmp.ne.s32.totalorder %s94, %s96
      %p100 = scmp.eq.s32.totalorder %s18, 0
      %p101 = por %p99, %p100
      %p102 = scmp.ne.s32.totalorder %s94, %s96
      %p103 = scmp.eq.s32.totalorder %s23, 1
      %p104 = por %p102, %p103
      %p105 = scmp.ne.s32.totalorder %s96, %s97
      %p106 = scmp.eq.s32.totalorder %s23, 0
      %p107 = por %p105, %p106
      %p108 = scmp.ne.s32.totalorder %s96, %s97
      %p109 = scmp.eq.s32.totalorder %s24, 1
      %p110 = por %p108, %p109
      %p112 = scmp.ne.s32.totalorder %s97, %s111
      %p113 = scmp.eq.s32.totalorder %s24, 0
      %p114 = por %p112, %p113
      %s116 = sadd.s32 %s115, 1
      %p119 = scmp.eq.s32.totalorder %s18, 1
      %p120 = scmp.ne.s32.totalorder %s115, %s117
      %p121 = scmp.eq.s32.totalorder %s18, 0
      %p122 = por %p120, %p121
      %p123 = scmp.ne.s32.totalorder %s115, %s117
      %p124 = scmp.eq.s32.totalorder %s23, 1
      %p125 = por %p123, %p124
      %p126 = scmp.ne.s32.totalorder %s117, %s118
      %p127 = scmp.eq.s32.totalorder %s23, 0
      %p128 = por %p126, %p127
      %p129 = scmp.ne.s32.totalorder %s117, %s118
      %p130 = scmp.eq.s32.totalorder %s24, 1
      %p131 = por %p129, %p130
      %p133 = scmp.ne.s32.totalorder %s118, %s132
      %p134 = scmp.eq.s32.totalorder %s24, 0
      %p135 = por %p133, %p134
      %s137 = sadd.s32 %s136, 1
      %p140 = scmp.eq.s32.totalorder %s18, 1
      %p141 = scmp.ne.s32.totalorder %s136, %s138
      %p142 = scmp.eq.s32.totalorder %s18, 0
      %p143 = por %p141, %p142
      %p144 = scmp.ne.s32.totalorder %s136, %s138
      %p145 = scmp.eq.s32.totalorder %s23, 1
      %p146 = por %p144, %p145
      %p147 = scmp.ne.s32.totalorder %s138, %s139
      %p148 = scmp.eq.s32.totalorder %s23, 0
      %p149 = por %p147, %p148
      %p150 = scmp.ne.s32.totalorder %s138, %s139
      %p151 = scmp.eq.s32.totalorder %s24, 1
      %p152 = por %p150, %p151
      %p154 = scmp.ne.s32.totalorder %s139, %s153
      %p155 = scmp.eq.s32.totalorder %s24, 0
      %p156 = por %p154, %p155
      %s158 = sadd.s32 %s157, 1
      %p161 = scmp.eq.s32.totalorder %s18, 1
      %p162 = scmp.ne.s32.totalorder %s157, %s159
      %p163 = scmp.eq.s32.totalorder %s18, 0
      %p164 = por %p162, %p163
      %p165 = scmp.ne.s32.totalorder %s157, %s159
      %p166 = scmp.eq.s32.totalorder %s23, 1
      %p167 = por %p165, %p166
      %p168 = scmp.ne.s32.totalorder %s159, %s160
      %p169 = scmp.eq.s32.totalorder %s23, 0
      %p170 = por %p168, %p169
      %p171 = scmp.ne.s32.totalorder %s159, %s160
      %p172 = scmp.eq.s32.totalorder %s24, 1
      %p173 = por %p171, %p172
      %p175 = scmp.ne.s32.totalorder %s160, %s174
      %p176 = scmp.eq.s32.totalorder %s24, 0
      %p177 = por %p175, %p176
      %s179 = sadd.s32 %s178, 1
      %p182 = scmp.eq.s32.totalorder %s18, 1
      %p183 = scmp.ne.s32.totalorder %s178, %s180
      %p184 = scmp.eq.s32.totalorder %s18, 0
      %p185 = por %p183, %p184
      %p186 = scmp.ne.s32.totalorder %s178, %s180
      %p187 = scmp.eq.s32.totalorder %s23, 1
      %p188 = por %p186, %p187
      %p189 = scmp.ne.s32.totalorder %s180, %s181
      %p190 = scmp.eq.s32.totalorder %s23, 0
      %p191 = por %p189, %p190
      %p192 = scmp.ne.s32.totalorder %s180, %s181
      %p193 = scmp.eq.s32.totalorder %s24, 1
      %p194 = por %p192, %p193
      %p196 = scmp.ne.s32.totalorder %s181, %s195
      %p197 = scmp.eq.s32.totalorder %s24, 0
      %p198 = por %p196, %p197
      %s200 = sadd.s32 %s199, 1
      %p203 = scmp.eq.s32.totalorder %s18, 1
      %p204 = scmp.ne.s32.totalorder %s199, %s201
      %p205 = scmp.eq.s32.totalorder %s18, 0
      %p206 = por %p204, %p205
      %p207 = scmp.ne.s32.totalorder %s199, %s201
      %p208 = scmp.eq.s32.totalorder %s23, 1
      %p209 = por %p207, %p208
      %p210 = scmp.ne.s32.totalorder %s201, %s202
      %p211 = scmp.eq.s32.totalorder %s23, 0
      %p212 = por %p210, %p211
      %p213 = scmp.ne.s32.totalorder %s201, %s202
      %p214 = scmp.eq.s32.totalorder %s24, 1
      %p215 = por %p213, %p214
      %p217 = scmp.ne.s32.totalorder %s202, %s216
      %p218 = scmp.eq.s32.totalorder %s24, 0
      %p219 = por %p217, %p218
      %s220 = ssub.s32 %s18, %s25
      %p221 = scmp.eq.s32.totalorder %s220, 0
      %s223 = sadd.s32 %s222, 1
      %s224 = scalar_select %p221, %s222, %s223
      %p227 = pneg %p221
      %p228 = scmp.eq.s32.totalorder %s18, 1
      %p229 = por %p227, %p228
      %p230 = scmp.ne.s32.totalorder %s222, %s225
      %p231 = scmp.eq.s32.totalorder %s18, 0
      %p232 = por %p230, %p231
      %p233 = scmp.ne.s32.totalorder %s222, %s225
      %p234 = scmp.eq.s32.totalorder %s23, 1
      %p235 = por %p233, %p234
      %p236 = scmp.ne.s32.totalorder %s225, %s226
      %p237 = scmp.eq.s32.totalorder %s23, 0
      %p238 = por %p236, %p237
      %p239 = scmp.ne.s32.totalorder %s225, %s226
      %p240 = scmp.eq.s32.totalorder %s24, 1
      %p241 = por %p239, %p240
      %p243 = scmp.ne.s32.totalorder %s226, %s242
      %p244 = scmp.eq.s32.totalorder %s24, 0
      %p245 = por %p243, %p244
      %p246 = scmp.le.s32.totalorder 1, %s18
      %p247 = scmp.lt.s32.totalorder %s18, 3
      %p248 = pnand %p246, %p247
      %p249 = pneg %p248
      // Predicated region
      $region9: #{tpu_custom_call.1} parent=5 // pred_check
        _
      $region10: #{tpu_custom_call.1} parent=5 // pred_check_branch
        %251 = sbr.rel (%p248) target = $region12
      $region11: #{tpu_custom_call.1} parent=5 // pred_region
        %s252 = ssub.s32 %s18, 1
        // Predicated region
        $region13: #{tpu_custom_call.1} parent=11 // pred_check
          %p253 = pneg %p65
        $region14: #{tpu_custom_call.1} parent=11 // pred_check_branch
          %255 = sbr.rel (%p253) target = $region16
        $region15: #{tpu_custom_call.1} parent=11 // pred_region
          _
        $region16: #{tpu_custom_call.1} parent=11 // pred_fallthru
          _
        // Predicated region
        $region17: #{tpu_custom_call.1} parent=11 // pred_check
          %p256 = pneg %p86
        $region18: #{tpu_custom_call.1} parent=11 // pred_check_branch
          %258 = sbr.rel (%p256) target = $region20
        $region19: #{tpu_custom_call.1} parent=11 // pred_region
          _
        $region20: #{tpu_custom_call.1} parent=11 // pred_fallthru
          _
        // Predicated region
        $region21: #{tpu_custom_call.1} parent=11 // pred_check
          %p259 = pneg %p107
        $region22: #{tpu_custom_call.1} parent=11 // pred_check_branch
          %261 = sbr.rel (%p259) target = $region24
        $region23: #{tpu_custom_call.1} parent=11 // pred_region
          _
        $region24: #{tpu_custom_call.1} parent=11 // pred_fallthru
          _
        // Predicated region
        $region25: #{tpu_custom_call.1} parent=11 // pred_check
          %p262 = pneg %p128
        $region26: #{tpu_custom_call.1} parent=11 // pred_check_branch
          %264 = sbr.rel (%p262) target = $region28
        $region27: #{tpu_custom_call.1} parent=11 // pred_region
          _
        $region28: #{tpu_custom_call.1} parent=11 // pred_fallthru
          _
        // Predicated region
        $region29: #{tpu_custom_call.1} parent=11 // pred_check
          %p265 = pneg %p149
        $region30: #{tpu_custom_call.1} parent=11 // pred_check_branch
          %267 = sbr.rel (%p265) target = $region32
        $region31: #{tpu_custom_call.1} parent=11 // pred_region
          _
        $region32: #{tpu_custom_call.1} parent=11 // pred_fallthru
          _
        // Predicated region
        $region33: #{tpu_custom_call.1} parent=11 // pred_check
          %p268 = pneg %p170
        $region34: #{tpu_custom_call.1} parent=11 // pred_check_branch
          %270 = sbr.rel (%p268) target = $region36
        $region35: #{tpu_custom_call.1} parent=11 // pred_region
          _
        $region36: #{tpu_custom_call.1} parent=11 // pred_fallthru
          _
        // Predicated region
        $region37: #{tpu_custom_call.1} parent=11 // pred_check
          %p271 = pneg %p191
        $region38: #{tpu_custom_call.1} parent=11 // pred_check_branch
          %273 = sbr.rel (%p271) target = $region40
        $region39: #{tpu_custom_call.1} parent=11 // pred_region
          _
        $region40: #{tpu_custom_call.1} parent=11 // pred_fallthru
          _
        // Predicated region
        $region41: #{tpu_custom_call.1} parent=11 // pred_check
          %p274 = pneg %p212
        $region42: #{tpu_custom_call.1} parent=11 // pred_check_branch
          %276 = sbr.rel (%p274) target = $region44
        $region43: #{tpu_custom_call.1} parent=11 // pred_region
          _
        $region44: #{tpu_custom_call.1} parent=11 // pred_fallthru
          _
      $region12: #{tpu_custom_call.1} parent=5 // pred_fallthru
        _
      %p277 = scmp.lt.s32.totalorder %s18, 2
      // Predicated region
      $region45: #{tpu_custom_call.1} parent=5 // pred_check
        %p278 = pneg %p277
      $region46: #{tpu_custom_call.1} parent=5 // pred_check_branch
        %280 = sbr.rel (%p278) target = $region48
      $region47: #{tpu_custom_call.1} parent=5 // pred_region
        // Predicated region
        $region49: #{tpu_custom_call.1} parent=47 // pred_check
          %p281 = pneg %p38
        $region50: #{tpu_custom_call.1} parent=47 // pred_check_branch
          %283 = sbr.rel (%p281) target = $region52
        $region51: #{tpu_custom_call.1} parent=47 // pred_region
          %p284 = scmp.lt.s32.totalorder %s18, 1
          %s285 = scalar_select %p284, %s18, 1
          %s286 = smul.addr %s285, 64
          %s287 = smul.addr %s286, 8
          %s288 = scalar_lea.vmem %s0, %s287
        $region52: #{tpu_custom_call.1} parent=47 // pred_fallthru
          _
      $region48: #{tpu_custom_call.1} parent=5 // pred_fallthru
        _
      %p289 = scmp.le.s32.totalorder 1, %s18
      %p290 = scmp.lt.s32.totalorder %s18, 3
      %p291 = pnand %p289, %p290
      %p292 = pneg %p291
      // Predicated region
      $region53: #{tpu_custom_call.1} parent=5 // pred_check
        _
      $region54: #{tpu_custom_call.1} parent=5 // pred_check_branch
        %294 = sbr.rel (%p291) target = $region56
      $region55: #{tpu_custom_call.1} parent=5 // pred_region
        %s295 = ssub.s32 %s18, 1
        %p296 = scmp.lt.s32.totalorder %s23, 1
        %s297 = scalar_select %p296, %s23, 1
        %s298 = smul.addr %s297, 64
        %s299 = smul.addr %s298, 8
        %s300 = scalar_lea.vmem %s0, %s299
        %p301 = pneg %p44
        %p302 = pneg %p41
        %p303 = pneg %p65
        %p304 = pneg %p62
        %p305 = pneg %p86
        %p306 = pneg %p83
        %p307 = pneg %p107
        %p308 = pneg %p104
        %p309 = pneg %p128
        %p310 = pneg %p125
        %p311 = pneg %p149
        %p312 = pneg %p146
        %p313 = pneg %p170
        %p314 = pneg %p167
        %p315 = pneg %p191
        %p316 = pneg %p188
        %p317 = pneg %p212
        %p318 = pneg %p209
        %p319 = pneg %p238
        %p320 = pneg %p235
        %s321 = sand.u32 %s225, 1
        %s322 = scalar_lea.sflag [#allocation3], %s321
        %s323 = sand.u32 %s225, 1
        %s324 = smul.addr %s323, 2
        %s325 = scalar_lea.vmem [#allocation2], %s324
        %p326 = scmp.lt.s32.totalorder %s23, 1
        %s327 = scalar_select %p326, %s23, 1
        %s328 = smul.addr %s327, 64
        %s329 = smul.addr %s328, 8
        %s330 = scalar_lea.vmem %s0, %s329
        %v331 = vld [vmem:[%s330] sm:$0xff]
        %v332 = vld [vmem:[%s330 + $0x8] sm:$0xff]
        %v333 = vld [vmem:[%s330 + $0x10] sm:$0xff]
        %v334 = vld [vmem:[%s330 + $0x18] sm:$0xff]
        %v335 = vld [vmem:[%s330 + $0x20] sm:$0xff]
        %v336 = vld [vmem:[%s330 + $0x28] sm:$0xff]
        %v337 = vld [vmem:[%s330 + $0x30] sm:$0xff]
        %v338 = vld [vmem:[%s330 + $0x38] sm:$0xff]
        %v339 = vld [vmem:[%s330 + $0x40] sm:$0xff]
        %v340 = vld [vmem:[%s330 + $0x48] sm:$0xff]
        %v341 = vld [vmem:[%s330 + $0x50] sm:$0xff]
        %v342 = vld [vmem:[%s330 + $0x58] sm:$0xff]
        %v343 = vld [vmem:[%s330 + $0x60] sm:$0xff]
        %v344 = vld [vmem:[%s330 + $0x68] sm:$0xff]
        %v345 = vld [vmem:[%s330 + $0x70] sm:$0xff]
        %v346 = vld [vmem:[%s330 + $0x78] sm:$0xff]
        %v347 = vld [vmem:[%s330 + $0x80] sm:$0xff]
        %v348 = vld [vmem:[%s330 + $0x88] sm:$0xff]
        %v349 = vld [vmem:[%s330 + $0x90] sm:$0xff]
        %v350 = vld [vmem:[%s330 + $0x98] sm:$0xff]
        %v351 = vld [vmem:[%s330 + $0xa0] sm:$0xff]
        %v352 = vld [vmem:[%s330 + $0xa8] sm:$0xff]
        %v353 = vld [vmem:[%s330 + $0xb0] sm:$0xff]
        %v354 = vld [vmem:[%s330 + $0xb8] sm:$0xff]
        %v355 = vld [vmem:[%s330 + $0xc0] sm:$0xff]
        %v356 = vld [vmem:[%s330 + $0xc8] sm:$0xff]
        %v357 = vld [vmem:[%s330 + $0xd0] sm:$0xff]
        %v358 = vld [vmem:[%s330 + $0xd8] sm:$0xff]
        %v359 = vld [vmem:[%s330 + $0xe0] sm:$0xff]
        %v360 = vld [vmem:[%s330 + $0xe8] sm:$0xff]
        %v361 = vld [vmem:[%s330 + $0xf0] sm:$0xff]
        %v362 = vld [vmem:[%s330 + $0xf8] sm:$0xff]
        %v363 = vld [vmem:[%s330 + $0x100] sm:$0xff]
        %v364 = vld [vmem:[%s330 + $0x108] sm:$0xff]
        %v365 = vld [vmem:[%s330 + $0x110] sm:$0xff]
        %v366 = vld [vmem:[%s330 + $0x118] sm:$0xff]
        %v367 = vld [vmem:[%s330 + $0x120] sm:$0xff]
        %v368 = vld [vmem:[%s330 + $0x128] sm:$0xff]
        %v369 = vld [vmem:[%s330 + $0x130] sm:$0xff]
        %v370 = vld [vmem:[%s330 + $0x138] sm:$0xff]
        %v371 = vld [vmem:[%s330 + $0x140] sm:$0xff]
        %v372 = vld [vmem:[%s330 + $0x148] sm:$0xff]
        %v373 = vld [vmem:[%s330 + $0x150] sm:$0xff]
        %v374 = vld [vmem:[%s330 + $0x158] sm:$0xff]
        %v375 = vld [vmem:[%s330 + $0x160] sm:$0xff]
        %v376 = vld [vmem:[%s330 + $0x168] sm:$0xff]
        %v377 = vld [vmem:[%s330 + $0x170] sm:$0xff]
        %v378 = vld [vmem:[%s330 + $0x178] sm:$0xff]
        %v379 = vld [vmem:[%s330 + $0x180] sm:$0xff]
        %v380 = vld [vmem:[%s330 + $0x188] sm:$0xff]
        %v381 = vld [vmem:[%s330 + $0x190] sm:$0xff]
        %v382 = vld [vmem:[%s330 + $0x198] sm:$0xff]
        %v383 = vld [vmem:[%s330 + $0x1a0] sm:$0xff]
        %v384 = vld [vmem:[%s330 + $0x1a8] sm:$0xff]
        %v385 = vld [vmem:[%s330 + $0x1b0] sm:$0xff]
        %v386 = vld [vmem:[%s330 + $0x1b8] sm:$0xff]
        %v387 = vld [vmem:[%s330 + $0x1c0] sm:$0xff]
        %v388 = vld [vmem:[%s330 + $0x1c8] sm:$0xff]
        %v389 = vld [vmem:[%s330 + $0x1d0] sm:$0xff]
        %v390 = vld [vmem:[%s330 + $0x1d8] sm:$0xff]
        %v391 = vld [vmem:[%s330 + $0x1e0] sm:$0xff]
        %v392 = vld [vmem:[%s330 + $0x1e8] sm:$0xff]
        %v393 = vld [vmem:[%s330 + $0x1f0] sm:$0xff]
        %v394 = vld [vmem:[%s330 + $0x1f8] sm:$0xff]
        %v395 = vld [vmem:[%s1] sm:$0xff]
        %v396 = vld [vmem:[%s1 + $0x8] sm:$0x1]
        %v397 = vld [vmem:[%s2] sm:$0x1]
        %vm462 = vcmask 1040384
        %v463 = vrot.slane %v331, 7
        %v464 = vrot.slane %v332, 7
        %v465 = vsel %vm462, %v463, %v464
        %v466 = vrot.slane %v333, 7
        %v467 = vrot.slane %v334, 7
        %v468 = vsel %vm462, %v466, %v467
        %v469 = vrot.slane %v335, 7
        %v470 = vrot.slane %v336, 7
        %v471 = vsel %vm462, %v469, %v470
        %v472 = vrot.slane %v337, 7
        %v473 = vrot.slane %v338, 7
        %v474 = vsel %vm462, %v472, %v473
        %v475 = vrot.slane %v339, 7
        %v476 = vrot.slane %v340, 7
        %v477 = vsel %vm462, %v475, %v476
        %v478 = vrot.slane %v341, 7
        %v479 = vrot.slane %v342, 7
        %v480 = vsel %vm462, %v478, %v479
        %v481 = vrot.slane %v343, 7
        %v482 = vrot.slane %v344, 7
        %v483 = vsel %vm462, %v481, %v482
        %v484 = vrot.slane %v345, 7
        %v485 = vrot.slane %v346, 7
        %v486 = vsel %vm462, %v484, %v485
        %v487 = vrot.slane %v347, 7
        %v488 = vrot.slane %v348, 7
        %v489 = vsel %vm462, %v487, %v488
        %v490 = vrot.slane %v349, 7
        %v491 = vrot.slane %v350, 7
        %v492 = vsel %vm462, %v490, %v491
        %v493 = vrot.slane %v351, 7
        %v494 = vrot.slane %v352, 7
        %v495 = vsel %vm462, %v493, %v494
        %v496 = vrot.slane %v353, 7
        %v497 = vrot.slane %v354, 7
        %v498 = vsel %vm462, %v496, %v497
        %v499 = vrot.slane %v355, 7
        %v500 = vrot.slane %v356, 7
        %v501 = vsel %vm462, %v499, %v500
        %v502 = vrot.slane %v357, 7
        %v503 = vrot.slane %v358, 7
        %v504 = vsel %vm462, %v502, %v503
        %v505 = vrot.slane %v359, 7
        %v506 = vrot.slane %v360, 7
        %v507 = vsel %vm462, %v505, %v506
        %v508 = vrot.slane %v361, 7
        %v509 = vrot.slane %v362, 7
        %v510 = vsel %vm462, %v508, %v509
        %v511 = vrot.slane %v363, 7
        %v512 = vrot.slane %v364, 7
        %v513 = vsel %vm462, %v511, %v512
        %v514 = vrot.slane %v365, 7
        %v515 = vrot.slane %v366, 7
        %v516 = vsel %vm462, %v514, %v515
        %v517 = vrot.slane %v367, 7
        %v518 = vrot.slane %v368, 7
        %v519 = vsel %vm462, %v517, %v518
        %v520 = vrot.slane %v369, 7
        %v521 = vrot.slane %v370, 7
        %v522 = vsel %vm462, %v520, %v521
        %v523 = vrot.slane %v371, 7
        %v524 = vrot.slane %v372, 7
        %v525 = vsel %vm462, %v523, %v524
        %v526 = vrot.slane %v373, 7
        %v527 = vrot.slane %v374, 7
        %v528 = vsel %vm462, %v526, %v527
        %v529 = vrot.slane %v375, 7
        %v530 = vrot.slane %v376, 7
        %v531 = vsel %vm462, %v529, %v530
        %v532 = vrot.slane %v377, 7
        %v533 = vrot.slane %v378, 7
        %v534 = vsel %vm462, %v532, %v533
        %v535 = vrot.slane %v379, 7
        %v536 = vrot.slane %v380, 7
        %v537 = vsel %vm462, %v535, %v536
        %v538 = vrot.slane %v381, 7
        %v539 = vrot.slane %v382, 7
        %v540 = vsel %vm462, %v538, %v539
        %v541 = vrot.slane %v383, 7
        %v542 = vrot.slane %v384, 7
        %v543 = vsel %vm462, %v541, %v542
        %v544 = vrot.slane %v385, 7
        %v545 = vrot.slane %v386, 7
        %v546 = vsel %vm462, %v544, %v545
        %v547 = vrot.slane %v387, 7
        %v548 = vrot.slane %v388, 7
        %v549 = vsel %vm462, %v547, %v548
        %v550 = vrot.slane %v389, 7
        %v551 = vrot.slane %v390, 7
        %v552 = vsel %vm462, %v550, %v551
        %v553 = vrot.slane %v391, 7
        %v554 = vrot.slane %v392, 7
        %v555 = vsel %vm462, %v553, %v554
        %v556 = vrot.slane %v393, 7
        %v557 = vrot.slane %v394, 7
        %v558 = vsel %vm462, %v556, %v557
        %v623 = vsel %vm462, 0.0, %v463
        %v624 = vsel %vm462, 0.0, %v466
        %v625 = vsel %vm462, 0.0, %v469
        %v626 = vsel %vm462, 0.0, %v472
        %v627 = vsel %vm462, 0.0, %v475
        %v628 = vsel %vm462, 0.0, %v478
        %v629 = vsel %vm462, 0.0, %v481
        %v630 = vsel %vm462, 0.0, %v484
        %v631 = vsel %vm462, 0.0, %v487
        %v632 = vsel %vm462, 0.0, %v490
        %v633 = vsel %vm462, 0.0, %v493
        %v634 = vsel %vm462, 0.0, %v496
        %v635 = vsel %vm462, 0.0, %v499
        %v636 = vsel %vm462, 0.0, %v502
        %v637 = vsel %vm462, 0.0, %v505
        %v638 = vsel %vm462, 0.0, %v508
        %v639 = vsel %vm462, 0.0, %v511
        %v640 = vsel %vm462, 0.0, %v514
        %v641 = vsel %vm462, 0.0, %v517
        %v642 = vsel %vm462, 0.0, %v520
        %v643 = vsel %vm462, 0.0, %v523
        %v644 = vsel %vm462, 0.0, %v526
        %v645 = vsel %vm462, 0.0, %v529
        %v646 = vsel %vm462, 0.0, %v532
        %v647 = vsel %vm462, 0.0, %v535
        %v648 = vsel %vm462, 0.0, %v538
        %v649 = vsel %vm462, 0.0, %v541
        %v650 = vsel %vm462, 0.0, %v544
        %v651 = vsel %vm462, 0.0, %v547
        %v652 = vsel %vm462, 0.0, %v550
        %v653 = vsel %vm462, 0.0, %v553
        %v654 = vsel %vm462, 0.0, %v556
        %v655 = vsel %vm462, %v464, 0.0
        %v656 = vsel %vm462, %v467, 0.0
        %v657 = vsel %vm462, %v470, 0.0
        %v658 = vsel %vm462, %v473, 0.0
        %v659 = vsel %vm462, %v476, 0.0
        %v660 = vsel %vm462, %v479, 0.0
        %v661 = vsel %vm462, %v482, 0.0
        %v662 = vsel %vm462, %v485, 0.0
        %v663 = vsel %vm462, %v488, 0.0
        %v664 = vsel %vm462, %v491, 0.0
        %v665 = vsel %vm462, %v494, 0.0
        %v666 = vsel %vm462, %v497, 0.0
        %v667 = vsel %vm462, %v500, 0.0
        %v668 = vsel %vm462, %v503, 0.0
        %v669 = vsel %vm462, %v506, 0.0
        %v670 = vsel %vm462, %v509, 0.0
        %v671 = vsel %vm462, %v512, 0.0
        %v672 = vsel %vm462, %v515, 0.0
        %v673 = vsel %vm462, %v518, 0.0
        %v674 = vsel %vm462, %v521, 0.0
        %v675 = vsel %vm462, %v524, 0.0
        %v676 = vsel %vm462, %v527, 0.0
        %v677 = vsel %vm462, %v530, 0.0
        %v678 = vsel %vm462, %v533, 0.0
        %v679 = vsel %vm462, %v536, 0.0
        %v680 = vsel %vm462, %v539, 0.0
        %v681 = vsel %vm462, %v542, 0.0
        %v682 = vsel %vm462, %v545, 0.0
        %v683 = vsel %vm462, %v548, 0.0
        %v684 = vsel %vm462, %v551, 0.0
        %v685 = vsel %vm462, %v554, 0.0
        %v686 = vsel %vm462, %v557, 0.0
        %688 = vset.pattern.permute.xlu0 0
        %689 = vperm.xlu0 %688, 0.0
        %v690 = vpop.permute.xlu0 %689
        %693 = vset.pattern.permute.xlu0 0
        %694 = vperm.xlu0 %693, %v623
        %v695 = vpop.permute.xlu0 %694
        %697 = vset.pattern.permute.xlu0 0
        %698 = vperm.xlu0 %697, %v465
        %v699 = vpop.permute.xlu0 %698
        %702 = vset.pattern.permute.xlu0 0
        %703 = vperm.xlu0 %702, %v624
        %v704 = vpop.permute.xlu0 %703
        %706 = vset.pattern.permute.xlu0 0
        %707 = vperm.xlu0 %706, %v468
        %v708 = vpop.permute.xlu0 %707
        %711 = vset.pattern.permute.xlu0 0
        %712 = vperm.xlu0 %711, %v625
        %v713 = vpop.permute.xlu0 %712
        %715 = vset.pattern.permute.xlu0 0
        %716 = vperm.xlu0 %715, %v471
        %v717 = vpop.permute.xlu0 %716
        %720 = vset.pattern.permute.xlu0 0
        %721 = vperm.xlu0 %720, %v626
        %v722 = vpop.permute.xlu0 %721
        %724 = vset.pattern.permute.xlu0 0
        %725 = vperm.xlu0 %724, %v474
        %v726 = vpop.permute.xlu0 %725
        %729 = vset.pattern.permute.xlu0 0
        %730 = vperm.xlu0 %729, %v627
        %v731 = vpop.permute.xlu0 %730
        %733 = vset.pattern.permute.xlu0 0
        %734 = vperm.xlu0 %733, %v477
        %v735 = vpop.permute.xlu0 %734
        %738 = vset.pattern.permute.xlu0 0
        %739 = vperm.xlu0 %738, %v628
        %v740 = vpop.permute.xlu0 %739
        %742 = vset.pattern.permute.xlu0 0
        %743 = vperm.xlu0 %742, %v480
        %v744 = vpop.permute.xlu0 %743
        %747 = vset.pattern.permute.xlu0 0
        %748 = vperm.xlu0 %747, %v629
        %v749 = vpop.permute.xlu0 %748
        %751 = vset.pattern.permute.xlu0 0
        %752 = vperm.xlu0 %751, %v483
        %v753 = vpop.permute.xlu0 %752
        %756 = vset.pattern.permute.xlu0 0
        %757 = vperm.xlu0 %756, %v630
        %v758 = vpop.permute.xlu0 %757
        %760 = vset.pattern.permute.xlu0 0
        %761 = vperm.xlu0 %760, %v486
        %v762 = vpop.permute.xlu0 %761
        %765 = vset.pattern.permute.xlu0 0
        %766 = vperm.xlu0 %765, %v631
        %v767 = vpop.permute.xlu0 %766
        %769 = vset.pattern.permute.xlu0 0
        %770 = vperm.xlu0 %769, %v489
        %v771 = vpop.permute.xlu0 %770
        %774 = vset.pattern.permute.xlu0 0
        %775 = vperm.xlu0 %774, %v632
        %v776 = vpop.permute.xlu0 %775
        %778 = vset.pattern.permute.xlu0 0
        %779 = vperm.xlu0 %778, %v492
        %v780 = vpop.permute.xlu0 %779
        %783 = vset.pattern.permute.xlu0 0
        %784 = vperm.xlu0 %783, %v633
        %v785 = vpop.permute.xlu0 %784
        %787 = vset.pattern.permute.xlu0 0
        %788 = vperm.xlu0 %787, %v495
        %v789 = vpop.permute.xlu0 %788
        %792 = vset.pattern.permute.xlu0 0
        %793 = vperm.xlu0 %792, %v634
        %v794 = vpop.permute.xlu0 %793
        %796 = vset.pattern.permute.xlu0 0
        %797 = vperm.xlu0 %796, %v498
        %v798 = vpop.permute.xlu0 %797
        %801 = vset.pattern.permute.xlu0 0
        %802 = vperm.xlu0 %801, %v635
        %v803 = vpop.permute.xlu0 %802
        %805 = vset.pattern.permute.xlu0 0
        %806 = vperm.xlu0 %805, %v501
        %v807 = vpop.permute.xlu0 %806
        %810 = vset.pattern.permute.xlu0 0
        %811 = vperm.xlu0 %810, %v636
        %v812 = vpop.permute.xlu0 %811
        %814 = vset.pattern.permute.xlu0 0
        %815 = vperm.xlu0 %814, %v504
        %v816 = vpop.permute.xlu0 %815
        %819 = vset.pattern.permute.xlu0 0
        %820 = vperm.xlu0 %819, %v637
        %v821 = vpop.permute.xlu0 %820
        %823 = vset.pattern.permute.xlu0 0
        %824 = vperm.xlu0 %823, %v507
        %v825 = vpop.permute.xlu0 %824
        %828 = vset.pattern.permute.xlu0 0
        %829 = vperm.xlu0 %828, %v639
        %v830 = vpop.permute.xlu0 %829
        %832 = vset.pattern.permute.xlu0 0
        %833 = vperm.xlu0 %832, %v513
        %v834 = vpop.permute.xlu0 %833
        %837 = vset.pattern.permute.xlu0 0
        %838 = vperm.xlu0 %837, %v640
        %v839 = vpop.permute.xlu0 %838
        %841 = vset.pattern.permute.xlu0 0
        %842 = vperm.xlu0 %841, %v516
        %v843 = vpop.permute.xlu0 %842
        %846 = vset.pattern.permute.xlu0 0
        %847 = vperm.xlu0 %846, %v641
        %v848 = vpop.permute.xlu0 %847
        %850 = vset.pattern.permute.xlu0 0
        %851 = vperm.xlu0 %850, %v519
        %v852 = vpop.permute.xlu0 %851
        %855 = vset.pattern.permute.xlu0 0
        %856 = vperm.xlu0 %855, %v642
        %v857 = vpop.permute.xlu0 %856
        %859 = vset.pattern.permute.xlu0 0
        %860 = vperm.xlu0 %859, %v522
        %v861 = vpop.permute.xlu0 %860
        %864 = vset.pattern.permute.xlu0 0
        %865 = vperm.xlu0 %864, %v643
        %v866 = vpop.permute.xlu0 %865
        %868 = vset.pattern.permute.xlu0 0
        %869 = vperm.xlu0 %868, %v525
        %v870 = vpop.permute.xlu0 %869
        %873 = vset.pattern.permute.xlu0 0
        %874 = vperm.xlu0 %873, %v644
        %v875 = vpop.permute.xlu0 %874
        %877 = vset.pattern.permute.xlu0 0
        %878 = vperm.xlu0 %877, %v528
        %v879 = vpop.permute.xlu0 %878
        %882 = vset.pattern.permute.xlu0 0
        %883 = vperm.xlu0 %882, %v645
        %v884 = vpop.permute.xlu0 %883
        %886 = vset.pattern.permute.xlu0 0
        %887 = vperm.xlu0 %886, %v531
        %v888 = vpop.permute.xlu0 %887
        %891 = vset.pattern.permute.xlu0 0
        %892 = vperm.xlu0 %891, %v646
        %v893 = vpop.permute.xlu0 %892
        %895 = vset.pattern.permute.xlu0 0
        %896 = vperm.xlu0 %895, %v534
        %v897 = vpop.permute.xlu0 %896
        %900 = vset.pattern.permute.xlu0 0
        %901 = vperm.xlu0 %900, %v647
        %v902 = vpop.permute.xlu0 %901
        %904 = vset.pattern.permute.xlu0 0
        %905 = vperm.xlu0 %904, %v537
        %v906 = vpop.permute.xlu0 %905
        %909 = vset.pattern.permute.xlu0 0
        %910 = vperm.xlu0 %909, %v648
        %v911 = vpop.permute.xlu0 %910
        %913 = vset.pattern.permute.xlu0 0
        %914 = vperm.xlu0 %913, %v540
        %v915 = vpop.permute.xlu0 %914
        %918 = vset.pattern.permute.xlu0 0
        %919 = vperm.xlu0 %918, %v649
        %v920 = vpop.permute.xlu0 %919
        %922 = vset.pattern.permute.xlu0 0
        %923 = vperm.xlu0 %922, %v543
        %v924 = vpop.permute.xlu0 %923
        %927 = vset.pattern.permute.xlu0 0
        %928 = vperm.xlu0 %927, %v650
        %v929 = vpop.permute.xlu0 %928
        %931 = vset.pattern.permute.xlu0 0
        %932 = vperm.xlu0 %931, %v546
        %v933 = vpop.permute.xlu0 %932
        %936 = vset.pattern.permute.xlu0 0
        %937 = vperm.xlu0 %936, %v651
        %v938 = vpop.permute.xlu0 %937
        %940 = vset.pattern.permute.xlu0 0
        %941 = vperm.xlu0 %940, %v549
        %v942 = vpop.permute.xlu0 %941
        %945 = vset.pattern.permute.xlu0 0
        %946 = vperm.xlu0 %945, %v652
        %v947 = vpop.permute.xlu0 %946
        %949 = vset.pattern.permute.xlu0 0
        %950 = vperm.xlu0 %949, %v552
        %v951 = vpop.permute.xlu0 %950
        %954 = vset.pattern.permute.xlu0 0
        %955 = vperm.xlu0 %954, %v653
        %v956 = vpop.permute.xlu0 %955
        %958 = vset.pattern.permute.xlu0 0
        %959 = vperm.xlu0 %958, %v555
        %v960 = vpop.permute.xlu0 %959
        %v962 = vlaneseq
        %v963 = vshrl.u32 %v962, 7
        %v964 = vsub.s32 0, %v963
        %v965 = vrot.slane %v395, %v964
        %v966 = vmul.f32 %v690, %v965
        %v967 = vmul.f32 %v695, %v965
        %v968 = vmul.f32 %v699, %v965
        %v969 = vmul.f32 %v704, %v965
        %v970 = vmul.f32 %v708, %v965
        %v971 = vmul.f32 %v713, %v965
        %v972 = vmul.f32 %v717, %v965
        %v973 = vmul.f32 %v722, %v965
        %v974 = vmul.f32 %v726, %v965
        %v975 = vmul.f32 %v731, %v965
        %v976 = vmul.f32 %v735, %v965
        %v977 = vmul.f32 %v740, %v965
        %v978 = vmul.f32 %v744, %v965
        %v979 = vmul.f32 %v749, %v965
        %v980 = vmul.f32 %v753, %v965
        %v981 = vmul.f32 %v758, %v965
        %v982 = vmul.f32 %v762, %v965
        %v983 = vmul.f32 %v767, %v965
        %v984 = vmul.f32 %v771, %v965
        %v985 = vmul.f32 %v776, %v965
        %v986 = vmul.f32 %v780, %v965
        %v987 = vmul.f32 %v785, %v965
        %v988 = vmul.f32 %v789, %v965
        %v989 = vmul.f32 %v794, %v965
        %v990 = vmul.f32 %v798, %v965
        %v991 = vmul.f32 %v803, %v965
        %v992 = vmul.f32 %v807, %v965
        %v993 = vmul.f32 %v812, %v965
        %v994 = vmul.f32 %v816, %v965
        %v995 = vmul.f32 %v821, %v965
        %v996 = vmul.f32 %v825, %v965
        %v997 = vmul.f32 %v830, %v965
        %v998 = vmul.f32 %v834, %v965
        %v999 = vmul.f32 %v839, %v965
        %v1000 = vmul.f32 %v843, %v965
        %v1001 = vmul.f32 %v848, %v965
        %v1002 = vmul.f32 %v852, %v965
        %v1003 = vmul.f32 %v857, %v965
        %v1004 = vmul.f32 %v861, %v965
        %v1005 = vmul.f32 %v866, %v965
        %v1006 = vmul.f32 %v870, %v965
        %v1007 = vmul.f32 %v875, %v965
        %v1008 = vmul.f32 %v879, %v965
        %v1009 = vmul.f32 %v884, %v965
        %v1010 = vmul.f32 %v888, %v965
        %v1011 = vmul.f32 %v893, %v965
        %v1012 = vmul.f32 %v897, %v965
        %v1013 = vmul.f32 %v902, %v965
        %v1014 = vmul.f32 %v906, %v965
        %v1015 = vmul.f32 %v911, %v965
        %v1016 = vmul.f32 %v915, %v965
        %v1017 = vmul.f32 %v920, %v965
        %v1018 = vmul.f32 %v924, %v965
        %v1019 = vmul.f32 %v929, %v965
        %v1020 = vmul.f32 %v933, %v965
        %v1021 = vmul.f32 %v938, %v965
        %v1022 = vmul.f32 %v942, %v965
        %v1023 = vmul.f32 %v947, %v965
        %v1024 = vmul.f32 %v951, %v965
        %v1025 = vmul.f32 %v956, %v965
        %v1026 = vmul.f32 %v960, %v965
        %v1027 = vadd.f32 %v966, 0.0
        %v1028 = vadd.f32 %v967, 0.0
        %v1029 = vadd.f32 %v968, 0.0
        %v1030 = vadd.f32 %v969, 0.0
        %v1031 = vadd.f32 %v970, 0.0
        %v1032 = vadd.f32 %v971, 0.0
        %v1033 = vadd.f32 %v972, 0.0
        %v1034 = vadd.f32 %v973, 0.0
        %v1035 = vadd.f32 %v974, 0.0
        %v1036 = vadd.f32 %v975, 0.0
        %v1037 = vadd.f32 %v976, 0.0
        %v1038 = vadd.f32 %v977, 0.0
        %v1039 = vadd.f32 %v978, 0.0
        %v1040 = vadd.f32 %v979, 0.0
        %v1041 = vadd.f32 %v980, 0.0
        %v1042 = vadd.f32 %v981, 0.0
        %v1043 = vadd.f32 %v982, 0.0
        %v1044 = vadd.f32 %v983, 0.0
        %v1045 = vadd.f32 %v984, 0.0
        %v1046 = vadd.f32 %v985, 0.0
        %v1047 = vadd.f32 %v986, 0.0
        %v1048 = vadd.f32 %v987, 0.0
        %v1049 = vadd.f32 %v988, 0.0
        %v1050 = vadd.f32 %v989, 0.0
        %v1051 = vadd.f32 %v990, 0.0
        %v1052 = vadd.f32 %v991, 0.0
        %v1053 = vadd.f32 %v992, 0.0
        %v1054 = vadd.f32 %v993, 0.0
        %v1055 = vadd.f32 %v994, 0.0
        %v1056 = vadd.f32 %v995, 0.0
        %v1057 = vadd.f32 %v996, 0.0
        %v1058 = vadd.f32 %v997, 0.0
        %v1059 = vadd.f32 %v998, 0.0
        %v1060 = vadd.f32 %v999, 0.0
        %v1061 = vadd.f32 %v1000, 0.0
        %v1062 = vadd.f32 %v1001, 0.0
        %v1063 = vadd.f32 %v1002, 0.0
        %v1064 = vadd.f32 %v1003, 0.0
        %v1065 = vadd.f32 %v1004, 0.0
        %v1066 = vadd.f32 %v1005, 0.0
        %v1067 = vadd.f32 %v1006, 0.0
        %v1068 = vadd.f32 %v1007, 0.0
        %v1069 = vadd.f32 %v1008, 0.0
        %v1070 = vadd.f32 %v1009, 0.0
        %v1071 = vadd.f32 %v1010, 0.0
        %v1072 = vadd.f32 %v1011, 0.0
        %v1073 = vadd.f32 %v1012, 0.0
        %v1074 = vadd.f32 %v1013, 0.0
        %v1075 = vadd.f32 %v1014, 0.0
        %v1076 = vadd.f32 %v1015, 0.0
        %v1077 = vadd.f32 %v1016, 0.0
        %v1078 = vadd.f32 %v1017, 0.0
        %v1079 = vadd.f32 %v1018, 0.0
        %v1080 = vadd.f32 %v1019, 0.0
        %v1081 = vadd.f32 %v1020, 0.0
        %v1082 = vadd.f32 %v1021, 0.0
        %v1083 = vadd.f32 %v1022, 0.0
        %v1084 = vadd.f32 %v1023, 0.0
        %v1085 = vadd.f32 %v1024, 0.0
        %v1086 = vadd.f32 %v1025, 0.0
        %v1087 = vadd.f32 %v1026, 0.0
        %1089 = vset.pattern.permute.xlu0 0
        %1090 = vperm.xlu0 %1089, %v655
        %v1091 = vpop.permute.xlu0 %1090
        %1094 = vset.pattern.permute.xlu0 0
        %1095 = vperm.xlu0 %1094, %v656
        %v1096 = vpop.permute.xlu0 %1095
        %1099 = vset.pattern.permute.xlu0 0
        %1100 = vperm.xlu0 %1099, %v657
        %v1101 = vpop.permute.xlu0 %1100
        %1104 = vset.pattern.permute.xlu0 0
        %1105 = vperm.xlu0 %1104, %v658
        %v1106 = vpop.permute.xlu0 %1105
        %1109 = vset.pattern.permute.xlu0 0
        %1110 = vperm.xlu0 %1109, %v659
        %v1111 = vpop.permute.xlu0 %1110
        %1114 = vset.pattern.permute.xlu0 0
        %1115 = vperm.xlu0 %1114, %v660
        %v1116 = vpop.permute.xlu0 %1115
        %1119 = vset.pattern.permute.xlu0 0
        %1120 = vperm.xlu0 %1119, %v661
        %v1121 = vpop.permute.xlu0 %1120
        %1124 = vset.pattern.permute.xlu0 0
        %1125 = vperm.xlu0 %1124, %v662
        %v1126 = vpop.permute.xlu0 %1125
        %1129 = vset.pattern.permute.xlu0 0
        %1130 = vperm.xlu0 %1129, %v663
        %v1131 = vpop.permute.xlu0 %1130
        %1134 = vset.pattern.permute.xlu0 0
        %1135 = vperm.xlu0 %1134, %v664
        %v1136 = vpop.permute.xlu0 %1135
        %1139 = vset.pattern.permute.xlu0 0
        %1140 = vperm.xlu0 %1139, %v665
        %v1141 = vpop.permute.xlu0 %1140
        %1144 = vset.pattern.permute.xlu0 0
        %1145 = vperm.xlu0 %1144, %v666
        %v1146 = vpop.permute.xlu0 %1145
        %1149 = vset.pattern.permute.xlu0 0
        %1150 = vperm.xlu0 %1149, %v667
        %v1151 = vpop.permute.xlu0 %1150
        %1154 = vset.pattern.permute.xlu0 0
        %1155 = vperm.xlu0 %1154, %v668
        %v1156 = vpop.permute.xlu0 %1155
        %1159 = vset.pattern.permute.xlu0 0
        %1160 = vperm.xlu0 %1159, %v669
        %v1161 = vpop.permute.xlu0 %1160
        %1164 = vset.pattern.permute.xlu0 0
        %1165 = vperm.xlu0 %1164, %v671
        %v1166 = vpop.permute.xlu0 %1165
        %1169 = vset.pattern.permute.xlu0 0
        %1170 = vperm.xlu0 %1169, %v672
        %v1171 = vpop.permute.xlu0 %1170
        %1174 = vset.pattern.permute.xlu0 0
        %1175 = vperm.xlu0 %1174, %v673
        %v1176 = vpop.permute.xlu0 %1175
        %1179 = vset.pattern.permute.xlu0 0
        %1180 = vperm.xlu0 %1179, %v674
        %v1181 = vpop.permute.xlu0 %1180
        %1184 = vset.pattern.permute.xlu0 0
        %1185 = vperm.xlu0 %1184, %v675
        %v1186 = vpop.permute.xlu0 %1185
        %1189 = vset.pattern.permute.xlu0 0
        %1190 = vperm.xlu0 %1189, %v676
        %v1191 = vpop.permute.xlu0 %1190
        %1194 = vset.pattern.permute.xlu0 0
        %1195 = vperm.xlu0 %1194, %v677
        %v1196 = vpop.permute.xlu0 %1195
        %1199 = vset.pattern.permute.xlu0 0
        %1200 = vperm.xlu0 %1199, %v678
        %v1201 = vpop.permute.xlu0 %1200
        %1204 = vset.pattern.permute.xlu0 0
        %1205 = vperm.xlu0 %1204, %v679
        %v1206 = vpop.permute.xlu0 %1205
        %1209 = vset.pattern.permute.xlu0 0
        %1210 = vperm.xlu0 %1209, %v680
        %v1211 = vpop.permute.xlu0 %1210
        %1214 = vset.pattern.permute.xlu0 0
        %1215 = vperm.xlu0 %1214, %v681
        %v1216 = vpop.permute.xlu0 %1215
        %1219 = vset.pattern.permute.xlu0 0
        %1220 = vperm.xlu0 %1219, %v682
        %v1221 = vpop.permute.xlu0 %1220
        %1224 = vset.pattern.permute.xlu0 0
        %1225 = vperm.xlu0 %1224, %v683
        %v1226 = vpop.permute.xlu0 %1225
        %1229 = vset.pattern.permute.xlu0 0
        %1230 = vperm.xlu0 %1229, %v684
        %v1231 = vpop.permute.xlu0 %1230
        %1234 = vset.pattern.permute.xlu0 0
        %1235 = vperm.xlu0 %1234, %v685
        %v1236 = vpop.permute.xlu0 %1235
        %v1238 = vlaneseq
        %v1239 = vshrl.u32 %v1238, 7
        %v1240 = vsub.s32 1, %v1239
        %v1241 = vrot.slane %v395, %v1240
        %v1242 = vmul.f32 %v690, %v1241
        %v1243 = vmul.f32 %v695, %v1241
        %v1244 = vmul.f32 %v699, %v1241
        %v1245 = vmul.f32 %v1091, %v1241
        %v1246 = vmul.f32 %v704, %v1241
        %v1247 = vmul.f32 %v708, %v1241
        %v1248 = vmul.f32 %v1096, %v1241
        %v1249 = vmul.f32 %v713, %v1241
        %v1250 = vmul.f32 %v717, %v1241
        %v1251 = vmul.f32 %v1101, %v1241
        %v1252 = vmul.f32 %v722, %v1241
        %v1253 = vmul.f32 %v726, %v1241
        %v1254 = vmul.f32 %v1106, %v1241
        %v1255 = vmul.f32 %v731, %v1241
        %v1256 = vmul.f32 %v735, %v1241
        %v1257 = vmul.f32 %v1111, %v1241
        %v1258 = vmul.f32 %v740, %v1241
        %v1259 = vmul.f32 %v744, %v1241
        %v1260 = vmul.f32 %v1116, %v1241
        %v1261 = vmul.f32 %v749, %v1241
        %v1262 = vmul.f32 %v753, %v1241
        %v1263 = vmul.f32 %v1121, %v1241
        %v1264 = vmul.f32 %v758, %v1241
        %v1265 = vmul.f32 %v762, %v1241
        %v1266 = vmul.f32 %v1126, %v1241
        %v1267 = vmul.f32 %v767, %v1241
        %v1268 = vmul.f32 %v771, %v1241
        %v1269 = vmul.f32 %v1131, %v1241
        %v1270 = vmul.f32 %v776, %v1241
        %v1271 = vmul.f32 %v780, %v1241
        %v1272 = vmul.f32 %v1136, %v1241
        %v1273 = vmul.f32 %v785, %v1241
        %v1274 = vmul.f32 %v789, %v1241
        %v1275 = vmul.f32 %v1141, %v1241
        %v1276 = vmul.f32 %v794, %v1241
        %v1277 = vmul.f32 %v798, %v1241
        %v1278 = vmul.f32 %v1146, %v1241
        %v1279 = vmul.f32 %v803, %v1241
        %v1280 = vmul.f32 %v807, %v1241
        %v1281 = vmul.f32 %v1151, %v1241
        %v1282 = vmul.f32 %v812, %v1241
        %v1283 = vmul.f32 %v816, %v1241
        %v1284 = vmul.f32 %v1156, %v1241
        %v1285 = vmul.f32 %v821, %v1241
        %v1286 = vmul.f32 %v825, %v1241
        %v1287 = vmul.f32 %v1161, %v1241
        %v1288 = vmul.f32 %v830, %v1241
        %v1289 = vmul.f32 %v834, %v1241
        %v1290 = vmul.f32 %v1166, %v1241
        %v1291 = vmul.f32 %v839, %v1241
        %v1292 = vmul.f32 %v843, %v1241
        %v1293 = vmul.f32 %v1171, %v1241
        %v1294 = vmul.f32 %v848, %v1241
        %v1295 = vmul.f32 %v852, %v1241
        %v1296 = vmul.f32 %v1176, %v1241
        %v1297 = vmul.f32 %v857, %v1241
        %v1298 = vmul.f32 %v861, %v1241
        %v1299 = vmul.f32 %v1181, %v1241
        %v1300 = vmul.f32 %v866, %v1241
        %v1301 = vmul.f32 %v870, %v1241
        %v1302 = vmul.f32 %v1186, %v1241
        %v1303 = vmul.f32 %v875, %v1241
        %v1304 = vmul.f32 %v879, %v1241
        %v1305 = vmul.f32 %v1191, %v1241
        %v1306 = vmul.f32 %v884, %v1241
        %v1307 = vmul.f32 %v888, %v1241
        %v1308 = vmul.f32 %v1196, %v1241
        %v1309 = vmul.f32 %v893, %v1241
        %v1310 = vmul.f32 %v897, %v1241
        %v1311 = vmul.f32 %v1201, %v1241
        %v1312 = vmul.f32 %v902, %v1241
        %v1313 = vmul.f32 %v906, %v1241
        %v1314 = vmul.f32 %v1206, %v1241
        %v1315 = vmul.f32 %v911, %v1241
        %v1316 = vmul.f32 %v915, %v1241
        %v1317 = vmul.f32 %v1211, %v1241
        %v1318 = vmul.f32 %v920, %v1241
        %v1319 = vmul.f32 %v924, %v1241
        %v1320 = vmul.f32 %v1216, %v1241
        %v1321 = vmul.f32 %v929, %v1241
        %v1322 = vmul.f32 %v933, %v1241
        %v1323 = vmul.f32 %v1221, %v1241
        %v1324 = vmul.f32 %v938, %v1241
        %v1325 = vmul.f32 %v942, %v1241
        %v1326 = vmul.f32 %v1226, %v1241
        %v1327 = vmul.f32 %v947, %v1241
        %v1328 = vmul.f32 %v951, %v1241
        %v1329 = vmul.f32 %v1231, %v1241
        %v1330 = vmul.f32 %v956, %v1241
        %v1331 = vmul.f32 %v960, %v1241
        %v1332 = vmul.f32 %v1236, %v1241
        %vm1424 = vcmask 1046528
        %v1425 = vrot.slane %v1242, 1
        %v1426 = vsel %vm1424, %v1425, %v1425
        %v1427 = vrot.slane %v1243, 1
        %v1428 = vrot.slane %v1244, 1
        %v1429 = vsel %vm1424, %v1427, %v1428
        %v1430 = vrot.slane %v1245, 1
        %v1431 = vsel %vm1424, %v1428, %v1430
        %v1432 = vrot.slane %v1246, 1
        %v1433 = vrot.slane %v1247, 1
        %v1434 = vsel %vm1424, %v1432, %v1433
        %v1435 = vrot.slane %v1248, 1
        %v1436 = vsel %vm1424, %v1433, %v1435
        %v1437 = vrot.slane %v1249, 1
        %v1438 = vrot.slane %v1250, 1
        %v1439 = vsel %vm1424, %v1437, %v1438
        %v1440 = vrot.slane %v1251, 1
        %v1441 = vsel %vm1424, %v1438, %v1440
        %v1442 = vrot.slane %v1252, 1
        %v1443 = vrot.slane %v1253, 1
        %v1444 = vsel %vm1424, %v1442, %v1443
        %v1445 = vrot.slane %v1254, 1
        %v1446 = vsel %vm1424, %v1443, %v1445
        %v1447 = vrot.slane %v1255, 1
        %v1448 = vrot.slane %v1256, 1
        %v1449 = vsel %vm1424, %v1447, %v1448
        %v1450 = vrot.slane %v1257, 1
        %v1451 = vsel %vm1424, %v1448, %v1450
        %v1452 = vrot.slane %v1258, 1
        %v1453 = vrot.slane %v1259, 1
        %v1454 = vsel %vm1424, %v1452, %v1453
        %v1455 = vrot.slane %v1260, 1
        %v1456 = vsel %vm1424, %v1453, %v1455
        %v1457 = vrot.slane %v1261, 1
        %v1458 = vrot.slane %v1262, 1
        %v1459 = vsel %vm1424, %v1457, %v1458
        %v1460 = vrot.slane %v1263, 1
        %v1461 = vsel %vm1424, %v1458, %v1460
        %v1462 = vrot.slane %v1264, 1
        %v1463 = vrot.slane %v1265, 1
        %v1464 = vsel %vm1424, %v1462, %v1463
        %v1465 = vrot.slane %v1266, 1
        %v1466 = vsel %vm1424, %v1463, %v1465
        %v1467 = vrot.slane %v1267, 1
        %v1468 = vrot.slane %v1268, 1
        %v1469 = vsel %vm1424, %v1467, %v1468
        %v1470 = vrot.slane %v1269, 1
        %v1471 = vsel %vm1424, %v1468, %v1470
        %v1472 = vrot.slane %v1270, 1
        %v1473 = vrot.slane %v1271, 1
        %v1474 = vsel %vm1424, %v1472, %v1473
        %v1475 = vrot.slane %v1272, 1
        %v1476 = vsel %vm1424, %v1473, %v1475
        %v1477 = vrot.slane %v1273, 1
        %v1478 = vrot.slane %v1274, 1
        %v1479 = vsel %vm1424, %v1477, %v1478
        %v1480 = vrot.slane %v1275, 1
        %v1481 = vsel %vm1424, %v1478, %v1480
        %v1482 = vrot.slane %v1276, 1
        %v1483 = vrot.slane %v1277, 1
        %v1484 = vsel %vm1424, %v1482, %v1483
        %v1485 = vrot.slane %v1278, 1
        %v1486 = vsel %vm1424, %v1483, %v1485
        %v1487 = vrot.slane %v1279, 1
        %v1488 = vrot.slane %v1280, 1
        %v1489 = vsel %vm1424, %v1487, %v1488
        %v1490 = vrot.slane %v1281, 1
        %v1491 = vsel %vm1424, %v1488, %v1490
        %v1492 = vrot.slane %v1282, 1
        %v1493 = vrot.slane %v1283, 1
        %v1494 = vsel %vm1424, %v1492, %v1493
        %v1495 = vrot.slane %v1284, 1
        %v1496 = vsel %vm1424, %v1493, %v1495
        %v1497 = vrot.slane %v1285, 1
        %v1498 = vrot.slane %v1286, 1
        %v1499 = vsel %vm1424, %v1497, %v1498
        %v1500 = vrot.slane %v1287, 1
        %v1501 = vsel %vm1424, %v1498, %v1500
        %v1502 = vrot.slane %v1288, 1
        %v1503 = vrot.slane %v1289, 1
        %v1504 = vsel %vm1424, %v1502, %v1503
        %v1505 = vrot.slane %v1290, 1
        %v1506 = vsel %vm1424, %v1503, %v1505
        %v1507 = vrot.slane %v1291, 1
        %v1508 = vrot.slane %v1292, 1
        %v1509 = vsel %vm1424, %v1507, %v1508
        %v1510 = vrot.slane %v1293, 1
        %v1511 = vsel %vm1424, %v1508, %v1510
        %v1512 = vrot.slane %v1294, 1
        %v1513 = vrot.slane %v1295, 1
        %v1514 = vsel %vm1424, %v1512, %v1513
        %v1515 = vrot.slane %v1296, 1
        %v1516 = vsel %vm1424, %v1513, %v1515
        %v1517 = vrot.slane %v1297, 1
        %v1518 = vrot.slane %v1298, 1
        %v1519 = vsel %vm1424, %v1517, %v1518
        %v1520 = vrot.slane %v1299, 1
        %v1521 = vsel %vm1424, %v1518, %v1520
        %v1522 = vrot.slane %v1300, 1
        %v1523 = vrot.slane %v1301, 1
        %v1524 = vsel %vm1424, %v1522, %v1523
        %v1525 = vrot.slane %v1302, 1
        %v1526 = vsel %vm1424, %v1523, %v1525
        %v1527 = vrot.slane %v1303, 1
        %v1528 = vrot.slane %v1304, 1
        %v1529 = vsel %vm1424, %v1527, %v1528
        %v1530 = vrot.slane %v1305, 1
        %v1531 = vsel %vm1424, %v1528, %v1530
        %v1532 = vrot.slane %v1306, 1
        %v1533 = vrot.slane %v1307, 1
        %v1534 = vsel %vm1424, %v1532, %v1533
        %v1535 = vrot.slane %v1308, 1
        %v1536 = vsel %vm1424, %v1533, %v1535
        %v1537 = vrot.slane %v1309, 1
        %v1538 = vrot.slane %v1310, 1
        %v1539 = vsel %vm1424, %v1537, %v1538
        %v1540 = vrot.slane %v1311, 1
        %v1541 = vsel %vm1424, %v1538, %v1540
        %v1542 = vrot.slane %v1312, 1
        %v1543 = vrot.slane %v1313, 1
        %v1544 = vsel %vm1424, %v1542, %v1543
        %v1545 = vrot.slane %v1314, 1
        %v1546 = vsel %vm1424, %v1543, %v1545
        %v1547 = vrot.slane %v1315, 1
        %v1548 = vrot.slane %v1316, 1
        %v1549 = vsel %vm1424, %v1547, %v1548
        %v1550 = vrot.slane %v1317, 1
        %v1551 = vsel %vm1424, %v1548, %v1550
        %v1552 = vrot.slane %v1318, 1
        %v1553 = vrot.slane %v1319, 1
        %v1554 = vsel %vm1424, %v1552, %v1553
        %v1555 = vrot.slane %v1320, 1
        %v1556 = vsel %vm1424, %v1553, %v1555
        %v1557 = vrot.slane %v1321, 1
        %v1558 = vrot.slane %v1322, 1
        %v1559 = vsel %vm1424, %v1557, %v1558
        %v1560 = vrot.slane %v1323, 1
        %v1561 = vsel %vm1424, %v1558, %v1560
        %v1562 = vrot.slane %v1324, 1
        %v1563 = vrot.slane %v1325, 1
        %v1564 = vsel %vm1424, %v1562, %v1563
        %v1565 = vrot.slane %v1326, 1
        %v1566 = vsel %vm1424, %v1563, %v1565
        %v1567 = vrot.slane %v1327, 1
        %v1568 = vrot.slane %v1328, 1
        %v1569 = vsel %vm1424, %v1567, %v1568
        %v1570 = vrot.slane %v1329, 1
        %v1571 = vsel %vm1424, %v1568, %v1570
        %v1572 = vrot.slane %v1330, 1
        %v1573 = vrot.slane %v1331, 1
        %v1574 = vsel %vm1424, %v1572, %v1573
        %v1575 = vrot.slane %v1332, 1
        %v1576 = vsel %vm1424, %v1573, %v1575
        %v1638 = vadd.f32 %v1027, %v1426
        %v1639 = vadd.f32 %v1028, %v1429
        %v1640 = vadd.f32 %v1029, %v1431
        %v1641 = vadd.f32 %v1030, %v1434
        %v1642 = vadd.f32 %v1031, %v1436
        %v1643 = vadd.f32 %v1032, %v1439
        %v1644 = vadd.f32 %v1033, %v1441
        %v1645 = vadd.f32 %v1034, %v1444
        %v1646 = vadd.f32 %v1035, %v1446
        %v1647 = vadd.f32 %v1036, %v1449
        %v1648 = vadd.f32 %v1037, %v1451
        %v1649 = vadd.f32 %v1038, %v1454
        %v1650 = vadd.f32 %v1039, %v1456
        %v1651 = vadd.f32 %v1040, %v1459
        %v1652 = vadd.f32 %v1041, %v1461
        %v1653 = vadd.f32 %v1042, %v1464
        %v1654 = vadd.f32 %v1043, %v1466
        %v1655 = vadd.f32 %v1044, %v1469
        %v1656 = vadd.f32 %v1045, %v1471
        %v1657 = vadd.f32 %v1046, %v1474
        %v1658 = vadd.f32 %v1047, %v1476
        %v1659 = vadd.f32 %v1048, %v1479
        %v1660 = vadd.f32 %v1049, %v1481
        %v1661 = vadd.f32 %v1050, %v1484
        %v1662 = vadd.f32 %v1051, %v1486
        %v1663 = vadd.f32 %v1052, %v1489
        %v1664 = vadd.f32 %v1053, %v1491
        %v1665 = vadd.f32 %v1054, %v1494
        %v1666 = vadd.f32 %v1055, %v1496
        %v1667 = vadd.f32 %v1056, %v1499
        %v1668 = vadd.f32 %v1057, %v1501
        %v1669 = vadd.f32 %v1058, %v1504
        %v1670 = vadd.f32 %v1059, %v1506
        %v1671 = vadd.f32 %v1060, %v1509
        %v1672 = vadd.f32 %v1061, %v1511
        %v1673 = vadd.f32 %v1062, %v1514
        %v1674 = vadd.f32 %v1063, %v1516
        %v1675 = vadd.f32 %v1064, %v1519
        %v1676 = vadd.f32 %v1065, %v1521
        %v1677 = vadd.f32 %v1066, %v1524
        %v1678 = vadd.f32 %v1067, %v1526
        %v1679 = vadd.f32 %v1068, %v1529
        %v1680 = vadd.f32 %v1069, %v1531
        %v1681 = vadd.f32 %v1070, %v1534
        %v1682 = vadd.f32 %v1071, %v1536
        %v1683 = vadd.f32 %v1072, %v1539
        %v1684 = vadd.f32 %v1073, %v1541
        %v1685 = vadd.f32 %v1074, %v1544
        %v1686 = vadd.f32 %v1075, %v1546
        %v1687 = vadd.f32 %v1076, %v1549
        %v1688 = vadd.f32 %v1077, %v1551
        %v1689 = vadd.f32 %v1078, %v1554
        %v1690 = vadd.f32 %v1079, %v1556
        %v1691 = vadd.f32 %v1080, %v1559
        %v1692 = vadd.f32 %v1081, %v1561
        %v1693 = vadd.f32 %v1082, %v1564
        %v1694 = vadd.f32 %v1083, %v1566
        %v1695 = vadd.f32 %v1084, %v1569
        %v1696 = vadd.f32 %v1085, %v1571
        %v1697 = vadd.f32 %v1086, %v1574
        %v1698 = vadd.f32 %v1087, %v1576
        %v1699 = vlaneseq
        %v1700 = vshrl.u32 %v1699, 7
        %v1701 = vsub.s32 2, %v1700
        %v1702 = vrot.slane %v395, %v1701
        %v1703 = vmul.f32 %v690, %v1702
        %v1704 = vmul.f32 %v695, %v1702
        %v1705 = vmul.f32 %v699, %v1702
        %v1706 = vmul.f32 %v1091, %v1702
        %v1707 = vmul.f32 %v704, %v1702
        %v1708 = vmul.f32 %v708, %v1702
        %v1709 = vmul.f32 %v1096, %v1702
        %v1710 = vmul.f32 %v713, %v1702
        %v1711 = vmul.f32 %v717, %v1702
        %v1712 = vmul.f32 %v1101, %v1702
        %v1713 = vmul.f32 %v722, %v1702
        %v1714 = vmul.f32 %v726, %v1702
        %v1715 = vmul.f32 %v1106, %v1702
        %v1716 = vmul.f32 %v731, %v1702
        %v1717 = vmul.f32 %v735, %v1702
        %v1718 = vmul.f32 %v1111, %v1702
        %v1719 = vmul.f32 %v740, %v1702
        %v1720 = vmul.f32 %v744, %v1702
        %v1721 = vmul.f32 %v1116, %v1702
        %v1722 = vmul.f32 %v749, %v1702
        %v1723 = vmul.f32 %v753, %v1702
        %v1724 = vmul.f32 %v1121, %v1702
        %v1725 = vmul.f32 %v758, %v1702
        %v1726 = vmul.f32 %v762, %v1702
        %v1727 = vmul.f32 %v1126, %v1702
        %v1728 = vmul.f32 %v767, %v1702
        %v1729 = vmul.f32 %v771, %v1702
        %v1730 = vmul.f32 %v1131, %v1702
        %v1731 = vmul.f32 %v776, %v1702
        %v1732 = vmul.f32 %v780, %v1702
        %v1733 = vmul.f32 %v1136, %v1702
        %v1734 = vmul.f32 %v785, %v1702
        %v1735 = vmul.f32 %v789, %v1702
        %v1736 = vmul.f32 %v1141, %v1702
        %v1737 = vmul.f32 %v794, %v1702
        %v1738 = vmul.f32 %v798, %v1702
        %v1739 = vmul.f32 %v1146, %v1702
        %v1740 = vmul.f32 %v803, %v1702
        %v1741 = vmul.f32 %v807, %v1702
        %v1742 = vmul.f32 %v1151, %v1702
        %v1743 = vmul.f32 %v812, %v1702
        %v1744 = vmul.f32 %v816, %v1702
        %v1745 = vmul.f32 %v1156, %v1702
        %v1746 = vmul.f32 %v821, %v1702
        %v1747 = vmul.f32 %v825, %v1702
        %v1748 = vmul.f32 %v1161, %v1702
        %v1749 = vmul.f32 %v830, %v1702
        %v1750 = vmul.f32 %v834, %v1702
        %v1751 = vmul.f32 %v1166, %v1702
        %v1752 = vmul.f32 %v839, %v1702
        %v1753 = vmul.f32 %v843, %v1702
        %v1754 = vmul.f32 %v1171, %v1702
        %v1755 = vmul.f32 %v848, %v1702
        %v1756 = vmul.f32 %v852, %v1702
        %v1757 = vmul.f32 %v1176, %v1702
        %v1758 = vmul.f32 %v857, %v1702
        %v1759 = vmul.f32 %v861, %v1702
        %v1760 = vmul.f32 %v1181, %v1702
        %v1761 = vmul.f32 %v866, %v1702
        %v1762 = vmul.f32 %v870, %v1702
        %v1763 = vmul.f32 %v1186, %v1702
        %v1764 = vmul.f32 %v875, %v1702
        %v1765 = vmul.f32 %v879, %v1702
        %v1766 = vmul.f32 %v1191, %v1702
        %v1767 = vmul.f32 %v884, %v1702
        %v1768 = vmul.f32 %v888, %v1702
        %v1769 = vmul.f32 %v1196, %v1702
        %v1770 = vmul.f32 %v893, %v1702
        %v1771 = vmul.f32 %v897, %v1702
        %v1772 = vmul.f32 %v1201, %v1702
        %v1773 = vmul.f32 %v902, %v1702
        %v1774 = vmul.f32 %v906, %v1702
        %v1775 = vmul.f32 %v1206, %v1702
        %v1776 = vmul.f32 %v911, %v1702
        %v1777 = vmul.f32 %v915, %v1702
        %v1778 = vmul.f32 %v1211, %v1702
        %v1779 = vmul.f32 %v920, %v1702
        %v1780 = vmul.f32 %v924, %v1702
        %v1781 = vmul.f32 %v1216, %v1702
        %v1782 = vmul.f32 %v929, %v1702
        %v1783 = vmul.f32 %v933, %v1702
        %v1784 = vmul.f32 %v1221, %v1702
        %v1785 = vmul.f32 %v938, %v1702
        %v1786 = vmul.f32 %v942, %v1702
        %v1787 = vmul.f32 %v1226, %v1702
        %v1788 = vmul.f32 %v947, %v1702
        %v1789 = vmul.f32 %v951, %v1702
        %v1790 = vmul.f32 %v1231, %v1702
        %v1791 = vmul.f32 %v956, %v1702
        %v1792 = vmul.f32 %v960, %v1702
        %v1793 = vmul.f32 %v1236, %v1702
        %vm1885 = vcmask 1045504
        %v1886 = vrot.slane %v1703, 2
        %v1887 = vsel %vm1885, %v1886, %v1886
        %v1888 = vrot.slane %v1704, 2
        %v1889 = vrot.slane %v1705, 2
        %v1890 = vsel %vm1885, %v1888, %v1889
        %v1891 = vrot.slane %v1706, 2
        %v1892 = vsel %vm1885, %v1889, %v1891
        %v1893 = vrot.slane %v1707, 2
        %v1894 = vrot.slane %v1708, 2
        %v1895 = vsel %vm1885, %v1893, %v1894
        %v1896 = vrot.slane %v1709, 2
        %v1897 = vsel %vm1885, %v1894, %v1896
        %v1898 = vrot.slane %v1710, 2
        %v1899 = vrot.slane %v1711, 2
        %v1900 = vsel %vm1885, %v1898, %v1899
        %v1901 = vrot.slane %v1712, 2
        %v1902 = vsel %vm1885, %v1899, %v1901
        %v1903 = vrot.slane %v1713, 2
        %v1904 = vrot.slane %v1714, 2
        %v1905 = vsel %vm1885, %v1903, %v1904
        %v1906 = vrot.slane %v1715, 2
        %v1907 = vsel %vm1885, %v1904, %v1906
        %v1908 = vrot.slane %v1716, 2
        %v1909 = vrot.slane %v1717, 2
        %v1910 = vsel %vm1885, %v1908, %v1909
        %v1911 = vrot.slane %v1718, 2
        %v1912 = vsel %vm1885, %v1909, %v1911
        %v1913 = vrot.slane %v1719, 2
        %v1914 = vrot.slane %v1720, 2
        %v1915 = vsel %vm1885, %v1913, %v1914
        %v1916 = vrot.slane %v1721, 2
        %v1917 = vsel %vm1885, %v1914, %v1916
        %v1918 = vrot.slane %v1722, 2
        %v1919 = vrot.slane %v1723, 2
        %v1920 = vsel %vm1885, %v1918, %v1919
        %v1921 = vrot.slane %v1724, 2
        %v1922 = vsel %vm1885, %v1919, %v1921
        %v1923 = vrot.slane %v1725, 2
        %v1924 = vrot.slane %v1726, 2
        %v1925 = vsel %vm1885, %v1923, %v1924
        %v1926 = vrot.slane %v1727, 2
        %v1927 = vsel %vm1885, %v1924, %v1926
        %v1928 = vrot.slane %v1728, 2
        %v1929 = vrot.slane %v1729, 2
        %v1930 = vsel %vm1885, %v1928, %v1929
        %v1931 = vrot.slane %v1730, 2
        %v1932 = vsel %vm1885, %v1929, %v1931
        %v1933 = vrot.slane %v1731, 2
        %v1934 = vrot.slane %v1732, 2
        %v1935 = vsel %vm1885, %v1933, %v1934
        %v1936 = vrot.slane %v1733, 2
        %v1937 = vsel %vm1885, %v1934, %v1936
        %v1938 = vrot.slane %v1734, 2
        %v1939 = vrot.slane %v1735, 2
        %v1940 = vsel %vm1885, %v1938, %v1939
        %v1941 = vrot.slane %v1736, 2
        %v1942 = vsel %vm1885, %v1939, %v1941
        %v1943 = vrot.slane %v1737, 2
        %v1944 = vrot.slane %v1738, 2
        %v1945 = vsel %vm1885, %v1943, %v1944
        %v1946 = vrot.slane %v1739, 2
        %v1947 = vsel %vm1885, %v1944, %v1946
        %v1948 = vrot.slane %v1740, 2
        %v1949 = vrot.slane %v1741, 2
        %v1950 = vsel %vm1885, %v1948, %v1949
        %v1951 = vrot.slane %v1742, 2
        %v1952 = vsel %vm1885, %v1949, %v1951
        %v1953 = vrot.slane %v1743, 2
        %v1954 = vrot.slane %v1744, 2
        %v1955 = vsel %vm1885, %v1953, %v1954
        %v1956 = vrot.slane %v1745, 2
        %v1957 = vsel %vm1885, %v1954, %v1956
        %v1958 = vrot.slane %v1746, 2
        %v1959 = vrot.slane %v1747, 2
        %v1960 = vsel %vm1885, %v1958, %v1959
        %v1961 = vrot.slane %v1748, 2
        %v1962 = vsel %vm1885, %v1959, %v1961
        %v1963 = vrot.slane %v1749, 2
        %v1964 = vrot.slane %v1750, 2
        %v1965 = vsel %vm1885, %v1963, %v1964
        %v1966 = vrot.slane %v1751, 2
        %v1967 = vsel %vm1885, %v1964, %v1966
        %v1968 = vrot.slane %v1752, 2
        %v1969 = vrot.slane %v1753, 2
        %v1970 = vsel %vm1885, %v1968, %v1969
        %v1971 = vrot.slane %v1754, 2
        %v1972 = vsel %vm1885, %v1969, %v1971
        %v1973 = vrot.slane %v1755, 2
        %v1974 = vrot.slane %v1756, 2
        %v1975 = vsel %vm1885, %v1973, %v1974
        %v1976 = vrot.slane %v1757, 2
        %v1977 = vsel %vm1885, %v1974, %v1976
        %v1978 = vrot.slane %v1758, 2
        %v1979 = vrot.slane %v1759, 2
        %v1980 = vsel %vm1885, %v1978, %v1979
        %v1981 = vrot.slane %v1760, 2
        %v1982 = vsel %vm1885, %v1979, %v1981
        %v1983 = vrot.slane %v1761, 2
        %v1984 = vrot.slane %v1762, 2
        %v1985 = vsel %vm1885, %v1983, %v1984
        %v1986 = vrot.slane %v1763, 2
        %v1987 = vsel %vm1885, %v1984, %v1986
        %v1988 = vrot.slane %v1764, 2
        %v1989 = vrot.slane %v1765, 2
        %v1990 = vsel %vm1885, %v1988, %v1989
        %v1991 = vrot.slane %v1766, 2
        %v1992 = vsel %vm1885, %v1989, %v1991
        %v1993 = vrot.slane %v1767, 2
        %v1994 = vrot.slane %v1768, 2
        %v1995 = vsel %vm1885, %v1993, %v1994
        %v1996 = vrot.slane %v1769, 2
        %v1997 = vsel %vm1885, %v1994, %v1996
        %v1998 = vrot.slane %v1770, 2
        %v1999 = vrot.slane %v1771, 2
        %v2000 = vsel %vm1885, %v1998, %v1999
        %v2001 = vrot.slane %v1772, 2
        %v2002 = vsel %vm1885, %v1999, %v2001
        %v2003 = vrot.slane %v1773, 2
        %v2004 = vrot.slane %v1774, 2
        %v2005 = vsel %vm1885, %v2003, %v2004
        %v2006 = vrot.slane %v1775, 2
        %v2007 = vsel %vm1885, %v2004, %v2006
        %v2008 = vrot.slane %v1776, 2
        %v2009 = vrot.slane %v1777, 2
        %v2010 = vsel %vm1885, %v2008, %v2009
        %v2011 = vrot.slane %v1778, 2
        %v2012 = vsel %vm1885, %v2009, %v2011
        %v2013 = vrot.slane %v1779, 2
        %v2014 = vrot.slane %v1780, 2
        %v2015 = vsel %vm1885, %v2013, %v2014
        %v2016 = vrot.slane %v1781, 2
        %v2017 = vsel %vm1885, %v2014, %v2016
        %v2018 = vrot.slane %v1782, 2
        %v2019 = vrot.slane %v1783, 2
        %v2020 = vsel %vm1885, %v2018, %v2019
        %v2021 = vrot.slane %v1784, 2
        %v2022 = vsel %vm1885, %v2019, %v2021
        %v2023 = vrot.slane %v1785, 2
        %v2024 = vrot.slane %v1786, 2
        %v2025 = vsel %vm1885, %v2023, %v2024
        %v2026 = vrot.slane %v1787, 2
        %v2027 = vsel %vm1885, %v2024, %v2026
        %v2028 = vrot.slane %v1788, 2
        %v2029 = vrot.slane %v1789, 2
        %v2030 = vsel %vm1885, %v2028, %v2029
        %v2031 = vrot.slane %v1790, 2
        %v2032 = vsel %vm1885, %v2029, %v2031
        %v2033 = vrot.slane %v1791, 2
        %v2034 = vrot.slane %v1792, 2
        %v2035 = vsel %vm1885, %v2033, %v2034
        %v2036 = vrot.slane %v1793, 2
        %v2037 = vsel %vm1885, %v2034, %v2036
        %v2099 = vadd.f32 %v1638, %v1887
        %v2100 = vadd.f32 %v1639, %v1890
        %v2101 = vadd.f32 %v1640, %v1892
        %v2102 = vadd.f32 %v1641, %v1895
        %v2103 = vadd.f32 %v1642, %v1897
        %v2104 = vadd.f32 %v1643, %v1900
        %v2105 = vadd.f32 %v1644, %v1902
        %v2106 = vadd.f32 %v1645, %v1905
        %v2107 = vadd.f32 %v1646, %v1907
        %v2108 = vadd.f32 %v1647, %v1910
        %v2109 = vadd.f32 %v1648, %v1912
        %v2110 = vadd.f32 %v1649, %v1915
        %v2111 = vadd.f32 %v1650, %v1917
        %v2112 = vadd.f32 %v1651, %v1920
        %v2113 = vadd.f32 %v1652, %v1922
        %v2114 = vadd.f32 %v1653, %v1925
        %v2115 = vadd.f32 %v1654, %v1927
        %v2116 = vadd.f32 %v1655, %v1930
        %v2117 = vadd.f32 %v1656, %v1932
        %v2118 = vadd.f32 %v1657, %v1935
        %v2119 = vadd.f32 %v1658, %v1937
        %v2120 = vadd.f32 %v1659, %v1940
        %v2121 = vadd.f32 %v1660, %v1942
        %v2122 = vadd.f32 %v1661, %v1945
        %v2123 = vadd.f32 %v1662, %v1947
        %v2124 = vadd.f32 %v1663, %v1950
        %v2125 = vadd.f32 %v1664, %v1952
        %v2126 = vadd.f32 %v1665, %v1955
        %v2127 = vadd.f32 %v1666, %v1957
        %v2128 = vadd.f32 %v1667, %v1960
        %v2129 = vadd.f32 %v1668, %v1962
        %v2130 = vadd.f32 %v1669, %v1965
        %v2131 = vadd.f32 %v1670, %v1967
        %v2132 = vadd.f32 %v1671, %v1970
        %v2133 = vadd.f32 %v1672, %v1972
        %v2134 = vadd.f32 %v1673, %v1975
        %v2135 = vadd.f32 %v1674, %v1977
        %v2136 = vadd.f32 %v1675, %v1980
        %v2137 = vadd.f32 %v1676, %v1982
        %v2138 = vadd.f32 %v1677, %v1985
        %v2139 = vadd.f32 %v1678, %v1987
        %v2140 = vadd.f32 %v1679, %v1990
        %v2141 = vadd.f32 %v1680, %v1992
        %v2142 = vadd.f32 %v1681, %v1995
        %v2143 = vadd.f32 %v1682, %v1997
        %v2144 = vadd.f32 %v1683, %v2000
        %v2145 = vadd.f32 %v1684, %v2002
        %v2146 = vadd.f32 %v1685, %v2005
        %v2147 = vadd.f32 %v1686, %v2007
        %v2148 = vadd.f32 %v1687, %v2010
        %v2149 = vadd.f32 %v1688, %v2012
        %v2150 = vadd.f32 %v1689, %v2015
        %v2151 = vadd.f32 %v1690, %v2017
        %v2152 = vadd.f32 %v1691, %v2020
        %v2153 = vadd.f32 %v1692, %v2022
        %v2154 = vadd.f32 %v1693, %v2025
        %v2155 = vadd.f32 %v1694, %v2027
        %v2156 = vadd.f32 %v1695, %v2030
        %v2157 = vadd.f32 %v1696, %v2032
        %v2158 = vadd.f32 %v1697, %v2035
        %v2159 = vadd.f32 %v1698, %v2037
        %2161 = vset.pattern.permute.xlu0 0
        %2162 = vperm.xlu0 %2161, %v638
        %v2163 = vpop.permute.xlu0 %2162
        %2165 = vset.pattern.permute.xlu0 0
        %2166 = vperm.xlu0 %2165, %v510
        %v2167 = vpop.permute.xlu0 %2166
        %2170 = vset.pattern.permute.xlu0 0
        %2171 = vperm.xlu0 %2170, %v654
        %v2172 = vpop.permute.xlu0 %2171
        %2174 = vset.pattern.permute.xlu0 0
        %2175 = vperm.xlu0 %2174, %v558
        %v2176 = vpop.permute.xlu0 %2175
        %v2178 = vlaneseq
        %v2179 = vshrl.u32 %v2178, 7
        %v2180 = vsub.s32 3, %v2179
        %v2181 = vrot.slane %v395, %v2180
        %v2182 = vmul.f32 %v695, %v2181
        %v2183 = vmul.f32 %v699, %v2181
        %v2184 = vmul.f32 %v704, %v2181
        %v2185 = vmul.f32 %v708, %v2181
        %v2186 = vmul.f32 %v713, %v2181
        %v2187 = vmul.f32 %v717, %v2181
        %v2188 = vmul.f32 %v722, %v2181
        %v2189 = vmul.f32 %v726, %v2181
        %v2190 = vmul.f32 %v731, %v2181
        %v2191 = vmul.f32 %v735, %v2181
        %v2192 = vmul.f32 %v740, %v2181
        %v2193 = vmul.f32 %v744, %v2181
        %v2194 = vmul.f32 %v749, %v2181
        %v2195 = vmul.f32 %v753, %v2181
        %v2196 = vmul.f32 %v758, %v2181
        %v2197 = vmul.f32 %v762, %v2181
        %v2198 = vmul.f32 %v767, %v2181
        %v2199 = vmul.f32 %v771, %v2181
        %v2200 = vmul.f32 %v776, %v2181
        %v2201 = vmul.f32 %v780, %v2181
        %v2202 = vmul.f32 %v785, %v2181
        %v2203 = vmul.f32 %v789, %v2181
        %v2204 = vmul.f32 %v794, %v2181
        %v2205 = vmul.f32 %v798, %v2181
        %v2206 = vmul.f32 %v803, %v2181
        %v2207 = vmul.f32 %v807, %v2181
        %v2208 = vmul.f32 %v812, %v2181
        %v2209 = vmul.f32 %v816, %v2181
        %v2210 = vmul.f32 %v821, %v2181
        %v2211 = vmul.f32 %v825, %v2181
        %v2212 = vmul.f32 %v2163, %v2181
        %v2213 = vmul.f32 %v2167, %v2181
        %v2214 = vmul.f32 %v830, %v2181
        %v2215 = vmul.f32 %v834, %v2181
        %v2216 = vmul.f32 %v839, %v2181
        %v2217 = vmul.f32 %v843, %v2181
        %v2218 = vmul.f32 %v848, %v2181
        %v2219 = vmul.f32 %v852, %v2181
        %v2220 = vmul.f32 %v857, %v2181
        %v2221 = vmul.f32 %v861, %v2181
        %v2222 = vmul.f32 %v866, %v2181
        %v2223 = vmul.f32 %v870, %v2181
        %v2224 = vmul.f32 %v875, %v2181
        %v2225 = vmul.f32 %v879, %v2181
        %v2226 = vmul.f32 %v884, %v2181
        %v2227 = vmul.f32 %v888, %v2181
        %v2228 = vmul.f32 %v893, %v2181
        %v2229 = vmul.f32 %v897, %v2181
        %v2230 = vmul.f32 %v902, %v2181
        %v2231 = vmul.f32 %v906, %v2181
        %v2232 = vmul.f32 %v911, %v2181
        %v2233 = vmul.f32 %v915, %v2181
        %v2234 = vmul.f32 %v920, %v2181
        %v2235 = vmul.f32 %v924, %v2181
        %v2236 = vmul.f32 %v929, %v2181
        %v2237 = vmul.f32 %v933, %v2181
        %v2238 = vmul.f32 %v938, %v2181
        %v2239 = vmul.f32 %v942, %v2181
        %v2240 = vmul.f32 %v947, %v2181
        %v2241 = vmul.f32 %v951, %v2181
        %v2242 = vmul.f32 %v956, %v2181
        %v2243 = vmul.f32 %v960, %v2181
        %v2244 = vmul.f32 %v2172, %v2181
        %v2245 = vmul.f32 %v2176, %v2181
        %v2246 = vadd.f32 %v2099, %v2182
        %v2247 = vadd.f32 %v2099, %v2183
        %v2248 = vadd.f32 %v2100, %v2184
        %v2249 = vadd.f32 %v2101, %v2185
        %v2250 = vadd.f32 %v2102, %v2186
        %v2251 = vadd.f32 %v2103, %v2187
        %v2252 = vadd.f32 %v2104, %v2188
        %v2253 = vadd.f32 %v2105, %v2189
        %v2254 = vadd.f32 %v2106, %v2190
        %v2255 = vadd.f32 %v2107, %v2191
        %v2256 = vadd.f32 %v2108, %v2192
        %v2257 = vadd.f32 %v2109, %v2193
        %v2258 = vadd.f32 %v2110, %v2194
        %v2259 = vadd.f32 %v2111, %v2195
        %v2260 = vadd.f32 %v2112, %v2196
        %v2261 = vadd.f32 %v2113, %v2197
        %v2262 = vadd.f32 %v2114, %v2198
        %v2263 = vadd.f32 %v2115, %v2199
        %v2264 = vadd.f32 %v2116, %v2200
        %v2265 = vadd.f32 %v2117, %v2201
        %v2266 = vadd.f32 %v2118, %v2202
        %v2267 = vadd.f32 %v2119, %v2203
        %v2268 = vadd.f32 %v2120, %v2204
        %v2269 = vadd.f32 %v2121, %v2205
        %v2270 = vadd.f32 %v2122, %v2206
        %v2271 = vadd.f32 %v2123, %v2207
        %v2272 = vadd.f32 %v2124, %v2208
        %v2273 = vadd.f32 %v2125, %v2209
        %v2274 = vadd.f32 %v2126, %v2210
        %v2275 = vadd.f32 %v2127, %v2211
        %v2276 = vadd.f32 %v2128, %v2212
        %v2277 = vadd.f32 %v2129, %v2213
        %v2278 = vadd.f32 %v2099, %v2214
        %v2279 = vadd.f32 %v2099, %v2215
        %v2280 = vadd.f32 %v2130, %v2216
        %v2281 = vadd.f32 %v2131, %v2217
        %v2282 = vadd.f32 %v2132, %v2218
        %v2283 = vadd.f32 %v2133, %v2219
        %v2284 = vadd.f32 %v2134, %v2220
        %v2285 = vadd.f32 %v2135, %v2221
        %v2286 = vadd.f32 %v2136, %v2222
        %v2287 = vadd.f32 %v2137, %v2223
        %v2288 = vadd.f32 %v2138, %v2224
        %v2289 = vadd.f32 %v2139, %v2225
        %v2290 = vadd.f32 %v2140, %v2226
        %v2291 = vadd.f32 %v2141, %v2227
        %v2292 = vadd.f32 %v2142, %v2228
        %v2293 = vadd.f32 %v2143, %v2229
        %v2294 = vadd.f32 %v2144, %v2230
        %v2295 = vadd.f32 %v2145, %v2231
        %v2296 = vadd.f32 %v2146, %v2232
        %v2297 = vadd.f32 %v2147, %v2233
        %v2298 = vadd.f32 %v2148, %v2234
        %v2299 = vadd.f32 %v2149, %v2235
        %v2300 = vadd.f32 %v2150, %v2236
        %v2301 = vadd.f32 %v2151, %v2237
        %v2302 = vadd.f32 %v2152, %v2238
        %v2303 = vadd.f32 %v2153, %v2239
        %v2304 = vadd.f32 %v2154, %v2240
        %v2305 = vadd.f32 %v2155, %v2241
        %v2306 = vadd.f32 %v2156, %v2242
        %v2307 = vadd.f32 %v2157, %v2243
        %v2308 = vadd.f32 %v2158, %v2244
        %v2309 = vadd.f32 %v2159, %v2245
        %2311 = vset.pattern.permute.xlu0 0
        %2312 = vperm.xlu0 %2311, %v670
        %v2313 = vpop.permute.xlu0 %2312
        %2316 = vset.pattern.permute.xlu0 0
        %2317 = vperm.xlu0 %2316, %v686
        %v2318 = vpop.permute.xlu0 %2317
        %v2320 = vlaneseq
        %v2321 = vshrl.u32 %v2320, 7
        %v2322 = vsub.s32 4, %v2321
        %v2323 = vrot.slane %v395, %v2322
        %v2324 = vmul.f32 %v695, %v2323
        %v2325 = vmul.f32 %v699, %v2323
        %v2326 = vmul.f32 %v1091, %v2323
        %v2327 = vmul.f32 %v704, %v2323
        %v2328 = vmul.f32 %v708, %v2323
        %v2329 = vmul.f32 %v1096, %v2323
        %v2330 = vmul.f32 %v713, %v2323
        %v2331 = vmul.f32 %v717, %v2323
        %v2332 = vmul.f32 %v1101, %v2323
        %v2333 = vmul.f32 %v722, %v2323
        %v2334 = vmul.f32 %v726, %v2323
        %v2335 = vmul.f32 %v1106, %v2323
        %v2336 = vmul.f32 %v731, %v2323
        %v2337 = vmul.f32 %v735, %v2323
        %v2338 = vmul.f32 %v1111, %v2323
        %v2339 = vmul.f32 %v740, %v2323
        %v2340 = vmul.f32 %v744, %v2323
        %v2341 = vmul.f32 %v1116, %v2323
        %v2342 = vmul.f32 %v749, %v2323
        %v2343 = vmul.f32 %v753, %v2323
        %v2344 = vmul.f32 %v1121, %v2323
        %v2345 = vmul.f32 %v758, %v2323
        %v2346 = vmul.f32 %v762, %v2323
        %v2347 = vmul.f32 %v1126, %v2323
        %v2348 = vmul.f32 %v767, %v2323
        %v2349 = vmul.f32 %v771, %v2323
        %v2350 = vmul.f32 %v1131, %v2323
        %v2351 = vmul.f32 %v776, %v2323
        %v2352 = vmul.f32 %v780, %v2323
        %v2353 = vmul.f32 %v1136, %v2323
        %v2354 = vmul.f32 %v785, %v2323
        %v2355 = vmul.f32 %v789, %v2323
        %v2356 = vmul.f32 %v1141, %v2323
        %v2357 = vmul.f32 %v794, %v2323
        %v2358 = vmul.f32 %v798, %v2323
        %v2359 = vmul.f32 %v1146, %v2323
        %v2360 = vmul.f32 %v803, %v2323
        %v2361 = vmul.f32 %v807, %v2323
        %v2362 = vmul.f32 %v1151, %v2323
        %v2363 = vmul.f32 %v812, %v2323
        %v2364 = vmul.f32 %v816, %v2323
        %v2365 = vmul.f32 %v1156, %v2323
        %v2366 = vmul.f32 %v821, %v2323
        %v2367 = vmul.f32 %v825, %v2323
        %v2368 = vmul.f32 %v1161, %v2323
        %v2369 = vmul.f32 %v2163, %v2323
        %v2370 = vmul.f32 %v2167, %v2323
        %v2371 = vmul.f32 %v2313, %v2323
        %v2372 = vmul.f32 %v830, %v2323
        %v2373 = vmul.f32 %v834, %v2323
        %v2374 = vmul.f32 %v1166, %v2323
        %v2375 = vmul.f32 %v839, %v2323
        %v2376 = vmul.f32 %v843, %v2323
        %v2377 = vmul.f32 %v1171, %v2323
        %v2378 = vmul.f32 %v848, %v2323
        %v2379 = vmul.f32 %v852, %v2323
        %v2380 = vmul.f32 %v1176, %v2323
        %v2381 = vmul.f32 %v857, %v2323
        %v2382 = vmul.f32 %v861, %v2323
        %v2383 = vmul.f32 %v1181, %v2323
        %v2384 = vmul.f32 %v866, %v2323
        %v2385 = vmul.f32 %v870, %v2323
        %v2386 = vmul.f32 %v1186, %v2323
        %v2387 = vmul.f32 %v875, %v2323
        %v2388 = vmul.f32 %v879, %v2323
        %v2389 = vmul.f32 %v1191, %v2323
        %v2390 = vmul.f32 %v884, %v2323
        %v2391 = vmul.f32 %v888, %v2323
        %v2392 = vmul.f32 %v1196, %v2323
        %v2393 = vmul.f32 %v893, %v2323
        %v2394 = vmul.f32 %v897, %v2323
        %v2395 = vmul.f32 %v1201, %v2323
        %v2396 = vmul.f32 %v902, %v2323
        %v2397 = vmul.f32 %v906, %v2323
        %v2398 = vmul.f32 %v1206, %v2323
        %v2399 = vmul.f32 %v911, %v2323
        %v2400 = vmul.f32 %v915, %v2323
        %v2401 = vmul.f32 %v1211, %v2323
        %v2402 = vmul.f32 %v920, %v2323
        %v2403 = vmul.f32 %v924, %v2323
        %v2404 = vmul.f32 %v1216, %v2323
        %v2405 = vmul.f32 %v929, %v2323
        %v2406 = vmul.f32 %v933, %v2323
        %v2407 = vmul.f32 %v1221, %v2323
        %v2408 = vmul.f32 %v938, %v2323
        %v2409 = vmul.f32 %v942, %v2323
        %v2410 = vmul.f32 %v1226, %v2323
        %v2411 = vmul.f32 %v947, %v2323
        %v2412 = vmul.f32 %v951, %v2323
        %v2413 = vmul.f32 %v1231, %v2323
        %v2414 = vmul.f32 %v956, %v2323
        %v2415 = vmul.f32 %v960, %v2323
        %v2416 = vmul.f32 %v1236, %v2323
        %v2417 = vmul.f32 %v2172, %v2323
        %v2418 = vmul.f32 %v2176, %v2323
        %v2419 = vmul.f32 %v2318, %v2323
        %v2516 = vrot.slane %v2324, 1
        %v2517 = vrot.slane %v2325, 1
        %v2518 = vsel %vm1424, %v2516, %v2517
        %v2519 = vrot.slane %v2326, 1
        %v2520 = vsel %vm1424, %v2517, %v2519
        %v2521 = vrot.slane %v2327, 1
        %v2522 = vrot.slane %v2328, 1
        %v2523 = vsel %vm1424, %v2521, %v2522
        %v2524 = vrot.slane %v2329, 1
        %v2525 = vsel %vm1424, %v2522, %v2524
        %v2526 = vrot.slane %v2330, 1
        %v2527 = vrot.slane %v2331, 1
        %v2528 = vsel %vm1424, %v2526, %v2527
        %v2529 = vrot.slane %v2332, 1
        %v2530 = vsel %vm1424, %v2527, %v2529
        %v2531 = vrot.slane %v2333, 1
        %v2532 = vrot.slane %v2334, 1
        %v2533 = vsel %vm1424, %v2531, %v2532
        %v2534 = vrot.slane %v2335, 1
        %v2535 = vsel %vm1424, %v2532, %v2534
        %v2536 = vrot.slane %v2336, 1
        %v2537 = vrot.slane %v2337, 1
        %v2538 = vsel %vm1424, %v2536, %v2537
        %v2539 = vrot.slane %v2338, 1
        %v2540 = vsel %vm1424, %v2537, %v2539
        %v2541 = vrot.slane %v2339, 1
        %v2542 = vrot.slane %v2340, 1
        %v2543 = vsel %vm1424, %v2541, %v2542
        %v2544 = vrot.slane %v2341, 1
        %v2545 = vsel %vm1424, %v2542, %v2544
        %v2546 = vrot.slane %v2342, 1
        %v2547 = vrot.slane %v2343, 1
        %v2548 = vsel %vm1424, %v2546, %v2547
        %v2549 = vrot.slane %v2344, 1
        %v2550 = vsel %vm1424, %v2547, %v2549
        %v2551 = vrot.slane %v2345, 1
        %v2552 = vrot.slane %v2346, 1
        %v2553 = vsel %vm1424, %v2551, %v2552
        %v2554 = vrot.slane %v2347, 1
        %v2555 = vsel %vm1424, %v2552, %v2554
        %v2556 = vrot.slane %v2348, 1
        %v2557 = vrot.slane %v2349, 1
        %v2558 = vsel %vm1424, %v2556, %v2557
        %v2559 = vrot.slane %v2350, 1
        %v2560 = vsel %vm1424, %v2557, %v2559
        %v2561 = vrot.slane %v2351, 1
        %v2562 = vrot.slane %v2352, 1
        %v2563 = vsel %vm1424, %v2561, %v2562
        %v2564 = vrot.slane %v2353, 1
        %v2565 = vsel %vm1424, %v2562, %v2564
        %v2566 = vrot.slane %v2354, 1
        %v2567 = vrot.slane %v2355, 1
        %v2568 = vsel %vm1424, %v2566, %v2567
        %v2569 = vrot.slane %v2356, 1
        %v2570 = vsel %vm1424, %v2567, %v2569
        %v2571 = vrot.slane %v2357, 1
        %v2572 = vrot.slane %v2358, 1
        %v2573 = vsel %vm1424, %v2571, %v2572
        %v2574 = vrot.slane %v2359, 1
        %v2575 = vsel %vm1424, %v2572, %v2574
        %v2576 = vrot.slane %v2360, 1
        %v2577 = vrot.slane %v2361, 1
        %v2578 = vsel %vm1424, %v2576, %v2577
        %v2579 = vrot.slane %v2362, 1
        %v2580 = vsel %vm1424, %v2577, %v2579
        %v2581 = vrot.slane %v2363, 1
        %v2582 = vrot.slane %v2364, 1
        %v2583 = vsel %vm1424, %v2581, %v2582
        %v2584 = vrot.slane %v2365, 1
        %v2585 = vsel %vm1424, %v2582, %v2584
        %v2586 = vrot.slane %v2366, 1
        %v2587 = vrot.slane %v2367, 1
        %v2588 = vsel %vm1424, %v2586, %v2587
        %v2589 = vrot.slane %v2368, 1
        %v2590 = vsel %vm1424, %v2587, %v2589
        %v2591 = vrot.slane %v2369, 1
        %v2592 = vrot.slane %v2370, 1
        %v2593 = vsel %vm1424, %v2591, %v2592
        %v2594 = vrot.slane %v2371, 1
        %v2595 = vsel %vm1424, %v2592, %v2594
        %v2596 = vrot.slane %v2372, 1
        %v2597 = vrot.slane %v2373, 1
        %v2598 = vsel %vm1424, %v2596, %v2597
        %v2599 = vrot.slane %v2374, 1
        %v2600 = vsel %vm1424, %v2597, %v2599
        %v2601 = vrot.slane %v2375, 1
        %v2602 = vrot.slane %v2376, 1
        %v2603 = vsel %vm1424, %v2601, %v2602
        %v2604 = vrot.slane %v2377, 1
        %v2605 = vsel %vm1424, %v2602, %v2604
        %v2606 = vrot.slane %v2378, 1
        %v2607 = vrot.slane %v2379, 1
        %v2608 = vsel %vm1424, %v2606, %v2607
        %v2609 = vrot.slane %v2380, 1
        %v2610 = vsel %vm1424, %v2607, %v2609
        %v2611 = vrot.slane %v2381, 1
        %v2612 = vrot.slane %v2382, 1
        %v2613 = vsel %vm1424, %v2611, %v2612
        %v2614 = vrot.slane %v2383, 1
        %v2615 = vsel %vm1424, %v2612, %v2614
        %v2616 = vrot.slane %v2384, 1
        %v2617 = vrot.slane %v2385, 1
        %v2618 = vsel %vm1424, %v2616, %v2617
        %v2619 = vrot.slane %v2386, 1
        %v2620 = vsel %vm1424, %v2617, %v2619
        %v2621 = vrot.slane %v2387, 1
        %v2622 = vrot.slane %v2388, 1
        %v2623 = vsel %vm1424, %v2621, %v2622
        %v2624 = vrot.slane %v2389, 1
        %v2625 = vsel %vm1424, %v2622, %v2624
        %v2626 = vrot.slane %v2390, 1
        %v2627 = vrot.slane %v2391, 1
        %v2628 = vsel %vm1424, %v2626, %v2627
        %v2629 = vrot.slane %v2392, 1
        %v2630 = vsel %vm1424, %v2627, %v2629
        %v2631 = vrot.slane %v2393, 1
        %v2632 = vrot.slane %v2394, 1
        %v2633 = vsel %vm1424, %v2631, %v2632
        %v2634 = vrot.slane %v2395, 1
        %v2635 = vsel %vm1424, %v2632, %v2634
        %v2636 = vrot.slane %v2396, 1
        %v2637 = vrot.slane %v2397, 1
        %v2638 = vsel %vm1424, %v2636, %v2637
        %v2639 = vrot.slane %v2398, 1
        %v2640 = vsel %vm1424, %v2637, %v2639
        %v2641 = vrot.slane %v2399, 1
        %v2642 = vrot.slane %v2400, 1
        %v2643 = vsel %vm1424, %v2641, %v2642
        %v2644 = vrot.slane %v2401, 1
        %v2645 = vsel %vm1424, %v2642, %v2644
        %v2646 = vrot.slane %v2402, 1
        %v2647 = vrot.slane %v2403, 1
        %v2648 = vsel %vm1424, %v2646, %v2647
        %v2649 = vrot.slane %v2404, 1
        %v2650 = vsel %vm1424, %v2647, %v2649
        %v2651 = vrot.slane %v2405, 1
        %v2652 = vrot.slane %v2406, 1
        %v2653 = vsel %vm1424, %v2651, %v2652
        %v2654 = vrot.slane %v2407, 1
        %v2655 = vsel %vm1424, %v2652, %v2654
        %v2656 = vrot.slane %v2408, 1
        %v2657 = vrot.slane %v2409, 1
        %v2658 = vsel %vm1424, %v2656, %v2657
        %v2659 = vrot.slane %v2410, 1
        %v2660 = vsel %vm1424, %v2657, %v2659
        %v2661 = vrot.slane %v2411, 1
        %v2662 = vrot.slane %v2412, 1
        %v2663 = vsel %vm1424, %v2661, %v2662
        %v2664 = vrot.slane %v2413, 1
        %v2665 = vsel %vm1424, %v2662, %v2664
        %v2666 = vrot.slane %v2414, 1
        %v2667 = vrot.slane %v2415, 1
        %v2668 = vsel %vm1424, %v2666, %v2667
        %v2669 = vrot.slane %v2416, 1
        %v2670 = vsel %vm1424, %v2667, %v2669
        %v2671 = vrot.slane %v2417, 1
        %v2672 = vrot.slane %v2418, 1
        %v2673 = vsel %vm1424, %v2671, %v2672
        %v2674 = vrot.slane %v2419, 1
        %v2675 = vsel %vm1424, %v2672, %v2674
        %v2740 = vadd.f32 %v2246, %v2518
        %v2741 = vadd.f32 %v2247, %v2520
        %v2742 = vadd.f32 %v2248, %v2523
        %v2743 = vadd.f32 %v2249, %v2525
        %v2744 = vadd.f32 %v2250, %v2528
        %v2745 = vadd.f32 %v2251, %v2530
        %v2746 = vadd.f32 %v2252, %v2533
        %v2747 = vadd.f32 %v2253, %v2535
        %v2748 = vadd.f32 %v2254, %v2538
        %v2749 = vadd.f32 %v2255, %v2540
        %v2750 = vadd.f32 %v2256, %v2543
        %v2751 = vadd.f32 %v2257, %v2545
        %v2752 = vadd.f32 %v2258, %v2548
        %v2753 = vadd.f32 %v2259, %v2550
        %v2754 = vadd.f32 %v2260, %v2553
        %v2755 = vadd.f32 %v2261, %v2555
        %v2756 = vadd.f32 %v2262, %v2558
        %v2757 = vadd.f32 %v2263, %v2560
        %v2758 = vadd.f32 %v2264, %v2563
        %v2759 = vadd.f32 %v2265, %v2565
        %v2760 = vadd.f32 %v2266, %v2568
        %v2761 = vadd.f32 %v2267, %v2570
        %v2762 = vadd.f32 %v2268, %v2573
        %v2763 = vadd.f32 %v2269, %v2575
        %v2764 = vadd.f32 %v2270, %v2578
        %v2765 = vadd.f32 %v2271, %v2580
        %v2766 = vadd.f32 %v2272, %v2583
        %v2767 = vadd.f32 %v2273, %v2585
        %v2768 = vadd.f32 %v2274, %v2588
        %v2769 = vadd.f32 %v2275, %v2590
        %v2770 = vadd.f32 %v2276, %v2593
        %v2771 = vadd.f32 %v2277, %v2595
        %v2772 = vadd.f32 %v2278, %v2598
        %v2773 = vadd.f32 %v2279, %v2600
        %v2774 = vadd.f32 %v2280, %v2603
        %v2775 = vadd.f32 %v2281, %v2605
        %v2776 = vadd.f32 %v2282, %v2608
        %v2777 = vadd.f32 %v2283, %v2610
        %v2778 = vadd.f32 %v2284, %v2613
        %v2779 = vadd.f32 %v2285, %v2615
        %v2780 = vadd.f32 %v2286, %v2618
        %v2781 = vadd.f32 %v2287, %v2620
        %v2782 = vadd.f32 %v2288, %v2623
        %v2783 = vadd.f32 %v2289, %v2625
        %v2784 = vadd.f32 %v2290, %v2628
        %v2785 = vadd.f32 %v2291, %v2630
        %v2786 = vadd.f32 %v2292, %v2633
        %v2787 = vadd.f32 %v2293, %v2635
        %v2788 = vadd.f32 %v2294, %v2638
        %v2789 = vadd.f32 %v2295, %v2640
        %v2790 = vadd.f32 %v2296, %v2643
        %v2791 = vadd.f32 %v2297, %v2645
        %v2792 = vadd.f32 %v2298, %v2648
        %v2793 = vadd.f32 %v2299, %v2650
        %v2794 = vadd.f32 %v2300, %v2653
        %v2795 = vadd.f32 %v2301, %v2655
        %v2796 = vadd.f32 %v2302, %v2658
        %v2797 = vadd.f32 %v2303, %v2660
        %v2798 = vadd.f32 %v2304, %v2663
        %v2799 = vadd.f32 %v2305, %v2665
        %v2800 = vadd.f32 %v2306, %v2668
        %v2801 = vadd.f32 %v2307, %v2670
        %v2802 = vadd.f32 %v2308, %v2673
        %v2803 = vadd.f32 %v2309, %v2675
        %v2804 = vlaneseq
        %v2805 = vshrl.u32 %v2804, 7
        %v2806 = vsub.s32 5, %v2805
        %v2807 = vrot.slane %v395, %v2806
        %v2808 = vmul.f32 %v695, %v2807
        %v2809 = vmul.f32 %v699, %v2807
        %v2810 = vmul.f32 %v1091, %v2807
        %v2811 = vmul.f32 %v704, %v2807
        %v2812 = vmul.f32 %v708, %v2807
        %v2813 = vmul.f32 %v1096, %v2807
        %v2814 = vmul.f32 %v713, %v2807
        %v2815 = vmul.f32 %v717, %v2807
        %v2816 = vmul.f32 %v1101, %v2807
        %v2817 = vmul.f32 %v722, %v2807
        %v2818 = vmul.f32 %v726, %v2807
        %v2819 = vmul.f32 %v1106, %v2807
        %v2820 = vmul.f32 %v731, %v2807
        %v2821 = vmul.f32 %v735, %v2807
        %v2822 = vmul.f32 %v1111, %v2807
        %v2823 = vmul.f32 %v740, %v2807
        %v2824 = vmul.f32 %v744, %v2807
        %v2825 = vmul.f32 %v1116, %v2807
        %v2826 = vmul.f32 %v749, %v2807
        %v2827 = vmul.f32 %v753, %v2807
        %v2828 = vmul.f32 %v1121, %v2807
        %v2829 = vmul.f32 %v758, %v2807
        %v2830 = vmul.f32 %v762, %v2807
        %v2831 = vmul.f32 %v1126, %v2807
        %v2832 = vmul.f32 %v767, %v2807
        %v2833 = vmul.f32 %v771, %v2807
        %v2834 = vmul.f32 %v1131, %v2807
        %v2835 = vmul.f32 %v776, %v2807
        %v2836 = vmul.f32 %v780, %v2807
        %v2837 = vmul.f32 %v1136, %v2807
        %v2838 = vmul.f32 %v785, %v2807
        %v2839 = vmul.f32 %v789, %v2807
        %v2840 = vmul.f32 %v1141, %v2807
        %v2841 = vmul.f32 %v794, %v2807
        %v2842 = vmul.f32 %v798, %v2807
        %v2843 = vmul.f32 %v1146, %v2807
        %v2844 = vmul.f32 %v803, %v2807
        %v2845 = vmul.f32 %v807, %v2807
        %v2846 = vmul.f32 %v1151, %v2807
        %v2847 = vmul.f32 %v812, %v2807
        %v2848 = vmul.f32 %v816, %v2807
        %v2849 = vmul.f32 %v1156, %v2807
        %v2850 = vmul.f32 %v821, %v2807
        %v2851 = vmul.f32 %v825, %v2807
        %v2852 = vmul.f32 %v1161, %v2807
        %v2853 = vmul.f32 %v2163, %v2807
        %v2854 = vmul.f32 %v2167, %v2807
        %v2855 = vmul.f32 %v2313, %v2807
        %v2856 = vmul.f32 %v830, %v2807
        %v2857 = vmul.f32 %v834, %v2807
        %v2858 = vmul.f32 %v1166, %v2807
        %v2859 = vmul.f32 %v839, %v2807
        %v2860 = vmul.f32 %v843, %v2807
        %v2861 = vmul.f32 %v1171, %v2807
        %v2862 = vmul.f32 %v848, %v2807
        %v2863 = vmul.f32 %v852, %v2807
        %v2864 = vmul.f32 %v1176, %v2807
        %v2865 = vmul.f32 %v857, %v2807
        %v2866 = vmul.f32 %v861, %v2807
        %v2867 = vmul.f32 %v1181, %v2807
        %v2868 = vmul.f32 %v866, %v2807
        %v2869 = vmul.f32 %v870, %v2807
        %v2870 = vmul.f32 %v1186, %v2807
        %v2871 = vmul.f32 %v875, %v2807
        %v2872 = vmul.f32 %v879, %v2807
        %v2873 = vmul.f32 %v1191, %v2807
        %v2874 = vmul.f32 %v884, %v2807
        %v2875 = vmul.f32 %v888, %v2807
        %v2876 = vmul.f32 %v1196, %v2807
        %v2877 = vmul.f32 %v893, %v2807
        %v2878 = vmul.f32 %v897, %v2807
        %v2879 = vmul.f32 %v1201, %v2807
        %v2880 = vmul.f32 %v902, %v2807
        %v2881 = vmul.f32 %v906, %v2807
        %v2882 = vmul.f32 %v1206, %v2807
        %v2883 = vmul.f32 %v911, %v2807
        %v2884 = vmul.f32 %v915, %v2807
        %v2885 = vmul.f32 %v1211, %v2807
        %v2886 = vmul.f32 %v920, %v2807
        %v2887 = vmul.f32 %v924, %v2807
        %v2888 = vmul.f32 %v1216, %v2807
        %v2889 = vmul.f32 %v929, %v2807
        %v2890 = vmul.f32 %v933, %v2807
        %v2891 = vmul.f32 %v1221, %v2807
        %v2892 = vmul.f32 %v938, %v2807
        %v2893 = vmul.f32 %v942, %v2807
        %v2894 = vmul.f32 %v1226, %v2807
        %v2895 = vmul.f32 %v947, %v2807
        %v2896 = vmul.f32 %v951, %v2807
        %v2897 = vmul.f32 %v1231, %v2807
        %v2898 = vmul.f32 %v956, %v2807
        %v2899 = vmul.f32 %v960, %v2807
        %v2900 = vmul.f32 %v1236, %v2807
        %v2901 = vmul.f32 %v2172, %v2807
        %v2902 = vmul.f32 %v2176, %v2807
        %v2903 = vmul.f32 %v2318, %v2807
        %v3000 = vrot.slane %v2808, 2
        %v3001 = vrot.slane %v2809, 2
        %v3002 = vsel %vm1885, %v3000, %v3001
        %v3003 = vrot.slane %v2810, 2
        %v3004 = vsel %vm1885, %v3001, %v3003
        %v3005 = vrot.slane %v2811, 2
        %v3006 = vrot.slane %v2812, 2
        %v3007 = vsel %vm1885, %v3005, %v3006
        %v3008 = vrot.slane %v2813, 2
        %v3009 = vsel %vm1885, %v3006, %v3008
        %v3010 = vrot.slane %v2814, 2
        %v3011 = vrot.slane %v2815, 2
        %v3012 = vsel %vm1885, %v3010, %v3011
        %v3013 = vrot.slane %v2816, 2
        %v3014 = vsel %vm1885, %v3011, %v3013
        %v3015 = vrot.slane %v2817, 2
        %v3016 = vrot.slane %v2818, 2
        %v3017 = vsel %vm1885, %v3015, %v3016
        %v3018 = vrot.slane %v2819, 2
        %v3019 = vsel %vm1885, %v3016, %v3018
        %v3020 = vrot.slane %v2820, 2
        %v3021 = vrot.slane %v2821, 2
        %v3022 = vsel %vm1885, %v3020, %v3021
        %v3023 = vrot.slane %v2822, 2
        %v3024 = vsel %vm1885, %v3021, %v3023
        %v3025 = vrot.slane %v2823, 2
        %v3026 = vrot.slane %v2824, 2
        %v3027 = vsel %vm1885, %v3025, %v3026
        %v3028 = vrot.slane %v2825, 2
        %v3029 = vsel %vm1885, %v3026, %v3028
        %v3030 = vrot.slane %v2826, 2
        %v3031 = vrot.slane %v2827, 2
        %v3032 = vsel %vm1885, %v3030, %v3031
        %v3033 = vrot.slane %v2828, 2
        %v3034 = vsel %vm1885, %v3031, %v3033
        %v3035 = vrot.slane %v2829, 2
        %v3036 = vrot.slane %v2830, 2
        %v3037 = vsel %vm1885, %v3035, %v3036
        %v3038 = vrot.slane %v2831, 2
        %v3039 = vsel %vm1885, %v3036, %v3038
        %v3040 = vrot.slane %v2832, 2
        %v3041 = vrot.slane %v2833, 2
        %v3042 = vsel %vm1885, %v3040, %v3041
        %v3043 = vrot.slane %v2834, 2
        %v3044 = vsel %vm1885, %v3041, %v3043
        %v3045 = vrot.slane %v2835, 2
        %v3046 = vrot.slane %v2836, 2
        %v3047 = vsel %vm1885, %v3045, %v3046
        %v3048 = vrot.slane %v2837, 2
        %v3049 = vsel %vm1885, %v3046, %v3048
        %v3050 = vrot.slane %v2838, 2
        %v3051 = vrot.slane %v2839, 2
        %v3052 = vsel %vm1885, %v3050, %v3051
        %v3053 = vrot.slane %v2840, 2
        %v3054 = vsel %vm1885, %v3051, %v3053
        %v3055 = vrot.slane %v2841, 2
        %v3056 = vrot.slane %v2842, 2
        %v3057 = vsel %vm1885, %v3055, %v3056
        %v3058 = vrot.slane %v2843, 2
        %v3059 = vsel %vm1885, %v3056, %v3058
        %v3060 = vrot.slane %v2844, 2
        %v3061 = vrot.slane %v2845, 2
        %v3062 = vsel %vm1885, %v3060, %v3061
        %v3063 = vrot.slane %v2846, 2
        %v3064 = vsel %vm1885, %v3061, %v3063
        %v3065 = vrot.slane %v2847, 2
        %v3066 = vrot.slane %v2848, 2
        %v3067 = vsel %vm1885, %v3065, %v3066
        %v3068 = vrot.slane %v2849, 2
        %v3069 = vsel %vm1885, %v3066, %v3068
        %v3070 = vrot.slane %v2850, 2
        %v3071 = vrot.slane %v2851, 2
        %v3072 = vsel %vm1885, %v3070, %v3071
        %v3073 = vrot.slane %v2852, 2
        %v3074 = vsel %vm1885, %v3071, %v3073
        %v3075 = vrot.slane %v2853, 2
        %v3076 = vrot.slane %v2854, 2
        %v3077 = vsel %vm1885, %v3075, %v3076
        %v3078 = vrot.slane %v2855, 2
        %v3079 = vsel %vm1885, %v3076, %v3078
        %v3080 = vrot.slane %v2856, 2
        %v3081 = vrot.slane %v2857, 2
        %v3082 = vsel %vm1885, %v3080, %v3081
        %v3083 = vrot.slane %v2858, 2
        %v3084 = vsel %vm1885, %v3081, %v3083
        %v3085 = vrot.slane %v2859, 2
        %v3086 = vrot.slane %v2860, 2
        %v3087 = vsel %vm1885, %v3085, %v3086
        %v3088 = vrot.slane %v2861, 2
        %v3089 = vsel %vm1885, %v3086, %v3088
        %v3090 = vrot.slane %v2862, 2
        %v3091 = vrot.slane %v2863, 2
        %v3092 = vsel %vm1885, %v3090, %v3091
        %v3093 = vrot.slane %v2864, 2
        %v3094 = vsel %vm1885, %v3091, %v3093
        %v3095 = vrot.slane %v2865, 2
        %v3096 = vrot.slane %v2866, 2
        %v3097 = vsel %vm1885, %v3095, %v3096
        %v3098 = vrot.slane %v2867, 2
        %v3099 = vsel %vm1885, %v3096, %v3098
        %v3100 = vrot.slane %v2868, 2
        %v3101 = vrot.slane %v2869, 2
        %v3102 = vsel %vm1885, %v3100, %v3101
        %v3103 = vrot.slane %v2870, 2
        %v3104 = vsel %vm1885, %v3101, %v3103
        %v3105 = vrot.slane %v2871, 2
        %v3106 = vrot.slane %v2872, 2
        %v3107 = vsel %vm1885, %v3105, %v3106
        %v3108 = vrot.slane %v2873, 2
        %v3109 = vsel %vm1885, %v3106, %v3108
        %v3110 = vrot.slane %v2874, 2
        %v3111 = vrot.slane %v2875, 2
        %v3112 = vsel %vm1885, %v3110, %v3111
        %v3113 = vrot.slane %v2876, 2
        %v3114 = vsel %vm1885, %v3111, %v3113
        %v3115 = vrot.slane %v2877, 2
        %v3116 = vrot.slane %v2878, 2
        %v3117 = vsel %vm1885, %v3115, %v3116
        %v3118 = vrot.slane %v2879, 2
        %v3119 = vsel %vm1885, %v3116, %v3118
        %v3120 = vrot.slane %v2880, 2
        %v3121 = vrot.slane %v2881, 2
        %v3122 = vsel %vm1885, %v3120, %v3121
        %v3123 = vrot.slane %v2882, 2
        %v3124 = vsel %vm1885, %v3121, %v3123
        %v3125 = vrot.slane %v2883, 2
        %v3126 = vrot.slane %v2884, 2
        %v3127 = vsel %vm1885, %v3125, %v3126
        %v3128 = vrot.slane %v2885, 2
        %v3129 = vsel %vm1885, %v3126, %v3128
        %v3130 = vrot.slane %v2886, 2
        %v3131 = vrot.slane %v2887, 2
        %v3132 = vsel %vm1885, %v3130, %v3131
        %v3133 = vrot.slane %v2888, 2
        %v3134 = vsel %vm1885, %v3131, %v3133
        %v3135 = vrot.slane %v2889, 2
        %v3136 = vrot.slane %v2890, 2
        %v3137 = vsel %vm1885, %v3135, %v3136
        %v3138 = vrot.slane %v2891, 2
        %v3139 = vsel %vm1885, %v3136, %v3138
        %v3140 = vrot.slane %v2892, 2
        %v3141 = vrot.slane %v2893, 2
        %v3142 = vsel %vm1885, %v3140, %v3141
        %v3143 = vrot.slane %v2894, 2
        %v3144 = vsel %vm1885, %v3141, %v3143
        %v3145 = vrot.slane %v2895, 2
        %v3146 = vrot.slane %v2896, 2
        %v3147 = vsel %vm1885, %v3145, %v3146
        %v3148 = vrot.slane %v2897, 2
        %v3149 = vsel %vm1885, %v3146, %v3148
        %v3150 = vrot.slane %v2898, 2
        %v3151 = vrot.slane %v2899, 2
        %v3152 = vsel %vm1885, %v3150, %v3151
        %v3153 = vrot.slane %v2900, 2
        %v3154 = vsel %vm1885, %v3151, %v3153
        %v3155 = vrot.slane %v2901, 2
        %v3156 = vrot.slane %v2902, 2
        %v3157 = vsel %vm1885, %v3155, %v3156
        %v3158 = vrot.slane %v2903, 2
        %v3159 = vsel %vm1885, %v3156, %v3158
        %v3224 = vadd.f32 %v2740, %v3002
        %v3225 = vadd.f32 %v2741, %v3004
        %v3226 = vadd.f32 %v2742, %v3007
        %v3227 = vadd.f32 %v2743, %v3009
        %v3228 = vadd.f32 %v2744, %v3012
        %v3229 = vadd.f32 %v2745, %v3014
        %v3230 = vadd.f32 %v2746, %v3017
        %v3231 = vadd.f32 %v2747, %v3019
        %v3232 = vadd.f32 %v2748, %v3022
        %v3233 = vadd.f32 %v2749, %v3024
        %v3234 = vadd.f32 %v2750, %v3027
        %v3235 = vadd.f32 %v2751, %v3029
        %v3236 = vadd.f32 %v2752, %v3032
        %v3237 = vadd.f32 %v2753, %v3034
        %v3238 = vadd.f32 %v2754, %v3037
        %v3239 = vadd.f32 %v2755, %v3039
        %v3240 = vadd.f32 %v2756, %v3042
        %v3241 = vadd.f32 %v2757, %v3044
        %v3242 = vadd.f32 %v2758, %v3047
        %v3243 = vadd.f32 %v2759, %v3049
        %v3244 = vadd.f32 %v2760, %v3052
        %v3245 = vadd.f32 %v2761, %v3054
        %v3246 = vadd.f32 %v2762, %v3057
        %v3247 = vadd.f32 %v2763, %v3059
        %v3248 = vadd.f32 %v2764, %v3062
        %v3249 = vadd.f32 %v2765, %v3064
        %v3250 = vadd.f32 %v2766, %v3067
        %v3251 = vadd.f32 %v2767, %v3069
        %v3252 = vadd.f32 %v2768, %v3072
        %v3253 = vadd.f32 %v2769, %v3074
        %v3254 = vadd.f32 %v2770, %v3077
        %v3255 = vadd.f32 %v2771, %v3079
        %v3256 = vadd.f32 %v2772, %v3082
        %v3257 = vadd.f32 %v2773, %v3084
        %v3258 = vadd.f32 %v2774, %v3087
        %v3259 = vadd.f32 %v2775, %v3089
        %v3260 = vadd.f32 %v2776, %v3092
        %v3261 = vadd.f32 %v2777, %v3094
        %v3262 = vadd.f32 %v2778, %v3097
        %v3263 = vadd.f32 %v2779, %v3099
        %v3264 = vadd.f32 %v2780, %v3102
        %v3265 = vadd.f32 %v2781, %v3104
        %v3266 = vadd.f32 %v2782, %v3107
        %v3267 = vadd.f32 %v2783, %v3109
        %v3268 = vadd.f32 %v2784, %v3112
        %v3269 = vadd.f32 %v2785, %v3114
        %v3270 = vadd.f32 %v2786, %v3117
        %v3271 = vadd.f32 %v2787, %v3119
        %v3272 = vadd.f32 %v2788, %v3122
        %v3273 = vadd.f32 %v2789, %v3124
        %v3274 = vadd.f32 %v2790, %v3127
        %v3275 = vadd.f32 %v2791, %v3129
        %v3276 = vadd.f32 %v2792, %v3132
        %v3277 = vadd.f32 %v2793, %v3134
        %v3278 = vadd.f32 %v2794, %v3137
        %v3279 = vadd.f32 %v2795, %v3139
        %v3280 = vadd.f32 %v2796, %v3142
        %v3281 = vadd.f32 %v2797, %v3144
        %v3282 = vadd.f32 %v2798, %v3147
        %v3283 = vadd.f32 %v2799, %v3149
        %v3284 = vadd.f32 %v2800, %v3152
        %v3285 = vadd.f32 %v2801, %v3154
        %v3286 = vadd.f32 %v2802, %v3157
        %v3287 = vadd.f32 %v2803, %v3159
        %v3288 = vlaneseq
        %v3289 = vshrl.u32 %v3288, 7
        %v3290 = vsub.s32 6, %v3289
        %v3291 = vrot.slane %v395, %v3290
        %v3292 = vmul.f32 %v704, %v3291
        %v3293 = vmul.f32 %v708, %v3291
        %v3294 = vmul.f32 %v713, %v3291
        %v3295 = vmul.f32 %v717, %v3291
        %v3296 = vmul.f32 %v722, %v3291
        %v3297 = vmul.f32 %v726, %v3291
        %v3298 = vmul.f32 %v731, %v3291
        %v3299 = vmul.f32 %v735, %v3291
        %v3300 = vmul.f32 %v740, %v3291
        %v3301 = vmul.f32 %v744, %v3291
        %v3302 = vmul.f32 %v749, %v3291
        %v3303 = vmul.f32 %v753, %v3291
        %v3304 = vmul.f32 %v758, %v3291
        %v3305 = vmul.f32 %v762, %v3291
        %v3306 = vmul.f32 %v767, %v3291
        %v3307 = vmul.f32 %v771, %v3291
        %v3308 = vmul.f32 %v776, %v3291
        %v3309 = vmul.f32 %v780, %v3291
        %v3310 = vmul.f32 %v785, %v3291
        %v3311 = vmul.f32 %v789, %v3291
        %v3312 = vmul.f32 %v794, %v3291
        %v3313 = vmul.f32 %v798, %v3291
        %v3314 = vmul.f32 %v803, %v3291
        %v3315 = vmul.f32 %v807, %v3291
        %v3316 = vmul.f32 %v812, %v3291
        %v3317 = vmul.f32 %v816, %v3291
        %v3318 = vmul.f32 %v821, %v3291
        %v3319 = vmul.f32 %v825, %v3291
        %v3320 = vmul.f32 %v2163, %v3291
        %v3321 = vmul.f32 %v2167, %v3291
        %v3322 = vmul.f32 %v690, %v3291
        %v3323 = vmul.f32 %v839, %v3291
        %v3324 = vmul.f32 %v843, %v3291
        %v3325 = vmul.f32 %v848, %v3291
        %v3326 = vmul.f32 %v852, %v3291
        %v3327 = vmul.f32 %v857, %v3291
        %v3328 = vmul.f32 %v861, %v3291
        %v3329 = vmul.f32 %v866, %v3291
        %v3330 = vmul.f32 %v870, %v3291
        %v3331 = vmul.f32 %v875, %v3291
        %v3332 = vmul.f32 %v879, %v3291
        %v3333 = vmul.f32 %v884, %v3291
        %v3334 = vmul.f32 %v888, %v3291
        %v3335 = vmul.f32 %v893, %v3291
        %v3336 = vmul.f32 %v897, %v3291
        %v3337 = vmul.f32 %v902, %v3291
        %v3338 = vmul.f32 %v906, %v3291
        %v3339 = vmul.f32 %v911, %v3291
        %v3340 = vmul.f32 %v915, %v3291
        %v3341 = vmul.f32 %v920, %v3291
        %v3342 = vmul.f32 %v924, %v3291
        %v3343 = vmul.f32 %v929, %v3291
        %v3344 = vmul.f32 %v933, %v3291
        %v3345 = vmul.f32 %v938, %v3291
        %v3346 = vmul.f32 %v942, %v3291
        %v3347 = vmul.f32 %v947, %v3291
        %v3348 = vmul.f32 %v951, %v3291
        %v3349 = vmul.f32 %v956, %v3291
        %v3350 = vmul.f32 %v960, %v3291
        %v3351 = vmul.f32 %v2172, %v3291
        %v3352 = vmul.f32 %v2176, %v3291
        %v3353 = vadd.f32 %v3224, %v3292
        %v3354 = vadd.f32 %v3225, %v3293
        %v3355 = vadd.f32 %v3226, %v3294
        %v3356 = vadd.f32 %v3227, %v3295
        %v3357 = vadd.f32 %v3228, %v3296
        %v3358 = vadd.f32 %v3229, %v3297
        %v3359 = vadd.f32 %v3230, %v3298
        %v3360 = vadd.f32 %v3231, %v3299
        %v3361 = vadd.f32 %v3232, %v3300
        %v3362 = vadd.f32 %v3233, %v3301
        %v3363 = vadd.f32 %v3234, %v3302
        %v3364 = vadd.f32 %v3235, %v3303
        %v3365 = vadd.f32 %v3236, %v3304
        %v3366 = vadd.f32 %v3237, %v3305
        %v3367 = vadd.f32 %v3238, %v3306
        %v3368 = vadd.f32 %v3239, %v3307
        %v3369 = vadd.f32 %v3240, %v3308
        %v3370 = vadd.f32 %v3241, %v3309
        %v3371 = vadd.f32 %v3242, %v3310
        %v3372 = vadd.f32 %v3243, %v3311
        %v3373 = vadd.f32 %v3244, %v3312
        %v3374 = vadd.f32 %v3245, %v3313
        %v3375 = vadd.f32 %v3246, %v3314
        %v3376 = vadd.f32 %v3247, %v3315
        %v3377 = vadd.f32 %v3248, %v3316
        %v3378 = vadd.f32 %v3249, %v3317
        %v3379 = vadd.f32 %v3250, %v3318
        %v3380 = vadd.f32 %v3251, %v3319
        %v3381 = vadd.f32 %v3252, %v3320
        %v3382 = vadd.f32 %v3253, %v3321
        %v3383 = vadd.f32 %v3254, %v3322
        %v3384 = vadd.f32 %v3255, %v3322
        %v3385 = vadd.f32 %v3256, %v3323
        %v3386 = vadd.f32 %v3257, %v3324
        %v3387 = vadd.f32 %v3258, %v3325
        %v3388 = vadd.f32 %v3259, %v3326
        %v3389 = vadd.f32 %v3260, %v3327
        %v3390 = vadd.f32 %v3261, %v3328
        %v3391 = vadd.f32 %v3262, %v3329
        %v3392 = vadd.f32 %v3263, %v3330
        %v3393 = vadd.f32 %v3264, %v3331
        %v3394 = vadd.f32 %v3265, %v3332
        %v3395 = vadd.f32 %v3266, %v3333
        %v3396 = vadd.f32 %v3267, %v3334
        %v3397 = vadd.f32 %v3268, %v3335
        %v3398 = vadd.f32 %v3269, %v3336
        %v3399 = vadd.f32 %v3270, %v3337
        %v3400 = vadd.f32 %v3271, %v3338
        %v3401 = vadd.f32 %v3272, %v3339
        %v3402 = vadd.f32 %v3273, %v3340
        %v3403 = vadd.f32 %v3274, %v3341
        %v3404 = vadd.f32 %v3275, %v3342
        %v3405 = vadd.f32 %v3276, %v3343
        %v3406 = vadd.f32 %v3277, %v3344
        %v3407 = vadd.f32 %v3278, %v3345
        %v3408 = vadd.f32 %v3279, %v3346
        %v3409 = vadd.f32 %v3280, %v3347
        %v3410 = vadd.f32 %v3281, %v3348
        %v3411 = vadd.f32 %v3282, %v3349
        %v3412 = vadd.f32 %v3283, %v3350
        %v3413 = vadd.f32 %v3284, %v3351
        %v3414 = vadd.f32 %v3285, %v3352
        %v3415 = vadd.f32 %v3286, %v3322
        %v3416 = vadd.f32 %v3287, %v3322
        %v3417 = vlaneseq
        %v3418 = vshrl.u32 %v3417, 7
        %v3419 = vsub.s32 7, %v3418
        %v3420 = vrot.slane %v395, %v3419
        %v3421 = vmul.f32 %v704, %v3420
        %v3422 = vmul.f32 %v708, %v3420
        %v3423 = vmul.f32 %v1096, %v3420
        %v3424 = vmul.f32 %v713, %v3420
        %v3425 = vmul.f32 %v717, %v3420
        %v3426 = vmul.f32 %v1101, %v3420
        %v3427 = vmul.f32 %v722, %v3420
        %v3428 = vmul.f32 %v726, %v3420
        %v3429 = vmul.f32 %v1106, %v3420
        %v3430 = vmul.f32 %v731, %v3420
        %v3431 = vmul.f32 %v735, %v3420
        %v3432 = vmul.f32 %v1111, %v3420
        %v3433 = vmul.f32 %v740, %v3420
        %v3434 = vmul.f32 %v744, %v3420
        %v3435 = vmul.f32 %v1116, %v3420
        %v3436 = vmul.f32 %v749, %v3420
        %v3437 = vmul.f32 %v753, %v3420
        %v3438 = vmul.f32 %v1121, %v3420
        %v3439 = vmul.f32 %v758, %v3420
        %v3440 = vmul.f32 %v762, %v3420
        %v3441 = vmul.f32 %v1126, %v3420
        %v3442 = vmul.f32 %v767, %v3420
        %v3443 = vmul.f32 %v771, %v3420
        %v3444 = vmul.f32 %v1131, %v3420
        %v3445 = vmul.f32 %v776, %v3420
        %v3446 = vmul.f32 %v780, %v3420
        %v3447 = vmul.f32 %v1136, %v3420
        %v3448 = vmul.f32 %v785, %v3420
        %v3449 = vmul.f32 %v789, %v3420
        %v3450 = vmul.f32 %v1141, %v3420
        %v3451 = vmul.f32 %v794, %v3420
        %v3452 = vmul.f32 %v798, %v3420
        %v3453 = vmul.f32 %v1146, %v3420
        %v3454 = vmul.f32 %v803, %v3420
        %v3455 = vmul.f32 %v807, %v3420
        %v3456 = vmul.f32 %v1151, %v3420
        %v3457 = vmul.f32 %v812, %v3420
        %v3458 = vmul.f32 %v816, %v3420
        %v3459 = vmul.f32 %v1156, %v3420
        %v3460 = vmul.f32 %v821, %v3420
        %v3461 = vmul.f32 %v825, %v3420
        %v3462 = vmul.f32 %v1161, %v3420
        %v3463 = vmul.f32 %v2163, %v3420
        %v3464 = vmul.f32 %v2167, %v3420
        %v3465 = vmul.f32 %v2313, %v3420
        %v3466 = vmul.f32 %v690, %v3420
        %v3467 = vmul.f32 %v839, %v3420
        %v3468 = vmul.f32 %v843, %v3420
        %v3469 = vmul.f32 %v1171, %v3420
        %v3470 = vmul.f32 %v848, %v3420
        %v3471 = vmul.f32 %v852, %v3420
        %v3472 = vmul.f32 %v1176, %v3420
        %v3473 = vmul.f32 %v857, %v3420
        %v3474 = vmul.f32 %v861, %v3420
        %v3475 = vmul.f32 %v1181, %v3420
        %v3476 = vmul.f32 %v866, %v3420
        %v3477 = vmul.f32 %v870, %v3420
        %v3478 = vmul.f32 %v1186, %v3420
        %v3479 = vmul.f32 %v875, %v3420
        %v3480 = vmul.f32 %v879, %v3420
        %v3481 = vmul.f32 %v1191, %v3420
        %v3482 = vmul.f32 %v884, %v3420
        %v3483 = vmul.f32 %v888, %v3420
        %v3484 = vmul.f32 %v1196, %v3420
        %v3485 = vmul.f32 %v893, %v3420
        %v3486 = vmul.f32 %v897, %v3420
        %v3487 = vmul.f32 %v1201, %v3420
        %v3488 = vmul.f32 %v902, %v3420
        %v3489 = vmul.f32 %v906, %v3420
        %v3490 = vmul.f32 %v1206, %v3420
        %v3491 = vmul.f32 %v911, %v3420
        %v3492 = vmul.f32 %v915, %v3420
        %v3493 = vmul.f32 %v1211, %v3420
        %v3494 = vmul.f32 %v920, %v3420
        %v3495 = vmul.f32 %v924, %v3420
        %v3496 = vmul.f32 %v1216, %v3420
        %v3497 = vmul.f32 %v929, %v3420
        %v3498 = vmul.f32 %v933, %v3420
        %v3499 = vmul.f32 %v1221, %v3420
        %v3500 = vmul.f32 %v938, %v3420
        %v3501 = vmul.f32 %v942, %v3420
        %v3502 = vmul.f32 %v1226, %v3420
        %v3503 = vmul.f32 %v947, %v3420
        %v3504 = vmul.f32 %v951, %v3420
        %v3505 = vmul.f32 %v1231, %v3420
        %v3506 = vmul.f32 %v956, %v3420
        %v3507 = vmul.f32 %v960, %v3420
        %v3508 = vmul.f32 %v1236, %v3420
        %v3509 = vmul.f32 %v2172, %v3420
        %v3510 = vmul.f32 %v2176, %v3420
        %v3511 = vmul.f32 %v2318, %v3420
        %v3603 = vrot.slane %v3421, 1
        %v3604 = vrot.slane %v3422, 1
        %v3605 = vsel %vm1424, %v3603, %v3604
        %v3606 = vrot.slane %v3423, 1
        %v3607 = vsel %vm1424, %v3604, %v3606
        %v3608 = vrot.slane %v3424, 1
        %v3609 = vrot.slane %v3425, 1
        %v3610 = vsel %vm1424, %v3608, %v3609
        %v3611 = vrot.slane %v3426, 1
        %v3612 = vsel %vm1424, %v3609, %v3611
        %v3613 = vrot.slane %v3427, 1
        %v3614 = vrot.slane %v3428, 1
        %v3615 = vsel %vm1424, %v3613, %v3614
        %v3616 = vrot.slane %v3429, 1
        %v3617 = vsel %vm1424, %v3614, %v3616
        %v3618 = vrot.slane %v3430, 1
        %v3619 = vrot.slane %v3431, 1
        %v3620 = vsel %vm1424, %v3618, %v3619
        %v3621 = vrot.slane %v3432, 1
        %v3622 = vsel %vm1424, %v3619, %v3621
        %v3623 = vrot.slane %v3433, 1
        %v3624 = vrot.slane %v3434, 1
        %v3625 = vsel %vm1424, %v3623, %v3624
        %v3626 = vrot.slane %v3435, 1
        %v3627 = vsel %vm1424, %v3624, %v3626
        %v3628 = vrot.slane %v3436, 1
        %v3629 = vrot.slane %v3437, 1
        %v3630 = vsel %vm1424, %v3628, %v3629
        %v3631 = vrot.slane %v3438, 1
        %v3632 = vsel %vm1424, %v3629, %v3631
        %v3633 = vrot.slane %v3439, 1
        %v3634 = vrot.slane %v3440, 1
        %v3635 = vsel %vm1424, %v3633, %v3634
        %v3636 = vrot.slane %v3441, 1
        %v3637 = vsel %vm1424, %v3634, %v3636
        %v3638 = vrot.slane %v3442, 1
        %v3639 = vrot.slane %v3443, 1
        %v3640 = vsel %vm1424, %v3638, %v3639
        %v3641 = vrot.slane %v3444, 1
        %v3642 = vsel %vm1424, %v3639, %v3641
        %v3643 = vrot.slane %v3445, 1
        %v3644 = vrot.slane %v3446, 1
        %v3645 = vsel %vm1424, %v3643, %v3644
        %v3646 = vrot.slane %v3447, 1
        %v3647 = vsel %vm1424, %v3644, %v3646
        %v3648 = vrot.slane %v3448, 1
        %v3649 = vrot.slane %v3449, 1
        %v3650 = vsel %vm1424, %v3648, %v3649
        %v3651 = vrot.slane %v3450, 1
        %v3652 = vsel %vm1424, %v3649, %v3651
        %v3653 = vrot.slane %v3451, 1
        %v3654 = vrot.slane %v3452, 1
        %v3655 = vsel %vm1424, %v3653, %v3654
        %v3656 = vrot.slane %v3453, 1
        %v3657 = vsel %vm1424, %v3654, %v3656
        %v3658 = vrot.slane %v3454, 1
        %v3659 = vrot.slane %v3455, 1
        %v3660 = vsel %vm1424, %v3658, %v3659
        %v3661 = vrot.slane %v3456, 1
        %v3662 = vsel %vm1424, %v3659, %v3661
        %v3663 = vrot.slane %v3457, 1
        %v3664 = vrot.slane %v3458, 1
        %v3665 = vsel %vm1424, %v3663, %v3664
        %v3666 = vrot.slane %v3459, 1
        %v3667 = vsel %vm1424, %v3664, %v3666
        %v3668 = vrot.slane %v3460, 1
        %v3669 = vrot.slane %v3461, 1
        %v3670 = vsel %vm1424, %v3668, %v3669
        %v3671 = vrot.slane %v3462, 1
        %v3672 = vsel %vm1424, %v3669, %v3671
        %v3673 = vrot.slane %v3463, 1
        %v3674 = vrot.slane %v3464, 1
        %v3675 = vsel %vm1424, %v3673, %v3674
        %v3676 = vrot.slane %v3465, 1
        %v3677 = vsel %vm1424, %v3674, %v3676
        %v3678 = vrot.slane %v3466, 1
        %v3679 = vsel %vm1424, %v3678, %v3678
        %v3680 = vrot.slane %v3467, 1
        %v3681 = vrot.slane %v3468, 1
        %v3682 = vsel %vm1424, %v3680, %v3681
        %v3683 = vrot.slane %v3469, 1
        %v3684 = vsel %vm1424, %v3681, %v3683
        %v3685 = vrot.slane %v3470, 1
        %v3686 = vrot.slane %v3471, 1
        %v3687 = vsel %vm1424, %v3685, %v3686
        %v3688 = vrot.slane %v3472, 1
        %v3689 = vsel %vm1424, %v3686, %v3688
        %v3690 = vrot.slane %v3473, 1
        %v3691 = vrot.slane %v3474, 1
        %v3692 = vsel %vm1424, %v3690, %v3691
        %v3693 = vrot.slane %v3475, 1
        %v3694 = vsel %vm1424, %v3691, %v3693
        %v3695 = vrot.slane %v3476, 1
        %v3696 = vrot.slane %v3477, 1
        %v3697 = vsel %vm1424, %v3695, %v3696
        %v3698 = vrot.slane %v3478, 1
        %v3699 = vsel %vm1424, %v3696, %v3698
        %v3700 = vrot.slane %v3479, 1
        %v3701 = vrot.slane %v3480, 1
        %v3702 = vsel %vm1424, %v3700, %v3701
        %v3703 = vrot.slane %v3481, 1
        %v3704 = vsel %vm1424, %v3701, %v3703
        %v3705 = vrot.slane %v3482, 1
        %v3706 = vrot.slane %v3483, 1
        %v3707 = vsel %vm1424, %v3705, %v3706
        %v3708 = vrot.slane %v3484, 1
        %v3709 = vsel %vm1424, %v3706, %v3708
        %v3710 = vrot.slane %v3485, 1
        %v3711 = vrot.slane %v3486, 1
        %v3712 = vsel %vm1424, %v3710, %v3711
        %v3713 = vrot.slane %v3487, 1
        %v3714 = vsel %vm1424, %v3711, %v3713
        %v3715 = vrot.slane %v3488, 1
        %v3716 = vrot.slane %v3489, 1
        %v3717 = vsel %vm1424, %v3715, %v3716
        %v3718 = vrot.slane %v3490, 1
        %v3719 = vsel %vm1424, %v3716, %v3718
        %v3720 = vrot.slane %v3491, 1
        %v3721 = vrot.slane %v3492, 1
        %v3722 = vsel %vm1424, %v3720, %v3721
        %v3723 = vrot.slane %v3493, 1
        %v3724 = vsel %vm1424, %v3721, %v3723
        %v3725 = vrot.slane %v3494, 1
        %v3726 = vrot.slane %v3495, 1
        %v3727 = vsel %vm1424, %v3725, %v3726
        %v3728 = vrot.slane %v3496, 1
        %v3729 = vsel %vm1424, %v3726, %v3728
        %v3730 = vrot.slane %v3497, 1
        %v3731 = vrot.slane %v3498, 1
        %v3732 = vsel %vm1424, %v3730, %v3731
        %v3733 = vrot.slane %v3499, 1
        %v3734 = vsel %vm1424, %v3731, %v3733
        %v3735 = vrot.slane %v3500, 1
        %v3736 = vrot.slane %v3501, 1
        %v3737 = vsel %vm1424, %v3735, %v3736
        %v3738 = vrot.slane %v3502, 1
        %v3739 = vsel %vm1424, %v3736, %v3738
        %v3740 = vrot.slane %v3503, 1
        %v3741 = vrot.slane %v3504, 1
        %v3742 = vsel %vm1424, %v3740, %v3741
        %v3743 = vrot.slane %v3505, 1
        %v3744 = vsel %vm1424, %v3741, %v3743
        %v3745 = vrot.slane %v3506, 1
        %v3746 = vrot.slane %v3507, 1
        %v3747 = vsel %vm1424, %v3745, %v3746
        %v3748 = vrot.slane %v3508, 1
        %v3749 = vsel %vm1424, %v3746, %v3748
        %v3750 = vrot.slane %v3509, 1
        %v3751 = vrot.slane %v3510, 1
        %v3752 = vsel %vm1424, %v3750, %v3751
        %v3753 = vrot.slane %v3511, 1
        %v3754 = vsel %vm1424, %v3751, %v3753
        %v3816 = vadd.f32 %v3353, %v3605
        %v3817 = vadd.f32 %v3354, %v3607
        %v3818 = vadd.f32 %v3355, %v3610
        %v3819 = vadd.f32 %v3356, %v3612
        %v3820 = vadd.f32 %v3357, %v3615
        %v3821 = vadd.f32 %v3358, %v3617
        %v3822 = vadd.f32 %v3359, %v3620
        %v3823 = vadd.f32 %v3360, %v3622
        %v3824 = vadd.f32 %v3361, %v3625
        %v3825 = vadd.f32 %v3362, %v3627
        %v3826 = vadd.f32 %v3363, %v3630
        %v3827 = vadd.f32 %v3364, %v3632
        %v3828 = vadd.f32 %v3365, %v3635
        %v3829 = vadd.f32 %v3366, %v3637
        %v3830 = vadd.f32 %v3367, %v3640
        %v3831 = vadd.f32 %v3368, %v3642
        %v3832 = vadd.f32 %v3369, %v3645
        %v3833 = vadd.f32 %v3370, %v3647
        %v3834 = vadd.f32 %v3371, %v3650
        %v3835 = vadd.f32 %v3372, %v3652
        %v3836 = vadd.f32 %v3373, %v3655
        %v3837 = vadd.f32 %v3374, %v3657
        %v3838 = vadd.f32 %v3375, %v3660
        %v3839 = vadd.f32 %v3376, %v3662
        %v3840 = vadd.f32 %v3377, %v3665
        %v3841 = vadd.f32 %v3378, %v3667
        %v3842 = vadd.f32 %v3379, %v3670
        %v3843 = vadd.f32 %v3380, %v3672
        %v3844 = vadd.f32 %v3381, %v3675
        %v3845 = vadd.f32 %v3382, %v3677
        %v3846 = vadd.f32 %v3383, %v3679
        %v3847 = vadd.f32 %v3384, %v3679
        %v3848 = vadd.f32 %v3385, %v3682
        %v3849 = vadd.f32 %v3386, %v3684
        %v3850 = vadd.f32 %v3387, %v3687
        %v3851 = vadd.f32 %v3388, %v3689
        %v3852 = vadd.f32 %v3389, %v3692
        %v3853 = vadd.f32 %v3390, %v3694
        %v3854 = vadd.f32 %v3391, %v3697
        %v3855 = vadd.f32 %v3392, %v3699
        %v3856 = vadd.f32 %v3393, %v3702
        %v3857 = vadd.f32 %v3394, %v3704
        %v3858 = vadd.f32 %v3395, %v3707
        %v3859 = vadd.f32 %v3396, %v3709
        %v3860 = vadd.f32 %v3397, %v3712
        %v3861 = vadd.f32 %v3398, %v3714
        %v3862 = vadd.f32 %v3399, %v3717
        %v3863 = vadd.f32 %v3400, %v3719
        %v3864 = vadd.f32 %v3401, %v3722
        %v3865 = vadd.f32 %v3402, %v3724
        %v3866 = vadd.f32 %v3403, %v3727
        %v3867 = vadd.f32 %v3404, %v3729
        %v3868 = vadd.f32 %v3405, %v3732
        %v3869 = vadd.f32 %v3406, %v3734
        %v3870 = vadd.f32 %v3407, %v3737
        %v3871 = vadd.f32 %v3408, %v3739
        %v3872 = vadd.f32 %v3409, %v3742
        %v3873 = vadd.f32 %v3410, %v3744
        %v3874 = vadd.f32 %v3411, %v3747
        %v3875 = vadd.f32 %v3412, %v3749
        %v3876 = vadd.f32 %v3413, %v3752
        %v3877 = vadd.f32 %v3414, %v3754
        %v3878 = vadd.f32 %v3415, %v3679
        %v3879 = vadd.f32 %v3416, %v3679
        %v3880 = vlaneseq
        %v3881 = vshrl.u32 %v3880, 7
        %v3882 = vsub.s32 0, %v3881
        %v3883 = vrot.slane %v396, %v3882
        %v3884 = vmul.f32 %v704, %v3883
        %v3885 = vmul.f32 %v708, %v3883
        %v3886 = vmul.f32 %v1096, %v3883
        %v3887 = vmul.f32 %v713, %v3883
        %v3888 = vmul.f32 %v717, %v3883
        %v3889 = vmul.f32 %v1101, %v3883
        %v3890 = vmul.f32 %v722, %v3883
        %v3891 = vmul.f32 %v726, %v3883
        %v3892 = vmul.f32 %v1106, %v3883
        %v3893 = vmul.f32 %v731, %v3883
        %v3894 = vmul.f32 %v735, %v3883
        %v3895 = vmul.f32 %v1111, %v3883
        %v3896 = vmul.f32 %v740, %v3883
        %v3897 = vmul.f32 %v744, %v3883
        %v3898 = vmul.f32 %v1116, %v3883
        %v3899 = vmul.f32 %v749, %v3883
        %v3900 = vmul.f32 %v753, %v3883
        %v3901 = vmul.f32 %v1121, %v3883
        %v3902 = vmul.f32 %v758, %v3883
        %v3903 = vmul.f32 %v762, %v3883
        %v3904 = vmul.f32 %v1126, %v3883
        %v3905 = vmul.f32 %v767, %v3883
        %v3906 = vmul.f32 %v771, %v3883
        %v3907 = vmul.f32 %v1131, %v3883
        %v3908 = vmul.f32 %v776, %v3883
        %v3909 = vmul.f32 %v780, %v3883
        %v3910 = vmul.f32 %v1136, %v3883
        %v3911 = vmul.f32 %v785, %v3883
        %v3912 = vmul.f32 %v789, %v3883
        %v3913 = vmul.f32 %v1141, %v3883
        %v3914 = vmul.f32 %v794, %v3883
        %v3915 = vmul.f32 %v798, %v3883
        %v3916 = vmul.f32 %v1146, %v3883
        %v3917 = vmul.f32 %v803, %v3883
        %v3918 = vmul.f32 %v807, %v3883
        %v3919 = vmul.f32 %v1151, %v3883
        %v3920 = vmul.f32 %v812, %v3883
        %v3921 = vmul.f32 %v816, %v3883
        %v3922 = vmul.f32 %v1156, %v3883
        %v3923 = vmul.f32 %v821, %v3883
        %v3924 = vmul.f32 %v825, %v3883
        %v3925 = vmul.f32 %v1161, %v3883
        %v3926 = vmul.f32 %v2163, %v3883
        %v3927 = vmul.f32 %v2167, %v3883
        %v3928 = vmul.f32 %v2313, %v3883
        %v3929 = vmul.f32 %v690, %v3883
        %v3930 = vmul.f32 %v839, %v3883
        %v3931 = vmul.f32 %v843, %v3883
        %v3932 = vmul.f32 %v1171, %v3883
        %v3933 = vmul.f32 %v848, %v3883
        %v3934 = vmul.f32 %v852, %v3883
        %v3935 = vmul.f32 %v1176, %v3883
        %v3936 = vmul.f32 %v857, %v3883
        %v3937 = vmul.f32 %v861, %v3883
        %v3938 = vmul.f32 %v1181, %v3883
        %v3939 = vmul.f32 %v866, %v3883
        %v3940 = vmul.f32 %v870, %v3883
        %v3941 = vmul.f32 %v1186, %v3883
        %v3942 = vmul.f32 %v875, %v3883
        %v3943 = vmul.f32 %v879, %v3883
        %v3944 = vmul.f32 %v1191, %v3883
        %v3945 = vmul.f32 %v884, %v3883
        %v3946 = vmul.f32 %v888, %v3883
        %v3947 = vmul.f32 %v1196, %v3883
        %v3948 = vmul.f32 %v893, %v3883
        %v3949 = vmul.f32 %v897, %v3883
        %v3950 = vmul.f32 %v1201, %v3883
        %v3951 = vmul.f32 %v902, %v3883
        %v3952 = vmul.f32 %v906, %v3883
        %v3953 = vmul.f32 %v1206, %v3883
        %v3954 = vmul.f32 %v911, %v3883
        %v3955 = vmul.f32 %v915, %v3883
        %v3956 = vmul.f32 %v1211, %v3883
        %v3957 = vmul.f32 %v920, %v3883
        %v3958 = vmul.f32 %v924, %v3883
        %v3959 = vmul.f32 %v1216, %v3883
        %v3960 = vmul.f32 %v929, %v3883
        %v3961 = vmul.f32 %v933, %v3883
        %v3962 = vmul.f32 %v1221, %v3883
        %v3963 = vmul.f32 %v938, %v3883
        %v3964 = vmul.f32 %v942, %v3883
        %v3965 = vmul.f32 %v1226, %v3883
        %v3966 = vmul.f32 %v947, %v3883
        %v3967 = vmul.f32 %v951, %v3883
        %v3968 = vmul.f32 %v1231, %v3883
        %v3969 = vmul.f32 %v956, %v3883
        %v3970 = vmul.f32 %v960, %v3883
        %v3971 = vmul.f32 %v1236, %v3883
        %v3972 = vmul.f32 %v2172, %v3883
        %v3973 = vmul.f32 %v2176, %v3883
        %v3974 = vmul.f32 %v2318, %v3883
        %v4066 = vrot.slane %v3884, 2
        %v4067 = vrot.slane %v3885, 2
        %v4068 = vsel %vm1885, %v4066, %v4067
        %v4069 = vrot.slane %v3886, 2
        %v4070 = vsel %vm1885, %v4067, %v4069
        %v4071 = vrot.slane %v3887, 2
        %v4072 = vrot.slane %v3888, 2
        %v4073 = vsel %vm1885, %v4071, %v4072
        %v4074 = vrot.slane %v3889, 2
        %v4075 = vsel %vm1885, %v4072, %v4074
        %v4076 = vrot.slane %v3890, 2
        %v4077 = vrot.slane %v3891, 2
        %v4078 = vsel %vm1885, %v4076, %v4077
        %v4079 = vrot.slane %v3892, 2
        %v4080 = vsel %vm1885, %v4077, %v4079
        %v4081 = vrot.slane %v3893, 2
        %v4082 = vrot.slane %v3894, 2
        %v4083 = vsel %vm1885, %v4081, %v4082
        %v4084 = vrot.slane %v3895, 2
        %v4085 = vsel %vm1885, %v4082, %v4084
        %v4086 = vrot.slane %v3896, 2
        %v4087 = vrot.slane %v3897, 2
        %v4088 = vsel %vm1885, %v4086, %v4087
        %v4089 = vrot.slane %v3898, 2
        %v4090 = vsel %vm1885, %v4087, %v4089
        %v4091 = vrot.slane %v3899, 2
        %v4092 = vrot.slane %v3900, 2
        %v4093 = vsel %vm1885, %v4091, %v4092
        %v4094 = vrot.slane %v3901, 2
        %v4095 = vsel %vm1885, %v4092, %v4094
        %v4096 = vrot.slane %v3902, 2
        %v4097 = vrot.slane %v3903, 2
        %v4098 = vsel %vm1885, %v4096, %v4097
        %v4099 = vrot.slane %v3904, 2
        %v4100 = vsel %vm1885, %v4097, %v4099
        %v4101 = vrot.slane %v3905, 2
        %v4102 = vrot.slane %v3906, 2
        %v4103 = vsel %vm1885, %v4101, %v4102
        %v4104 = vrot.slane %v3907, 2
        %v4105 = vsel %vm1885, %v4102, %v4104
        %v4106 = vrot.slane %v3908, 2
        %v4107 = vrot.slane %v3909, 2
        %v4108 = vsel %vm1885, %v4106, %v4107
        %v4109 = vrot.slane %v3910, 2
        %v4110 = vsel %vm1885, %v4107, %v4109
        %v4111 = vrot.slane %v3911, 2
        %v4112 = vrot.slane %v3912, 2
        %v4113 = vsel %vm1885, %v4111, %v4112
        %v4114 = vrot.slane %v3913, 2
        %v4115 = vsel %vm1885, %v4112, %v4114
        %v4116 = vrot.slane %v3914, 2
        %v4117 = vrot.slane %v3915, 2
        %v4118 = vsel %vm1885, %v4116, %v4117
        %v4119 = vrot.slane %v3916, 2
        %v4120 = vsel %vm1885, %v4117, %v4119
        %v4121 = vrot.slane %v3917, 2
        %v4122 = vrot.slane %v3918, 2
        %v4123 = vsel %vm1885, %v4121, %v4122
        %v4124 = vrot.slane %v3919, 2
        %v4125 = vsel %vm1885, %v4122, %v4124
        %v4126 = vrot.slane %v3920, 2
        %v4127 = vrot.slane %v3921, 2
        %v4128 = vsel %vm1885, %v4126, %v4127
        %v4129 = vrot.slane %v3922, 2
        %v4130 = vsel %vm1885, %v4127, %v4129
        %v4131 = vrot.slane %v3923, 2
        %v4132 = vrot.slane %v3924, 2
        %v4133 = vsel %vm1885, %v4131, %v4132
        %v4134 = vrot.slane %v3925, 2
        %v4135 = vsel %vm1885, %v4132, %v4134
        %v4136 = vrot.slane %v3926, 2
        %v4137 = vrot.slane %v3927, 2
        %v4138 = vsel %vm1885, %v4136, %v4137
        %v4139 = vrot.slane %v3928, 2
        %v4140 = vsel %vm1885, %v4137, %v4139
        %v4141 = vrot.slane %v3929, 2
        %v4142 = vsel %vm1885, %v4141, %v4141
        %v4143 = vrot.slane %v3930, 2
        %v4144 = vrot.slane %v3931, 2
        %v4145 = vsel %vm1885, %v4143, %v4144
        %v4146 = vrot.slane %v3932, 2
        %v4147 = vsel %vm1885, %v4144, %v4146
        %v4148 = vrot.slane %v3933, 2
        %v4149 = vrot.slane %v3934, 2
        %v4150 = vsel %vm1885, %v4148, %v4149
        %v4151 = vrot.slane %v3935, 2
        %v4152 = vsel %vm1885, %v4149, %v4151
        %v4153 = vrot.slane %v3936, 2
        %v4154 = vrot.slane %v3937, 2
        %v4155 = vsel %vm1885, %v4153, %v4154
        %v4156 = vrot.slane %v3938, 2
        %v4157 = vsel %vm1885, %v4154, %v4156
        %v4158 = vrot.slane %v3939, 2
        %v4159 = vrot.slane %v3940, 2
        %v4160 = vsel %vm1885, %v4158, %v4159
        %v4161 = vrot.slane %v3941, 2
        %v4162 = vsel %vm1885, %v4159, %v4161
        %v4163 = vrot.slane %v3942, 2
        %v4164 = vrot.slane %v3943, 2
        %v4165 = vsel %vm1885, %v4163, %v4164
        %v4166 = vrot.slane %v3944, 2
        %v4167 = vsel %vm1885, %v4164, %v4166
        %v4168 = vrot.slane %v3945, 2
        %v4169 = vrot.slane %v3946, 2
        %v4170 = vsel %vm1885, %v4168, %v4169
        %v4171 = vrot.slane %v3947, 2
        %v4172 = vsel %vm1885, %v4169, %v4171
        %v4173 = vrot.slane %v3948, 2
        %v4174 = vrot.slane %v3949, 2
        %v4175 = vsel %vm1885, %v4173, %v4174
        %v4176 = vrot.slane %v3950, 2
        %v4177 = vsel %vm1885, %v4174, %v4176
        %v4178 = vrot.slane %v3951, 2
        %v4179 = vrot.slane %v3952, 2
        %v4180 = vsel %vm1885, %v4178, %v4179
        %v4181 = vrot.slane %v3953, 2
        %v4182 = vsel %vm1885, %v4179, %v4181
        %v4183 = vrot.slane %v3954, 2
        %v4184 = vrot.slane %v3955, 2
        %v4185 = vsel %vm1885, %v4183, %v4184
        %v4186 = vrot.slane %v3956, 2
        %v4187 = vsel %vm1885, %v4184, %v4186
        %v4188 = vrot.slane %v3957, 2
        %v4189 = vrot.slane %v3958, 2
        %v4190 = vsel %vm1885, %v4188, %v4189
        %v4191 = vrot.slane %v3959, 2
        %v4192 = vsel %vm1885, %v4189, %v4191
        %v4193 = vrot.slane %v3960, 2
        %v4194 = vrot.slane %v3961, 2
        %v4195 = vsel %vm1885, %v4193, %v4194
        %v4196 = vrot.slane %v3962, 2
        %v4197 = vsel %vm1885, %v4194, %v4196
        %v4198 = vrot.slane %v3963, 2
        %v4199 = vrot.slane %v3964, 2
        %v4200 = vsel %vm1885, %v4198, %v4199
        %v4201 = vrot.slane %v3965, 2
        %v4202 = vsel %vm1885, %v4199, %v4201
        %v4203 = vrot.slane %v3966, 2
        %v4204 = vrot.slane %v3967, 2
        %v4205 = vsel %vm1885, %v4203, %v4204
        %v4206 = vrot.slane %v3968, 2
        %v4207 = vsel %vm1885, %v4204, %v4206
        %v4208 = vrot.slane %v3969, 2
        %v4209 = vrot.slane %v3970, 2
        %v4210 = vsel %vm1885, %v4208, %v4209
        %v4211 = vrot.slane %v3971, 2
        %v4212 = vsel %vm1885, %v4209, %v4211
        %v4213 = vrot.slane %v3972, 2
        %v4214 = vrot.slane %v3973, 2
        %v4215 = vsel %vm1885, %v4213, %v4214
        %v4216 = vrot.slane %v3974, 2
        %v4217 = vsel %vm1885, %v4214, %v4216
        %v4279 = vadd.f32 %v3816, %v4068
        %v4280 = vadd.f32 %v3817, %v4070
        %v4281 = vadd.f32 %v3818, %v4073
        %v4282 = vadd.f32 %v3819, %v4075
        %v4283 = vadd.f32 %v3820, %v4078
        %v4284 = vadd.f32 %v3821, %v4080
        %v4285 = vadd.f32 %v3822, %v4083
        %v4286 = vadd.f32 %v3823, %v4085
        %v4287 = vadd.f32 %v3824, %v4088
        %v4288 = vadd.f32 %v3825, %v4090
        %v4289 = vadd.f32 %v3826, %v4093
        %v4290 = vadd.f32 %v3827, %v4095
        %v4291 = vadd.f32 %v3828, %v4098
        %v4292 = vadd.f32 %v3829, %v4100
        %v4293 = vadd.f32 %v3830, %v4103
        %v4294 = vadd.f32 %v3831, %v4105
        %v4295 = vadd.f32 %v3832, %v4108
        %v4296 = vadd.f32 %v3833, %v4110
        %v4297 = vadd.f32 %v3834, %v4113
        %v4298 = vadd.f32 %v3835, %v4115
        %v4299 = vadd.f32 %v3836, %v4118
        %v4300 = vadd.f32 %v3837, %v4120
        %v4301 = vadd.f32 %v3838, %v4123
        %v4302 = vadd.f32 %v3839, %v4125
        %v4303 = vadd.f32 %v3840, %v4128
        %v4304 = vadd.f32 %v3841, %v4130
        %v4305 = vadd.f32 %v3842, %v4133
        %v4306 = vadd.f32 %v3843, %v4135
        %v4307 = vadd.f32 %v3844, %v4138
        %v4308 = vadd.f32 %v3845, %v4140
        %v4309 = vadd.f32 %v3846, %v4142
        %v4310 = vadd.f32 %v3847, %v4142
        %v4311 = vadd.f32 %v3848, %v4145
        %v4312 = vadd.f32 %v3849, %v4147
        %v4313 = vadd.f32 %v3850, %v4150
        %v4314 = vadd.f32 %v3851, %v4152
        %v4315 = vadd.f32 %v3852, %v4155
        %v4316 = vadd.f32 %v3853, %v4157
        %v4317 = vadd.f32 %v3854, %v4160
        %v4318 = vadd.f32 %v3855, %v4162
        %v4319 = vadd.f32 %v3856, %v4165
        %v4320 = vadd.f32 %v3857, %v4167
        %v4321 = vadd.f32 %v3858, %v4170
        %v4322 = vadd.f32 %v3859, %v4172
        %v4323 = vadd.f32 %v3860, %v4175
        %v4324 = vadd.f32 %v3861, %v4177
        %v4325 = vadd.f32 %v3862, %v4180
        %v4326 = vadd.f32 %v3863, %v4182
        %v4327 = vadd.f32 %v3864, %v4185
        %v4328 = vadd.f32 %v3865, %v4187
        %v4329 = vadd.f32 %v3866, %v4190
        %v4330 = vadd.f32 %v3867, %v4192
        %v4331 = vadd.f32 %v3868, %v4195
        %v4332 = vadd.f32 %v3869, %v4197
        %v4333 = vadd.f32 %v3870, %v4200
        %v4334 = vadd.f32 %v3871, %v4202
        %v4335 = vadd.f32 %v3872, %v4205
        %v4336 = vadd.f32 %v3873, %v4207
        %v4337 = vadd.f32 %v3874, %v4210
        %v4338 = vadd.f32 %v3875, %v4212
        %v4339 = vadd.f32 %v3876, %v4215
        %v4340 = vadd.f32 %v3877, %v4217
        %v4341 = vadd.f32 %v3878, %v4142
        %v4342 = vadd.f32 %v3879, %v4142
        %v4344 = vlaneseq
        %v4345 = vshrl.u32 %v4344, 7
        %v4346 = vsub.s32 0, %v4345
        %v4347 = vrot.slane %v397, %v4346
        %v4349 = vadd.f32 %v4279, %v4347
        %v4350 = vadd.f32 %v4280, %v4347
        %v4351 = vadd.f32 %v4281, %v4347
        %v4352 = vadd.f32 %v4282, %v4347
        %v4353 = vadd.f32 %v4283, %v4347
        %v4354 = vadd.f32 %v4284, %v4347
        %v4355 = vadd.f32 %v4285, %v4347
        %v4356 = vadd.f32 %v4286, %v4347
        %v4357 = vadd.f32 %v4287, %v4347
        %v4358 = vadd.f32 %v4288, %v4347
        %v4359 = vadd.f32 %v4289, %v4347
        %v4360 = vadd.f32 %v4290, %v4347
        %v4361 = vadd.f32 %v4291, %v4347
        %v4362 = vadd.f32 %v4292, %v4347
        %v4363 = vadd.f32 %v4293, %v4347
        %v4364 = vadd.f32 %v4294, %v4347
        %v4365 = vadd.f32 %v4295, %v4347
        %v4366 = vadd.f32 %v4296, %v4347
        %v4367 = vadd.f32 %v4297, %v4347
        %v4368 = vadd.f32 %v4298, %v4347
        %v4369 = vadd.f32 %v4299, %v4347
        %v4370 = vadd.f32 %v4300, %v4347
        %v4371 = vadd.f32 %v4301, %v4347
        %v4372 = vadd.f32 %v4302, %v4347
        %v4373 = vadd.f32 %v4303, %v4347
        %v4374 = vadd.f32 %v4304, %v4347
        %v4375 = vadd.f32 %v4305, %v4347
        %v4376 = vadd.f32 %v4306, %v4347
        %v4377 = vadd.f32 %v4307, %v4347
        %v4378 = vadd.f32 %v4308, %v4347
        %v4379 = vadd.f32 %v4309, %v4347
        %v4380 = vadd.f32 %v4310, %v4347
        %v4381 = vadd.f32 %v4311, %v4347
        %v4382 = vadd.f32 %v4312, %v4347
        %v4383 = vadd.f32 %v4313, %v4347
        %v4384 = vadd.f32 %v4314, %v4347
        %v4385 = vadd.f32 %v4315, %v4347
        %v4386 = vadd.f32 %v4316, %v4347
        %v4387 = vadd.f32 %v4317, %v4347
        %v4388 = vadd.f32 %v4318, %v4347
        %v4389 = vadd.f32 %v4319, %v4347
        %v4390 = vadd.f32 %v4320, %v4347
        %v4391 = vadd.f32 %v4321, %v4347
        %v4392 = vadd.f32 %v4322, %v4347
        %v4393 = vadd.f32 %v4323, %v4347
        %v4394 = vadd.f32 %v4324, %v4347
        %v4395 = vadd.f32 %v4325, %v4347
        %v4396 = vadd.f32 %v4326, %v4347
        %v4397 = vadd.f32 %v4327, %v4347
        %v4398 = vadd.f32 %v4328, %v4347
        %v4399 = vadd.f32 %v4329, %v4347
        %v4400 = vadd.f32 %v4330, %v4347
        %v4401 = vadd.f32 %v4331, %v4347
        %v4402 = vadd.f32 %v4332, %v4347
        %v4403 = vadd.f32 %v4333, %v4347
        %v4404 = vadd.f32 %v4334, %v4347
        %v4405 = vadd.f32 %v4335, %v4347
        %v4406 = vadd.f32 %v4336, %v4347
        %v4407 = vadd.f32 %v4337, %v4347
        %v4408 = vadd.f32 %v4338, %v4347
        %v4409 = vadd.f32 %v4339, %v4347
        %v4410 = vadd.f32 %v4340, %v4347
        %v4411 = vadd.f32 %v4341, %v4347
        %v4412 = vadd.f32 %v4342, %v4347
        %v4413 = vmax.f32 %v4349, 0.0
        %v4414 = vmax.f32 %v4350, 0.0
        %v4415 = vmax.f32 %v4351, 0.0
        %v4416 = vmax.f32 %v4352, 0.0
        %v4417 = vmax.f32 %v4353, 0.0
        %v4418 = vmax.f32 %v4354, 0.0
        %v4419 = vmax.f32 %v4355, 0.0
        %v4420 = vmax.f32 %v4356, 0.0
        %v4421 = vmax.f32 %v4357, 0.0
        %v4422 = vmax.f32 %v4358, 0.0
        %v4423 = vmax.f32 %v4359, 0.0
        %v4424 = vmax.f32 %v4360, 0.0
        %v4425 = vmax.f32 %v4361, 0.0
        %v4426 = vmax.f32 %v4362, 0.0
        %v4427 = vmax.f32 %v4363, 0.0
        %v4428 = vmax.f32 %v4364, 0.0
        %v4429 = vmax.f32 %v4365, 0.0
        %v4430 = vmax.f32 %v4366, 0.0
        %v4431 = vmax.f32 %v4367, 0.0
        %v4432 = vmax.f32 %v4368, 0.0
        %v4433 = vmax.f32 %v4369, 0.0
        %v4434 = vmax.f32 %v4370, 0.0
        %v4435 = vmax.f32 %v4371, 0.0
        %v4436 = vmax.f32 %v4372, 0.0
        %v4437 = vmax.f32 %v4373, 0.0
        %v4438 = vmax.f32 %v4374, 0.0
        %v4439 = vmax.f32 %v4375, 0.0
        %v4440 = vmax.f32 %v4376, 0.0
        %v4441 = vmax.f32 %v4377, 0.0
        %v4442 = vmax.f32 %v4378, 0.0
        %v4443 = vmax.f32 %v4379, 0.0
        %v4444 = vmax.f32 %v4380, 0.0
        %v4445 = vmax.f32 %v4381, 0.0
        %v4446 = vmax.f32 %v4382, 0.0
        %v4447 = vmax.f32 %v4383, 0.0
        %v4448 = vmax.f32 %v4384, 0.0
        %v4449 = vmax.f32 %v4385, 0.0
        %v4450 = vmax.f32 %v4386, 0.0
        %v4451 = vmax.f32 %v4387, 0.0
        %v4452 = vmax.f32 %v4388, 0.0
        %v4453 = vmax.f32 %v4389, 0.0
        %v4454 = vmax.f32 %v4390, 0.0
        %v4455 = vmax.f32 %v4391, 0.0
        %v4456 = vmax.f32 %v4392, 0.0
        %v4457 = vmax.f32 %v4393, 0.0
        %v4458 = vmax.f32 %v4394, 0.0
        %v4459 = vmax.f32 %v4395, 0.0
        %v4460 = vmax.f32 %v4396, 0.0
        %v4461 = vmax.f32 %v4397, 0.0
        %v4462 = vmax.f32 %v4398, 0.0
        %v4463 = vmax.f32 %v4399, 0.0
        %v4464 = vmax.f32 %v4400, 0.0
        %v4465 = vmax.f32 %v4401, 0.0
        %v4466 = vmax.f32 %v4402, 0.0
        %v4467 = vmax.f32 %v4403, 0.0
        %v4468 = vmax.f32 %v4404, 0.0
        %v4469 = vmax.f32 %v4405, 0.0
        %v4470 = vmax.f32 %v4406, 0.0
        %v4471 = vmax.f32 %v4407, 0.0
        %v4472 = vmax.f32 %v4408, 0.0
        %v4473 = vmax.f32 %v4409, 0.0
        %v4474 = vmax.f32 %v4410, 0.0
        %v4475 = vmax.f32 %v4411, 0.0
        %v4476 = vmax.f32 %v4412, 0.0
        %v4477 = vld [vmem:[%s3] sm:$0xff]
        %v4478 = vld [vmem:[%s3 + $0x8] sm:$0xff]
        %v4479 = vld [vmem:[%s3 + $0x10] sm:$0xff]
        %v4480 = vld [vmem:[%s3 + $0x18] sm:$0xff]
        %v4481 = vld [vmem:[%s3 + $0x20] sm:$0xff]
        %v4482 = vld [vmem:[%s3 + $0x28] sm:$0xff]
        %v4483 = vld [vmem:[%s3 + $0x30] sm:$0xff]
        %v4484 = vld [vmem:[%s3 + $0x38] sm:$0xff]
        %v4485 = vld [vmem:[%s3 + $0x40] sm:$0xff]
        %v4486 = vld [vmem:[%s4] sm:$0x1]
        %v4551 = vrot.slane %v4413, 7
        %v4552 = vrot.slane %v4414, 7
        %v4553 = vsel %vm462, %v4551, %v4552
        %v4554 = vrot.slane %v4415, 7
        %v4555 = vrot.slane %v4416, 7
        %v4556 = vsel %vm462, %v4554, %v4555
        %v4557 = vrot.slane %v4417, 7
        %v4558 = vrot.slane %v4418, 7
        %v4559 = vsel %vm462, %v4557, %v4558
        %v4560 = vrot.slane %v4419, 7
        %v4561 = vrot.slane %v4420, 7
        %v4562 = vsel %vm462, %v4560, %v4561
        %v4563 = vrot.slane %v4421, 7
        %v4564 = vrot.slane %v4422, 7
        %v4565 = vsel %vm462, %v4563, %v4564
        %v4566 = vrot.slane %v4423, 7
        %v4567 = vrot.slane %v4424, 7
        %v4568 = vsel %vm462, %v4566, %v4567
        %v4569 = vrot.slane %v4425, 7
        %v4570 = vrot.slane %v4426, 7
        %v4571 = vsel %vm462, %v4569, %v4570
        %v4572 = vrot.slane %v4427, 7
        %v4573 = vrot.slane %v4428, 7
        %v4574 = vsel %vm462, %v4572, %v4573
        %v4575 = vrot.slane %v4429, 7
        %v4576 = vrot.slane %v4430, 7
        %v4577 = vsel %vm462, %v4575, %v4576
        %v4578 = vrot.slane %v4431, 7
        %v4579 = vrot.slane %v4432, 7
        %v4580 = vsel %vm462, %v4578, %v4579
        %v4581 = vrot.slane %v4433, 7
        %v4582 = vrot.slane %v4434, 7
        %v4583 = vsel %vm462, %v4581, %v4582
        %v4584 = vrot.slane %v4435, 7
        %v4585 = vrot.slane %v4436, 7
        %v4586 = vsel %vm462, %v4584, %v4585
        %v4587 = vrot.slane %v4437, 7
        %v4588 = vrot.slane %v4438, 7
        %v4589 = vsel %vm462, %v4587, %v4588
        %v4590 = vrot.slane %v4439, 7
        %v4591 = vrot.slane %v4440, 7
        %v4592 = vsel %vm462, %v4590, %v4591
        %v4593 = vrot.slane %v4441, 7
        %v4594 = vrot.slane %v4442, 7
        %v4595 = vsel %vm462, %v4593, %v4594
        %v4596 = vrot.slane %v4443, 7
        %v4597 = vrot.slane %v4444, 7
        %v4598 = vsel %vm462, %v4596, %v4597
        %v4599 = vrot.slane %v4445, 7
        %v4600 = vrot.slane %v4446, 7
        %v4601 = vsel %vm462, %v4599, %v4600
        %v4602 = vrot.slane %v4447, 7
        %v4603 = vrot.slane %v4448, 7
        %v4604 = vsel %vm462, %v4602, %v4603
        %v4605 = vrot.slane %v4449, 7
        %v4606 = vrot.slane %v4450, 7
        %v4607 = vsel %vm462, %v4605, %v4606
        %v4608 = vrot.slane %v4451, 7
        %v4609 = vrot.slane %v4452, 7
        %v4610 = vsel %vm462, %v4608, %v4609
        %v4611 = vrot.slane %v4453, 7
        %v4612 = vrot.slane %v4454, 7
        %v4613 = vsel %vm462, %v4611, %v4612
        %v4614 = vrot.slane %v4455, 7
        %v4615 = vrot.slane %v4456, 7
        %v4616 = vsel %vm462, %v4614, %v4615
        %v4617 = vrot.slane %v4457, 7
        %v4618 = vrot.slane %v4458, 7
        %v4619 = vsel %vm462, %v4617, %v4618
        %v4620 = vrot.slane %v4459, 7
        %v4621 = vrot.slane %v4460, 7
        %v4622 = vsel %vm462, %v4620, %v4621
        %v4623 = vrot.slane %v4461, 7
        %v4624 = vrot.slane %v4462, 7
        %v4625 = vsel %vm462, %v4623, %v4624
        %v4626 = vrot.slane %v4463, 7
        %v4627 = vrot.slane %v4464, 7
        %v4628 = vsel %vm462, %v4626, %v4627
        %v4629 = vrot.slane %v4465, 7
        %v4630 = vrot.slane %v4466, 7
        %v4631 = vsel %vm462, %v4629, %v4630
        %v4632 = vrot.slane %v4467, 7
        %v4633 = vrot.slane %v4468, 7
        %v4634 = vsel %vm462, %v4632, %v4633
        %v4635 = vrot.slane %v4469, 7
        %v4636 = vrot.slane %v4470, 7
        %v4637 = vsel %vm462, %v4635, %v4636
        %v4638 = vrot.slane %v4471, 7
        %v4639 = vrot.slane %v4472, 7
        %v4640 = vsel %vm462, %v4638, %v4639
        %v4641 = vrot.slane %v4473, 7
        %v4642 = vrot.slane %v4474, 7
        %v4643 = vsel %vm462, %v4641, %v4642
        %v4644 = vrot.slane %v4475, 7
        %v4645 = vrot.slane %v4476, 7
        %v4646 = vsel %vm462, %v4644, %v4645
        %v4741 = vsel %vm462, 0.0, %v4551
        %v4742 = vsel %vm462, 0.0, %v4554
        %v4743 = vsel %vm462, 0.0, %v4557
        %v4744 = vsel %vm462, 0.0, %v4560
        %v4745 = vsel %vm462, 0.0, %v4563
        %v4746 = vsel %vm462, 0.0, %v4566
        %v4747 = vsel %vm462, 0.0, %v4569
        %v4748 = vsel %vm462, 0.0, %v4572
        %v4749 = vsel %vm462, 0.0, %v4575
        %v4750 = vsel %vm462, 0.0, %v4578
        %v4751 = vsel %vm462, 0.0, %v4581
        %v4752 = vsel %vm462, 0.0, %v4584
        %v4753 = vsel %vm462, 0.0, %v4587
        %v4754 = vsel %vm462, 0.0, %v4590
        %v4755 = vsel %vm462, 0.0, %v4593
        %v4756 = vsel %vm462, 0.0, %v4596
        %v4757 = vsel %vm462, 0.0, %v4599
        %v4758 = vsel %vm462, 0.0, %v4602
        %v4759 = vsel %vm462, 0.0, %v4605
        %v4760 = vsel %vm462, 0.0, %v4608
        %v4761 = vsel %vm462, 0.0, %v4611
        %v4762 = vsel %vm462, 0.0, %v4614
        %v4763 = vsel %vm462, 0.0, %v4617
        %v4764 = vsel %vm462, 0.0, %v4620
        %v4765 = vsel %vm462, 0.0, %v4623
        %v4766 = vsel %vm462, 0.0, %v4626
        %v4767 = vsel %vm462, 0.0, %v4629
        %v4768 = vsel %vm462, 0.0, %v4632
        %v4769 = vsel %vm462, 0.0, %v4635
        %v4770 = vsel %vm462, 0.0, %v4638
        %v4771 = vsel %vm462, 0.0, %v4641
        %v4772 = vsel %vm462, 0.0, %v4644
        %v4773 = vsel %vm462, %v4552, 0.0
        %v4774 = vsel %vm462, %v4555, 0.0
        %v4775 = vsel %vm462, %v4558, 0.0
        %v4776 = vsel %vm462, %v4561, 0.0
        %v4777 = vsel %vm462, %v4564, 0.0
        %v4778 = vsel %vm462, %v4567, 0.0
        %v4779 = vsel %vm462, %v4570, 0.0
        %v4780 = vsel %vm462, %v4573, 0.0
        %v4781 = vsel %vm462, %v4576, 0.0
        %v4782 = vsel %vm462, %v4579, 0.0
        %v4783 = vsel %vm462, %v4582, 0.0
        %v4784 = vsel %vm462, %v4585, 0.0
        %v4785 = vsel %vm462, %v4588, 0.0
        %v4786 = vsel %vm462, %v4591, 0.0
        %v4787 = vsel %vm462, %v4594, 0.0
        %v4788 = vsel %vm462, %v4597, 0.0
        %v4789 = vsel %vm462, %v4600, 0.0
        %v4790 = vsel %vm462, %v4603, 0.0
        %v4791 = vsel %vm462, %v4606, 0.0
        %v4792 = vsel %vm462, %v4609, 0.0
        %v4793 = vsel %vm462, %v4612, 0.0
        %v4794 = vsel %vm462, %v4615, 0.0
        %v4795 = vsel %vm462, %v4618, 0.0
        %v4796 = vsel %vm462, %v4621, 0.0
        %v4797 = vsel %vm462, %v4624, 0.0
        %v4798 = vsel %vm462, %v4627, 0.0
        %v4799 = vsel %vm462, %v4630, 0.0
        %v4800 = vsel %vm462, %v4633, 0.0
        %v4801 = vsel %vm462, %v4636, 0.0
        %v4802 = vsel %vm462, %v4639, 0.0
        %v4803 = vsel %vm462, %v4642, 0.0
        %v4804 = vsel %vm462, %v4645, 0.0
        %v4865 = vrot.slane 0.0, 1
        %v4866 = vsel %vm1424, %v4865, %v4865
        %v4867 = vrot.slane %v4741, 1
        %v4868 = vrot.slane %v4553, 1
        %v4869 = vsel %vm1424, %v4867, %v4868
        %v4870 = vrot.slane %v4773, 1
        %v4871 = vsel %vm1424, %v4868, %v4870
        %v4872 = vrot.slane %v4742, 1
        %v4873 = vrot.slane %v4556, 1
        %v4874 = vsel %vm1424, %v4872, %v4873
        %v4875 = vrot.slane %v4774, 1
        %v4876 = vsel %vm1424, %v4873, %v4875
        %v4877 = vrot.slane %v4743, 1
        %v4878 = vrot.slane %v4559, 1
        %v4879 = vsel %vm1424, %v4877, %v4878
        %v4880 = vrot.slane %v4775, 1
        %v4881 = vsel %vm1424, %v4878, %v4880
        %v4882 = vrot.slane %v4744, 1
        %v4883 = vrot.slane %v4562, 1
        %v4884 = vsel %vm1424, %v4882, %v4883
        %v4885 = vrot.slane %v4776, 1
        %v4886 = vsel %vm1424, %v4883, %v4885
        %v4887 = vrot.slane %v4745, 1
        %v4888 = vrot.slane %v4565, 1
        %v4889 = vsel %vm1424, %v4887, %v4888
        %v4890 = vrot.slane %v4777, 1
        %v4891 = vsel %vm1424, %v4888, %v4890
        %v4892 = vrot.slane %v4746, 1
        %v4893 = vrot.slane %v4568, 1
        %v4894 = vsel %vm1424, %v4892, %v4893
        %v4895 = vrot.slane %v4778, 1
        %v4896 = vsel %vm1424, %v4893, %v4895
        %v4897 = vrot.slane %v4747, 1
        %v4898 = vrot.slane %v4571, 1
        %v4899 = vsel %vm1424, %v4897, %v4898
        %v4900 = vrot.slane %v4779, 1
        %v4901 = vsel %vm1424, %v4898, %v4900
        %v4902 = vrot.slane %v4748, 1
        %v4903 = vrot.slane %v4574, 1
        %v4904 = vsel %vm1424, %v4902, %v4903
        %v4905 = vrot.slane %v4780, 1
        %v4906 = vsel %vm1424, %v4903, %v4905
        %v4907 = vrot.slane %v4749, 1
        %v4908 = vrot.slane %v4577, 1
        %v4909 = vsel %vm1424, %v4907, %v4908
        %v4910 = vrot.slane %v4781, 1
        %v4911 = vsel %vm1424, %v4908, %v4910
        %v4912 = vrot.slane %v4750, 1
        %v4913 = vrot.slane %v4580, 1
        %v4914 = vsel %vm1424, %v4912, %v4913
        %v4915 = vrot.slane %v4782, 1
        %v4916 = vsel %vm1424, %v4913, %v4915
        %v4917 = vrot.slane %v4751, 1
        %v4918 = vrot.slane %v4583, 1
        %v4919 = vsel %vm1424, %v4917, %v4918
        %v4920 = vrot.slane %v4783, 1
        %v4921 = vsel %vm1424, %v4918, %v4920
        %v4922 = vrot.slane %v4752, 1
        %v4923 = vrot.slane %v4586, 1
        %v4924 = vsel %vm1424, %v4922, %v4923
        %v4925 = vrot.slane %v4784, 1
        %v4926 = vsel %vm1424, %v4923, %v4925
        %v4927 = vrot.slane %v4753, 1
        %v4928 = vrot.slane %v4589, 1
        %v4929 = vsel %vm1424, %v4927, %v4928
        %v4930 = vrot.slane %v4785, 1
        %v4931 = vsel %vm1424, %v4928, %v4930
        %v4932 = vrot.slane %v4754, 1
        %v4933 = vrot.slane %v4592, 1
        %v4934 = vsel %vm1424, %v4932, %v4933
        %v4935 = vrot.slane %v4786, 1
        %v4936 = vsel %vm1424, %v4933, %v4935
        %v4937 = vrot.slane %v4755, 1
        %v4938 = vrot.slane %v4595, 1
        %v4939 = vsel %vm1424, %v4937, %v4938
        %v4940 = vrot.slane %v4787, 1
        %v4941 = vsel %vm1424, %v4938, %v4940
        %v4942 = vrot.slane %v4757, 1
        %v4943 = vrot.slane %v4601, 1
        %v4944 = vsel %vm1424, %v4942, %v4943
        %v4945 = vrot.slane %v4789, 1
        %v4946 = vsel %vm1424, %v4943, %v4945
        %v4947 = vrot.slane %v4758, 1
        %v4948 = vrot.slane %v4604, 1
        %v4949 = vsel %vm1424, %v4947, %v4948
        %v4950 = vrot.slane %v4790, 1
        %v4951 = vsel %vm1424, %v4948, %v4950
        %v4952 = vrot.slane %v4759, 1
        %v4953 = vrot.slane %v4607, 1
        %v4954 = vsel %vm1424, %v4952, %v4953
        %v4955 = vrot.slane %v4791, 1
        %v4956 = vsel %vm1424, %v4953, %v4955
        %v4957 = vrot.slane %v4760, 1
        %v4958 = vrot.slane %v4610, 1
        %v4959 = vsel %vm1424, %v4957, %v4958
        %v4960 = vrot.slane %v4792, 1
        %v4961 = vsel %vm1424, %v4958, %v4960
        %v4962 = vrot.slane %v4761, 1
        %v4963 = vrot.slane %v4613, 1
        %v4964 = vsel %vm1424, %v4962, %v4963
        %v4965 = vrot.slane %v4793, 1
        %v4966 = vsel %vm1424, %v4963, %v4965
        %v4967 = vrot.slane %v4762, 1
        %v4968 = vrot.slane %v4616, 1
        %v4969 = vsel %vm1424, %v4967, %v4968
        %v4970 = vrot.slane %v4794, 1
        %v4971 = vsel %vm1424, %v4968, %v4970
        %v4972 = vrot.slane %v4763, 1
        %v4973 = vrot.slane %v4619, 1
        %v4974 = vsel %vm1424, %v4972, %v4973
        %v4975 = vrot.slane %v4795, 1
        %v4976 = vsel %vm1424, %v4973, %v4975
        %v4977 = vrot.slane %v4764, 1
        %v4978 = vrot.slane %v4622, 1
        %v4979 = vsel %vm1424, %v4977, %v4978
        %v4980 = vrot.slane %v4796, 1
        %v4981 = vsel %vm1424, %v4978, %v4980
        %v4982 = vrot.slane %v4765, 1
        %v4983 = vrot.slane %v4625, 1
        %v4984 = vsel %vm1424, %v4982, %v4983
        %v4985 = vrot.slane %v4797, 1
        %v4986 = vsel %vm1424, %v4983, %v4985
        %v4987 = vrot.slane %v4766, 1
        %v4988 = vrot.slane %v4628, 1
        %v4989 = vsel %vm1424, %v4987, %v4988
        %v4990 = vrot.slane %v4798, 1
        %v4991 = vsel %vm1424, %v4988, %v4990
        %v4992 = vrot.slane %v4767, 1
        %v4993 = vrot.slane %v4631, 1
        %v4994 = vsel %vm1424, %v4992, %v4993
        %v4995 = vrot.slane %v4799, 1
        %v4996 = vsel %vm1424, %v4993, %v4995
        %v4997 = vrot.slane %v4768, 1
        %v4998 = vrot.slane %v4634, 1
        %v4999 = vsel %vm1424, %v4997, %v4998
        %v5000 = vrot.slane %v4800, 1
        %v5001 = vsel %vm1424, %v4998, %v5000
        %v5002 = vrot.slane %v4769, 1
        %v5003 = vrot.slane %v4637, 1
        %v5004 = vsel %vm1424, %v5002, %v5003
        %v5005 = vrot.slane %v4801, 1
        %v5006 = vsel %vm1424, %v5003, %v5005
        %v5007 = vrot.slane %v4770, 1
        %v5008 = vrot.slane %v4640, 1
        %v5009 = vsel %vm1424, %v5007, %v5008
        %v5010 = vrot.slane %v4802, 1
        %v5011 = vsel %vm1424, %v5008, %v5010
        %v5012 = vrot.slane %v4771, 1
        %v5013 = vrot.slane %v4643, 1
        %v5014 = vsel %vm1424, %v5012, %v5013
        %v5015 = vrot.slane %v4803, 1
        %v5016 = vsel %vm1424, %v5013, %v5015
        %5017 = vrot.lane.b32.xlu0 %v4866, 8
        %v5018 = vpop.permute.xlu0 %5017
        %5019 = vrot.lane.b32.xlu0 %v4869, 8
        %v5020 = vpop.permute.xlu0 %5019
        %5021 = vrot.lane.b32.xlu0 %v4871, 8
        %v5022 = vpop.permute.xlu0 %5021
        %5023 = vrot.lane.b32.xlu0 %v4874, 8
        %v5024 = vpop.permute.xlu0 %5023
        %5025 = vrot.lane.b32.xlu0 %v4876, 8
        %v5026 = vpop.permute.xlu0 %5025
        %5027 = vrot.lane.b32.xlu0 %v4879, 8
        %v5028 = vpop.permute.xlu0 %5027
        %5029 = vrot.lane.b32.xlu0 %v4881, 8
        %v5030 = vpop.permute.xlu0 %5029
        %5031 = vrot.lane.b32.xlu0 %v4884, 8
        %v5032 = vpop.permute.xlu0 %5031
        %5033 = vrot.lane.b32.xlu0 %v4886, 8
        %v5034 = vpop.permute.xlu0 %5033
        %5035 = vrot.lane.b32.xlu0 %v4889, 8
        %v5036 = vpop.permute.xlu0 %5035
        %5037 = vrot.lane.b32.xlu0 %v4891, 8
        %v5038 = vpop.permute.xlu0 %5037
        %5039 = vrot.lane.b32.xlu0 %v4894, 8
        %v5040 = vpop.permute.xlu0 %5039
        %5041 = vrot.lane.b32.xlu0 %v4896, 8
        %v5042 = vpop.permute.xlu0 %5041
        %5043 = vrot.lane.b32.xlu0 %v4899, 8
        %v5044 = vpop.permute.xlu0 %5043
        %5045 = vrot.lane.b32.xlu0 %v4901, 8
        %v5046 = vpop.permute.xlu0 %5045
        %5047 = vrot.lane.b32.xlu0 %v4904, 8
        %v5048 = vpop.permute.xlu0 %5047
        %5049 = vrot.lane.b32.xlu0 %v4906, 8
        %v5050 = vpop.permute.xlu0 %5049
        %5051 = vrot.lane.b32.xlu0 %v4909, 8
        %v5052 = vpop.permute.xlu0 %5051
        %5053 = vrot.lane.b32.xlu0 %v4911, 8
        %v5054 = vpop.permute.xlu0 %5053
        %5055 = vrot.lane.b32.xlu0 %v4914, 8
        %v5056 = vpop.permute.xlu0 %5055
        %5057 = vrot.lane.b32.xlu0 %v4916, 8
        %v5058 = vpop.permute.xlu0 %5057
        %5059 = vrot.lane.b32.xlu0 %v4919, 8
        %v5060 = vpop.permute.xlu0 %5059
        %5061 = vrot.lane.b32.xlu0 %v4921, 8
        %v5062 = vpop.permute.xlu0 %5061
        %5063 = vrot.lane.b32.xlu0 %v4924, 8
        %v5064 = vpop.permute.xlu0 %5063
        %5065 = vrot.lane.b32.xlu0 %v4926, 8
        %v5066 = vpop.permute.xlu0 %5065
        %5067 = vrot.lane.b32.xlu0 %v4929, 8
        %v5068 = vpop.permute.xlu0 %5067
        %5069 = vrot.lane.b32.xlu0 %v4931, 8
        %v5070 = vpop.permute.xlu0 %5069
        %5071 = vrot.lane.b32.xlu0 %v4934, 8
        %v5072 = vpop.permute.xlu0 %5071
        %5073 = vrot.lane.b32.xlu0 %v4936, 8
        %v5074 = vpop.permute.xlu0 %5073
        %5075 = vrot.lane.b32.xlu0 %v4939, 8
        %v5076 = vpop.permute.xlu0 %5075
        %5077 = vrot.lane.b32.xlu0 %v4941, 8
        %v5078 = vpop.permute.xlu0 %5077
        %5079 = vrot.lane.b32.xlu0 %v4944, 8
        %v5080 = vpop.permute.xlu0 %5079
        %5081 = vrot.lane.b32.xlu0 %v4946, 8
        %v5082 = vpop.permute.xlu0 %5081
        %5083 = vrot.lane.b32.xlu0 %v4949, 8
        %v5084 = vpop.permute.xlu0 %5083
        %5085 = vrot.lane.b32.xlu0 %v4951, 8
        %v5086 = vpop.permute.xlu0 %5085
        %5087 = vrot.lane.b32.xlu0 %v4954, 8
        %v5088 = vpop.permute.xlu0 %5087
        %5089 = vrot.lane.b32.xlu0 %v4956, 8
        %v5090 = vpop.permute.xlu0 %5089
        %5091 = vrot.lane.b32.xlu0 %v4959, 8
        %v5092 = vpop.permute.xlu0 %5091
        %5093 = vrot.lane.b32.xlu0 %v4961, 8
        %v5094 = vpop.permute.xlu0 %5093
        %5095 = vrot.lane.b32.xlu0 %v4964, 8
        %v5096 = vpop.permute.xlu0 %5095
        %5097 = vrot.lane.b32.xlu0 %v4966, 8
        %v5098 = vpop.permute.xlu0 %5097
        %5099 = vrot.lane.b32.xlu0 %v4969, 8
        %v5100 = vpop.permute.xlu0 %5099
        %5101 = vrot.lane.b32.xlu0 %v4971, 8
        %v5102 = vpop.permute.xlu0 %5101
        %5103 = vrot.lane.b32.xlu0 %v4974, 8
        %v5104 = vpop.permute.xlu0 %5103
        %5105 = vrot.lane.b32.xlu0 %v4976, 8
        %v5106 = vpop.permute.xlu0 %5105
        %5107 = vrot.lane.b32.xlu0 %v4979, 8
        %v5108 = vpop.permute.xlu0 %5107
        %5109 = vrot.lane.b32.xlu0 %v4981, 8
        %v5110 = vpop.permute.xlu0 %5109
        %5111 = vrot.lane.b32.xlu0 %v4984, 8
        %v5112 = vpop.permute.xlu0 %5111
        %5113 = vrot.lane.b32.xlu0 %v4986, 8
        %v5114 = vpop.permute.xlu0 %5113
        %5115 = vrot.lane.b32.xlu0 %v4989, 8
        %v5116 = vpop.permute.xlu0 %5115
        %5117 = vrot.lane.b32.xlu0 %v4991, 8
        %v5118 = vpop.permute.xlu0 %5117
        %5119 = vrot.lane.b32.xlu0 %v4994, 8
        %v5120 = vpop.permute.xlu0 %5119
        %5121 = vrot.lane.b32.xlu0 %v4996, 8
        %v5122 = vpop.permute.xlu0 %5121
        %5123 = vrot.lane.b32.xlu0 %v4999, 8
        %v5124 = vpop.permute.xlu0 %5123
        %5125 = vrot.lane.b32.xlu0 %v5001, 8
        %v5126 = vpop.permute.xlu0 %5125
        %5127 = vrot.lane.b32.xlu0 %v5004, 8
        %v5128 = vpop.permute.xlu0 %5127
        %5129 = vrot.lane.b32.xlu0 %v5006, 8
        %v5130 = vpop.permute.xlu0 %5129
        %5131 = vrot.lane.b32.xlu0 %v5009, 8
        %v5132 = vpop.permute.xlu0 %5131
        %5133 = vrot.lane.b32.xlu0 %v5011, 8
        %v5134 = vpop.permute.xlu0 %5133
        %5135 = vrot.lane.b32.xlu0 %v5014, 8
        %v5136 = vpop.permute.xlu0 %5135
        %5137 = vrot.lane.b32.xlu0 %v5016, 8
        %v5138 = vpop.permute.xlu0 %5137
        %v5200 = vrot.slane 0.0, 2
        %v5201 = vsel %vm1885, %v5200, %v5200
        %v5202 = vrot.slane %v4741, 2
        %v5203 = vrot.slane %v4553, 2
        %v5204 = vsel %vm1885, %v5202, %v5203
        %v5205 = vrot.slane %v4773, 2
        %v5206 = vsel %vm1885, %v5203, %v5205
        %v5207 = vrot.slane %v4742, 2
        %v5208 = vrot.slane %v4556, 2
        %v5209 = vsel %vm1885, %v5207, %v5208
        %v5210 = vrot.slane %v4774, 2
        %v5211 = vsel %vm1885, %v5208, %v5210
        %v5212 = vrot.slane %v4743, 2
        %v5213 = vrot.slane %v4559, 2
        %v5214 = vsel %vm1885, %v5212, %v5213
        %v5215 = vrot.slane %v4775, 2
        %v5216 = vsel %vm1885, %v5213, %v5215
        %v5217 = vrot.slane %v4744, 2
        %v5218 = vrot.slane %v4562, 2
        %v5219 = vsel %vm1885, %v5217, %v5218
        %v5220 = vrot.slane %v4776, 2
        %v5221 = vsel %vm1885, %v5218, %v5220
        %v5222 = vrot.slane %v4745, 2
        %v5223 = vrot.slane %v4565, 2
        %v5224 = vsel %vm1885, %v5222, %v5223
        %v5225 = vrot.slane %v4777, 2
        %v5226 = vsel %vm1885, %v5223, %v5225
        %v5227 = vrot.slane %v4746, 2
        %v5228 = vrot.slane %v4568, 2
        %v5229 = vsel %vm1885, %v5227, %v5228
        %v5230 = vrot.slane %v4778, 2
        %v5231 = vsel %vm1885, %v5228, %v5230
        %v5232 = vrot.slane %v4747, 2
        %v5233 = vrot.slane %v4571, 2
        %v5234 = vsel %vm1885, %v5232, %v5233
        %v5235 = vrot.slane %v4779, 2
        %v5236 = vsel %vm1885, %v5233, %v5235
        %v5237 = vrot.slane %v4748, 2
        %v5238 = vrot.slane %v4574, 2
        %v5239 = vsel %vm1885, %v5237, %v5238
        %v5240 = vrot.slane %v4780, 2
        %v5241 = vsel %vm1885, %v5238, %v5240
        %v5242 = vrot.slane %v4749, 2
        %v5243 = vrot.slane %v4577, 2
        %v5244 = vsel %vm1885, %v5242, %v5243
        %v5245 = vrot.slane %v4781, 2
        %v5246 = vsel %vm1885, %v5243, %v5245
        %v5247 = vrot.slane %v4750, 2
        %v5248 = vrot.slane %v4580, 2
        %v5249 = vsel %vm1885, %v5247, %v5248
        %v5250 = vrot.slane %v4782, 2
        %v5251 = vsel %vm1885, %v5248, %v5250
        %v5252 = vrot.slane %v4751, 2
        %v5253 = vrot.slane %v4583, 2
        %v5254 = vsel %vm1885, %v5252, %v5253
        %v5255 = vrot.slane %v4783, 2
        %v5256 = vsel %vm1885, %v5253, %v5255
        %v5257 = vrot.slane %v4752, 2
        %v5258 = vrot.slane %v4586, 2
        %v5259 = vsel %vm1885, %v5257, %v5258
        %v5260 = vrot.slane %v4784, 2
        %v5261 = vsel %vm1885, %v5258, %v5260
        %v5262 = vrot.slane %v4753, 2
        %v5263 = vrot.slane %v4589, 2
        %v5264 = vsel %vm1885, %v5262, %v5263
        %v5265 = vrot.slane %v4785, 2
        %v5266 = vsel %vm1885, %v5263, %v5265
        %v5267 = vrot.slane %v4754, 2
        %v5268 = vrot.slane %v4592, 2
        %v5269 = vsel %vm1885, %v5267, %v5268
        %v5270 = vrot.slane %v4786, 2
        %v5271 = vsel %vm1885, %v5268, %v5270
        %v5272 = vrot.slane %v4755, 2
        %v5273 = vrot.slane %v4595, 2
        %v5274 = vsel %vm1885, %v5272, %v5273
        %v5275 = vrot.slane %v4787, 2
        %v5276 = vsel %vm1885, %v5273, %v5275
        %v5277 = vrot.slane %v4757, 2
        %v5278 = vrot.slane %v4601, 2
        %v5279 = vsel %vm1885, %v5277, %v5278
        %v5280 = vrot.slane %v4789, 2
        %v5281 = vsel %vm1885, %v5278, %v5280
        %v5282 = vrot.slane %v4758, 2
        %v5283 = vrot.slane %v4604, 2
        %v5284 = vsel %vm1885, %v5282, %v5283
        %v5285 = vrot.slane %v4790, 2
        %v5286 = vsel %vm1885, %v5283, %v5285
        %v5287 = vrot.slane %v4759, 2
        %v5288 = vrot.slane %v4607, 2
        %v5289 = vsel %vm1885, %v5287, %v5288
        %v5290 = vrot.slane %v4791, 2
        %v5291 = vsel %vm1885, %v5288, %v5290
        %v5292 = vrot.slane %v4760, 2
        %v5293 = vrot.slane %v4610, 2
        %v5294 = vsel %vm1885, %v5292, %v5293
        %v5295 = vrot.slane %v4792, 2
        %v5296 = vsel %vm1885, %v5293, %v5295
        %v5297 = vrot.slane %v4761, 2
        %v5298 = vrot.slane %v4613, 2
        %v5299 = vsel %vm1885, %v5297, %v5298
        %v5300 = vrot.slane %v4793, 2
        %v5301 = vsel %vm1885, %v5298, %v5300
        %v5302 = vrot.slane %v4762, 2
        %v5303 = vrot.slane %v4616, 2
        %v5304 = vsel %vm1885, %v5302, %v5303
        %v5305 = vrot.slane %v4794, 2
        %v5306 = vsel %vm1885, %v5303, %v5305
        %v5307 = vrot.slane %v4763, 2
        %v5308 = vrot.slane %v4619, 2
        %v5309 = vsel %vm1885, %v5307, %v5308
        %v5310 = vrot.slane %v4795, 2
        %v5311 = vsel %vm1885, %v5308, %v5310
        %v5312 = vrot.slane %v4764, 2
        %v5313 = vrot.slane %v4622, 2
        %v5314 = vsel %vm1885, %v5312, %v5313
        %v5315 = vrot.slane %v4796, 2
        %v5316 = vsel %vm1885, %v5313, %v5315
        %v5317 = vrot.slane %v4765, 2
        %v5318 = vrot.slane %v4625, 2
        %v5319 = vsel %vm1885, %v5317, %v5318
        %v5320 = vrot.slane %v4797, 2
        %v5321 = vsel %vm1885, %v5318, %v5320
        %v5322 = vrot.slane %v4766, 2
        %v5323 = vrot.slane %v4628, 2
        %v5324 = vsel %vm1885, %v5322, %v5323
        %v5325 = vrot.slane %v4798, 2
        %v5326 = vsel %vm1885, %v5323, %v5325
        %v5327 = vrot.slane %v4767, 2
        %v5328 = vrot.slane %v4631, 2
        %v5329 = vsel %vm1885, %v5327, %v5328
        %v5330 = vrot.slane %v4799, 2
        %v5331 = vsel %vm1885, %v5328, %v5330
        %v5332 = vrot.slane %v4768, 2
        %v5333 = vrot.slane %v4634, 2
        %v5334 = vsel %vm1885, %v5332, %v5333
        %v5335 = vrot.slane %v4800, 2
        %v5336 = vsel %vm1885, %v5333, %v5335
        %v5337 = vrot.slane %v4769, 2
        %v5338 = vrot.slane %v4637, 2
        %v5339 = vsel %vm1885, %v5337, %v5338
        %v5340 = vrot.slane %v4801, 2
        %v5341 = vsel %vm1885, %v5338, %v5340
        %v5342 = vrot.slane %v4770, 2
        %v5343 = vrot.slane %v4640, 2
        %v5344 = vsel %vm1885, %v5342, %v5343
        %v5345 = vrot.slane %v4802, 2
        %v5346 = vsel %vm1885, %v5343, %v5345
        %v5347 = vrot.slane %v4771, 2
        %v5348 = vrot.slane %v4643, 2
        %v5349 = vsel %vm1885, %v5347, %v5348
        %v5350 = vrot.slane %v4803, 2
        %v5351 = vsel %vm1885, %v5348, %v5350
        %5352 = vrot.lane.b32.xlu0 %v5201, 16
        %v5353 = vpop.permute.xlu0 %5352
        %5354 = vrot.lane.b32.xlu0 %v5204, 16
        %v5355 = vpop.permute.xlu0 %5354
        %5356 = vrot.lane.b32.xlu0 %v5206, 16
        %v5357 = vpop.permute.xlu0 %5356
        %5358 = vrot.lane.b32.xlu0 %v5209, 16
        %v5359 = vpop.permute.xlu0 %5358
        %5360 = vrot.lane.b32.xlu0 %v5211, 16
        %v5361 = vpop.permute.xlu0 %5360
        %5362 = vrot.lane.b32.xlu0 %v5214, 16
        %v5363 = vpop.permute.xlu0 %5362
        %5364 = vrot.lane.b32.xlu0 %v5216, 16
        %v5365 = vpop.permute.xlu0 %5364
        %5366 = vrot.lane.b32.xlu0 %v5219, 16
        %v5367 = vpop.permute.xlu0 %5366
        %5368 = vrot.lane.b32.xlu0 %v5221, 16
        %v5369 = vpop.permute.xlu0 %5368
        %5370 = vrot.lane.b32.xlu0 %v5224, 16
        %v5371 = vpop.permute.xlu0 %5370
        %5372 = vrot.lane.b32.xlu0 %v5226, 16
        %v5373 = vpop.permute.xlu0 %5372
        %5374 = vrot.lane.b32.xlu0 %v5229, 16
        %v5375 = vpop.permute.xlu0 %5374
        %5376 = vrot.lane.b32.xlu0 %v5231, 16
        %v5377 = vpop.permute.xlu0 %5376
        %5378 = vrot.lane.b32.xlu0 %v5234, 16
        %v5379 = vpop.permute.xlu0 %5378
        %5380 = vrot.lane.b32.xlu0 %v5236, 16
        %v5381 = vpop.permute.xlu0 %5380
        %5382 = vrot.lane.b32.xlu0 %v5239, 16
        %v5383 = vpop.permute.xlu0 %5382
        %5384 = vrot.lane.b32.xlu0 %v5241, 16
        %v5385 = vpop.permute.xlu0 %5384
        %5386 = vrot.lane.b32.xlu0 %v5244, 16
        %v5387 = vpop.permute.xlu0 %5386
        %5388 = vrot.lane.b32.xlu0 %v5246, 16
        %v5389 = vpop.permute.xlu0 %5388
        %5390 = vrot.lane.b32.xlu0 %v5249, 16
        %v5391 = vpop.permute.xlu0 %5390
        %5392 = vrot.lane.b32.xlu0 %v5251, 16
        %v5393 = vpop.permute.xlu0 %5392
        %5394 = vrot.lane.b32.xlu0 %v5254, 16
        %v5395 = vpop.permute.xlu0 %5394
        %5396 = vrot.lane.b32.xlu0 %v5256, 16
        %v5397 = vpop.permute.xlu0 %5396
        %5398 = vrot.lane.b32.xlu0 %v5259, 16
        %v5399 = vpop.permute.xlu0 %5398
        %5400 = vrot.lane.b32.xlu0 %v5261, 16
        %v5401 = vpop.permute.xlu0 %5400
        %5402 = vrot.lane.b32.xlu0 %v5264, 16
        %v5403 = vpop.permute.xlu0 %5402
        %5404 = vrot.lane.b32.xlu0 %v5266, 16
        %v5405 = vpop.permute.xlu0 %5404
        %5406 = vrot.lane.b32.xlu0 %v5269, 16
        %v5407 = vpop.permute.xlu0 %5406
        %5408 = vrot.lane.b32.xlu0 %v5271, 16
        %v5409 = vpop.permute.xlu0 %5408
        %5410 = vrot.lane.b32.xlu0 %v5274, 16
        %v5411 = vpop.permute.xlu0 %5410
        %5412 = vrot.lane.b32.xlu0 %v5276, 16
        %v5413 = vpop.permute.xlu0 %5412
        %5414 = vrot.lane.b32.xlu0 %v5279, 16
        %v5415 = vpop.permute.xlu0 %5414
        %5416 = vrot.lane.b32.xlu0 %v5281, 16
        %v5417 = vpop.permute.xlu0 %5416
        %5418 = vrot.lane.b32.xlu0 %v5284, 16
        %v5419 = vpop.permute.xlu0 %5418
        %5420 = vrot.lane.b32.xlu0 %v5286, 16
        %v5421 = vpop.permute.xlu0 %5420
        %5422 = vrot.lane.b32.xlu0 %v5289, 16
        %v5423 = vpop.permute.xlu0 %5422
        %5424 = vrot.lane.b32.xlu0 %v5291, 16
        %v5425 = vpop.permute.xlu0 %5424
        %5426 = vrot.lane.b32.xlu0 %v5294, 16
        %v5427 = vpop.permute.xlu0 %5426
        %5428 = vrot.lane.b32.xlu0 %v5296, 16
        %v5429 = vpop.permute.xlu0 %5428
        %5430 = vrot.lane.b32.xlu0 %v5299, 16
        %v5431 = vpop.permute.xlu0 %5430
        %5432 = vrot.lane.b32.xlu0 %v5301, 16
        %v5433 = vpop.permute.xlu0 %5432
        %5434 = vrot.lane.b32.xlu0 %v5304, 16
        %v5435 = vpop.permute.xlu0 %5434
        %5436 = vrot.lane.b32.xlu0 %v5306, 16
        %v5437 = vpop.permute.xlu0 %5436
        %5438 = vrot.lane.b32.xlu0 %v5309, 16
        %v5439 = vpop.permute.xlu0 %5438
        %5440 = vrot.lane.b32.xlu0 %v5311, 16
        %v5441 = vpop.permute.xlu0 %5440
        %5442 = vrot.lane.b32.xlu0 %v5314, 16
        %v5443 = vpop.permute.xlu0 %5442
        %5444 = vrot.lane.b32.xlu0 %v5316, 16
        %v5445 = vpop.permute.xlu0 %5444
        %5446 = vrot.lane.b32.xlu0 %v5319, 16
        %v5447 = vpop.permute.xlu0 %5446
        %5448 = vrot.lane.b32.xlu0 %v5321, 16
        %v5449 = vpop.permute.xlu0 %5448
        %5450 = vrot.lane.b32.xlu0 %v5324, 16
        %v5451 = vpop.permute.xlu0 %5450
        %5452 = vrot.lane.b32.xlu0 %v5326, 16
        %v5453 = vpop.permute.xlu0 %5452
        %5454 = vrot.lane.b32.xlu0 %v5329, 16
        %v5455 = vpop.permute.xlu0 %5454
        %5456 = vrot.lane.b32.xlu0 %v5331, 16
        %v5457 = vpop.permute.xlu0 %5456
        %5458 = vrot.lane.b32.xlu0 %v5334, 16
        %v5459 = vpop.permute.xlu0 %5458
        %5460 = vrot.lane.b32.xlu0 %v5336, 16
        %v5461 = vpop.permute.xlu0 %5460
        %5462 = vrot.lane.b32.xlu0 %v5339, 16
        %v5463 = vpop.permute.xlu0 %5462
        %5464 = vrot.lane.b32.xlu0 %v5341, 16
        %v5465 = vpop.permute.xlu0 %5464
        %5466 = vrot.lane.b32.xlu0 %v5344, 16
        %v5467 = vpop.permute.xlu0 %5466
        %5468 = vrot.lane.b32.xlu0 %v5346, 16
        %v5469 = vpop.permute.xlu0 %5468
        %5470 = vrot.lane.b32.xlu0 %v5349, 16
        %v5471 = vpop.permute.xlu0 %5470
        %5472 = vrot.lane.b32.xlu0 %v5351, 16
        %v5473 = vpop.permute.xlu0 %5472
        %5537 = vrot.lane.b32.xlu0 %v4741, 24
        %v5538 = vpop.permute.xlu0 %5537
        %5539 = vrot.lane.b32.xlu0 %v4553, 24
        %v5540 = vpop.permute.xlu0 %5539
        %5541 = vrot.lane.b32.xlu0 %v4742, 24
        %v5542 = vpop.permute.xlu0 %5541
        %5543 = vrot.lane.b32.xlu0 %v4556, 24
        %v5544 = vpop.permute.xlu0 %5543
        %5545 = vrot.lane.b32.xlu0 %v4743, 24
        %v5546 = vpop.permute.xlu0 %5545
        %5547 = vrot.lane.b32.xlu0 %v4559, 24
        %v5548 = vpop.permute.xlu0 %5547
        %5549 = vrot.lane.b32.xlu0 %v4744, 24
        %v5550 = vpop.permute.xlu0 %5549
        %5551 = vrot.lane.b32.xlu0 %v4562, 24
        %v5552 = vpop.permute.xlu0 %5551
        %5553 = vrot.lane.b32.xlu0 %v4745, 24
        %v5554 = vpop.permute.xlu0 %5553
        %5555 = vrot.lane.b32.xlu0 %v4565, 24
        %v5556 = vpop.permute.xlu0 %5555
        %5557 = vrot.lane.b32.xlu0 %v4746, 24
        %v5558 = vpop.permute.xlu0 %5557
        %5559 = vrot.lane.b32.xlu0 %v4568, 24
        %v5560 = vpop.permute.xlu0 %5559
        %5561 = vrot.lane.b32.xlu0 %v4747, 24
        %v5562 = vpop.permute.xlu0 %5561
        %5563 = vrot.lane.b32.xlu0 %v4571, 24
        %v5564 = vpop.permute.xlu0 %5563
        %5565 = vrot.lane.b32.xlu0 %v4748, 24
        %v5566 = vpop.permute.xlu0 %5565
        %5567 = vrot.lane.b32.xlu0 %v4574, 24
        %v5568 = vpop.permute.xlu0 %5567
        %5569 = vrot.lane.b32.xlu0 %v4749, 24
        %v5570 = vpop.permute.xlu0 %5569
        %5571 = vrot.lane.b32.xlu0 %v4577, 24
        %v5572 = vpop.permute.xlu0 %5571
        %5573 = vrot.lane.b32.xlu0 %v4750, 24
        %v5574 = vpop.permute.xlu0 %5573
        %5575 = vrot.lane.b32.xlu0 %v4580, 24
        %v5576 = vpop.permute.xlu0 %5575
        %5577 = vrot.lane.b32.xlu0 %v4751, 24
        %v5578 = vpop.permute.xlu0 %5577
        %5579 = vrot.lane.b32.xlu0 %v4583, 24
        %v5580 = vpop.permute.xlu0 %5579
        %5581 = vrot.lane.b32.xlu0 %v4752, 24
        %v5582 = vpop.permute.xlu0 %5581
        %5583 = vrot.lane.b32.xlu0 %v4586, 24
        %v5584 = vpop.permute.xlu0 %5583
        %5585 = vrot.lane.b32.xlu0 %v4753, 24
        %v5586 = vpop.permute.xlu0 %5585
        %5587 = vrot.lane.b32.xlu0 %v4589, 24
        %v5588 = vpop.permute.xlu0 %5587
        %5589 = vrot.lane.b32.xlu0 %v4754, 24
        %v5590 = vpop.permute.xlu0 %5589
        %5591 = vrot.lane.b32.xlu0 %v4592, 24
        %v5592 = vpop.permute.xlu0 %5591
        %5593 = vrot.lane.b32.xlu0 %v4755, 24
        %v5594 = vpop.permute.xlu0 %5593
        %5595 = vrot.lane.b32.xlu0 %v4595, 24
        %v5596 = vpop.permute.xlu0 %5595
        %5597 = vrot.lane.b32.xlu0 %v4756, 24
        %v5598 = vpop.permute.xlu0 %5597
        %5599 = vrot.lane.b32.xlu0 %v4598, 24
        %v5600 = vpop.permute.xlu0 %5599
        %5601 = vrot.lane.b32.xlu0 %v4757, 24
        %v5602 = vpop.permute.xlu0 %5601
        %5603 = vrot.lane.b32.xlu0 %v4601, 24
        %v5604 = vpop.permute.xlu0 %5603
        %5605 = vrot.lane.b32.xlu0 %v4758, 24
        %v5606 = vpop.permute.xlu0 %5605
        %5607 = vrot.lane.b32.xlu0 %v4604, 24
        %v5608 = vpop.permute.xlu0 %5607
        %5609 = vrot.lane.b32.xlu0 %v4759, 24
        %v5610 = vpop.permute.xlu0 %5609
        %5611 = vrot.lane.b32.xlu0 %v4607, 24
        %v5612 = vpop.permute.xlu0 %5611
        %5613 = vrot.lane.b32.xlu0 %v4760, 24
        %v5614 = vpop.permute.xlu0 %5613
        %5615 = vrot.lane.b32.xlu0 %v4610, 24
        %v5616 = vpop.permute.xlu0 %5615
        %5617 = vrot.lane.b32.xlu0 %v4761, 24
        %v5618 = vpop.permute.xlu0 %5617
        %5619 = vrot.lane.b32.xlu0 %v4613, 24
        %v5620 = vpop.permute.xlu0 %5619
        %5621 = vrot.lane.b32.xlu0 %v4762, 24
        %v5622 = vpop.permute.xlu0 %5621
        %5623 = vrot.lane.b32.xlu0 %v4616, 24
        %v5624 = vpop.permute.xlu0 %5623
        %5625 = vrot.lane.b32.xlu0 %v4763, 24
        %v5626 = vpop.permute.xlu0 %5625
        %5627 = vrot.lane.b32.xlu0 %v4619, 24
        %v5628 = vpop.permute.xlu0 %5627
        %5629 = vrot.lane.b32.xlu0 %v4764, 24
        %v5630 = vpop.permute.xlu0 %5629
        %5631 = vrot.lane.b32.xlu0 %v4622, 24
        %v5632 = vpop.permute.xlu0 %5631
        %5633 = vrot.lane.b32.xlu0 %v4765, 24
        %v5634 = vpop.permute.xlu0 %5633
        %5635 = vrot.lane.b32.xlu0 %v4625, 24
        %v5636 = vpop.permute.xlu0 %5635
        %5637 = vrot.lane.b32.xlu0 %v4766, 24
        %v5638 = vpop.permute.xlu0 %5637
        %5639 = vrot.lane.b32.xlu0 %v4628, 24
        %v5640 = vpop.permute.xlu0 %5639
        %5641 = vrot.lane.b32.xlu0 %v4767, 24
        %v5642 = vpop.permute.xlu0 %5641
        %5643 = vrot.lane.b32.xlu0 %v4631, 24
        %v5644 = vpop.permute.xlu0 %5643
        %5645 = vrot.lane.b32.xlu0 %v4768, 24
        %v5646 = vpop.permute.xlu0 %5645
        %5647 = vrot.lane.b32.xlu0 %v4634, 24
        %v5648 = vpop.permute.xlu0 %5647
        %5649 = vrot.lane.b32.xlu0 %v4769, 24
        %v5650 = vpop.permute.xlu0 %5649
        %5651 = vrot.lane.b32.xlu0 %v4637, 24
        %v5652 = vpop.permute.xlu0 %5651
        %5653 = vrot.lane.b32.xlu0 %v4770, 24
        %v5654 = vpop.permute.xlu0 %5653
        %5655 = vrot.lane.b32.xlu0 %v4640, 24
        %v5656 = vpop.permute.xlu0 %5655
        %5657 = vrot.lane.b32.xlu0 %v4771, 24
        %v5658 = vpop.permute.xlu0 %5657
        %5659 = vrot.lane.b32.xlu0 %v4643, 24
        %v5660 = vpop.permute.xlu0 %5659
        %5661 = vrot.lane.b32.xlu0 %v4772, 24
        %v5662 = vpop.permute.xlu0 %5661
        %5663 = vrot.lane.b32.xlu0 %v4646, 24
        %v5664 = vpop.permute.xlu0 %5663
        %v5731 = vrot.slane %v4756, 1
        %v5732 = vrot.slane %v4598, 1
        %v5733 = vsel %vm1424, %v5731, %v5732
        %v5734 = vrot.slane %v4788, 1
        %v5735 = vsel %vm1424, %v5732, %v5734
        %v5736 = vrot.slane %v4772, 1
        %v5737 = vrot.slane %v4646, 1
        %v5738 = vsel %vm1424, %v5736, %v5737
        %v5739 = vrot.slane %v4804, 1
        %v5740 = vsel %vm1424, %v5737, %v5739
        %5741 = vrot.lane.b32.xlu0 %v4869, 32
        %v5742 = vpop.permute.xlu0 %5741
        %5743 = vrot.lane.b32.xlu0 %v4871, 32
        %v5744 = vpop.permute.xlu0 %5743
        %5745 = vrot.lane.b32.xlu0 %v4874, 32
        %v5746 = vpop.permute.xlu0 %5745
        %5747 = vrot.lane.b32.xlu0 %v4876, 32
        %v5748 = vpop.permute.xlu0 %5747
        %5749 = vrot.lane.b32.xlu0 %v4879, 32
        %v5750 = vpop.permute.xlu0 %5749
        %5751 = vrot.lane.b32.xlu0 %v4881, 32
        %v5752 = vpop.permute.xlu0 %5751
        %5753 = vrot.lane.b32.xlu0 %v4884, 32
        %v5754 = vpop.permute.xlu0 %5753
        %5755 = vrot.lane.b32.xlu0 %v4886, 32
        %v5756 = vpop.permute.xlu0 %5755
        %5757 = vrot.lane.b32.xlu0 %v4889, 32
        %v5758 = vpop.permute.xlu0 %5757
        %5759 = vrot.lane.b32.xlu0 %v4891, 32
        %v5760 = vpop.permute.xlu0 %5759
        %5761 = vrot.lane.b32.xlu0 %v4894, 32
        %v5762 = vpop.permute.xlu0 %5761
        %5763 = vrot.lane.b32.xlu0 %v4896, 32
        %v5764 = vpop.permute.xlu0 %5763
        %5765 = vrot.lane.b32.xlu0 %v4899, 32
        %v5766 = vpop.permute.xlu0 %5765
        %5767 = vrot.lane.b32.xlu0 %v4901, 32
        %v5768 = vpop.permute.xlu0 %5767
        %5769 = vrot.lane.b32.xlu0 %v4904, 32
        %v5770 = vpop.permute.xlu0 %5769
        %5771 = vrot.lane.b32.xlu0 %v4906, 32
        %v5772 = vpop.permute.xlu0 %5771
        %5773 = vrot.lane.b32.xlu0 %v4909, 32
        %v5774 = vpop.permute.xlu0 %5773
        %5775 = vrot.lane.b32.xlu0 %v4911, 32
        %v5776 = vpop.permute.xlu0 %5775
        %5777 = vrot.lane.b32.xlu0 %v4914, 32
        %v5778 = vpop.permute.xlu0 %5777
        %5779 = vrot.lane.b32.xlu0 %v4916, 32
        %v5780 = vpop.permute.xlu0 %5779
        %5781 = vrot.lane.b32.xlu0 %v4919, 32
        %v5782 = vpop.permute.xlu0 %5781
        %5783 = vrot.lane.b32.xlu0 %v4921, 32
        %v5784 = vpop.permute.xlu0 %5783
        %5785 = vrot.lane.b32.xlu0 %v4924, 32
        %v5786 = vpop.permute.xlu0 %5785
        %5787 = vrot.lane.b32.xlu0 %v4926, 32
        %v5788 = vpop.permute.xlu0 %5787
        %5789 = vrot.lane.b32.xlu0 %v4929, 32
        %v5790 = vpop.permute.xlu0 %5789
        %5791 = vrot.lane.b32.xlu0 %v4931, 32
        %v5792 = vpop.permute.xlu0 %5791
        %5793 = vrot.lane.b32.xlu0 %v4934, 32
        %v5794 = vpop.permute.xlu0 %5793
        %5795 = vrot.lane.b32.xlu0 %v4936, 32
        %v5796 = vpop.permute.xlu0 %5795
        %5797 = vrot.lane.b32.xlu0 %v4939, 32
        %v5798 = vpop.permute.xlu0 %5797
        %5799 = vrot.lane.b32.xlu0 %v4941, 32
        %v5800 = vpop.permute.xlu0 %5799
        %5801 = vrot.lane.b32.xlu0 %v5733, 32
        %v5802 = vpop.permute.xlu0 %5801
        %5803 = vrot.lane.b32.xlu0 %v5735, 32
        %v5804 = vpop.permute.xlu0 %5803
        %5805 = vrot.lane.b32.xlu0 %v4944, 32
        %v5806 = vpop.permute.xlu0 %5805
        %5807 = vrot.lane.b32.xlu0 %v4946, 32
        %v5808 = vpop.permute.xlu0 %5807
        %5809 = vrot.lane.b32.xlu0 %v4949, 32
        %v5810 = vpop.permute.xlu0 %5809
        %5811 = vrot.lane.b32.xlu0 %v4951, 32
        %v5812 = vpop.permute.xlu0 %5811
        %5813 = vrot.lane.b32.xlu0 %v4954, 32
        %v5814 = vpop.permute.xlu0 %5813
        %5815 = vrot.lane.b32.xlu0 %v4956, 32
        %v5816 = vpop.permute.xlu0 %5815
        %5817 = vrot.lane.b32.xlu0 %v4959, 32
        %v5818 = vpop.permute.xlu0 %5817
        %5819 = vrot.lane.b32.xlu0 %v4961, 32
        %v5820 = vpop.permute.xlu0 %5819
        %5821 = vrot.lane.b32.xlu0 %v4964, 32
        %v5822 = vpop.permute.xlu0 %5821
        %5823 = vrot.lane.b32.xlu0 %v4966, 32
        %v5824 = vpop.permute.xlu0 %5823
        %5825 = vrot.lane.b32.xlu0 %v4969, 32
        %v5826 = vpop.permute.xlu0 %5825
        %5827 = vrot.lane.b32.xlu0 %v4971, 32
        %v5828 = vpop.permute.xlu0 %5827
        %5829 = vrot.lane.b32.xlu0 %v4974, 32
        %v5830 = vpop.permute.xlu0 %5829
        %5831 = vrot.lane.b32.xlu0 %v4976, 32
        %v5832 = vpop.permute.xlu0 %5831
        %5833 = vrot.lane.b32.xlu0 %v4979, 32
        %v5834 = vpop.permute.xlu0 %5833
        %5835 = vrot.lane.b32.xlu0 %v4981, 32
        %v5836 = vpop.permute.xlu0 %5835
        %5837 = vrot.lane.b32.xlu0 %v4984, 32
        %v5838 = vpop.permute.xlu0 %5837
        %5839 = vrot.lane.b32.xlu0 %v4986, 32
        %v5840 = vpop.permute.xlu0 %5839
        %5841 = vrot.lane.b32.xlu0 %v4989, 32
        %v5842 = vpop.permute.xlu0 %5841
        %5843 = vrot.lane.b32.xlu0 %v4991, 32
        %v5844 = vpop.permute.xlu0 %5843
        %5845 = vrot.lane.b32.xlu0 %v4994, 32
        %v5846 = vpop.permute.xlu0 %5845
        %5847 = vrot.lane.b32.xlu0 %v4996, 32
        %v5848 = vpop.permute.xlu0 %5847
        %5849 = vrot.lane.b32.xlu0 %v4999, 32
        %v5850 = vpop.permute.xlu0 %5849
        %5851 = vrot.lane.b32.xlu0 %v5001, 32
        %v5852 = vpop.permute.xlu0 %5851
        %5853 = vrot.lane.b32.xlu0 %v5004, 32
        %v5854 = vpop.permute.xlu0 %5853
        %5855 = vrot.lane.b32.xlu0 %v5006, 32
        %v5856 = vpop.permute.xlu0 %5855
        %5857 = vrot.lane.b32.xlu0 %v5009, 32
        %v5858 = vpop.permute.xlu0 %5857
        %5859 = vrot.lane.b32.xlu0 %v5011, 32
        %v5860 = vpop.permute.xlu0 %5859
        %5861 = vrot.lane.b32.xlu0 %v5014, 32
        %v5862 = vpop.permute.xlu0 %5861
        %5863 = vrot.lane.b32.xlu0 %v5016, 32
        %v5864 = vpop.permute.xlu0 %5863
        %5865 = vrot.lane.b32.xlu0 %v5738, 32
        %v5866 = vpop.permute.xlu0 %5865
        %5867 = vrot.lane.b32.xlu0 %v5740, 32
        %v5868 = vpop.permute.xlu0 %5867
        %v5933 = vrot.slane %v4756, 2
        %v5934 = vrot.slane %v4598, 2
        %v5935 = vsel %vm1885, %v5933, %v5934
        %v5936 = vrot.slane %v4788, 2
        %v5937 = vsel %vm1885, %v5934, %v5936
        %v5938 = vrot.slane %v4772, 2
        %v5939 = vrot.slane %v4646, 2
        %v5940 = vsel %vm1885, %v5938, %v5939
        %v5941 = vrot.slane %v4804, 2
        %v5942 = vsel %vm1885, %v5939, %v5941
        %5943 = vrot.lane.b32.xlu0 %v5204, 40
        %v5944 = vpop.permute.xlu0 %5943
        %5945 = vrot.lane.b32.xlu0 %v5206, 40
        %v5946 = vpop.permute.xlu0 %5945
        %5947 = vrot.lane.b32.xlu0 %v5209, 40
        %v5948 = vpop.permute.xlu0 %5947
        %5949 = vrot.lane.b32.xlu0 %v5211, 40
        %v5950 = vpop.permute.xlu0 %5949
        %5951 = vrot.lane.b32.xlu0 %v5214, 40
        %v5952 = vpop.permute.xlu0 %5951
        %5953 = vrot.lane.b32.xlu0 %v5216, 40
        %v5954 = vpop.permute.xlu0 %5953
        %5955 = vrot.lane.b32.xlu0 %v5219, 40
        %v5956 = vpop.permute.xlu0 %5955
        %5957 = vrot.lane.b32.xlu0 %v5221, 40
        %v5958 = vpop.permute.xlu0 %5957
        %5959 = vrot.lane.b32.xlu0 %v5224, 40
        %v5960 = vpop.permute.xlu0 %5959
        %5961 = vrot.lane.b32.xlu0 %v5226, 40
        %v5962 = vpop.permute.xlu0 %5961
        %5963 = vrot.lane.b32.xlu0 %v5229, 40
        %v5964 = vpop.permute.xlu0 %5963
        %5965 = vrot.lane.b32.xlu0 %v5231, 40
        %v5966 = vpop.permute.xlu0 %5965
        %5967 = vrot.lane.b32.xlu0 %v5234, 40
        %v5968 = vpop.permute.xlu0 %5967
        %5969 = vrot.lane.b32.xlu0 %v5236, 40
        %v5970 = vpop.permute.xlu0 %5969
        %5971 = vrot.lane.b32.xlu0 %v5239, 40
        %v5972 = vpop.permute.xlu0 %5971
        %5973 = vrot.lane.b32.xlu0 %v5241, 40
        %v5974 = vpop.permute.xlu0 %5973
        %5975 = vrot.lane.b32.xlu0 %v5244, 40
        %v5976 = vpop.permute.xlu0 %5975
        %5977 = vrot.lane.b32.xlu0 %v5246, 40
        %v5978 = vpop.permute.xlu0 %5977
        %5979 = vrot.lane.b32.xlu0 %v5249, 40
        %v5980 = vpop.permute.xlu0 %5979
        %5981 = vrot.lane.b32.xlu0 %v5251, 40
        %v5982 = vpop.permute.xlu0 %5981
        %5983 = vrot.lane.b32.xlu0 %v5254, 40
        %v5984 = vpop.permute.xlu0 %5983
        %5985 = vrot.lane.b32.xlu0 %v5256, 40
        %v5986 = vpop.permute.xlu0 %5985
        %5987 = vrot.lane.b32.xlu0 %v5259, 40
        %v5988 = vpop.permute.xlu0 %5987
        %5989 = vrot.lane.b32.xlu0 %v5261, 40
        %v5990 = vpop.permute.xlu0 %5989
        %5991 = vrot.lane.b32.xlu0 %v5264, 40
        %v5992 = vpop.permute.xlu0 %5991
        %5993 = vrot.lane.b32.xlu0 %v5266, 40
        %v5994 = vpop.permute.xlu0 %5993
        %5995 = vrot.lane.b32.xlu0 %v5269, 40
        %v5996 = vpop.permute.xlu0 %5995
        %5997 = vrot.lane.b32.xlu0 %v5271, 40
        %v5998 = vpop.permute.xlu0 %5997
        %5999 = vrot.lane.b32.xlu0 %v5274, 40
        %v6000 = vpop.permute.xlu0 %5999
        %6001 = vrot.lane.b32.xlu0 %v5276, 40
        %v6002 = vpop.permute.xlu0 %6001
        %6003 = vrot.lane.b32.xlu0 %v5935, 40
        %v6004 = vpop.permute.xlu0 %6003
        %6005 = vrot.lane.b32.xlu0 %v5937, 40
        %v6006 = vpop.permute.xlu0 %6005
        %6007 = vrot.lane.b32.xlu0 %v5279, 40
        %v6008 = vpop.permute.xlu0 %6007
        %6009 = vrot.lane.b32.xlu0 %v5281, 40
        %v6010 = vpop.permute.xlu0 %6009
        %6011 = vrot.lane.b32.xlu0 %v5284, 40
        %v6012 = vpop.permute.xlu0 %6011
        %6013 = vrot.lane.b32.xlu0 %v5286, 40
        %v6014 = vpop.permute.xlu0 %6013
        %6015 = vrot.lane.b32.xlu0 %v5289, 40
        %v6016 = vpop.permute.xlu0 %6015
        %6017 = vrot.lane.b32.xlu0 %v5291, 40
        %v6018 = vpop.permute.xlu0 %6017
        %6019 = vrot.lane.b32.xlu0 %v5294, 40
        %v6020 = vpop.permute.xlu0 %6019
        %6021 = vrot.lane.b32.xlu0 %v5296, 40
        %v6022 = vpop.permute.xlu0 %6021
        %6023 = vrot.lane.b32.xlu0 %v5299, 40
        %v6024 = vpop.permute.xlu0 %6023
        %6025 = vrot.lane.b32.xlu0 %v5301, 40
        %v6026 = vpop.permute.xlu0 %6025
        %6027 = vrot.lane.b32.xlu0 %v5304, 40
        %v6028 = vpop.permute.xlu0 %6027
        %6029 = vrot.lane.b32.xlu0 %v5306, 40
        %v6030 = vpop.permute.xlu0 %6029
        %6031 = vrot.lane.b32.xlu0 %v5309, 40
        %v6032 = vpop.permute.xlu0 %6031
        %6033 = vrot.lane.b32.xlu0 %v5311, 40
        %v6034 = vpop.permute.xlu0 %6033
        %6035 = vrot.lane.b32.xlu0 %v5314, 40
        %v6036 = vpop.permute.xlu0 %6035
        %6037 = vrot.lane.b32.xlu0 %v5316, 40
        %v6038 = vpop.permute.xlu0 %6037
        %6039 = vrot.lane.b32.xlu0 %v5319, 40
        %v6040 = vpop.permute.xlu0 %6039
        %6041 = vrot.lane.b32.xlu0 %v5321, 40
        %v6042 = vpop.permute.xlu0 %6041
        %6043 = vrot.lane.b32.xlu0 %v5324, 40
        %v6044 = vpop.permute.xlu0 %6043
        %6045 = vrot.lane.b32.xlu0 %v5326, 40
        %v6046 = vpop.permute.xlu0 %6045
        %6047 = vrot.lane.b32.xlu0 %v5329, 40
        %v6048 = vpop.permute.xlu0 %6047
        %6049 = vrot.lane.b32.xlu0 %v5331, 40
        %v6050 = vpop.permute.xlu0 %6049
        %6051 = vrot.lane.b32.xlu0 %v5334, 40
        %v6052 = vpop.permute.xlu0 %6051
        %6053 = vrot.lane.b32.xlu0 %v5336, 40
        %v6054 = vpop.permute.xlu0 %6053
        %6055 = vrot.lane.b32.xlu0 %v5339, 40
        %v6056 = vpop.permute.xlu0 %6055
        %6057 = vrot.lane.b32.xlu0 %v5341, 40
        %v6058 = vpop.permute.xlu0 %6057
        %6059 = vrot.lane.b32.xlu0 %v5344, 40
        %v6060 = vpop.permute.xlu0 %6059
        %6061 = vrot.lane.b32.xlu0 %v5346, 40
        %v6062 = vpop.permute.xlu0 %6061
        %6063 = vrot.lane.b32.xlu0 %v5349, 40
        %v6064 = vpop.permute.xlu0 %6063
        %6065 = vrot.lane.b32.xlu0 %v5351, 40
        %v6066 = vpop.permute.xlu0 %6065
        %6067 = vrot.lane.b32.xlu0 %v5940, 40
        %v6068 = vpop.permute.xlu0 %6067
        %6069 = vrot.lane.b32.xlu0 %v5942, 40
        %v6070 = vpop.permute.xlu0 %6069
        %6135 = vrot.lane.b32.xlu0 %v4742, 48
        %v6136 = vpop.permute.xlu0 %6135
        %6137 = vrot.lane.b32.xlu0 %v4556, 48
        %v6138 = vpop.permute.xlu0 %6137
        %6139 = vrot.lane.b32.xlu0 %v4743, 48
        %v6140 = vpop.permute.xlu0 %6139
        %6141 = vrot.lane.b32.xlu0 %v4559, 48
        %v6142 = vpop.permute.xlu0 %6141
        %6143 = vrot.lane.b32.xlu0 %v4744, 48
        %v6144 = vpop.permute.xlu0 %6143
        %6145 = vrot.lane.b32.xlu0 %v4562, 48
        %v6146 = vpop.permute.xlu0 %6145
        %6147 = vrot.lane.b32.xlu0 %v4745, 48
        %v6148 = vpop.permute.xlu0 %6147
        %6149 = vrot.lane.b32.xlu0 %v4565, 48
        %v6150 = vpop.permute.xlu0 %6149
        %6151 = vrot.lane.b32.xlu0 %v4746, 48
        %v6152 = vpop.permute.xlu0 %6151
        %6153 = vrot.lane.b32.xlu0 %v4568, 48
        %v6154 = vpop.permute.xlu0 %6153
        %6155 = vrot.lane.b32.xlu0 %v4747, 48
        %v6156 = vpop.permute.xlu0 %6155
        %6157 = vrot.lane.b32.xlu0 %v4571, 48
        %v6158 = vpop.permute.xlu0 %6157
        %6159 = vrot.lane.b32.xlu0 %v4748, 48
        %v6160 = vpop.permute.xlu0 %6159
        %6161 = vrot.lane.b32.xlu0 %v4574, 48
        %v6162 = vpop.permute.xlu0 %6161
        %6163 = vrot.lane.b32.xlu0 %v4749, 48
        %v6164 = vpop.permute.xlu0 %6163
        %6165 = vrot.lane.b32.xlu0 %v4577, 48
        %v6166 = vpop.permute.xlu0 %6165
        %6167 = vrot.lane.b32.xlu0 %v4750, 48
        %v6168 = vpop.permute.xlu0 %6167
        %6169 = vrot.lane.b32.xlu0 %v4580, 48
        %v6170 = vpop.permute.xlu0 %6169
        %6171 = vrot.lane.b32.xlu0 %v4751, 48
        %v6172 = vpop.permute.xlu0 %6171
        %6173 = vrot.lane.b32.xlu0 %v4583, 48
        %v6174 = vpop.permute.xlu0 %6173
        %6175 = vrot.lane.b32.xlu0 %v4752, 48
        %v6176 = vpop.permute.xlu0 %6175
        %6177 = vrot.lane.b32.xlu0 %v4586, 48
        %v6178 = vpop.permute.xlu0 %6177
        %6179 = vrot.lane.b32.xlu0 %v4753, 48
        %v6180 = vpop.permute.xlu0 %6179
        %6181 = vrot.lane.b32.xlu0 %v4589, 48
        %v6182 = vpop.permute.xlu0 %6181
        %6183 = vrot.lane.b32.xlu0 %v4754, 48
        %v6184 = vpop.permute.xlu0 %6183
        %6185 = vrot.lane.b32.xlu0 %v4592, 48
        %v6186 = vpop.permute.xlu0 %6185
        %6187 = vrot.lane.b32.xlu0 %v4755, 48
        %v6188 = vpop.permute.xlu0 %6187
        %6189 = vrot.lane.b32.xlu0 %v4595, 48
        %v6190 = vpop.permute.xlu0 %6189
        %6191 = vrot.lane.b32.xlu0 %v4756, 48
        %v6192 = vpop.permute.xlu0 %6191
        %6193 = vrot.lane.b32.xlu0 %v4598, 48
        %v6194 = vpop.permute.xlu0 %6193
        %6195 = vrot.lane.b32.xlu0 0.0, 48
        %v6196 = vpop.permute.xlu0 %6195
        %6197 = vrot.lane.b32.xlu0 %v4758, 48
        %v6198 = vpop.permute.xlu0 %6197
        %6199 = vrot.lane.b32.xlu0 %v4604, 48
        %v6200 = vpop.permute.xlu0 %6199
        %6201 = vrot.lane.b32.xlu0 %v4759, 48
        %v6202 = vpop.permute.xlu0 %6201
        %6203 = vrot.lane.b32.xlu0 %v4607, 48
        %v6204 = vpop.permute.xlu0 %6203
        %6205 = vrot.lane.b32.xlu0 %v4760, 48
        %v6206 = vpop.permute.xlu0 %6205
        %6207 = vrot.lane.b32.xlu0 %v4610, 48
        %v6208 = vpop.permute.xlu0 %6207
        %6209 = vrot.lane.b32.xlu0 %v4761, 48
        %v6210 = vpop.permute.xlu0 %6209
        %6211 = vrot.lane.b32.xlu0 %v4613, 48
        %v6212 = vpop.permute.xlu0 %6211
        %6213 = vrot.lane.b32.xlu0 %v4762, 48
        %v6214 = vpop.permute.xlu0 %6213
        %6215 = vrot.lane.b32.xlu0 %v4616, 48
        %v6216 = vpop.permute.xlu0 %6215
        %6217 = vrot.lane.b32.xlu0 %v4763, 48
        %v6218 = vpop.permute.xlu0 %6217
        %6219 = vrot.lane.b32.xlu0 %v4619, 48
        %v6220 = vpop.permute.xlu0 %6219
        %6221 = vrot.lane.b32.xlu0 %v4764, 48
        %v6222 = vpop.permute.xlu0 %6221
        %6223 = vrot.lane.b32.xlu0 %v4622, 48
        %v6224 = vpop.permute.xlu0 %6223
        %6225 = vrot.lane.b32.xlu0 %v4765, 48
        %v6226 = vpop.permute.xlu0 %6225
        %6227 = vrot.lane.b32.xlu0 %v4625, 48
        %v6228 = vpop.permute.xlu0 %6227
        %6229 = vrot.lane.b32.xlu0 %v4766, 48
        %v6230 = vpop.permute.xlu0 %6229
        %6231 = vrot.lane.b32.xlu0 %v4628, 48
        %v6232 = vpop.permute.xlu0 %6231
        %6233 = vrot.lane.b32.xlu0 %v4767, 48
        %v6234 = vpop.permute.xlu0 %6233
        %6235 = vrot.lane.b32.xlu0 %v4631, 48
        %v6236 = vpop.permute.xlu0 %6235
        %6237 = vrot.lane.b32.xlu0 %v4768, 48
        %v6238 = vpop.permute.xlu0 %6237
        %6239 = vrot.lane.b32.xlu0 %v4634, 48
        %v6240 = vpop.permute.xlu0 %6239
        %6241 = vrot.lane.b32.xlu0 %v4769, 48
        %v6242 = vpop.permute.xlu0 %6241
        %6243 = vrot.lane.b32.xlu0 %v4637, 48
        %v6244 = vpop.permute.xlu0 %6243
        %6245 = vrot.lane.b32.xlu0 %v4770, 48
        %v6246 = vpop.permute.xlu0 %6245
        %6247 = vrot.lane.b32.xlu0 %v4640, 48
        %v6248 = vpop.permute.xlu0 %6247
        %6249 = vrot.lane.b32.xlu0 %v4771, 48
        %v6250 = vpop.permute.xlu0 %6249
        %6251 = vrot.lane.b32.xlu0 %v4643, 48
        %v6252 = vpop.permute.xlu0 %6251
        %6253 = vrot.lane.b32.xlu0 %v4772, 48
        %v6254 = vpop.permute.xlu0 %6253
        %6255 = vrot.lane.b32.xlu0 %v4646, 48
        %v6256 = vpop.permute.xlu0 %6255
        %6318 = vrot.lane.b32.xlu0 %v4874, 56
        %v6319 = vpop.permute.xlu0 %6318
        %6320 = vrot.lane.b32.xlu0 %v4876, 56
        %v6321 = vpop.permute.xlu0 %6320
        %6322 = vrot.lane.b32.xlu0 %v4879, 56
        %v6323 = vpop.permute.xlu0 %6322
        %6324 = vrot.lane.b32.xlu0 %v4881, 56
        %v6325 = vpop.permute.xlu0 %6324
        %6326 = vrot.lane.b32.xlu0 %v4884, 56
        %v6327 = vpop.permute.xlu0 %6326
        %6328 = vrot.lane.b32.xlu0 %v4886, 56
        %v6329 = vpop.permute.xlu0 %6328
        %6330 = vrot.lane.b32.xlu0 %v4889, 56
        %v6331 = vpop.permute.xlu0 %6330
        %6332 = vrot.lane.b32.xlu0 %v4891, 56
        %v6333 = vpop.permute.xlu0 %6332
        %6334 = vrot.lane.b32.xlu0 %v4894, 56
        %v6335 = vpop.permute.xlu0 %6334
        %6336 = vrot.lane.b32.xlu0 %v4896, 56
        %v6337 = vpop.permute.xlu0 %6336
        %6338 = vrot.lane.b32.xlu0 %v4899, 56
        %v6339 = vpop.permute.xlu0 %6338
        %6340 = vrot.lane.b32.xlu0 %v4901, 56
        %v6341 = vpop.permute.xlu0 %6340
        %6342 = vrot.lane.b32.xlu0 %v4904, 56
        %v6343 = vpop.permute.xlu0 %6342
        %6344 = vrot.lane.b32.xlu0 %v4906, 56
        %v6345 = vpop.permute.xlu0 %6344
        %6346 = vrot.lane.b32.xlu0 %v4909, 56
        %v6347 = vpop.permute.xlu0 %6346
        %6348 = vrot.lane.b32.xlu0 %v4911, 56
        %v6349 = vpop.permute.xlu0 %6348
        %6350 = vrot.lane.b32.xlu0 %v4914, 56
        %v6351 = vpop.permute.xlu0 %6350
        %6352 = vrot.lane.b32.xlu0 %v4916, 56
        %v6353 = vpop.permute.xlu0 %6352
        %6354 = vrot.lane.b32.xlu0 %v4919, 56
        %v6355 = vpop.permute.xlu0 %6354
        %6356 = vrot.lane.b32.xlu0 %v4921, 56
        %v6357 = vpop.permute.xlu0 %6356
        %6358 = vrot.lane.b32.xlu0 %v4924, 56
        %v6359 = vpop.permute.xlu0 %6358
        %6360 = vrot.lane.b32.xlu0 %v4926, 56
        %v6361 = vpop.permute.xlu0 %6360
        %6362 = vrot.lane.b32.xlu0 %v4929, 56
        %v6363 = vpop.permute.xlu0 %6362
        %6364 = vrot.lane.b32.xlu0 %v4931, 56
        %v6365 = vpop.permute.xlu0 %6364
        %6366 = vrot.lane.b32.xlu0 %v4934, 56
        %v6367 = vpop.permute.xlu0 %6366
        %6368 = vrot.lane.b32.xlu0 %v4936, 56
        %v6369 = vpop.permute.xlu0 %6368
        %6370 = vrot.lane.b32.xlu0 %v4939, 56
        %v6371 = vpop.permute.xlu0 %6370
        %6372 = vrot.lane.b32.xlu0 %v4941, 56
        %v6373 = vpop.permute.xlu0 %6372
        %6374 = vrot.lane.b32.xlu0 %v5733, 56
        %v6375 = vpop.permute.xlu0 %6374
        %6376 = vrot.lane.b32.xlu0 %v5735, 56
        %v6377 = vpop.permute.xlu0 %6376
        %6378 = vrot.lane.b32.xlu0 %v4866, 56
        %v6379 = vpop.permute.xlu0 %6378
        %6380 = vrot.lane.b32.xlu0 %v4949, 56
        %v6381 = vpop.permute.xlu0 %6380
        %6382 = vrot.lane.b32.xlu0 %v4951, 56
        %v6383 = vpop.permute.xlu0 %6382
        %6384 = vrot.lane.b32.xlu0 %v4954, 56
        %v6385 = vpop.permute.xlu0 %6384
        %6386 = vrot.lane.b32.xlu0 %v4956, 56
        %v6387 = vpop.permute.xlu0 %6386
        %6388 = vrot.lane.b32.xlu0 %v4959, 56
        %v6389 = vpop.permute.xlu0 %6388
        %6390 = vrot.lane.b32.xlu0 %v4961, 56
        %v6391 = vpop.permute.xlu0 %6390
        %6392 = vrot.lane.b32.xlu0 %v4964, 56
        %v6393 = vpop.permute.xlu0 %6392
        %6394 = vrot.lane.b32.xlu0 %v4966, 56
        %v6395 = vpop.permute.xlu0 %6394
        %6396 = vrot.lane.b32.xlu0 %v4969, 56
        %v6397 = vpop.permute.xlu0 %6396
        %6398 = vrot.lane.b32.xlu0 %v4971, 56
        %v6399 = vpop.permute.xlu0 %6398
        %6400 = vrot.lane.b32.xlu0 %v4974, 56
        %v6401 = vpop.permute.xlu0 %6400
        %6402 = vrot.lane.b32.xlu0 %v4976, 56
        %v6403 = vpop.permute.xlu0 %6402
        %6404 = vrot.lane.b32.xlu0 %v4979, 56
        %v6405 = vpop.permute.xlu0 %6404
        %6406 = vrot.lane.b32.xlu0 %v4981, 56
        %v6407 = vpop.permute.xlu0 %6406
        %6408 = vrot.lane.b32.xlu0 %v4984, 56
        %v6409 = vpop.permute.xlu0 %6408
        %6410 = vrot.lane.b32.xlu0 %v4986, 56
        %v6411 = vpop.permute.xlu0 %6410
        %6412 = vrot.lane.b32.xlu0 %v4989, 56
        %v6413 = vpop.permute.xlu0 %6412
        %6414 = vrot.lane.b32.xlu0 %v4991, 56
        %v6415 = vpop.permute.xlu0 %6414
        %6416 = vrot.lane.b32.xlu0 %v4994, 56
        %v6417 = vpop.permute.xlu0 %6416
        %6418 = vrot.lane.b32.xlu0 %v4996, 56
        %v6419 = vpop.permute.xlu0 %6418
        %6420 = vrot.lane.b32.xlu0 %v4999, 56
        %v6421 = vpop.permute.xlu0 %6420
        %6422 = vrot.lane.b32.xlu0 %v5001, 56
        %v6423 = vpop.permute.xlu0 %6422
        %6424 = vrot.lane.b32.xlu0 %v5004, 56
        %v6425 = vpop.permute.xlu0 %6424
        %6426 = vrot.lane.b32.xlu0 %v5006, 56
        %v6427 = vpop.permute.xlu0 %6426
        %6428 = vrot.lane.b32.xlu0 %v5009, 56
        %v6429 = vpop.permute.xlu0 %6428
        %6430 = vrot.lane.b32.xlu0 %v5011, 56
        %v6431 = vpop.permute.xlu0 %6430
        %6432 = vrot.lane.b32.xlu0 %v5014, 56
        %v6433 = vpop.permute.xlu0 %6432
        %6434 = vrot.lane.b32.xlu0 %v5016, 56
        %v6435 = vpop.permute.xlu0 %6434
        %6436 = vrot.lane.b32.xlu0 %v5738, 56
        %v6437 = vpop.permute.xlu0 %6436
        %6438 = vrot.lane.b32.xlu0 %v5740, 56
        %v6439 = vpop.permute.xlu0 %6438
        %6501 = vrot.lane.b32.xlu0 %v5209, 64
        %v6502 = vpop.permute.xlu0 %6501
        %6503 = vrot.lane.b32.xlu0 %v5211, 64
        %v6504 = vpop.permute.xlu0 %6503
        %6505 = vrot.lane.b32.xlu0 %v5214, 64
        %v6506 = vpop.permute.xlu0 %6505
        %6507 = vrot.lane.b32.xlu0 %v5216, 64
        %v6508 = vpop.permute.xlu0 %6507
        %6509 = vrot.lane.b32.xlu0 %v5219, 64
        %v6510 = vpop.permute.xlu0 %6509
        %6511 = vrot.lane.b32.xlu0 %v5221, 64
        %v6512 = vpop.permute.xlu0 %6511
        %6513 = vrot.lane.b32.xlu0 %v5224, 64
        %v6514 = vpop.permute.xlu0 %6513
        %6515 = vrot.lane.b32.xlu0 %v5226, 64
        %v6516 = vpop.permute.xlu0 %6515
        %6517 = vrot.lane.b32.xlu0 %v5229, 64
        %v6518 = vpop.permute.xlu0 %6517
        %6519 = vrot.lane.b32.xlu0 %v5231, 64
        %v6520 = vpop.permute.xlu0 %6519
        %6521 = vrot.lane.b32.xlu0 %v5234, 64
        %v6522 = vpop.permute.xlu0 %6521
        %6523 = vrot.lane.b32.xlu0 %v5236, 64
        %v6524 = vpop.permute.xlu0 %6523
        %6525 = vrot.lane.b32.xlu0 %v5239, 64
        %v6526 = vpop.permute.xlu0 %6525
        %6527 = vrot.lane.b32.xlu0 %v5241, 64
        %v6528 = vpop.permute.xlu0 %6527
        %6529 = vrot.lane.b32.xlu0 %v5244, 64
        %v6530 = vpop.permute.xlu0 %6529
        %6531 = vrot.lane.b32.xlu0 %v5246, 64
        %v6532 = vpop.permute.xlu0 %6531
        %6533 = vrot.lane.b32.xlu0 %v5249, 64
        %v6534 = vpop.permute.xlu0 %6533
        %6535 = vrot.lane.b32.xlu0 %v5251, 64
        %v6536 = vpop.permute.xlu0 %6535
        %6537 = vrot.lane.b32.xlu0 %v5254, 64
        %v6538 = vpop.permute.xlu0 %6537
        %6539 = vrot.lane.b32.xlu0 %v5256, 64
        %v6540 = vpop.permute.xlu0 %6539
        %6541 = vrot.lane.b32.xlu0 %v5259, 64
        %v6542 = vpop.permute.xlu0 %6541
        %6543 = vrot.lane.b32.xlu0 %v5261, 64
        %v6544 = vpop.permute.xlu0 %6543
        %6545 = vrot.lane.b32.xlu0 %v5264, 64
        %v6546 = vpop.permute.xlu0 %6545
        %6547 = vrot.lane.b32.xlu0 %v5266, 64
        %v6548 = vpop.permute.xlu0 %6547
        %6549 = vrot.lane.b32.xlu0 %v5269, 64
        %v6550 = vpop.permute.xlu0 %6549
        %6551 = vrot.lane.b32.xlu0 %v5271, 64
        %v6552 = vpop.permute.xlu0 %6551
        %6553 = vrot.lane.b32.xlu0 %v5274, 64
        %v6554 = vpop.permute.xlu0 %6553
        %6555 = vrot.lane.b32.xlu0 %v5276, 64
        %v6556 = vpop.permute.xlu0 %6555
        %6557 = vrot.lane.b32.xlu0 %v5935, 64
        %v6558 = vpop.permute.xlu0 %6557
        %6559 = vrot.lane.b32.xlu0 %v5937, 64
        %v6560 = vpop.permute.xlu0 %6559
        %6561 = vrot.lane.b32.xlu0 %v5201, 64
        %v6562 = vpop.permute.xlu0 %6561
        %6563 = vrot.lane.b32.xlu0 %v5284, 64
        %v6564 = vpop.permute.xlu0 %6563
        %6565 = vrot.lane.b32.xlu0 %v5286, 64
        %v6566 = vpop.permute.xlu0 %6565
        %6567 = vrot.lane.b32.xlu0 %v5289, 64
        %v6568 = vpop.permute.xlu0 %6567
        %6569 = vrot.lane.b32.xlu0 %v5291, 64
        %v6570 = vpop.permute.xlu0 %6569
        %6571 = vrot.lane.b32.xlu0 %v5294, 64
        %v6572 = vpop.permute.xlu0 %6571
        %6573 = vrot.lane.b32.xlu0 %v5296, 64
        %v6574 = vpop.permute.xlu0 %6573
        %6575 = vrot.lane.b32.xlu0 %v5299, 64
        %v6576 = vpop.permute.xlu0 %6575
        %6577 = vrot.lane.b32.xlu0 %v5301, 64
        %v6578 = vpop.permute.xlu0 %6577
        %6579 = vrot.lane.b32.xlu0 %v5304, 64
        %v6580 = vpop.permute.xlu0 %6579
        %6581 = vrot.lane.b32.xlu0 %v5306, 64
        %v6582 = vpop.permute.xlu0 %6581
        %6583 = vrot.lane.b32.xlu0 %v5309, 64
        %v6584 = vpop.permute.xlu0 %6583
        %6585 = vrot.lane.b32.xlu0 %v5311, 64
        %v6586 = vpop.permute.xlu0 %6585
        %6587 = vrot.lane.b32.xlu0 %v5314, 64
        %v6588 = vpop.permute.xlu0 %6587
        %6589 = vrot.lane.b32.xlu0 %v5316, 64
        %v6590 = vpop.permute.xlu0 %6589
        %6591 = vrot.lane.b32.xlu0 %v5319, 64
        %v6592 = vpop.permute.xlu0 %6591
        %6593 = vrot.lane.b32.xlu0 %v5321, 64
        %v6594 = vpop.permute.xlu0 %6593
        %6595 = vrot.lane.b32.xlu0 %v5324, 64
        %v6596 = vpop.permute.xlu0 %6595
        %6597 = vrot.lane.b32.xlu0 %v5326, 64
        %v6598 = vpop.permute.xlu0 %6597
        %6599 = vrot.lane.b32.xlu0 %v5329, 64
        %v6600 = vpop.permute.xlu0 %6599
        %6601 = vrot.lane.b32.xlu0 %v5331, 64
        %v6602 = vpop.permute.xlu0 %6601
        %6603 = vrot.lane.b32.xlu0 %v5334, 64
        %v6604 = vpop.permute.xlu0 %6603
        %6605 = vrot.lane.b32.xlu0 %v5336, 64
        %v6606 = vpop.permute.xlu0 %6605
        %6607 = vrot.lane.b32.xlu0 %v5339, 64
        %v6608 = vpop.permute.xlu0 %6607
        %6609 = vrot.lane.b32.xlu0 %v5341, 64
        %v6610 = vpop.permute.xlu0 %6609
        %6611 = vrot.lane.b32.xlu0 %v5344, 64
        %v6612 = vpop.permute.xlu0 %6611
        %6613 = vrot.lane.b32.xlu0 %v5346, 64
        %v6614 = vpop.permute.xlu0 %6613
        %6615 = vrot.lane.b32.xlu0 %v5349, 64
        %v6616 = vpop.permute.xlu0 %6615
        %6617 = vrot.lane.b32.xlu0 %v5351, 64
        %v6618 = vpop.permute.xlu0 %6617
        %6619 = vrot.lane.b32.xlu0 %v5940, 64
        %v6620 = vpop.permute.xlu0 %6619
        %6621 = vrot.lane.b32.xlu0 %v5942, 64
        %v6622 = vpop.permute.xlu0 %6621
        %vm6684 = vcmask 64512
        %v6685 = vsel %vm6684, 0.0, %v5018
        %v6686 = vsel %vm6684, %v4741, %v5020
        %v6687 = vsel %vm6684, %v4553, %v5022
        %v6688 = vsel %vm6684, %v4742, %v5024
        %v6689 = vsel %vm6684, %v4556, %v5026
        %v6690 = vsel %vm6684, %v4743, %v5028
        %v6691 = vsel %vm6684, %v4559, %v5030
        %v6692 = vsel %vm6684, %v4744, %v5032
        %v6693 = vsel %vm6684, %v4562, %v5034
        %v6694 = vsel %vm6684, %v4745, %v5036
        %v6695 = vsel %vm6684, %v4565, %v5038
        %v6696 = vsel %vm6684, %v4746, %v5040
        %v6697 = vsel %vm6684, %v4568, %v5042
        %v6698 = vsel %vm6684, %v4747, %v5044
        %v6699 = vsel %vm6684, %v4571, %v5046
        %v6700 = vsel %vm6684, %v4748, %v5048
        %v6701 = vsel %vm6684, %v4574, %v5050
        %v6702 = vsel %vm6684, %v4749, %v5052
        %v6703 = vsel %vm6684, %v4577, %v5054
        %v6704 = vsel %vm6684, %v4750, %v5056
        %v6705 = vsel %vm6684, %v4580, %v5058
        %v6706 = vsel %vm6684, %v4751, %v5060
        %v6707 = vsel %vm6684, %v4583, %v5062
        %v6708 = vsel %vm6684, %v4752, %v5064
        %v6709 = vsel %vm6684, %v4586, %v5066
        %v6710 = vsel %vm6684, %v4753, %v5068
        %v6711 = vsel %vm6684, %v4589, %v5070
        %v6712 = vsel %vm6684, %v4754, %v5072
        %v6713 = vsel %vm6684, %v4592, %v5074
        %v6714 = vsel %vm6684, %v4755, %v5076
        %v6715 = vsel %vm6684, %v4595, %v5078
        %v6716 = vsel %vm6684, %v4757, %v5080
        %v6717 = vsel %vm6684, %v4601, %v5082
        %v6718 = vsel %vm6684, %v4758, %v5084
        %v6719 = vsel %vm6684, %v4604, %v5086
        %v6720 = vsel %vm6684, %v4759, %v5088
        %v6721 = vsel %vm6684, %v4607, %v5090
        %v6722 = vsel %vm6684, %v4760, %v5092
        %v6723 = vsel %vm6684, %v4610, %v5094
        %v6724 = vsel %vm6684, %v4761, %v5096
        %v6725 = vsel %vm6684, %v4613, %v5098
        %v6726 = vsel %vm6684, %v4762, %v5100
        %v6727 = vsel %vm6684, %v4616, %v5102
        %v6728 = vsel %vm6684, %v4763, %v5104
        %v6729 = vsel %vm6684, %v4619, %v5106
        %v6730 = vsel %vm6684, %v4764, %v5108
        %v6731 = vsel %vm6684, %v4622, %v5110
        %v6732 = vsel %vm6684, %v4765, %v5112
        %v6733 = vsel %vm6684, %v4625, %v5114
        %v6734 = vsel %vm6684, %v4766, %v5116
        %v6735 = vsel %vm6684, %v4628, %v5118
        %v6736 = vsel %vm6684, %v4767, %v5120
        %v6737 = vsel %vm6684, %v4631, %v5122
        %v6738 = vsel %vm6684, %v4768, %v5124
        %v6739 = vsel %vm6684, %v4634, %v5126
        %v6740 = vsel %vm6684, %v4769, %v5128
        %v6741 = vsel %vm6684, %v4637, %v5130
        %v6742 = vsel %vm6684, %v4770, %v5132
        %v6743 = vsel %vm6684, %v4640, %v5134
        %v6744 = vsel %vm6684, %v4771, %v5136
        %v6745 = vsel %vm6684, %v4643, %v5138
        %vm6746 = vcmask 130048
        %v6747 = vsel %vm6746, %v6685, %v5353
        %v6748 = vsel %vm6746, %v6686, %v5355
        %v6749 = vsel %vm6746, %v6687, %v5357
        %v6750 = vsel %vm6746, %v6688, %v5359
        %v6751 = vsel %vm6746, %v6689, %v5361
        %v6752 = vsel %vm6746, %v6690, %v5363
        %v6753 = vsel %vm6746, %v6691, %v5365
        %v6754 = vsel %vm6746, %v6692, %v5367
        %v6755 = vsel %vm6746, %v6693, %v5369
        %v6756 = vsel %vm6746, %v6694, %v5371
        %v6757 = vsel %vm6746, %v6695, %v5373
        %v6758 = vsel %vm6746, %v6696, %v5375
        %v6759 = vsel %vm6746, %v6697, %v5377
        %v6760 = vsel %vm6746, %v6698, %v5379
        %v6761 = vsel %vm6746, %v6699, %v5381
        %v6762 = vsel %vm6746, %v6700, %v5383
        %v6763 = vsel %vm6746, %v6701, %v5385
        %v6764 = vsel %vm6746, %v6702, %v5387
        %v6765 = vsel %vm6746, %v6703, %v5389
        %v6766 = vsel %vm6746, %v6704, %v5391
        %v6767 = vsel %vm6746, %v6705, %v5393
        %v6768 = vsel %vm6746, %v6706, %v5395
        %v6769 = vsel %vm6746, %v6707, %v5397
        %v6770 = vsel %vm6746, %v6708, %v5399
        %v6771 = vsel %vm6746, %v6709, %v5401
        %v6772 = vsel %vm6746, %v6710, %v5403
        %v6773 = vsel %vm6746, %v6711, %v5405
        %v6774 = vsel %vm6746, %v6712, %v5407
        %v6775 = vsel %vm6746, %v6713, %v5409
        %v6776 = vsel %vm6746, %v6714, %v5411
        %v6777 = vsel %vm6746, %v6715, %v5413
        %v6778 = vsel %vm6746, %v6716, %v5415
        %v6779 = vsel %vm6746, %v6717, %v5417
        %v6780 = vsel %vm6746, %v6718, %v5419
        %v6781 = vsel %vm6746, %v6719, %v5421
        %v6782 = vsel %vm6746, %v6720, %v5423
        %v6783 = vsel %vm6746, %v6721, %v5425
        %v6784 = vsel %vm6746, %v6722, %v5427
        %v6785 = vsel %vm6746, %v6723, %v5429
        %v6786 = vsel %vm6746, %v6724, %v5431
        %v6787 = vsel %vm6746, %v6725, %v5433
        %v6788 = vsel %vm6746, %v6726, %v5435
        %v6789 = vsel %vm6746, %v6727, %v5437
        %v6790 = vsel %vm6746, %v6728, %v5439
        %v6791 = vsel %vm6746, %v6729, %v5441
        %v6792 = vsel %vm6746, %v6730, %v5443
        %v6793 = vsel %vm6746, %v6731, %v5445
        %v6794 = vsel %vm6746, %v6732, %v5447
        %v6795 = vsel %vm6746, %v6733, %v5449
        %v6796 = vsel %vm6746, %v6734, %v5451
        %v6797 = vsel %vm6746, %v6735, %v5453
        %v6798 = vsel %vm6746, %v6736, %v5455
        %v6799 = vsel %vm6746, %v6737, %v5457
        %v6800 = vsel %vm6746, %v6738, %v5459
        %v6801 = vsel %vm6746, %v6739, %v5461
        %v6802 = vsel %vm6746, %v6740, %v5463
        %v6803 = vsel %vm6746, %v6741, %v5465
        %v6804 = vsel %vm6746, %v6742, %v5467
        %v6805 = vsel %vm6746, %v6743, %v5469
        %v6806 = vsel %vm6746, %v6744, %v5471
        %v6807 = vsel %vm6746, %v6745, %v5473
        %vm6808 = vcmask 195584
        %v6809 = vsel %vm6808, %v6747, %v5538
        %v6810 = vsel %vm6808, %v6747, %v5540
        %v6811 = vsel %vm6808, %v6748, %v5542
        %v6812 = vsel %vm6808, %v6749, %v5544
        %v6813 = vsel %vm6808, %v6750, %v5546
        %v6814 = vsel %vm6808, %v6751, %v5548
        %v6815 = vsel %vm6808, %v6752, %v5550
        %v6816 = vsel %vm6808, %v6753, %v5552
        %v6817 = vsel %vm6808, %v6754, %v5554
        %v6818 = vsel %vm6808, %v6755, %v5556
        %v6819 = vsel %vm6808, %v6756, %v5558
        %v6820 = vsel %vm6808, %v6757, %v5560
        %v6821 = vsel %vm6808, %v6758, %v5562
        %v6822 = vsel %vm6808, %v6759, %v5564
        %v6823 = vsel %vm6808, %v6760, %v5566
        %v6824 = vsel %vm6808, %v6761, %v5568
        %v6825 = vsel %vm6808, %v6762, %v5570
        %v6826 = vsel %vm6808, %v6763, %v5572
        %v6827 = vsel %vm6808, %v6764, %v5574
        %v6828 = vsel %vm6808, %v6765, %v5576
        %v6829 = vsel %vm6808, %v6766, %v5578
        %v6830 = vsel %vm6808, %v6767, %v5580
        %v6831 = vsel %vm6808, %v6768, %v5582
        %v6832 = vsel %vm6808, %v6769, %v5584
        %v6833 = vsel %vm6808, %v6770, %v5586
        %v6834 = vsel %vm6808, %v6771, %v5588
        %v6835 = vsel %vm6808, %v6772, %v5590
        %v6836 = vsel %vm6808, %v6773, %v5592
        %v6837 = vsel %vm6808, %v6774, %v5594
        %v6838 = vsel %vm6808, %v6775, %v5596
        %v6839 = vsel %vm6808, %v6776, %v5598
        %v6840 = vsel %vm6808, %v6777, %v5600
        %v6841 = vsel %vm6808, %v6747, %v5602
        %v6842 = vsel %vm6808, %v6747, %v5604
        %v6843 = vsel %vm6808, %v6778, %v5606
        %v6844 = vsel %vm6808, %v6779, %v5608
        %v6845 = vsel %vm6808, %v6780, %v5610
        %v6846 = vsel %vm6808, %v6781, %v5612
        %v6847 = vsel %vm6808, %v6782, %v5614
        %v6848 = vsel %vm6808, %v6783, %v5616
        %v6849 = vsel %vm6808, %v6784, %v5618
        %v6850 = vsel %vm6808, %v6785, %v5620
        %v6851 = vsel %vm6808, %v6786, %v5622
        %v6852 = vsel %vm6808, %v6787, %v5624
        %v6853 = vsel %vm6808, %v6788, %v5626
        %v6854 = vsel %vm6808, %v6789, %v5628
        %v6855 = vsel %vm6808, %v6790, %v5630
        %v6856 = vsel %vm6808, %v6791, %v5632
        %v6857 = vsel %vm6808, %v6792, %v5634
        %v6858 = vsel %vm6808, %v6793, %v5636
        %v6859 = vsel %vm6808, %v6794, %v5638
        %v6860 = vsel %vm6808, %v6795, %v5640
        %v6861 = vsel %vm6808, %v6796, %v5642
        %v6862 = vsel %vm6808, %v6797, %v5644
        %v6863 = vsel %vm6808, %v6798, %v5646
        %v6864 = vsel %vm6808, %v6799, %v5648
        %v6865 = vsel %vm6808, %v6800, %v5650
        %v6866 = vsel %vm6808, %v6801, %v5652
        %v6867 = vsel %vm6808, %v6802, %v5654
        %v6868 = vsel %vm6808, %v6803, %v5656
        %v6869 = vsel %vm6808, %v6804, %v5658
        %v6870 = vsel %vm6808, %v6805, %v5660
        %v6871 = vsel %vm6808, %v6806, %v5662
        %v6872 = vsel %vm6808, %v6807, %v5664
        %vm6873 = vcmask 261120
        %v6874 = vsel %vm6873, %v6809, %v5742
        %v6875 = vsel %vm6873, %v6810, %v5744
        %v6876 = vsel %vm6873, %v6811, %v5746
        %v6877 = vsel %vm6873, %v6812, %v5748
        %v6878 = vsel %vm6873, %v6813, %v5750
        %v6879 = vsel %vm6873, %v6814, %v5752
        %v6880 = vsel %vm6873, %v6815, %v5754
        %v6881 = vsel %vm6873, %v6816, %v5756
        %v6882 = vsel %vm6873, %v6817, %v5758
        %v6883 = vsel %vm6873, %v6818, %v5760
        %v6884 = vsel %vm6873, %v6819, %v5762
        %v6885 = vsel %vm6873, %v6820, %v5764
        %v6886 = vsel %vm6873, %v6821, %v5766
        %v6887 = vsel %vm6873, %v6822, %v5768
        %v6888 = vsel %vm6873, %v6823, %v5770
        %v6889 = vsel %vm6873, %v6824, %v5772
        %v6890 = vsel %vm6873, %v6825, %v5774
        %v6891 = vsel %vm6873, %v6826, %v5776
        %v6892 = vsel %vm6873, %v6827, %v5778
        %v6893 = vsel %vm6873, %v6828, %v5780
        %v6894 = vsel %vm6873, %v6829, %v5782
        %v6895 = vsel %vm6873, %v6830, %v5784
        %v6896 = vsel %vm6873, %v6831, %v5786
        %v6897 = vsel %vm6873, %v6832, %v5788
        %v6898 = vsel %vm6873, %v6833, %v5790
        %v6899 = vsel %vm6873, %v6834, %v5792
        %v6900 = vsel %vm6873, %v6835, %v5794
        %v6901 = vsel %vm6873, %v6836, %v5796
        %v6902 = vsel %vm6873, %v6837, %v5798
        %v6903 = vsel %vm6873, %v6838, %v5800
        %v6904 = vsel %vm6873, %v6839, %v5802
        %v6905 = vsel %vm6873, %v6840, %v5804
        %v6906 = vsel %vm6873, %v6841, %v5806
        %v6907 = vsel %vm6873, %v6842, %v5808
        %v6908 = vsel %vm6873, %v6843, %v5810
        %v6909 = vsel %vm6873, %v6844, %v5812
        %v6910 = vsel %vm6873, %v6845, %v5814
        %v6911 = vsel %vm6873, %v6846, %v5816
        %v6912 = vsel %vm6873, %v6847, %v5818
        %v6913 = vsel %vm6873, %v6848, %v5820
        %v6914 = vsel %vm6873, %v6849, %v5822
        %v6915 = vsel %vm6873, %v6850, %v5824
        %v6916 = vsel %vm6873, %v6851, %v5826
        %v6917 = vsel %vm6873, %v6852, %v5828
        %v6918 = vsel %vm6873, %v6853, %v5830
        %v6919 = vsel %vm6873, %v6854, %v5832
        %v6920 = vsel %vm6873, %v6855, %v5834
        %v6921 = vsel %vm6873, %v6856, %v5836
        %v6922 = vsel %vm6873, %v6857, %v5838
        %v6923 = vsel %vm6873, %v6858, %v5840
        %v6924 = vsel %vm6873, %v6859, %v5842
        %v6925 = vsel %vm6873, %v6860, %v5844
        %v6926 = vsel %vm6873, %v6861, %v5846
        %v6927 = vsel %vm6873, %v6862, %v5848
        %v6928 = vsel %vm6873, %v6863, %v5850
        %v6929 = vsel %vm6873, %v6864, %v5852
        %v6930 = vsel %vm6873, %v6865, %v5854
        %v6931 = vsel %vm6873, %v6866, %v5856
        %v6932 = vsel %vm6873, %v6867, %v5858
        %v6933 = vsel %vm6873, %v6868, %v5860
        %v6934 = vsel %vm6873, %v6869, %v5862
        %v6935 = vsel %vm6873, %v6870, %v5864
        %v6936 = vsel %vm6873, %v6871, %v5866
        %v6937 = vsel %vm6873, %v6872, %v5868
        %vm6938 = vcmask 326656
        %v6939 = vsel %vm6938, %v6874, %v5944
        %v6940 = vsel %vm6938, %v6875, %v5946
        %v6941 = vsel %vm6938, %v6876, %v5948
        %v6942 = vsel %vm6938, %v6877, %v5950
        %v6943 = vsel %vm6938, %v6878, %v5952
        %v6944 = vsel %vm6938, %v6879, %v5954
        %v6945 = vsel %vm6938, %v6880, %v5956
        %v6946 = vsel %vm6938, %v6881, %v5958
        %v6947 = vsel %vm6938, %v6882, %v5960
        %v6948 = vsel %vm6938, %v6883, %v5962
        %v6949 = vsel %vm6938, %v6884, %v5964
        %v6950 = vsel %vm6938, %v6885, %v5966
        %v6951 = vsel %vm6938, %v6886, %v5968
        %v6952 = vsel %vm6938, %v6887, %v5970
        %v6953 = vsel %vm6938, %v6888, %v5972
        %v6954 = vsel %vm6938, %v6889, %v5974
        %v6955 = vsel %vm6938, %v6890, %v5976
        %v6956 = vsel %vm6938, %v6891, %v5978
        %v6957 = vsel %vm6938, %v6892, %v5980
        %v6958 = vsel %vm6938, %v6893, %v5982
        %v6959 = vsel %vm6938, %v6894, %v5984
        %v6960 = vsel %vm6938, %v6895, %v5986
        %v6961 = vsel %vm6938, %v6896, %v5988
        %v6962 = vsel %vm6938, %v6897, %v5990
        %v6963 = vsel %vm6938, %v6898, %v5992
        %v6964 = vsel %vm6938, %v6899, %v5994
        %v6965 = vsel %vm6938, %v6900, %v5996
        %v6966 = vsel %vm6938, %v6901, %v5998
        %v6967 = vsel %vm6938, %v6902, %v6000
        %v6968 = vsel %vm6938, %v6903, %v6002
        %v6969 = vsel %vm6938, %v6904, %v6004
        %v6970 = vsel %vm6938, %v6905, %v6006
        %v6971 = vsel %vm6938, %v6906, %v6008
        %v6972 = vsel %vm6938, %v6907, %v6010
        %v6973 = vsel %vm6938, %v6908, %v6012
        %v6974 = vsel %vm6938, %v6909, %v6014
        %v6975 = vsel %vm6938, %v6910, %v6016
        %v6976 = vsel %vm6938, %v6911, %v6018
        %v6977 = vsel %vm6938, %v6912, %v6020
        %v6978 = vsel %vm6938, %v6913, %v6022
        %v6979 = vsel %vm6938, %v6914, %v6024
        %v6980 = vsel %vm6938, %v6915, %v6026
        %v6981 = vsel %vm6938, %v6916, %v6028
        %v6982 = vsel %vm6938, %v6917, %v6030
        %v6983 = vsel %vm6938, %v6918, %v6032
        %v6984 = vsel %vm6938, %v6919, %v6034
        %v6985 = vsel %vm6938, %v6920, %v6036
        %v6986 = vsel %vm6938, %v6921, %v6038
        %v6987 = vsel %vm6938, %v6922, %v6040
        %v6988 = vsel %vm6938, %v6923, %v6042
        %v6989 = vsel %vm6938, %v6924, %v6044
        %v6990 = vsel %vm6938, %v6925, %v6046
        %v6991 = vsel %vm6938, %v6926, %v6048
        %v6992 = vsel %vm6938, %v6927, %v6050
        %v6993 = vsel %vm6938, %v6928, %v6052
        %v6994 = vsel %vm6938, %v6929, %v6054
        %v6995 = vsel %vm6938, %v6930, %v6056
        %v6996 = vsel %vm6938, %v6931, %v6058
        %v6997 = vsel %vm6938, %v6932, %v6060
        %v6998 = vsel %vm6938, %v6933, %v6062
        %v6999 = vsel %vm6938, %v6934, %v6064
        %v7000 = vsel %vm6938, %v6935, %v6066
        %v7001 = vsel %vm6938, %v6936, %v6068
        %v7002 = vsel %vm6938, %v6937, %v6070
        %vm7003 = vcmask 392192
        %v7004 = vsel %vm7003, %v6939, %v6136
        %v7005 = vsel %vm7003, %v6940, %v6138
        %v7006 = vsel %vm7003, %v6941, %v6140
        %v7007 = vsel %vm7003, %v6942, %v6142
        %v7008 = vsel %vm7003, %v6943, %v6144
        %v7009 = vsel %vm7003, %v6944, %v6146
        %v7010 = vsel %vm7003, %v6945, %v6148
        %v7011 = vsel %vm7003, %v6946, %v6150
        %v7012 = vsel %vm7003, %v6947, %v6152
        %v7013 = vsel %vm7003, %v6948, %v6154
        %v7014 = vsel %vm7003, %v6949, %v6156
        %v7015 = vsel %vm7003, %v6950, %v6158
        %v7016 = vsel %vm7003, %v6951, %v6160
        %v7017 = vsel %vm7003, %v6952, %v6162
        %v7018 = vsel %vm7003, %v6953, %v6164
        %v7019 = vsel %vm7003, %v6954, %v6166
        %v7020 = vsel %vm7003, %v6955, %v6168
        %v7021 = vsel %vm7003, %v6956, %v6170
        %v7022 = vsel %vm7003, %v6957, %v6172
        %v7023 = vsel %vm7003, %v6958, %v6174
        %v7024 = vsel %vm7003, %v6959, %v6176
        %v7025 = vsel %vm7003, %v6960, %v6178
        %v7026 = vsel %vm7003, %v6961, %v6180
        %v7027 = vsel %vm7003, %v6962, %v6182
        %v7028 = vsel %vm7003, %v6963, %v6184
        %v7029 = vsel %vm7003, %v6964, %v6186
        %v7030 = vsel %vm7003, %v6965, %v6188
        %v7031 = vsel %vm7003, %v6966, %v6190
        %v7032 = vsel %vm7003, %v6967, %v6192
        %v7033 = vsel %vm7003, %v6968, %v6194
        %v7034 = vsel %vm7003, %v6969, %v6196
        %v7035 = vsel %vm7003, %v6970, %v6196
        %v7036 = vsel %vm7003, %v6971, %v6198
        %v7037 = vsel %vm7003, %v6972, %v6200
        %v7038 = vsel %vm7003, %v6973, %v6202
        %v7039 = vsel %vm7003, %v6974, %v6204
        %v7040 = vsel %vm7003, %v6975, %v6206
        %v7041 = vsel %vm7003, %v6976, %v6208
        %v7042 = vsel %vm7003, %v6977, %v6210
        %v7043 = vsel %vm7003, %v6978, %v6212
        %v7044 = vsel %vm7003, %v6979, %v6214
        %v7045 = vsel %vm7003, %v6980, %v6216
        %v7046 = vsel %vm7003, %v6981, %v6218
        %v7047 = vsel %vm7003, %v6982, %v6220
        %v7048 = vsel %vm7003, %v6983, %v6222
        %v7049 = vsel %vm7003, %v6984, %v6224
        %v7050 = vsel %vm7003, %v6985, %v6226
        %v7051 = vsel %vm7003, %v6986, %v6228
        %v7052 = vsel %vm7003, %v6987, %v6230
        %v7053 = vsel %vm7003, %v6988, %v6232
        %v7054 = vsel %vm7003, %v6989, %v6234
        %v7055 = vsel %vm7003, %v6990, %v6236
        %v7056 = vsel %vm7003, %v6991, %v6238
        %v7057 = vsel %vm7003, %v6992, %v6240
        %v7058 = vsel %vm7003, %v6993, %v6242
        %v7059 = vsel %vm7003, %v6994, %v6244
        %v7060 = vsel %vm7003, %v6995, %v6246
        %v7061 = vsel %vm7003, %v6996, %v6248
        %v7062 = vsel %vm7003, %v6997, %v6250
        %v7063 = vsel %vm7003, %v6998, %v6252
        %v7064 = vsel %vm7003, %v6999, %v6254
        %v7065 = vsel %vm7003, %v7000, %v6256
        %v7066 = vsel %vm7003, %v7001, %v6196
        %v7067 = vsel %vm7003, %v7002, %v6196
        %vm7068 = vcmask 457728
        %v7069 = vsel %vm7068, %v7004, %v6319
        %v7070 = vsel %vm7068, %v7005, %v6321
        %v7071 = vsel %vm7068, %v7006, %v6323
        %v7072 = vsel %vm7068, %v7007, %v6325
        %v7073 = vsel %vm7068, %v7008, %v6327
        %v7074 = vsel %vm7068, %v7009, %v6329
        %v7075 = vsel %vm7068, %v7010, %v6331
        %v7076 = vsel %vm7068, %v7011, %v6333
        %v7077 = vsel %vm7068, %v7012, %v6335
        %v7078 = vsel %vm7068, %v7013, %v6337
        %v7079 = vsel %vm7068, %v7014, %v6339
        %v7080 = vsel %vm7068, %v7015, %v6341
        %v7081 = vsel %vm7068, %v7016, %v6343
        %v7082 = vsel %vm7068, %v7017, %v6345
        %v7083 = vsel %vm7068, %v7018, %v6347
        %v7084 = vsel %vm7068, %v7019, %v6349
        %v7085 = vsel %vm7068, %v7020, %v6351
        %v7086 = vsel %vm7068, %v7021, %v6353
        %v7087 = vsel %vm7068, %v7022, %v6355
        %v7088 = vsel %vm7068, %v7023, %v6357
        %v7089 = vsel %vm7068, %v7024, %v6359
        %v7090 = vsel %vm7068, %v7025, %v6361
        %v7091 = vsel %vm7068, %v7026, %v6363
        %v7092 = vsel %vm7068, %v7027, %v6365
        %v7093 = vsel %vm7068, %v7028, %v6367
        %v7094 = vsel %vm7068, %v7029, %v6369
        %v7095 = vsel %vm7068, %v7030, %v6371
        %v7096 = vsel %vm7068, %v7031, %v6373
        %v7097 = vsel %vm7068, %v7032, %v6375
        %v7098 = vsel %vm7068, %v7033, %v6377
        %v7099 = vsel %vm7068, %v7034, %v6379
        %v7100 = vsel %vm7068, %v7035, %v6379
        %v7101 = vsel %vm7068, %v7036, %v6381
        %v7102 = vsel %vm7068, %v7037, %v6383
        %v7103 = vsel %vm7068, %v7038, %v6385
        %v7104 = vsel %vm7068, %v7039, %v6387
        %v7105 = vsel %vm7068, %v7040, %v6389
        %v7106 = vsel %vm7068, %v7041, %v6391
        %v7107 = vsel %vm7068, %v7042, %v6393
        %v7108 = vsel %vm7068, %v7043, %v6395
        %v7109 = vsel %vm7068, %v7044, %v6397
        %v7110 = vsel %vm7068, %v7045, %v6399
        %v7111 = vsel %vm7068, %v7046, %v6401
        %v7112 = vsel %vm7068, %v7047, %v6403
        %v7113 = vsel %vm7068, %v7048, %v6405
        %v7114 = vsel %vm7068, %v7049, %v6407
        %v7115 = vsel %vm7068, %v7050, %v6409
        %v7116 = vsel %vm7068, %v7051, %v6411
        %v7117 = vsel %vm7068, %v7052, %v6413
        %v7118 = vsel %vm7068, %v7053, %v6415
        %v7119 = vsel %vm7068, %v7054, %v6417
        %v7120 = vsel %vm7068, %v7055, %v6419
        %v7121 = vsel %vm7068, %v7056, %v6421
        %v7122 = vsel %vm7068, %v7057, %v6423
        %v7123 = vsel %vm7068, %v7058, %v6425
        %v7124 = vsel %vm7068, %v7059, %v6427
        %v7125 = vsel %vm7068, %v7060, %v6429
        %v7126 = vsel %vm7068, %v7061, %v6431
        %v7127 = vsel %vm7068, %v7062, %v6433
        %v7128 = vsel %vm7068, %v7063, %v6435
        %v7129 = vsel %vm7068, %v7064, %v6437
        %v7130 = vsel %vm7068, %v7065, %v6439
        %v7131 = vsel %vm7068, %v7066, %v6379
        %v7132 = vsel %vm7068, %v7067, %v6379
        %vm7133 = vcmask 523264
        %v7134 = vsel %vm7133, %v7069, %v6502
        %v7135 = vsel %vm7133, %v7070, %v6504
        %v7136 = vsel %vm7133, %v7071, %v6506
        %v7137 = vsel %vm7133, %v7072, %v6508
        %v7138 = vsel %vm7133, %v7073, %v6510
        %v7139 = vsel %vm7133, %v7074, %v6512
        %v7140 = vsel %vm7133, %v7075, %v6514
        %v7141 = vsel %vm7133, %v7076, %v6516
        %v7142 = vsel %vm7133, %v7077, %v6518
        %v7143 = vsel %vm7133, %v7078, %v6520
        %v7144 = vsel %vm7133, %v7079, %v6522
        %v7145 = vsel %vm7133, %v7080, %v6524
        %v7146 = vsel %vm7133, %v7081, %v6526
        %v7147 = vsel %vm7133, %v7082, %v6528
        %v7148 = vsel %vm7133, %v7083, %v6530
        %v7149 = vsel %vm7133, %v7084, %v6532
        %v7150 = vsel %vm7133, %v7085, %v6534
        %v7151 = vsel %vm7133, %v7086, %v6536
        %v7152 = vsel %vm7133, %v7087, %v6538
        %v7153 = vsel %vm7133, %v7088, %v6540
        %v7154 = vsel %vm7133, %v7089, %v6542
        %v7155 = vsel %vm7133, %v7090, %v6544
        %v7156 = vsel %vm7133, %v7091, %v6546
        %v7157 = vsel %vm7133, %v7092, %v6548
        %v7158 = vsel %vm7133, %v7093, %v6550
        %v7159 = vsel %vm7133, %v7094, %v6552
        %v7160 = vsel %vm7133, %v7095, %v6554
        %v7161 = vsel %vm7133, %v7096, %v6556
        %v7162 = vsel %vm7133, %v7097, %v6558
        %v7163 = vsel %vm7133, %v7098, %v6560
        %v7164 = vsel %vm7133, %v7099, %v6562
        %v7165 = vsel %vm7133, %v7100, %v6562
        %v7166 = vsel %vm7133, %v7101, %v6564
        %v7167 = vsel %vm7133, %v7102, %v6566
        %v7168 = vsel %vm7133, %v7103, %v6568
        %v7169 = vsel %vm7133, %v7104, %v6570
        %v7170 = vsel %vm7133, %v7105, %v6572
        %v7171 = vsel %vm7133, %v7106, %v6574
        %v7172 = vsel %vm7133, %v7107, %v6576
        %v7173 = vsel %vm7133, %v7108, %v6578
        %v7174 = vsel %vm7133, %v7109, %v6580
        %v7175 = vsel %vm7133, %v7110, %v6582
        %v7176 = vsel %vm7133, %v7111, %v6584
        %v7177 = vsel %vm7133, %v7112, %v6586
        %v7178 = vsel %vm7133, %v7113, %v6588
        %v7179 = vsel %vm7133, %v7114, %v6590
        %v7180 = vsel %vm7133, %v7115, %v6592
        %v7181 = vsel %vm7133, %v7116, %v6594
        %v7182 = vsel %vm7133, %v7117, %v6596
        %v7183 = vsel %vm7133, %v7118, %v6598
        %v7184 = vsel %vm7133, %v7119, %v6600
        %v7185 = vsel %vm7133, %v7120, %v6602
        %v7186 = vsel %vm7133, %v7121, %v6604
        %v7187 = vsel %vm7133, %v7122, %v6606
        %v7188 = vsel %vm7133, %v7123, %v6608
        %v7189 = vsel %vm7133, %v7124, %v6610
        %v7190 = vsel %vm7133, %v7125, %v6612
        %v7191 = vsel %vm7133, %v7126, %v6614
        %v7192 = vsel %vm7133, %v7127, %v6616
        %v7193 = vsel %vm7133, %v7128, %v6618
        %v7194 = vsel %vm7133, %v7129, %v6620
        %v7195 = vsel %vm7133, %v7130, %v6622
        %v7196 = vsel %vm7133, %v7131, %v6562
        %v7197 = vsel %vm7133, %v7132, %v6562
        %v7199 = vlaneseq
        %v7200 = vshrl.u32 %v7199, 7
        %v7201 = vsub.s32 0, %v7200
        %v7202 = vrot.slane %v4486, %v7201
        %vm7204 = vcmask 588800
        %v7206 = vsel %vm7204, %v7134, 0
        %v7209 = vsel %vm7204, %v7135, 0
        %v7212 = vsel %vm7204, %v7136, 0
        %v7215 = vsel %vm7204, %v7137, 0
        %v7218 = vsel %vm7204, %v7138, 0
        %v7221 = vsel %vm7204, %v7139, 0
        %v7224 = vsel %vm7204, %v7140, 0
        %v7227 = vsel %vm7204, %v7141, 0
        %v7230 = vsel %vm7204, %v7142, 0
        %v7233 = vsel %vm7204, %v7143, 0
        %v7236 = vsel %vm7204, %v7144, 0
        %v7239 = vsel %vm7204, %v7145, 0
        %v7242 = vsel %vm7204, %v7146, 0
        %v7245 = vsel %vm7204, %v7147, 0
        %v7248 = vsel %vm7204, %v7148, 0
        %v7251 = vsel %vm7204, %v7149, 0
        %v7254 = vsel %vm7204, %v7150, 0
        %v7257 = vsel %vm7204, %v7151, 0
        %v7260 = vsel %vm7204, %v7152, 0
        %v7263 = vsel %vm7204, %v7153, 0
        %v7266 = vsel %vm7204, %v7154, 0
        %v7269 = vsel %vm7204, %v7155, 0
        %v7272 = vsel %vm7204, %v7156, 0
        %v7275 = vsel %vm7204, %v7157, 0
        %v7278 = vsel %vm7204, %v7158, 0
        %v7281 = vsel %vm7204, %v7159, 0
        %v7284 = vsel %vm7204, %v7160, 0
        %v7287 = vsel %vm7204, %v7161, 0
        %v7290 = vsel %vm7204, %v7162, 0
        %v7293 = vsel %vm7204, %v7163, 0
        %v7296 = vsel %vm7204, %v7164, 0
        %v7299 = vsel %vm7204, %v7165, 0
        %v7302 = vsel %vm7204, %v7166, 0
        %v7305 = vsel %vm7204, %v7167, 0
        %v7308 = vsel %vm7204, %v7168, 0
        %v7311 = vsel %vm7204, %v7169, 0
        %v7314 = vsel %vm7204, %v7170, 0
        %v7317 = vsel %vm7204, %v7171, 0
        %v7320 = vsel %vm7204, %v7172, 0
        %v7323 = vsel %vm7204, %v7173, 0
        %v7326 = vsel %vm7204, %v7174, 0
        %v7329 = vsel %vm7204, %v7175, 0
        %v7332 = vsel %vm7204, %v7176, 0
        %v7335 = vsel %vm7204, %v7177, 0
        %v7338 = vsel %vm7204, %v7178, 0
        %v7341 = vsel %vm7204, %v7179, 0
        %v7344 = vsel %vm7204, %v7180, 0
        %v7347 = vsel %vm7204, %v7181, 0
        %v7350 = vsel %vm7204, %v7182, 0
        %v7353 = vsel %vm7204, %v7183, 0
        %v7356 = vsel %vm7204, %v7184, 0
        %v7359 = vsel %vm7204, %v7185, 0
        %v7362 = vsel %vm7204, %v7186, 0
        %v7365 = vsel %vm7204, %v7187, 0
        %v7368 = vsel %vm7204, %v7188, 0
        %v7371 = vsel %vm7204, %v7189, 0
        %v7374 = vsel %vm7204, %v7190, 0
        %v7377 = vsel %vm7204, %v7191, 0
        %v7380 = vsel %vm7204, %v7192, 0
        %v7383 = vsel %vm7204, %v7193, 0
        %v7386 = vsel %vm7204, %v7194, 0
        %v7389 = vsel %vm7204, %v7195, 0
        %v7392 = vsel %vm7204, %v7196, 0
        %v7395 = vsel %vm7204, %v7197, 0
        %7397 = vmatprep.subr.mxu0 0.0
        %7398 = vmatpush1.msra.mxu0 0.0
        %7399 = vmatprep.subr.mxu0 0.0
        %7400 = vmatpush1.msra.mxu0 0.0
        %7401 = vmatprep.subr.mxu0 0.0
        %7402 = vmatpush1.msra.mxu0 0.0
        %7403 = vmatprep.subr.mxu0 0.0
        %7404 = vmatpush1.msra.mxu0 0.0
        %7405 = vmatprep.subr.mxu0 0.0
        %7406 = vmatpush1.msra.mxu0 0.0
        %7407 = vmatprep.subr.mxu0 0.0
        %7408 = vmatpush1.msra.mxu0 0.0
        %7409 = vmatprep.subr.mxu0 0.0
        %7410 = vmatpush1.msra.mxu0 0.0
        %7411 = vmatprep.subr.mxu0 0.0
        %7412 = vmatpush1.msra.mxu0 %v4485
        %7413 = vmatprep.subr.mxu0 0.0
        %7414 = vmatpush1.msra.mxu0 %v4484
        %7415 = vmatprep.subr.mxu0 0.0
        %7416 = vmatpush1.msra.mxu0 %v4483
        %7417 = vmatprep.subr.mxu0 0.0
        %7418 = vmatpush1.msra.mxu0 %v4482
        %7419 = vmatprep.subr.mxu0 0.0
        %7420 = vmatpush1.msra.mxu0 %v4481
        %7421 = vmatprep.subr.mxu0 0.0
        %7422 = vmatpush1.msra.mxu0 %v4480
        %7423 = vmatprep.subr.mxu0 0.0
        %7424 = vmatpush1.msra.mxu0 %v4479
        %7425 = vmatprep.subr.mxu0 0.0
        %7426 = vmatpush1.msra.mxu0 %v4478
        %7427 = vmatprep.subr.mxu0 0.0
        %7428 = vmatpush1.msra.mxu0 %v4477
        %7429 = vmatprep.subr.mxu0 0.0
        %7430 = vmatpush2.msra.mxu0 0.0
        %7431 = vmatprep.subr.mxu0 0.0
        %7432 = vmatpush2.msra.mxu0 0.0
        %7433 = vmatprep.subr.mxu0 0.0
        %7434 = vmatpush2.msra.mxu0 0.0
        %7435 = vmatprep.subr.mxu0 0.0
        %7436 = vmatpush2.msra.mxu0 0.0
        %7437 = vmatprep.subr.mxu0 0.0
        %7438 = vmatpush2.msra.mxu0 0.0
        %7439 = vmatprep.subr.mxu0 0.0
        %7440 = vmatpush2.msra.mxu0 0.0
        %7441 = vmatprep.subr.mxu0 0.0
        %7442 = vmatpush2.msra.mxu0 0.0
        %7443 = vmatprep.subr.mxu0 0.0
        %7444 = vmatpush2.msra.mxu0 0.0
        %7445 = vmatprep.subr.mxu0 0.0
        %7446 = vmatpush2.msra.mxu0 0.0
        %7447 = vmatprep.subr.mxu0 0.0
        %7448 = vmatpush2.msra.mxu0 0.0
        %7449 = vmatprep.subr.mxu0 0.0
        %7450 = vmatpush2.msra.mxu0 0.0
        %7451 = vmatprep.subr.mxu0 0.0
        %7452 = vmatpush2.msra.mxu0 0.0
        %7453 = vmatprep.subr.mxu0 0.0
        %7454 = vmatpush2.msra.mxu0 0.0
        %7455 = vmatprep.subr.mxu0 0.0
        %7456 = vmatpush2.msra.mxu0 0.0
        %7457 = vmatprep.subr.mxu0 0.0
        %7458 = vmatpush2.msra.mxu0 0.0
        %7459 = vmatprep.subr.mxu0 0.0
        %7460 = vmatpush2.msra.mxu0 0.0
        %7461 = vmatprep.mubr.f32.mxu0 0.0
        %7462 = vmatmul.mubr.f32.gmra.mxu0 %v7206
        %v7463 = vpop.f32.mrf.mxu0
        %v7464 = vadd.f32 %v7202, %v7463
        %v7465 = vpop.f32.mrf.mxu0
        %7466 = vmatprep.mubr.f32.mxu0 0.0
        %7467 = vmatmul.mubr.f32.gmra.mxu0 %v7209
        %v7468 = vpop.f32.mrf.mxu0
        %v7469 = vadd.f32 %v7202, %v7468
        %v7470 = vpop.f32.mrf.mxu0
        %7471 = vmatprep.mubr.f32.mxu0 0.0
        %7472 = vmatmul.mubr.f32.gmra.mxu0 %v7212
        %v7473 = vpop.f32.mrf.mxu0
        %v7474 = vadd.f32 %v7202, %v7473
        %v7475 = vpop.f32.mrf.mxu0
        %7476 = vmatprep.mubr.f32.mxu0 0.0
        %7477 = vmatmul.mubr.f32.gmra.mxu0 %v7215
        %v7478 = vpop.f32.mrf.mxu0
        %v7479 = vadd.f32 %v7202, %v7478
        %v7480 = vpop.f32.mrf.mxu0
        %7481 = vmatprep.mubr.f32.mxu0 0.0
        %7482 = vmatmul.mubr.f32.gmra.mxu0 %v7218
        %v7483 = vpop.f32.mrf.mxu0
        %v7484 = vadd.f32 %v7202, %v7483
        %v7485 = vpop.f32.mrf.mxu0
        %7486 = vmatprep.mubr.f32.mxu0 0.0
        %7487 = vmatmul.mubr.f32.gmra.mxu0 %v7221
        %v7488 = vpop.f32.mrf.mxu0
        %v7489 = vadd.f32 %v7202, %v7488
        %v7490 = vpop.f32.mrf.mxu0
        %7491 = vmatprep.mubr.f32.mxu0 0.0
        %7492 = vmatmul.mubr.f32.gmra.mxu0 %v7224
        %v7493 = vpop.f32.mrf.mxu0
        %v7494 = vadd.f32 %v7202, %v7493
        %v7495 = vpop.f32.mrf.mxu0
        %7496 = vmatprep.mubr.f32.mxu0 0.0
        %7497 = vmatmul.mubr.f32.gmra.mxu0 %v7227
        %v7498 = vpop.f32.mrf.mxu0
        %v7499 = vadd.f32 %v7202, %v7498
        %v7500 = vpop.f32.mrf.mxu0
        %7501 = vmatprep.mubr.f32.mxu0 0.0
        %7502 = vmatmul.mubr.f32.gmra.mxu0 %v7230
        %v7503 = vpop.f32.mrf.mxu0
        %v7504 = vadd.f32 %v7202, %v7503
        %v7505 = vpop.f32.mrf.mxu0
        %7506 = vmatprep.mubr.f32.mxu0 0.0
        %7507 = vmatmul.mubr.f32.gmra.mxu0 %v7233
        %v7508 = vpop.f32.mrf.mxu0
        %v7509 = vadd.f32 %v7202, %v7508
        %v7510 = vpop.f32.mrf.mxu0
        %7511 = vmatprep.mubr.f32.mxu0 0.0
        %7512 = vmatmul.mubr.f32.gmra.mxu0 %v7236
        %v7513 = vpop.f32.mrf.mxu0
        %v7514 = vadd.f32 %v7202, %v7513
        %v7515 = vpop.f32.mrf.mxu0
        %7516 = vmatprep.mubr.f32.mxu0 0.0
        %7517 = vmatmul.mubr.f32.gmra.mxu0 %v7239
        %v7518 = vpop.f32.mrf.mxu0
        %v7519 = vadd.f32 %v7202, %v7518
        %v7520 = vpop.f32.mrf.mxu0
        %7521 = vmatprep.mubr.f32.mxu0 0.0
        %7522 = vmatmul.mubr.f32.gmra.mxu0 %v7242
        %v7523 = vpop.f32.mrf.mxu0
        %v7524 = vadd.f32 %v7202, %v7523
        %v7525 = vpop.f32.mrf.mxu0
        %7526 = vmatprep.mubr.f32.mxu0 0.0
        %7527 = vmatmul.mubr.f32.gmra.mxu0 %v7245
        %v7528 = vpop.f32.mrf.mxu0
        %v7529 = vadd.f32 %v7202, %v7528
        %v7530 = vpop.f32.mrf.mxu0
        %7531 = vmatprep.mubr.f32.mxu0 0.0
        %7532 = vmatmul.mubr.f32.gmra.mxu0 %v7248
        %v7533 = vpop.f32.mrf.mxu0
        %v7534 = vadd.f32 %v7202, %v7533
        %v7535 = vpop.f32.mrf.mxu0
        %7536 = vmatprep.mubr.f32.mxu0 0.0
        %7537 = vmatmul.mubr.f32.gmra.mxu0 %v7251
        %v7538 = vpop.f32.mrf.mxu0
        %v7539 = vadd.f32 %v7202, %v7538
        %v7540 = vpop.f32.mrf.mxu0
        %7541 = vmatprep.mubr.f32.mxu0 0.0
        %7542 = vmatmul.mubr.f32.gmra.mxu0 %v7254
        %v7543 = vpop.f32.mrf.mxu0
        %v7544 = vadd.f32 %v7202, %v7543
        %v7545 = vpop.f32.mrf.mxu0
        %7546 = vmatprep.mubr.f32.mxu0 0.0
        %7547 = vmatmul.mubr.f32.gmra.mxu0 %v7257
        %v7548 = vpop.f32.mrf.mxu0
        %v7549 = vadd.f32 %v7202, %v7548
        %v7550 = vpop.f32.mrf.mxu0
        %7551 = vmatprep.mubr.f32.mxu0 0.0
        %7552 = vmatmul.mubr.f32.gmra.mxu0 %v7260
        %v7553 = vpop.f32.mrf.mxu0
        %v7554 = vadd.f32 %v7202, %v7553
        %v7555 = vpop.f32.mrf.mxu0
        %7556 = vmatprep.mubr.f32.mxu0 0.0
        %7557 = vmatmul.mubr.f32.gmra.mxu0 %v7263
        %v7558 = vpop.f32.mrf.mxu0
        %v7559 = vadd.f32 %v7202, %v7558
        %v7560 = vpop.f32.mrf.mxu0
        %7561 = vmatprep.mubr.f32.mxu0 0.0
        %7562 = vmatmul.mubr.f32.gmra.mxu0 %v7266
        %v7563 = vpop.f32.mrf.mxu0
        %v7564 = vadd.f32 %v7202, %v7563
        %v7565 = vpop.f32.mrf.mxu0
        %7566 = vmatprep.mubr.f32.mxu0 0.0
        %7567 = vmatmul.mubr.f32.gmra.mxu0 %v7269
        %v7568 = vpop.f32.mrf.mxu0
        %v7569 = vadd.f32 %v7202, %v7568
        %v7570 = vpop.f32.mrf.mxu0
        %7571 = vmatprep.mubr.f32.mxu0 0.0
        %7572 = vmatmul.mubr.f32.gmra.mxu0 %v7272
        %v7573 = vpop.f32.mrf.mxu0
        %v7574 = vadd.f32 %v7202, %v7573
        %v7575 = vpop.f32.mrf.mxu0
        %7576 = vmatprep.mubr.f32.mxu0 0.0
        %7577 = vmatmul.mubr.f32.gmra.mxu0 %v7275
        %v7578 = vpop.f32.mrf.mxu0
        %v7579 = vadd.f32 %v7202, %v7578
        %v7580 = vpop.f32.mrf.mxu0
        %7581 = vmatprep.mubr.f32.mxu0 0.0
        %7582 = vmatmul.mubr.f32.gmra.mxu0 %v7278
        %v7583 = vpop.f32.mrf.mxu0
        %v7584 = vadd.f32 %v7202, %v7583
        %v7585 = vpop.f32.mrf.mxu0
        %7586 = vmatprep.mubr.f32.mxu0 0.0
        %7587 = vmatmul.mubr.f32.gmra.mxu0 %v7281
        %v7588 = vpop.f32.mrf.mxu0
        %v7589 = vadd.f32 %v7202, %v7588
        %v7590 = vpop.f32.mrf.mxu0
        %7591 = vmatprep.mubr.f32.mxu0 0.0
        %7592 = vmatmul.mubr.f32.gmra.mxu0 %v7284
        %v7593 = vpop.f32.mrf.mxu0
        %v7594 = vadd.f32 %v7202, %v7593
        %v7595 = vpop.f32.mrf.mxu0
        %7596 = vmatprep.mubr.f32.mxu0 0.0
        %7597 = vmatmul.mubr.f32.gmra.mxu0 %v7287
        %v7598 = vpop.f32.mrf.mxu0
        %v7599 = vadd.f32 %v7202, %v7598
        %v7600 = vpop.f32.mrf.mxu0
        %7601 = vmatprep.mubr.f32.mxu0 0.0
        %7602 = vmatmul.mubr.f32.gmra.mxu0 %v7290
        %v7603 = vpop.f32.mrf.mxu0
        %v7604 = vadd.f32 %v7202, %v7603
        %v7605 = vpop.f32.mrf.mxu0
        %7606 = vmatprep.mubr.f32.mxu0 0.0
        %7607 = vmatmul.mubr.f32.gmra.mxu0 %v7293
        %v7608 = vpop.f32.mrf.mxu0
        %v7609 = vadd.f32 %v7202, %v7608
        %v7610 = vpop.f32.mrf.mxu0
        %7611 = vmatprep.mubr.f32.mxu0 0.0
        %7612 = vmatmul.mubr.f32.gmra.mxu0 %v7296
        %v7613 = vpop.f32.mrf.mxu0
        %v7614 = vadd.f32 %v7202, %v7613
        %v7615 = vpop.f32.mrf.mxu0
        %7616 = vmatprep.mubr.f32.mxu0 0.0
        %7617 = vmatmul.mubr.f32.gmra.mxu0 %v7299
        %v7618 = vpop.f32.mrf.mxu0
        %v7619 = vadd.f32 %v7202, %v7618
        %v7620 = vpop.f32.mrf.mxu0
        %7621 = vmatprep.mubr.f32.mxu0 0.0
        %7622 = vmatmul.mubr.f32.gmra.mxu0 %v7302
        %v7623 = vpop.f32.mrf.mxu0
        %v7624 = vadd.f32 %v7202, %v7623
        %v7625 = vpop.f32.mrf.mxu0
        %7626 = vmatprep.mubr.f32.mxu0 0.0
        %7627 = vmatmul.mubr.f32.gmra.mxu0 %v7305
        %v7628 = vpop.f32.mrf.mxu0
        %v7629 = vadd.f32 %v7202, %v7628
        %v7630 = vpop.f32.mrf.mxu0
        %7631 = vmatprep.mubr.f32.mxu0 0.0
        %7632 = vmatmul.mubr.f32.gmra.mxu0 %v7308
        %v7633 = vpop.f32.mrf.mxu0
        %v7634 = vadd.f32 %v7202, %v7633
        %v7635 = vpop.f32.mrf.mxu0
        %7636 = vmatprep.mubr.f32.mxu0 0.0
        %7637 = vmatmul.mubr.f32.gmra.mxu0 %v7311
        %v7638 = vpop.f32.mrf.mxu0
        %v7639 = vadd.f32 %v7202, %v7638
        %v7640 = vpop.f32.mrf.mxu0
        %7641 = vmatprep.mubr.f32.mxu0 0.0
        %7642 = vmatmul.mubr.f32.gmra.mxu0 %v7314
        %v7643 = vpop.f32.mrf.mxu0
        %v7644 = vadd.f32 %v7202, %v7643
        %v7645 = vpop.f32.mrf.mxu0
        %7646 = vmatprep.mubr.f32.mxu0 0.0
        %7647 = vmatmul.mubr.f32.gmra.mxu0 %v7317
        %v7648 = vpop.f32.mrf.mxu0
        %v7649 = vadd.f32 %v7202, %v7648
        %v7650 = vpop.f32.mrf.mxu0
        %7651 = vmatprep.mubr.f32.mxu0 0.0
        %7652 = vmatmul.mubr.f32.gmra.mxu0 %v7320
        %v7653 = vpop.f32.mrf.mxu0
        %v7654 = vadd.f32 %v7202, %v7653
        %v7655 = vpop.f32.mrf.mxu0
        %7656 = vmatprep.mubr.f32.mxu0 0.0
        %7657 = vmatmul.mubr.f32.gmra.mxu0 %v7323
        %v7658 = vpop.f32.mrf.mxu0
        %v7659 = vadd.f32 %v7202, %v7658
        %v7660 = vpop.f32.mrf.mxu0
        %7661 = vmatprep.mubr.f32.mxu0 0.0
        %7662 = vmatmul.mubr.f32.gmra.mxu0 %v7326
        %v7663 = vpop.f32.mrf.mxu0
        %v7664 = vadd.f32 %v7202, %v7663
        %v7665 = vpop.f32.mrf.mxu0
        %7666 = vmatprep.mubr.f32.mxu0 0.0
        %7667 = vmatmul.mubr.f32.gmra.mxu0 %v7329
        %v7668 = vpop.f32.mrf.mxu0
        %v7669 = vadd.f32 %v7202, %v7668
        %v7670 = vpop.f32.mrf.mxu0
        %7671 = vmatprep.mubr.f32.mxu0 0.0
        %7672 = vmatmul.mubr.f32.gmra.mxu0 %v7332
        %v7673 = vpop.f32.mrf.mxu0
        %v7674 = vadd.f32 %v7202, %v7673
        %v7675 = vpop.f32.mrf.mxu0
        %7676 = vmatprep.mubr.f32.mxu0 0.0
        %7677 = vmatmul.mubr.f32.gmra.mxu0 %v7335
        %v7678 = vpop.f32.mrf.mxu0
        %v7679 = vadd.f32 %v7202, %v7678
        %v7680 = vpop.f32.mrf.mxu0
        %7681 = vmatprep.mubr.f32.mxu0 0.0
        %7682 = vmatmul.mubr.f32.gmra.mxu0 %v7338
        %v7683 = vpop.f32.mrf.mxu0
        %v7684 = vadd.f32 %v7202, %v7683
        %v7685 = vpop.f32.mrf.mxu0
        %7686 = vmatprep.mubr.f32.mxu0 0.0
        %7687 = vmatmul.mubr.f32.gmra.mxu0 %v7341
        %v7688 = vpop.f32.mrf.mxu0
        %v7689 = vadd.f32 %v7202, %v7688
        %v7690 = vpop.f32.mrf.mxu0
        %7691 = vmatprep.mubr.f32.mxu0 0.0
        %7692 = vmatmul.mubr.f32.gmra.mxu0 %v7344
        %v7693 = vpop.f32.mrf.mxu0
        %v7694 = vadd.f32 %v7202, %v7693
        %v7695 = vpop.f32.mrf.mxu0
        %7696 = vmatprep.mubr.f32.mxu0 0.0
        %7697 = vmatmul.mubr.f32.gmra.mxu0 %v7347
        %v7698 = vpop.f32.mrf.mxu0
        %v7699 = vadd.f32 %v7202, %v7698
        %v7700 = vpop.f32.mrf.mxu0
        %7701 = vmatprep.mubr.f32.mxu0 0.0
        %7702 = vmatmul.mubr.f32.gmra.mxu0 %v7350
        %v7703 = vpop.f32.mrf.mxu0
        %v7704 = vadd.f32 %v7202, %v7703
        %v7705 = vpop.f32.mrf.mxu0
        %7706 = vmatprep.mubr.f32.mxu0 0.0
        %7707 = vmatmul.mubr.f32.gmra.mxu0 %v7353
        %v7708 = vpop.f32.mrf.mxu0
        %v7709 = vadd.f32 %v7202, %v7708
        %v7710 = vpop.f32.mrf.mxu0
        %7711 = vmatprep.mubr.f32.mxu0 0.0
        %7712 = vmatmul.mubr.f32.gmra.mxu0 %v7356
        %v7713 = vpop.f32.mrf.mxu0
        %v7714 = vadd.f32 %v7202, %v7713
        %v7715 = vpop.f32.mrf.mxu0
        %7716 = vmatprep.mubr.f32.mxu0 0.0
        %7717 = vmatmul.mubr.f32.gmra.mxu0 %v7359
        %v7718 = vpop.f32.mrf.mxu0
        %v7719 = vadd.f32 %v7202, %v7718
        %v7720 = vpop.f32.mrf.mxu0
        %7721 = vmatprep.mubr.f32.mxu0 0.0
        %7722 = vmatmul.mubr.f32.gmra.mxu0 %v7362
        %v7723 = vpop.f32.mrf.mxu0
        %v7724 = vadd.f32 %v7202, %v7723
        %v7725 = vpop.f32.mrf.mxu0
        %7726 = vmatprep.mubr.f32.mxu0 0.0
        %7727 = vmatmul.mubr.f32.gmra.mxu0 %v7365
        %v7728 = vpop.f32.mrf.mxu0
        %v7729 = vadd.f32 %v7202, %v7728
        %v7730 = vpop.f32.mrf.mxu0
        %7731 = vmatprep.mubr.f32.mxu0 0.0
        %7732 = vmatmul.mubr.f32.gmra.mxu0 %v7368
        %v7733 = vpop.f32.mrf.mxu0
        %v7734 = vadd.f32 %v7202, %v7733
        %v7735 = vpop.f32.mrf.mxu0
        %7736 = vmatprep.mubr.f32.mxu0 0.0
        %7737 = vmatmul.mubr.f32.gmra.mxu0 %v7371
        %v7738 = vpop.f32.mrf.mxu0
        %v7739 = vadd.f32 %v7202, %v7738
        %v7740 = vpop.f32.mrf.mxu0
        %7741 = vmatprep.mubr.f32.mxu0 0.0
        %7742 = vmatmul.mubr.f32.gmra.mxu0 %v7374
        %v7743 = vpop.f32.mrf.mxu0
        %v7744 = vadd.f32 %v7202, %v7743
        %v7745 = vpop.f32.mrf.mxu0
        %7746 = vmatprep.mubr.f32.mxu0 0.0
        %7747 = vmatmul.mubr.f32.gmra.mxu0 %v7377
        %v7748 = vpop.f32.mrf.mxu0
        %v7749 = vadd.f32 %v7202, %v7748
        %v7750 = vpop.f32.mrf.mxu0
        %7751 = vmatprep.mubr.f32.mxu0 0.0
        %7752 = vmatmul.mubr.f32.gmra.mxu0 %v7380
        %v7753 = vpop.f32.mrf.mxu0
        %v7754 = vadd.f32 %v7202, %v7753
        %v7755 = vpop.f32.mrf.mxu0
        %7756 = vmatprep.mubr.f32.mxu0 0.0
        %7757 = vmatmul.mubr.f32.gmra.mxu0 %v7383
        %v7758 = vpop.f32.mrf.mxu0
        %v7759 = vadd.f32 %v7202, %v7758
        %v7760 = vpop.f32.mrf.mxu0
        %7761 = vmatprep.mubr.f32.mxu0 0.0
        %7762 = vmatmul.mubr.f32.gmra.mxu0 %v7386
        %v7763 = vpop.f32.mrf.mxu0
        %v7764 = vadd.f32 %v7202, %v7763
        %v7765 = vpop.f32.mrf.mxu0
        %7766 = vmatprep.mubr.f32.mxu0 0.0
        %7767 = vmatmul.mubr.f32.gmra.mxu0 %v7389
        %v7768 = vpop.f32.mrf.mxu0
        %v7769 = vadd.f32 %v7202, %v7768
        %v7770 = vpop.f32.mrf.mxu0
        %7771 = vmatprep.mubr.f32.mxu0 0.0
        %7772 = vmatmul.mubr.f32.gmra.mxu0 %v7392
        %v7773 = vpop.f32.mrf.mxu0
        %v7774 = vadd.f32 %v7202, %v7773
        %v7775 = vpop.f32.mrf.mxu0
        %7776 = vmatprep.mubr.f32.mxu0 0.0
        %7777 = vmatmul.mubr.f32.gmra.mxu0 %v7395
        %v7778 = vpop.f32.mrf.mxu0
        %v7779 = vadd.f32 %v7202, %v7778
        %v7780 = vpop.f32.mrf.mxu0
        %7781 = vdwg.mxu0
        %v7782 = vmax.f32 %v7464, 0.0
        %v7783 = vmax.f32 %v7469, 0.0
        %v7784 = vmax.f32 %v7474, 0.0
        %v7785 = vmax.f32 %v7479, 0.0
        %v7786 = vmax.f32 %v7484, 0.0
        %v7787 = vmax.f32 %v7489, 0.0
        %v7788 = vmax.f32 %v7494, 0.0
        %v7789 = vmax.f32 %v7499, 0.0
        %v7790 = vmax.f32 %v7504, 0.0
        %v7791 = vmax.f32 %v7509, 0.0
        %v7792 = vmax.f32 %v7514, 0.0
        %v7793 = vmax.f32 %v7519, 0.0
        %v7794 = vmax.f32 %v7524, 0.0
        %v7795 = vmax.f32 %v7529, 0.0
        %v7796 = vmax.f32 %v7534, 0.0
        %v7797 = vmax.f32 %v7539, 0.0
        %v7798 = vmax.f32 %v7544, 0.0
        %v7799 = vmax.f32 %v7549, 0.0
        %v7800 = vmax.f32 %v7554, 0.0
        %v7801 = vmax.f32 %v7559, 0.0
        %v7802 = vmax.f32 %v7564, 0.0
        %v7803 = vmax.f32 %v7569, 0.0
        %v7804 = vmax.f32 %v7574, 0.0
        %v7805 = vmax.f32 %v7579, 0.0
        %v7806 = vmax.f32 %v7584, 0.0
        %v7807 = vmax.f32 %v7589, 0.0
        %v7808 = vmax.f32 %v7594, 0.0
        %v7809 = vmax.f32 %v7599, 0.0
        %v7810 = vmax.f32 %v7604, 0.0
        %v7811 = vmax.f32 %v7609, 0.0
        %v7812 = vmax.f32 %v7614, 0.0
        %v7813 = vmax.f32 %v7619, 0.0
        %v7814 = vmax.f32 %v7624, 0.0
        %v7815 = vmax.f32 %v7629, 0.0
        %v7816 = vmax.f32 %v7634, 0.0
        %v7817 = vmax.f32 %v7639, 0.0
        %v7818 = vmax.f32 %v7644, 0.0
        %v7819 = vmax.f32 %v7649, 0.0
        %v7820 = vmax.f32 %v7654, 0.0
        %v7821 = vmax.f32 %v7659, 0.0
        %v7822 = vmax.f32 %v7664, 0.0
        %v7823 = vmax.f32 %v7669, 0.0
        %v7824 = vmax.f32 %v7674, 0.0
        %v7825 = vmax.f32 %v7679, 0.0
        %v7826 = vmax.f32 %v7684, 0.0
        %v7827 = vmax.f32 %v7689, 0.0
        %v7828 = vmax.f32 %v7694, 0.0
        %v7829 = vmax.f32 %v7699, 0.0
        %v7830 = vmax.f32 %v7704, 0.0
        %v7831 = vmax.f32 %v7709, 0.0
        %v7832 = vmax.f32 %v7714, 0.0
        %v7833 = vmax.f32 %v7719, 0.0
        %v7834 = vmax.f32 %v7724, 0.0
        %v7835 = vmax.f32 %v7729, 0.0
        %v7836 = vmax.f32 %v7734, 0.0
        %v7837 = vmax.f32 %v7739, 0.0
        %v7838 = vmax.f32 %v7744, 0.0
        %v7839 = vmax.f32 %v7749, 0.0
        %v7840 = vmax.f32 %v7754, 0.0
        %v7841 = vmax.f32 %v7759, 0.0
        %v7842 = vmax.f32 %v7764, 0.0
        %v7843 = vmax.f32 %v7769, 0.0
        %v7844 = vmax.f32 %v7774, 0.0
        %v7845 = vmax.f32 %v7779, 0.0
        %v7846 = vld [vmem:[%s5] sm:$0xff]
        %v7847 = vld [vmem:[%s5 + $0x8] sm:$0xff]
        %v7848 = vld [vmem:[%s5 + $0x10] sm:$0xff]
        %v7849 = vld [vmem:[%s5 + $0x18] sm:$0xff]
        %v7850 = vld [vmem:[%s5 + $0x20] sm:$0xff]
        %v7851 = vld [vmem:[%s5 + $0x28] sm:$0xff]
        %v7852 = vld [vmem:[%s5 + $0x30] sm:$0xff]
        %v7853 = vld [vmem:[%s5 + $0x38] sm:$0xff]
        %v7854 = vld [vmem:[%s5 + $0x40] sm:$0xff]
        %v7855 = vld [vmem:[%s5 + $0x48] sm:$0xff]
        %v7856 = vld [vmem:[%s5 + $0x50] sm:$0xff]
        %v7857 = vld [vmem:[%s5 + $0x58] sm:$0xff]
        %v7858 = vld [vmem:[%s5 + $0x60] sm:$0xff]
        %v7859 = vld [vmem:[%s5 + $0x68] sm:$0xff]
        %v7860 = vld [vmem:[%s5 + $0x70] sm:$0xff]
        %v7861 = vld [vmem:[%s5 + $0x78] sm:$0xff]
        %v7862 = vld [vmem:[%s5 + $0x80] sm:$0xff]
        %v7863 = vld [vmem:[%s5 + $0x88] sm:$0xff]
        %v7864 = vld [vmem:[%s5 + $0x90] sm:$0xff]
        %v7865 = vld [vmem:[%s5 + $0x98] sm:$0xff]
        %v7866 = vld [vmem:[%s5 + $0xa0] sm:$0xff]
        %v7867 = vld [vmem:[%s5 + $0xa8] sm:$0xff]
        %v7868 = vld [vmem:[%s5 + $0xb0] sm:$0xff]
        %v7869 = vld [vmem:[%s5 + $0xb8] sm:$0xff]
        %v7870 = vld [vmem:[%s5 + $0xc0] sm:$0xff]
        %v7871 = vld [vmem:[%s5 + $0xc8] sm:$0xff]
        %v7872 = vld [vmem:[%s5 + $0xd0] sm:$0xff]
        %v7873 = vld [vmem:[%s5 + $0xd8] sm:$0xff]
        %v7874 = vld [vmem:[%s5 + $0xe0] sm:$0xff]
        %v7875 = vld [vmem:[%s5 + $0xe8] sm:$0xff]
        %v7876 = vld [vmem:[%s5 + $0xf0] sm:$0xff]
        %v7877 = vld [vmem:[%s5 + $0xf8] sm:$0xff]
        %v7878 = vld [vmem:[%s5 + $0x100] sm:$0xff]
        %v7879 = vld [vmem:[%s5 + $0x108] sm:$0xff]
        %v7880 = vld [vmem:[%s5 + $0x110] sm:$0xff]
        %v7881 = vld [vmem:[%s5 + $0x118] sm:$0xff]
        %v7882 = vld [vmem:[%s5 + $0x120] sm:$0xff]
        %v7883 = vld [vmem:[%s5 + $0x128] sm:$0xff]
        %v7884 = vld [vmem:[%s5 + $0x130] sm:$0xff]
        %v7885 = vld [vmem:[%s5 + $0x138] sm:$0xff]
        %v7886 = vld [vmem:[%s5 + $0x140] sm:$0xff]
        %v7887 = vld [vmem:[%s5 + $0x148] sm:$0xff]
        %v7888 = vld [vmem:[%s5 + $0x150] sm:$0xff]
        %v7889 = vld [vmem:[%s5 + $0x158] sm:$0xff]
        %v7890 = vld [vmem:[%s5 + $0x160] sm:$0xff]
        %v7891 = vld [vmem:[%s5 + $0x168] sm:$0xff]
        %v7892 = vld [vmem:[%s5 + $0x170] sm:$0xff]
        %v7893 = vld [vmem:[%s5 + $0x178] sm:$0xff]
        %v7894 = vld [vmem:[%s5 + $0x180] sm:$0xff]
        %v7895 = vld [vmem:[%s5 + $0x188] sm:$0xff]
        %v7896 = vld [vmem:[%s5 + $0x190] sm:$0xff]
        %v7897 = vld [vmem:[%s5 + $0x198] sm:$0xff]
        %v7898 = vld [vmem:[%s5 + $0x1a0] sm:$0xff]
        %v7899 = vld [vmem:[%s5 + $0x1a8] sm:$0xff]
        %v7900 = vld [vmem:[%s5 + $0x1b0] sm:$0xff]
        %v7901 = vld [vmem:[%s5 + $0x1b8] sm:$0xff]
        %v7902 = vld [vmem:[%s5 + $0x1c0] sm:$0xff]
        %v7903 = vld [vmem:[%s5 + $0x1c8] sm:$0xff]
        %v7904 = vld [vmem:[%s5 + $0x1d0] sm:$0xff]
        %v7905 = vld [vmem:[%s5 + $0x1d8] sm:$0xff]
        %v7906 = vld [vmem:[%s5 + $0x1e0] sm:$0xff]
        %v7907 = vld [vmem:[%s5 + $0x1e8] sm:$0xff]
        %v7908 = vld [vmem:[%s5 + $0x1f0] sm:$0xff]
        %v7909 = vld [vmem:[%s5 + $0x1f8] sm:$0xff]
        %v7910 = vld [vmem:[%s6] sm:$0x1]
        %v7911 = vld [vmem:[%s7] sm:$0xff]
        %v7912 = vld [vmem:[%s7 + $0x8] sm:$0xff]
        %v7913 = vld [vmem:[%s7 + $0x10] sm:$0xff]
        %v7914 = vld [vmem:[%s7 + $0x18] sm:$0xff]
        %v7915 = vld [vmem:[%s8] sm:$0x1]
        %v7916 = vmax.f32 %v7782, %v7784
        %v7917 = vmax.f32 %v7783, %v7785
        %v7918 = vmax.f32 %v7786, %v7788
        %v7919 = vmax.f32 %v7787, %v7789
        %v7920 = vmax.f32 %v7790, %v7792
        %v7921 = vmax.f32 %v7791, %v7793
        %v7922 = vmax.f32 %v7794, %v7796
        %v7923 = vmax.f32 %v7795, %v7797
        %v7924 = vmax.f32 %v7798, %v7800
        %v7925 = vmax.f32 %v7799, %v7801
        %v7926 = vmax.f32 %v7802, %v7804
        %v7927 = vmax.f32 %v7803, %v7805
        %v7928 = vmax.f32 %v7806, %v7808
        %v7929 = vmax.f32 %v7807, %v7809
        %v7930 = vmax.f32 %v7810, %v7812
        %v7931 = vmax.f32 %v7811, %v7813
        %v7932 = vmax.f32 %v7814, %v7816
        %v7933 = vmax.f32 %v7815, %v7817
        %v7934 = vmax.f32 %v7818, %v7820
        %v7935 = vmax.f32 %v7819, %v7821
        %v7936 = vmax.f32 %v7822, %v7824
        %v7937 = vmax.f32 %v7823, %v7825
        %v7938 = vmax.f32 %v7826, %v7828
        %v7939 = vmax.f32 %v7827, %v7829
        %v7940 = vmax.f32 %v7830, %v7832
        %v7941 = vmax.f32 %v7831, %v7833
        %v7942 = vmax.f32 %v7834, %v7836
        %v7943 = vmax.f32 %v7835, %v7837
        %v7944 = vmax.f32 %v7838, %v7840
        %v7945 = vmax.f32 %v7839, %v7841
        %v7946 = vmax.f32 %v7842, %v7844
        %v7947 = vmax.f32 %v7843, %v7845
        %v7980 = vcombine.high %v7916, %v7916
        %v7982 = vunpack.c.l.s4 1983009808
        %v7983 = vunpack.c.0.s8 %v7982
        %v7984 = vlaneseq
        %v7985 = vshrl.u32 %v7984, 7
        %v7986 = vsub.s32 %v7983, %v7985
        %v7987 = vrot.slane %v7916, %v7986
        %v7989 = vunpack.c.l.s4 1983009808
        %v7990 = vunpack.c.0.s8 %v7989
        %v7991 = vlaneseq
        %v7992 = vshrl.u32 %v7991, 7
        %v7993 = vsub.s32 %v7990, %v7992
        %v7994 = vrot.slane %v7980, %v7993
        %v7995 = vcombine.high %v7987, %v7987
        %v7996 = vcombine.high %v7994, %v7994
        %v7997 = vcombine.high %v7917, %v7917
        %v7999 = vunpack.c.l.s4 1983009808
        %v8000 = vunpack.c.0.s8 %v7999
        %v8001 = vlaneseq
        %v8002 = vshrl.u32 %v8001, 7
        %v8003 = vsub.s32 %v8000, %v8002
        %v8004 = vrot.slane %v7917, %v8003
        %v8006 = vunpack.c.l.s4 1983009808
        %v8007 = vunpack.c.0.s8 %v8006
        %v8008 = vlaneseq
        %v8009 = vshrl.u32 %v8008, 7
        %v8010 = vsub.s32 %v8007, %v8009
        %v8011 = vrot.slane %v7997, %v8010
        %v8012 = vcombine.high %v8004, %v8004
        %v8013 = vcombine.high %v8011, %v8011
        %v8014 = vcombine.high %v7918, %v7918
        %v8016 = vunpack.c.l.s4 1983009808
        %v8017 = vunpack.c.0.s8 %v8016
        %v8018 = vlaneseq
        %v8019 = vshrl.u32 %v8018, 7
        %v8020 = vsub.s32 %v8017, %v8019
        %v8021 = vrot.slane %v7918, %v8020
        %v8023 = vunpack.c.l.s4 1983009808
        %v8024 = vunpack.c.0.s8 %v8023
        %v8025 = vlaneseq
        %v8026 = vshrl.u32 %v8025, 7
        %v8027 = vsub.s32 %v8024, %v8026
        %v8028 = vrot.slane %v8014, %v8027
        %v8029 = vcombine.high %v8021, %v8021
        %v8030 = vcombine.high %v8028, %v8028
        %v8031 = vcombine.high %v7919, %v7919
        %v8033 = vunpack.c.l.s4 1983009808
        %v8034 = vunpack.c.0.s8 %v8033
        %v8035 = vlaneseq
        %v8036 = vshrl.u32 %v8035, 7
        %v8037 = vsub.s32 %v8034, %v8036
        %v8038 = vrot.slane %v7919, %v8037
        %v8040 = vunpack.c.l.s4 1983009808
        %v8041 = vunpack.c.0.s8 %v8040
        %v8042 = vlaneseq
        %v8043 = vshrl.u32 %v8042, 7
        %v8044 = vsub.s32 %v8041, %v8043
        %v8045 = vrot.slane %v8031, %v8044
        %v8046 = vcombine.high %v8038, %v8038
        %v8047 = vcombine.high %v8045, %v8045
        %v8048 = vcombine.high %v7920, %v7920
        %v8050 = vunpack.c.l.s4 1983009808
        %v8051 = vunpack.c.0.s8 %v8050
        %v8052 = vlaneseq
        %v8053 = vshrl.u32 %v8052, 7
        %v8054 = vsub.s32 %v8051, %v8053
        %v8055 = vrot.slane %v7920, %v8054
        %v8057 = vunpack.c.l.s4 1983009808
        %v8058 = vunpack.c.0.s8 %v8057
        %v8059 = vlaneseq
        %v8060 = vshrl.u32 %v8059, 7
        %v8061 = vsub.s32 %v8058, %v8060
        %v8062 = vrot.slane %v8048, %v8061
        %v8063 = vcombine.high %v8055, %v8055
        %v8064 = vcombine.high %v8062, %v8062
        %v8065 = vcombine.high %v7921, %v7921
        %v8067 = vunpack.c.l.s4 1983009808
        %v8068 = vunpack.c.0.s8 %v8067
        %v8069 = vlaneseq
        %v8070 = vshrl.u32 %v8069, 7
        %v8071 = vsub.s32 %v8068, %v8070
        %v8072 = vrot.slane %v7921, %v8071
        %v8074 = vunpack.c.l.s4 1983009808
        %v8075 = vunpack.c.0.s8 %v8074
        %v8076 = vlaneseq
        %v8077 = vshrl.u32 %v8076, 7
        %v8078 = vsub.s32 %v8075, %v8077
        %v8079 = vrot.slane %v8065, %v8078
        %v8080 = vcombine.high %v8072, %v8072
        %v8081 = vcombine.high %v8079, %v8079
        %v8082 = vcombine.high %v7922, %v7922
        %v8084 = vunpack.c.l.s4 1983009808
        %v8085 = vunpack.c.0.s8 %v8084
        %v8086 = vlaneseq
        %v8087 = vshrl.u32 %v8086, 7
        %v8088 = vsub.s32 %v8085, %v8087
        %v8089 = vrot.slane %v7922, %v8088
        %v8091 = vunpack.c.l.s4 1983009808
        %v8092 = vunpack.c.0.s8 %v8091
        %v8093 = vlaneseq
        %v8094 = vshrl.u32 %v8093, 7
        %v8095 = vsub.s32 %v8092, %v8094
        %v8096 = vrot.slane %v8082, %v8095
        %v8097 = vcombine.high %v8089, %v8089
        %v8098 = vcombine.high %v8096, %v8096
        %v8099 = vcombine.high %v7923, %v7923
        %v8101 = vunpack.c.l.s4 1983009808
        %v8102 = vunpack.c.0.s8 %v8101
        %v8103 = vlaneseq
        %v8104 = vshrl.u32 %v8103, 7
        %v8105 = vsub.s32 %v8102, %v8104
        %v8106 = vrot.slane %v7923, %v8105
        %v8108 = vunpack.c.l.s4 1983009808
        %v8109 = vunpack.c.0.s8 %v8108
        %v8110 = vlaneseq
        %v8111 = vshrl.u32 %v8110, 7
        %v8112 = vsub.s32 %v8109, %v8111
        %v8113 = vrot.slane %v8099, %v8112
        %v8114 = vcombine.high %v8106, %v8106
        %v8115 = vcombine.high %v8113, %v8113
        %v8116 = vcombine.high %v7924, %v7924
        %v8118 = vunpack.c.l.s4 1983009808
        %v8119 = vunpack.c.0.s8 %v8118
        %v8120 = vlaneseq
        %v8121 = vshrl.u32 %v8120, 7
        %v8122 = vsub.s32 %v8119, %v8121
        %v8123 = vrot.slane %v7924, %v8122
        %v8125 = vunpack.c.l.s4 1983009808
        %v8126 = vunpack.c.0.s8 %v8125
        %v8127 = vlaneseq
        %v8128 = vshrl.u32 %v8127, 7
        %v8129 = vsub.s32 %v8126, %v8128
        %v8130 = vrot.slane %v8116, %v8129
        %v8131 = vcombine.high %v8123, %v8123
        %v8132 = vcombine.high %v8130, %v8130
        %v8133 = vcombine.high %v7925, %v7925
        %v8135 = vunpack.c.l.s4 1983009808
        %v8136 = vunpack.c.0.s8 %v8135
        %v8137 = vlaneseq
        %v8138 = vshrl.u32 %v8137, 7
        %v8139 = vsub.s32 %v8136, %v8138
        %v8140 = vrot.slane %v7925, %v8139
        %v8142 = vunpack.c.l.s4 1983009808
        %v8143 = vunpack.c.0.s8 %v8142
        %v8144 = vlaneseq
        %v8145 = vshrl.u32 %v8144, 7
        %v8146 = vsub.s32 %v8143, %v8145
        %v8147 = vrot.slane %v8133, %v8146
        %v8148 = vcombine.high %v8140, %v8140
        %v8149 = vcombine.high %v8147, %v8147
        %v8150 = vcombine.high %v7926, %v7926
        %v8152 = vunpack.c.l.s4 1983009808
        %v8153 = vunpack.c.0.s8 %v8152
        %v8154 = vlaneseq
        %v8155 = vshrl.u32 %v8154, 7
        %v8156 = vsub.s32 %v8153, %v8155
        %v8157 = vrot.slane %v7926, %v8156
        %v8159 = vunpack.c.l.s4 1983009808
        %v8160 = vunpack.c.0.s8 %v8159
        %v8161 = vlaneseq
        %v8162 = vshrl.u32 %v8161, 7
        %v8163 = vsub.s32 %v8160, %v8162
        %v8164 = vrot.slane %v8150, %v8163
        %v8165 = vcombine.high %v8157, %v8157
        %v8166 = vcombine.high %v8164, %v8164
        %v8167 = vcombine.high %v7927, %v7927
        %v8169 = vunpack.c.l.s4 1983009808
        %v8170 = vunpack.c.0.s8 %v8169
        %v8171 = vlaneseq
        %v8172 = vshrl.u32 %v8171, 7
        %v8173 = vsub.s32 %v8170, %v8172
        %v8174 = vrot.slane %v7927, %v8173
        %v8176 = vunpack.c.l.s4 1983009808
        %v8177 = vunpack.c.0.s8 %v8176
        %v8178 = vlaneseq
        %v8179 = vshrl.u32 %v8178, 7
        %v8180 = vsub.s32 %v8177, %v8179
        %v8181 = vrot.slane %v8167, %v8180
        %v8182 = vcombine.high %v8174, %v8174
        %v8183 = vcombine.high %v8181, %v8181
        %v8184 = vcombine.high %v7928, %v7928
        %v8186 = vunpack.c.l.s4 1983009808
        %v8187 = vunpack.c.0.s8 %v8186
        %v8188 = vlaneseq
        %v8189 = vshrl.u32 %v8188, 7
        %v8190 = vsub.s32 %v8187, %v8189
        %v8191 = vrot.slane %v7928, %v8190
        %v8193 = vunpack.c.l.s4 1983009808
        %v8194 = vunpack.c.0.s8 %v8193
        %v8195 = vlaneseq
        %v8196 = vshrl.u32 %v8195, 7
        %v8197 = vsub.s32 %v8194, %v8196
        %v8198 = vrot.slane %v8184, %v8197
        %v8199 = vcombine.high %v8191, %v8191
        %v8200 = vcombine.high %v8198, %v8198
        %v8201 = vcombine.high %v7929, %v7929
        %v8203 = vunpack.c.l.s4 1983009808
        %v8204 = vunpack.c.0.s8 %v8203
        %v8205 = vlaneseq
        %v8206 = vshrl.u32 %v8205, 7
        %v8207 = vsub.s32 %v8204, %v8206
        %v8208 = vrot.slane %v7929, %v8207
        %v8210 = vunpack.c.l.s4 1983009808
        %v8211 = vunpack.c.0.s8 %v8210
        %v8212 = vlaneseq
        %v8213 = vshrl.u32 %v8212, 7
        %v8214 = vsub.s32 %v8211, %v8213
        %v8215 = vrot.slane %v8201, %v8214
        %v8216 = vcombine.high %v8208, %v8208
        %v8217 = vcombine.high %v8215, %v8215
        %v8218 = vcombine.high %v7930, %v7930
        %v8220 = vunpack.c.l.s4 1983009808
        %v8221 = vunpack.c.0.s8 %v8220
        %v8222 = vlaneseq
        %v8223 = vshrl.u32 %v8222, 7
        %v8224 = vsub.s32 %v8221, %v8223
        %v8225 = vrot.slane %v7930, %v8224
        %v8227 = vunpack.c.l.s4 1983009808
        %v8228 = vunpack.c.0.s8 %v8227
        %v8229 = vlaneseq
        %v8230 = vshrl.u32 %v8229, 7
        %v8231 = vsub.s32 %v8228, %v8230
        %v8232 = vrot.slane %v8218, %v8231
        %v8233 = vcombine.high %v8225, %v8225
        %v8234 = vcombine.high %v8232, %v8232
        %v8235 = vcombine.high %v7931, %v7931
        %v8237 = vunpack.c.l.s4 1983009808
        %v8238 = vunpack.c.0.s8 %v8237
        %v8239 = vlaneseq
        %v8240 = vshrl.u32 %v8239, 7
        %v8241 = vsub.s32 %v8238, %v8240
        %v8242 = vrot.slane %v7931, %v8241
        %v8244 = vunpack.c.l.s4 1983009808
        %v8245 = vunpack.c.0.s8 %v8244
        %v8246 = vlaneseq
        %v8247 = vshrl.u32 %v8246, 7
        %v8248 = vsub.s32 %v8245, %v8247
        %v8249 = vrot.slane %v8235, %v8248
        %v8250 = vcombine.high %v8242, %v8242
        %v8251 = vcombine.high %v8249, %v8249
        %v8252 = vcombine.high %v7932, %v7932
        %v8254 = vunpack.c.l.s4 1983009808
        %v8255 = vunpack.c.0.s8 %v8254
        %v8256 = vlaneseq
        %v8257 = vshrl.u32 %v8256, 7
        %v8258 = vsub.s32 %v8255, %v8257
        %v8259 = vrot.slane %v7932, %v8258
        %v8261 = vunpack.c.l.s4 1983009808
        %v8262 = vunpack.c.0.s8 %v8261
        %v8263 = vlaneseq
        %v8264 = vshrl.u32 %v8263, 7
        %v8265 = vsub.s32 %v8262, %v8264
        %v8266 = vrot.slane %v8252, %v8265
        %v8267 = vcombine.high %v8259, %v8259
        %v8268 = vcombine.high %v8266, %v8266
        %v8269 = vcombine.high %v7933, %v7933
        %v8271 = vunpack.c.l.s4 1983009808
        %v8272 = vunpack.c.0.s8 %v8271
        %v8273 = vlaneseq
        %v8274 = vshrl.u32 %v8273, 7
        %v8275 = vsub.s32 %v8272, %v8274
        %v8276 = vrot.slane %v7933, %v8275
        %v8278 = vunpack.c.l.s4 1983009808
        %v8279 = vunpack.c.0.s8 %v8278
        %v8280 = vlaneseq
        %v8281 = vshrl.u32 %v8280, 7
        %v8282 = vsub.s32 %v8279, %v8281
        %v8283 = vrot.slane %v8269, %v8282
        %v8284 = vcombine.high %v8276, %v8276
        %v8285 = vcombine.high %v8283, %v8283
        %v8286 = vcombine.high %v7934, %v7934
        %v8288 = vunpack.c.l.s4 1983009808
        %v8289 = vunpack.c.0.s8 %v8288
        %v8290 = vlaneseq
        %v8291 = vshrl.u32 %v8290, 7
        %v8292 = vsub.s32 %v8289, %v8291
        %v8293 = vrot.slane %v7934, %v8292
        %v8295 = vunpack.c.l.s4 1983009808
        %v8296 = vunpack.c.0.s8 %v8295
        %v8297 = vlaneseq
        %v8298 = vshrl.u32 %v8297, 7
        %v8299 = vsub.s32 %v8296, %v8298
        %v8300 = vrot.slane %v8286, %v8299
        %v8301 = vcombine.high %v8293, %v8293
        %v8302 = vcombine.high %v8300, %v8300
        %v8303 = vcombine.high %v7935, %v7935
        %v8305 = vunpack.c.l.s4 1983009808
        %v8306 = vunpack.c.0.s8 %v8305
        %v8307 = vlaneseq
        %v8308 = vshrl.u32 %v8307, 7
        %v8309 = vsub.s32 %v8306, %v8308
        %v8310 = vrot.slane %v7935, %v8309
        %v8312 = vunpack.c.l.s4 1983009808
        %v8313 = vunpack.c.0.s8 %v8312
        %v8314 = vlaneseq
        %v8315 = vshrl.u32 %v8314, 7
        %v8316 = vsub.s32 %v8313, %v8315
        %v8317 = vrot.slane %v8303, %v8316
        %v8318 = vcombine.high %v8310, %v8310
        %v8319 = vcombine.high %v8317, %v8317
        %v8320 = vcombine.high %v7936, %v7936
        %v8322 = vunpack.c.l.s4 1983009808
        %v8323 = vunpack.c.0.s8 %v8322
        %v8324 = vlaneseq
        %v8325 = vshrl.u32 %v8324, 7
        %v8326 = vsub.s32 %v8323, %v8325
        %v8327 = vrot.slane %v7936, %v8326
        %v8329 = vunpack.c.l.s4 1983009808
        %v8330 = vunpack.c.0.s8 %v8329
        %v8331 = vlaneseq
        %v8332 = vshrl.u32 %v8331, 7
        %v8333 = vsub.s32 %v8330, %v8332
        %v8334 = vrot.slane %v8320, %v8333
        %v8335 = vcombine.high %v8327, %v8327
        %v8336 = vcombine.high %v8334, %v8334
        %v8337 = vcombine.high %v7937, %v7937
        %v8339 = vunpack.c.l.s4 1983009808
        %v8340 = vunpack.c.0.s8 %v8339
        %v8341 = vlaneseq
        %v8342 = vshrl.u32 %v8341, 7
        %v8343 = vsub.s32 %v8340, %v8342
        %v8344 = vrot.slane %v7937, %v8343
        %v8346 = vunpack.c.l.s4 1983009808
        %v8347 = vunpack.c.0.s8 %v8346
        %v8348 = vlaneseq
        %v8349 = vshrl.u32 %v8348, 7
        %v8350 = vsub.s32 %v8347, %v8349
        %v8351 = vrot.slane %v8337, %v8350
        %v8352 = vcombine.high %v8344, %v8344
        %v8353 = vcombine.high %v8351, %v8351
        %v8354 = vcombine.high %v7938, %v7938
        %v8356 = vunpack.c.l.s4 1983009808
        %v8357 = vunpack.c.0.s8 %v8356
        %v8358 = vlaneseq
        %v8359 = vshrl.u32 %v8358, 7
        %v8360 = vsub.s32 %v8357, %v8359
        %v8361 = vrot.slane %v7938, %v8360
        %v8363 = vunpack.c.l.s4 1983009808
        %v8364 = vunpack.c.0.s8 %v8363
        %v8365 = vlaneseq
        %v8366 = vshrl.u32 %v8365, 7
        %v8367 = vsub.s32 %v8364, %v8366
        %v8368 = vrot.slane %v8354, %v8367
        %v8369 = vcombine.high %v8361, %v8361
        %v8370 = vcombine.high %v8368, %v8368
        %v8371 = vcombine.high %v7939, %v7939
        %v8373 = vunpack.c.l.s4 1983009808
        %v8374 = vunpack.c.0.s8 %v8373
        %v8375 = vlaneseq
        %v8376 = vshrl.u32 %v8375, 7
        %v8377 = vsub.s32 %v8374, %v8376
        %v8378 = vrot.slane %v7939, %v8377
        %v8380 = vunpack.c.l.s4 1983009808
        %v8381 = vunpack.c.0.s8 %v8380
        %v8382 = vlaneseq
        %v8383 = vshrl.u32 %v8382, 7
        %v8384 = vsub.s32 %v8381, %v8383
        %v8385 = vrot.slane %v8371, %v8384
        %v8386 = vcombine.high %v8378, %v8378
        %v8387 = vcombine.high %v8385, %v8385
        %v8388 = vcombine.high %v7940, %v7940
        %v8390 = vunpack.c.l.s4 1983009808
        %v8391 = vunpack.c.0.s8 %v8390
        %v8392 = vlaneseq
        %v8393 = vshrl.u32 %v8392, 7
        %v8394 = vsub.s32 %v8391, %v8393
        %v8395 = vrot.slane %v7940, %v8394
        %v8397 = vunpack.c.l.s4 1983009808
        %v8398 = vunpack.c.0.s8 %v8397
        %v8399 = vlaneseq
        %v8400 = vshrl.u32 %v8399, 7
        %v8401 = vsub.s32 %v8398, %v8400
        %v8402 = vrot.slane %v8388, %v8401
        %v8403 = vcombine.high %v8395, %v8395
        %v8404 = vcombine.high %v8402, %v8402
        %v8405 = vcombine.high %v7941, %v7941
        %v8407 = vunpack.c.l.s4 1983009808
        %v8408 = vunpack.c.0.s8 %v8407
        %v8409 = vlaneseq
        %v8410 = vshrl.u32 %v8409, 7
        %v8411 = vsub.s32 %v8408, %v8410
        %v8412 = vrot.slane %v7941, %v8411
        %v8414 = vunpack.c.l.s4 1983009808
        %v8415 = vunpack.c.0.s8 %v8414
        %v8416 = vlaneseq
        %v8417 = vshrl.u32 %v8416, 7
        %v8418 = vsub.s32 %v8415, %v8417
        %v8419 = vrot.slane %v8405, %v8418
        %v8420 = vcombine.high %v8412, %v8412
        %v8421 = vcombine.high %v8419, %v8419
        %v8422 = vcombine.high %v7942, %v7942
        %v8424 = vunpack.c.l.s4 1983009808
        %v8425 = vunpack.c.0.s8 %v8424
        %v8426 = vlaneseq
        %v8427 = vshrl.u32 %v8426, 7
        %v8428 = vsub.s32 %v8425, %v8427
        %v8429 = vrot.slane %v7942, %v8428
        %v8431 = vunpack.c.l.s4 1983009808
        %v8432 = vunpack.c.0.s8 %v8431
        %v8433 = vlaneseq
        %v8434 = vshrl.u32 %v8433, 7
        %v8435 = vsub.s32 %v8432, %v8434
        %v8436 = vrot.slane %v8422, %v8435
        %v8437 = vcombine.high %v8429, %v8429
        %v8438 = vcombine.high %v8436, %v8436
        %v8439 = vcombine.high %v7943, %v7943
        %v8441 = vunpack.c.l.s4 1983009808
        %v8442 = vunpack.c.0.s8 %v8441
        %v8443 = vlaneseq
        %v8444 = vshrl.u32 %v8443, 7
        %v8445 = vsub.s32 %v8442, %v8444
        %v8446 = vrot.slane %v7943, %v8445
        %v8448 = vunpack.c.l.s4 1983009808
        %v8449 = vunpack.c.0.s8 %v8448
        %v8450 = vlaneseq
        %v8451 = vshrl.u32 %v8450, 7
        %v8452 = vsub.s32 %v8449, %v8451
        %v8453 = vrot.slane %v8439, %v8452
        %v8454 = vcombine.high %v8446, %v8446
        %v8455 = vcombine.high %v8453, %v8453
        %v8456 = vcombine.high %v7944, %v7944
        %v8458 = vunpack.c.l.s4 1983009808
        %v8459 = vunpack.c.0.s8 %v8458
        %v8460 = vlaneseq
        %v8461 = vshrl.u32 %v8460, 7
        %v8462 = vsub.s32 %v8459, %v8461
        %v8463 = vrot.slane %v7944, %v8462
        %v8465 = vunpack.c.l.s4 1983009808
        %v8466 = vunpack.c.0.s8 %v8465
        %v8467 = vlaneseq
        %v8468 = vshrl.u32 %v8467, 7
        %v8469 = vsub.s32 %v8466, %v8468
        %v8470 = vrot.slane %v8456, %v8469
        %v8471 = vcombine.high %v8463, %v8463
        %v8472 = vcombine.high %v8470, %v8470
        %v8473 = vcombine.high %v7945, %v7945
        %v8475 = vunpack.c.l.s4 1983009808
        %v8476 = vunpack.c.0.s8 %v8475
        %v8477 = vlaneseq
        %v8478 = vshrl.u32 %v8477, 7
        %v8479 = vsub.s32 %v8476, %v8478
        %v8480 = vrot.slane %v7945, %v8479
        %v8482 = vunpack.c.l.s4 1983009808
        %v8483 = vunpack.c.0.s8 %v8482
        %v8484 = vlaneseq
        %v8485 = vshrl.u32 %v8484, 7
        %v8486 = vsub.s32 %v8483, %v8485
        %v8487 = vrot.slane %v8473, %v8486
        %v8488 = vcombine.high %v8480, %v8480
        %v8489 = vcombine.high %v8487, %v8487
        %v8490 = vcombine.high %v7946, %v7946
        %v8492 = vunpack.c.l.s4 1983009808
        %v8493 = vunpack.c.0.s8 %v8492
        %v8494 = vlaneseq
        %v8495 = vshrl.u32 %v8494, 7
        %v8496 = vsub.s32 %v8493, %v8495
        %v8497 = vrot.slane %v7946, %v8496
        %v8499 = vunpack.c.l.s4 1983009808
        %v8500 = vunpack.c.0.s8 %v8499
        %v8501 = vlaneseq
        %v8502 = vshrl.u32 %v8501, 7
        %v8503 = vsub.s32 %v8500, %v8502
        %v8504 = vrot.slane %v8490, %v8503
        %v8505 = vcombine.high %v8497, %v8497
        %v8506 = vcombine.high %v8504, %v8504
        %v8507 = vcombine.high %v7947, %v7947
        %v8509 = vunpack.c.l.s4 1983009808
        %v8510 = vunpack.c.0.s8 %v8509
        %v8511 = vlaneseq
        %v8512 = vshrl.u32 %v8511, 7
        %v8513 = vsub.s32 %v8510, %v8512
        %v8514 = vrot.slane %v7947, %v8513
        %v8516 = vunpack.c.l.s4 1983009808
        %v8517 = vunpack.c.0.s8 %v8516
        %v8518 = vlaneseq
        %v8519 = vshrl.u32 %v8518, 7
        %v8520 = vsub.s32 %v8517, %v8519
        %v8521 = vrot.slane %v8507, %v8520
        %v8522 = vcombine.high %v8514, %v8514
        %v8523 = vcombine.high %v8521, %v8521
        %v8652 = vrot.slane %v7987, 7
        %v8653 = vrot.slane %v8652, 2
        %v8654 = vrot.slane %v7995, 7
        %v8655 = vrot.slane %v8654, 2
        %v8656 = vrot.slane %v7994, 7
        %v8657 = vrot.slane %v8656, 2
        %v8658 = vrot.slane %v7996, 7
        %v8659 = vrot.slane %v8658, 2
        %v8660 = vrot.slane %v8004, 7
        %v8661 = vrot.slane %v8660, 2
        %v8662 = vrot.slane %v8012, 7
        %v8663 = vrot.slane %v8662, 2
        %v8664 = vrot.slane %v8011, 7
        %v8665 = vrot.slane %v8664, 2
        %v8666 = vrot.slane %v8013, 7
        %v8667 = vrot.slane %v8666, 2
        %v8668 = vrot.slane %v8021, 7
        %v8669 = vrot.slane %v8668, 2
        %v8670 = vrot.slane %v8029, 7
        %v8671 = vrot.slane %v8670, 2
        %v8672 = vrot.slane %v8028, 7
        %v8673 = vrot.slane %v8672, 2
        %v8674 = vrot.slane %v8030, 7
        %v8675 = vrot.slane %v8674, 2
        %v8676 = vrot.slane %v8038, 7
        %v8677 = vrot.slane %v8676, 2
        %v8678 = vrot.slane %v8046, 7
        %v8679 = vrot.slane %v8678, 2
        %v8680 = vrot.slane %v8045, 7
        %v8681 = vrot.slane %v8680, 2
        %v8682 = vrot.slane %v8047, 7
        %v8683 = vrot.slane %v8682, 2
        %v8684 = vrot.slane %v8055, 7
        %v8685 = vrot.slane %v8684, 2
        %v8686 = vrot.slane %v8063, 7
        %v8687 = vrot.slane %v8686, 2
        %v8688 = vrot.slane %v8062, 7
        %v8689 = vrot.slane %v8688, 2
        %v8690 = vrot.slane %v8064, 7
        %v8691 = vrot.slane %v8690, 2
        %v8692 = vrot.slane %v8072, 7
        %v8693 = vrot.slane %v8692, 2
        %v8694 = vrot.slane %v8080, 7
        %v8695 = vrot.slane %v8694, 2
        %v8696 = vrot.slane %v8079, 7
        %v8697 = vrot.slane %v8696, 2
        %v8698 = vrot.slane %v8081, 7
        %v8699 = vrot.slane %v8698, 2
        %v8700 = vrot.slane %v8089, 7
        %v8701 = vrot.slane %v8700, 2
        %v8702 = vrot.slane %v8097, 7
        %v8703 = vrot.slane %v8702, 2
        %v8704 = vrot.slane %v8096, 7
        %v8705 = vrot.slane %v8704, 2
        %v8706 = vrot.slane %v8098, 7
        %v8707 = vrot.slane %v8706, 2
        %v8708 = vrot.slane %v8106, 7
        %v8709 = vrot.slane %v8708, 2
        %v8710 = vrot.slane %v8114, 7
        %v8711 = vrot.slane %v8710, 2
        %v8712 = vrot.slane %v8113, 7
        %v8713 = vrot.slane %v8712, 2
        %v8714 = vrot.slane %v8115, 7
        %v8715 = vrot.slane %v8714, 2
        %v8716 = vrot.slane %v8123, 7
        %v8717 = vrot.slane %v8716, 2
        %v8718 = vrot.slane %v8131, 7
        %v8719 = vrot.slane %v8718, 2
        %v8720 = vrot.slane %v8130, 7
        %v8721 = vrot.slane %v8720, 2
        %v8722 = vrot.slane %v8132, 7
        %v8723 = vrot.slane %v8722, 2
        %v8724 = vrot.slane %v8140, 7
        %v8725 = vrot.slane %v8724, 2
        %v8726 = vrot.slane %v8148, 7
        %v8727 = vrot.slane %v8726, 2
        %v8728 = vrot.slane %v8147, 7
        %v8729 = vrot.slane %v8728, 2
        %v8730 = vrot.slane %v8149, 7
        %v8731 = vrot.slane %v8730, 2
        %v8732 = vrot.slane %v8157, 7
        %v8733 = vrot.slane %v8732, 2
        %v8734 = vrot.slane %v8165, 7
        %v8735 = vrot.slane %v8734, 2
        %v8736 = vrot.slane %v8164, 7
        %v8737 = vrot.slane %v8736, 2
        %v8738 = vrot.slane %v8166, 7
        %v8739 = vrot.slane %v8738, 2
        %v8740 = vrot.slane %v8174, 7
        %v8741 = vrot.slane %v8740, 2
        %v8742 = vrot.slane %v8182, 7
        %v8743 = vrot.slane %v8742, 2
        %v8744 = vrot.slane %v8181, 7
        %v8745 = vrot.slane %v8744, 2
        %v8746 = vrot.slane %v8183, 7
        %v8747 = vrot.slane %v8746, 2
        %v8748 = vrot.slane %v8191, 7
        %v8749 = vrot.slane %v8748, 2
        %v8750 = vrot.slane %v8199, 7
        %v8751 = vrot.slane %v8750, 2
        %v8752 = vrot.slane %v8198, 7
        %v8753 = vrot.slane %v8752, 2
        %v8754 = vrot.slane %v8200, 7
        %v8755 = vrot.slane %v8754, 2
        %v8756 = vrot.slane %v8208, 7
        %v8757 = vrot.slane %v8756, 2
        %v8758 = vrot.slane %v8216, 7
        %v8759 = vrot.slane %v8758, 2
        %v8760 = vrot.slane %v8215, 7
        %v8761 = vrot.slane %v8760, 2
        %v8762 = vrot.slane %v8217, 7
        %v8763 = vrot.slane %v8762, 2
        %v8764 = vrot.slane %v8225, 7
        %v8765 = vrot.slane %v8764, 2
        %v8766 = vrot.slane %v8233, 7
        %v8767 = vrot.slane %v8766, 2
        %v8768 = vrot.slane %v8232, 7
        %v8769 = vrot.slane %v8768, 2
        %v8770 = vrot.slane %v8234, 7
        %v8771 = vrot.slane %v8770, 2
        %v8772 = vrot.slane %v8242, 7
        %v8773 = vrot.slane %v8772, 2
        %v8774 = vrot.slane %v8250, 7
        %v8775 = vrot.slane %v8774, 2
        %v8776 = vrot.slane %v8249, 7
        %v8777 = vrot.slane %v8776, 2
        %v8778 = vrot.slane %v8251, 7
        %v8779 = vrot.slane %v8778, 2
        %v8780 = vrot.slane %v8259, 7
        %v8781 = vrot.slane %v8780, 2
        %v8782 = vrot.slane %v8267, 7
        %v8783 = vrot.slane %v8782, 2
        %v8784 = vrot.slane %v8266, 7
        %v8785 = vrot.slane %v8784, 2
        %v8786 = vrot.slane %v8268, 7
        %v8787 = vrot.slane %v8786, 2
        %v8788 = vrot.slane %v8276, 7
        %v8789 = vrot.slane %v8788, 2
        %v8790 = vrot.slane %v8284, 7
        %v8791 = vrot.slane %v8790, 2
        %v8792 = vrot.slane %v8283, 7
        %v8793 = vrot.slane %v8792, 2
        %v8794 = vrot.slane %v8285, 7
        %v8795 = vrot.slane %v8794, 2
        %v8796 = vrot.slane %v8293, 7
        %v8797 = vrot.slane %v8796, 2
        %v8798 = vrot.slane %v8301, 7
        %v8799 = vrot.slane %v8798, 2
        %v8800 = vrot.slane %v8300, 7
        %v8801 = vrot.slane %v8800, 2
        %v8802 = vrot.slane %v8302, 7
        %v8803 = vrot.slane %v8802, 2
        %v8804 = vrot.slane %v8310, 7
        %v8805 = vrot.slane %v8804, 2
        %v8806 = vrot.slane %v8318, 7
        %v8807 = vrot.slane %v8806, 2
        %v8808 = vrot.slane %v8317, 7
        %v8809 = vrot.slane %v8808, 2
        %v8810 = vrot.slane %v8319, 7
        %v8811 = vrot.slane %v8810, 2
        %v8812 = vrot.slane %v8327, 7
        %v8813 = vrot.slane %v8812, 2
        %v8814 = vrot.slane %v8335, 7
        %v8815 = vrot.slane %v8814, 2
        %v8816 = vrot.slane %v8334, 7
        %v8817 = vrot.slane %v8816, 2
        %v8818 = vrot.slane %v8336, 7
        %v8819 = vrot.slane %v8818, 2
        %v8820 = vrot.slane %v8344, 7
        %v8821 = vrot.slane %v8820, 2
        %v8822 = vrot.slane %v8352, 7
        %v8823 = vrot.slane %v8822, 2
        %v8824 = vrot.slane %v8351, 7
        %v8825 = vrot.slane %v8824, 2
        %v8826 = vrot.slane %v8353, 7
        %v8827 = vrot.slane %v8826, 2
        %v8828 = vrot.slane %v8361, 7
        %v8829 = vrot.slane %v8828, 2
        %v8830 = vrot.slane %v8369, 7
        %v8831 = vrot.slane %v8830, 2
        %v8832 = vrot.slane %v8368, 7
        %v8833 = vrot.slane %v8832, 2
        %v8834 = vrot.slane %v8370, 7
        %v8835 = vrot.slane %v8834, 2
        %v8836 = vrot.slane %v8378, 7
        %v8837 = vrot.slane %v8836, 2
        %v8838 = vrot.slane %v8386, 7
        %v8839 = vrot.slane %v8838, 2
        %v8840 = vrot.slane %v8385, 7
        %v8841 = vrot.slane %v8840, 2
        %v8842 = vrot.slane %v8387, 7
        %v8843 = vrot.slane %v8842, 2
        %v8844 = vrot.slane %v8395, 7
        %v8845 = vrot.slane %v8844, 2
        %v8846 = vrot.slane %v8403, 7
        %v8847 = vrot.slane %v8846, 2
        %v8848 = vrot.slane %v8402, 7
        %v8849 = vrot.slane %v8848, 2
        %v8850 = vrot.slane %v8404, 7
        %v8851 = vrot.slane %v8850, 2
        %v8852 = vrot.slane %v8412, 7
        %v8853 = vrot.slane %v8852, 2
        %v8854 = vrot.slane %v8420, 7
        %v8855 = vrot.slane %v8854, 2
        %v8856 = vrot.slane %v8419, 7
        %v8857 = vrot.slane %v8856, 2
        %v8858 = vrot.slane %v8421, 7
        %v8859 = vrot.slane %v8858, 2
        %v8860 = vrot.slane %v8429, 7
        %v8861 = vrot.slane %v8860, 2
        %v8862 = vrot.slane %v8437, 7
        %v8863 = vrot.slane %v8862, 2
        %v8864 = vrot.slane %v8436, 7
        %v8865 = vrot.slane %v8864, 2
        %v8866 = vrot.slane %v8438, 7
        %v8867 = vrot.slane %v8866, 2
        %v8868 = vrot.slane %v8446, 7
        %v8869 = vrot.slane %v8868, 2
        %v8870 = vrot.slane %v8454, 7
        %v8871 = vrot.slane %v8870, 2
        %v8872 = vrot.slane %v8453, 7
        %v8873 = vrot.slane %v8872, 2
        %v8874 = vrot.slane %v8455, 7
        %v8875 = vrot.slane %v8874, 2
        %v8876 = vrot.slane %v8463, 7
        %v8877 = vrot.slane %v8876, 2
        %v8878 = vrot.slane %v8471, 7
        %v8879 = vrot.slane %v8878, 2
        %v8880 = vrot.slane %v8470, 7
        %v8881 = vrot.slane %v8880, 2
        %v8882 = vrot.slane %v8472, 7
        %v8883 = vrot.slane %v8882, 2
        %v8884 = vrot.slane %v8480, 7
        %v8885 = vrot.slane %v8884, 2
        %v8886 = vrot.slane %v8488, 7
        %v8887 = vrot.slane %v8886, 2
        %v8888 = vrot.slane %v8487, 7
        %v8889 = vrot.slane %v8888, 2
        %v8890 = vrot.slane %v8489, 7
        %v8891 = vrot.slane %v8890, 2
        %v8892 = vrot.slane %v8497, 7
        %v8893 = vrot.slane %v8892, 2
        %v8894 = vrot.slane %v8505, 7
        %v8895 = vrot.slane %v8894, 2
        %v8896 = vrot.slane %v8504, 7
        %v8897 = vrot.slane %v8896, 2
        %v8898 = vrot.slane %v8506, 7
        %v8899 = vrot.slane %v8898, 2
        %v8900 = vrot.slane %v8514, 7
        %v8901 = vrot.slane %v8900, 2
        %v8902 = vrot.slane %v8522, 7
        %v8903 = vrot.slane %v8902, 2
        %v8904 = vrot.slane %v8521, 7
        %v8905 = vrot.slane %v8904, 2
        %v8906 = vrot.slane %v8523, 7
        %v8907 = vrot.slane %v8906, 2
        %v9036 = vmax.f32 %v7987, %v8653
        %v9037 = vmax.f32 %v7995, %v8655
        %v9038 = vmax.f32 %v7994, %v8657
        %v9039 = vmax.f32 %v7996, %v8659
        %v9040 = vmax.f32 %v8004, %v8661
        %v9041 = vmax.f32 %v8012, %v8663
        %v9042 = vmax.f32 %v8011, %v8665
        %v9043 = vmax.f32 %v8013, %v8667
        %v9044 = vmax.f32 %v8021, %v8669
        %v9045 = vmax.f32 %v8029, %v8671
        %v9046 = vmax.f32 %v8028, %v8673
        %v9047 = vmax.f32 %v8030, %v8675
        %v9048 = vmax.f32 %v8038, %v8677
        %v9049 = vmax.f32 %v8046, %v8679
        %v9050 = vmax.f32 %v8045, %v8681
        %v9051 = vmax.f32 %v8047, %v8683
        %v9052 = vmax.f32 %v8055, %v8685
        %v9053 = vmax.f32 %v8063, %v8687
        %v9054 = vmax.f32 %v8062, %v8689
        %v9055 = vmax.f32 %v8064, %v8691
        %v9056 = vmax.f32 %v8072, %v8693
        %v9057 = vmax.f32 %v8080, %v8695
        %v9058 = vmax.f32 %v8079, %v8697
        %v9059 = vmax.f32 %v8081, %v8699
        %v9060 = vmax.f32 %v8089, %v8701
        %v9061 = vmax.f32 %v8097, %v8703
        %v9062 = vmax.f32 %v8096, %v8705
        %v9063 = vmax.f32 %v8098, %v8707
        %v9064 = vmax.f32 %v8106, %v8709
        %v9065 = vmax.f32 %v8114, %v8711
        %v9066 = vmax.f32 %v8113, %v8713
        %v9067 = vmax.f32 %v8115, %v8715
        %v9068 = vmax.f32 %v8123, %v8717
        %v9069 = vmax.f32 %v8131, %v8719
        %v9070 = vmax.f32 %v8130, %v8721
        %v9071 = vmax.f32 %v8132, %v8723
        %v9072 = vmax.f32 %v8140, %v8725
        %v9073 = vmax.f32 %v8148, %v8727
        %v9074 = vmax.f32 %v8147, %v8729
        %v9075 = vmax.f32 %v8149, %v8731
        %v9076 = vmax.f32 %v8157, %v8733
        %v9077 = vmax.f32 %v8165, %v8735
        %v9078 = vmax.f32 %v8164, %v8737
        %v9079 = vmax.f32 %v8166, %v8739
        %v9080 = vmax.f32 %v8174, %v8741
        %v9081 = vmax.f32 %v8182, %v8743
        %v9082 = vmax.f32 %v8181, %v8745
        %v9083 = vmax.f32 %v8183, %v8747
        %v9084 = vmax.f32 %v8191, %v8749
        %v9085 = vmax.f32 %v8199, %v8751
        %v9086 = vmax.f32 %v8198, %v8753
        %v9087 = vmax.f32 %v8200, %v8755
        %v9088 = vmax.f32 %v8208, %v8757
        %v9089 = vmax.f32 %v8216, %v8759
        %v9090 = vmax.f32 %v8215, %v8761
        %v9091 = vmax.f32 %v8217, %v8763
        %v9092 = vmax.f32 %v8225, %v8765
        %v9093 = vmax.f32 %v8233, %v8767
        %v9094 = vmax.f32 %v8232, %v8769
        %v9095 = vmax.f32 %v8234, %v8771
        %v9096 = vmax.f32 %v8242, %v8773
        %v9097 = vmax.f32 %v8250, %v8775
        %v9098 = vmax.f32 %v8249, %v8777
        %v9099 = vmax.f32 %v8251, %v8779
        %v9100 = vmax.f32 %v8259, %v8781
        %v9101 = vmax.f32 %v8267, %v8783
        %v9102 = vmax.f32 %v8266, %v8785
        %v9103 = vmax.f32 %v8268, %v8787
        %v9104 = vmax.f32 %v8276, %v8789
        %v9105 = vmax.f32 %v8284, %v8791
        %v9106 = vmax.f32 %v8283, %v8793
        %v9107 = vmax.f32 %v8285, %v8795
        %v9108 = vmax.f32 %v8293, %v8797
        %v9109 = vmax.f32 %v8301, %v8799
        %v9110 = vmax.f32 %v8300, %v8801
        %v9111 = vmax.f32 %v8302, %v8803
        %v9112 = vmax.f32 %v8310, %v8805
        %v9113 = vmax.f32 %v8318, %v8807
        %v9114 = vmax.f32 %v8317, %v8809
        %v9115 = vmax.f32 %v8319, %v8811
        %v9116 = vmax.f32 %v8327, %v8813
        %v9117 = vmax.f32 %v8335, %v8815
        %v9118 = vmax.f32 %v8334, %v8817
        %v9119 = vmax.f32 %v8336, %v8819
        %v9120 = vmax.f32 %v8344, %v8821
        %v9121 = vmax.f32 %v8352, %v8823
        %v9122 = vmax.f32 %v8351, %v8825
        %v9123 = vmax.f32 %v8353, %v8827
        %v9124 = vmax.f32 %v8361, %v8829
        %v9125 = vmax.f32 %v8369, %v8831
        %v9126 = vmax.f32 %v8368, %v8833
        %v9127 = vmax.f32 %v8370, %v8835
        %v9128 = vmax.f32 %v8378, %v8837
        %v9129 = vmax.f32 %v8386, %v8839
        %v9130 = vmax.f32 %v8385, %v8841
        %v9131 = vmax.f32 %v8387, %v8843
        %v9132 = vmax.f32 %v8395, %v8845
        %v9133 = vmax.f32 %v8403, %v8847
        %v9134 = vmax.f32 %v8402, %v8849
        %v9135 = vmax.f32 %v8404, %v8851
        %v9136 = vmax.f32 %v8412, %v8853
        %v9137 = vmax.f32 %v8420, %v8855
        %v9138 = vmax.f32 %v8419, %v8857
        %v9139 = vmax.f32 %v8421, %v8859
        %v9140 = vmax.f32 %v8429, %v8861
        %v9141 = vmax.f32 %v8437, %v8863
        %v9142 = vmax.f32 %v8436, %v8865
        %v9143 = vmax.f32 %v8438, %v8867
        %v9144 = vmax.f32 %v8446, %v8869
        %v9145 = vmax.f32 %v8454, %v8871
        %v9146 = vmax.f32 %v8453, %v8873
        %v9147 = vmax.f32 %v8455, %v8875
        %v9148 = vmax.f32 %v8463, %v8877
        %v9149 = vmax.f32 %v8471, %v8879
        %v9150 = vmax.f32 %v8470, %v8881
        %v9151 = vmax.f32 %v8472, %v8883
        %v9152 = vmax.f32 %v8480, %v8885
        %v9153 = vmax.f32 %v8488, %v8887
        %v9154 = vmax.f32 %v8487, %v8889
        %v9155 = vmax.f32 %v8489, %v8891
        %v9156 = vmax.f32 %v8497, %v8893
        %v9157 = vmax.f32 %v8505, %v8895
        %v9158 = vmax.f32 %v8504, %v8897
        %v9159 = vmax.f32 %v8506, %v8899
        %v9160 = vmax.f32 %v8514, %v8901
        %v9161 = vmax.f32 %v8522, %v8903
        %v9162 = vmax.f32 %v8521, %v8905
        %v9163 = vmax.f32 %v8523, %v8907
        %v9166 = vlaneseq
        %v9167 = vshrl.u32 %v9166, 7
        %v9168 = vsub.s32 0, %v9167
        %v9169 = vrot.slane %v9036, %v9168
        %v9170 = vlaneseq
        %v9171 = vshrl.u32 %v9170, 7
        %v9172 = vsub.s32 0, %v9171
        %v9173 = vrot.slane %v9100, %v9172
        %vm9174 = vcmask 1041409
        %v9175 = vsel %vm9174, %v9173, %v9169
        %v9179 = vlaneseq
        %v9180 = vshrl.u32 %v9179, 7
        %v9181 = vsub.s32 0, %v9180
        %v9182 = vrot.slane %v9037, %v9181
        %v9183 = vlaneseq
        %v9184 = vshrl.u32 %v9183, 7
        %v9185 = vsub.s32 0, %v9184
        %v9186 = vrot.slane %v9101, %v9185
        %v9187 = vsel %vm9174, %v9186, %v9182
        %9188 = vrot.lane.b32.xlu0 %v9187, 8
        %v9189 = vpop.permute.xlu0 %9188
        %v9193 = vlaneseq
        %v9194 = vshrl.u32 %v9193, 7
        %v9195 = vsub.s32 0, %v9194
        %v9196 = vrot.slane %v9038, %v9195
        %v9197 = vlaneseq
        %v9198 = vshrl.u32 %v9197, 7
        %v9199 = vsub.s32 0, %v9198
        %v9200 = vrot.slane %v9102, %v9199
        %v9201 = vsel %vm9174, %v9200, %v9196
        %9202 = vrot.lane.b32.xlu0 %v9201, 16
        %v9203 = vpop.permute.xlu0 %9202
        %v9207 = vlaneseq
        %v9208 = vshrl.u32 %v9207, 7
        %v9209 = vsub.s32 0, %v9208
        %v9210 = vrot.slane %v9039, %v9209
        %v9211 = vlaneseq
        %v9212 = vshrl.u32 %v9211, 7
        %v9213 = vsub.s32 0, %v9212
        %v9214 = vrot.slane %v9103, %v9213
        %v9215 = vsel %vm9174, %v9214, %v9210
        %9216 = vrot.lane.b32.xlu0 %v9215, 24
        %v9217 = vpop.permute.xlu0 %9216
        %v9221 = vlaneseq
        %v9222 = vshrl.u32 %v9221, 7
        %v9223 = vsub.s32 0, %v9222
        %v9224 = vrot.slane %v9040, %v9223
        %v9225 = vlaneseq
        %v9226 = vshrl.u32 %v9225, 7
        %v9227 = vsub.s32 0, %v9226
        %v9228 = vrot.slane %v9104, %v9227
        %v9229 = vsel %vm9174, %v9228, %v9224
        %9230 = vrot.lane.b32.xlu0 %v9229, 32
        %v9231 = vpop.permute.xlu0 %9230
        %v9235 = vlaneseq
        %v9236 = vshrl.u32 %v9235, 7
        %v9237 = vsub.s32 0, %v9236
        %v9238 = vrot.slane %v9041, %v9237
        %v9239 = vlaneseq
        %v9240 = vshrl.u32 %v9239, 7
        %v9241 = vsub.s32 0, %v9240
        %v9242 = vrot.slane %v9105, %v9241
        %v9243 = vsel %vm9174, %v9242, %v9238
        %9244 = vrot.lane.b32.xlu0 %v9243, 40
        %v9245 = vpop.permute.xlu0 %9244
        %v9249 = vlaneseq
        %v9250 = vshrl.u32 %v9249, 7
        %v9251 = vsub.s32 0, %v9250
        %v9252 = vrot.slane %v9042, %v9251
        %v9253 = vlaneseq
        %v9254 = vshrl.u32 %v9253, 7
        %v9255 = vsub.s32 0, %v9254
        %v9256 = vrot.slane %v9106, %v9255
        %v9257 = vsel %vm9174, %v9256, %v9252
        %9258 = vrot.lane.b32.xlu0 %v9257, 48
        %v9259 = vpop.permute.xlu0 %9258
        %v9263 = vlaneseq
        %v9264 = vshrl.u32 %v9263, 7
        %v9265 = vsub.s32 0, %v9264
        %v9266 = vrot.slane %v9043, %v9265
        %v9267 = vlaneseq
        %v9268 = vshrl.u32 %v9267, 7
        %v9269 = vsub.s32 0, %v9268
        %v9270 = vrot.slane %v9107, %v9269
        %v9271 = vsel %vm9174, %v9270, %v9266
        %9272 = vrot.lane.b32.xlu0 %v9271, 56
        %v9273 = vpop.permute.xlu0 %9272
        %v9277 = vlaneseq
        %v9278 = vshrl.u32 %v9277, 7
        %v9279 = vsub.s32 0, %v9278
        %v9280 = vrot.slane %v9044, %v9279
        %v9281 = vlaneseq
        %v9282 = vshrl.u32 %v9281, 7
        %v9283 = vsub.s32 0, %v9282
        %v9284 = vrot.slane %v9108, %v9283
        %v9285 = vsel %vm9174, %v9284, %v9280
        %9286 = vrot.lane.b32.xlu0 %v9285, 64
        %v9287 = vpop.permute.xlu0 %9286
        %v9291 = vlaneseq
        %v9292 = vshrl.u32 %v9291, 7
        %v9293 = vsub.s32 0, %v9292
        %v9294 = vrot.slane %v9045, %v9293
        %v9295 = vlaneseq
        %v9296 = vshrl.u32 %v9295, 7
        %v9297 = vsub.s32 0, %v9296
        %v9298 = vrot.slane %v9109, %v9297
        %v9299 = vsel %vm9174, %v9298, %v9294
        %9300 = vrot.lane.b32.xlu0 %v9299, 72
        %v9301 = vpop.permute.xlu0 %9300
        %v9305 = vlaneseq
        %v9306 = vshrl.u32 %v9305, 7
        %v9307 = vsub.s32 0, %v9306
        %v9308 = vrot.slane %v9046, %v9307
        %v9309 = vlaneseq
        %v9310 = vshrl.u32 %v9309, 7
        %v9311 = vsub.s32 0, %v9310
        %v9312 = vrot.slane %v9110, %v9311
        %v9313 = vsel %vm9174, %v9312, %v9308
        %9314 = vrot.lane.b32.xlu0 %v9313, 80
        %v9315 = vpop.permute.xlu0 %9314
        %v9319 = vlaneseq
        %v9320 = vshrl.u32 %v9319, 7
        %v9321 = vsub.s32 0, %v9320
        %v9322 = vrot.slane %v9047, %v9321
        %v9323 = vlaneseq
        %v9324 = vshrl.u32 %v9323, 7
        %v9325 = vsub.s32 0, %v9324
        %v9326 = vrot.slane %v9111, %v9325
        %v9327 = vsel %vm9174, %v9326, %v9322
        %9328 = vrot.lane.b32.xlu0 %v9327, 88
        %v9329 = vpop.permute.xlu0 %9328
        %v9333 = vlaneseq
        %v9334 = vshrl.u32 %v9333, 7
        %v9335 = vsub.s32 0, %v9334
        %v9336 = vrot.slane %v9048, %v9335
        %v9337 = vlaneseq
        %v9338 = vshrl.u32 %v9337, 7
        %v9339 = vsub.s32 0, %v9338
        %v9340 = vrot.slane %v9112, %v9339
        %v9341 = vsel %vm9174, %v9340, %v9336
        %9342 = vrot.lane.b32.xlu0 %v9341, 96
        %v9343 = vpop.permute.xlu0 %9342
        %v9347 = vlaneseq
        %v9348 = vshrl.u32 %v9347, 7
        %v9349 = vsub.s32 0, %v9348
        %v9350 = vrot.slane %v9049, %v9349
        %v9351 = vlaneseq
        %v9352 = vshrl.u32 %v9351, 7
        %v9353 = vsub.s32 0, %v9352
        %v9354 = vrot.slane %v9113, %v9353
        %v9355 = vsel %vm9174, %v9354, %v9350
        %9356 = vrot.lane.b32.xlu0 %v9355, 104
        %v9357 = vpop.permute.xlu0 %9356
        %v9361 = vlaneseq
        %v9362 = vshrl.u32 %v9361, 7
        %v9363 = vsub.s32 0, %v9362
        %v9364 = vrot.slane %v9050, %v9363
        %v9365 = vlaneseq
        %v9366 = vshrl.u32 %v9365, 7
        %v9367 = vsub.s32 0, %v9366
        %v9368 = vrot.slane %v9114, %v9367
        %v9369 = vsel %vm9174, %v9368, %v9364
        %9370 = vrot.lane.b32.xlu0 %v9369, 112
        %v9371 = vpop.permute.xlu0 %9370
        %v9375 = vlaneseq
        %v9376 = vshrl.u32 %v9375, 7
        %v9377 = vsub.s32 0, %v9376
        %v9378 = vrot.slane %v9051, %v9377
        %v9379 = vlaneseq
        %v9380 = vshrl.u32 %v9379, 7
        %v9381 = vsub.s32 0, %v9380
        %v9382 = vrot.slane %v9115, %v9381
        %v9383 = vsel %vm9174, %v9382, %v9378
        %9384 = vrot.lane.b32.xlu0 %v9383, 120
        %v9385 = vpop.permute.xlu0 %9384
        %v9387 = vsel %vm6684, %v9175, %v9189
        %v9388 = vsel %vm6746, %v9387, %v9203
        %v9389 = vsel %vm6808, %v9388, %v9217
        %v9390 = vsel %vm6873, %v9389, %v9231
        %v9391 = vsel %vm6938, %v9390, %v9245
        %v9392 = vsel %vm7003, %v9391, %v9259
        %v9393 = vsel %vm7068, %v9392, %v9273
        %v9394 = vsel %vm7133, %v9393, %v9287
        %v9395 = vsel %vm7204, %v9394, %v9301
        %vm9396 = vcmask 654336
        %v9397 = vsel %vm9396, %v9395, %v9315
        %vm9398 = vcmask 719872
        %v9399 = vsel %vm9398, %v9397, %v9329
        %vm9400 = vcmask 785408
        %v9401 = vsel %vm9400, %v9399, %v9343
        %vm9402 = vcmask 850944
        %v9403 = vsel %vm9402, %v9401, %v9357
        %vm9404 = vcmask 916480
        %v9405 = vsel %vm9404, %v9403, %v9371
        %vm9406 = vcmask 982016
        %v9407 = vsel %vm9406, %v9405, %v9385
        %v9410 = vlaneseq
        %v9411 = vshrl.u32 %v9410, 7
        %v9412 = vsub.s32 0, %v9411
        %v9413 = vrot.slane %v9052, %v9412
        %v9414 = vlaneseq
        %v9415 = vshrl.u32 %v9414, 7
        %v9416 = vsub.s32 0, %v9415
        %v9417 = vrot.slane %v9116, %v9416
        %v9418 = vsel %vm9174, %v9417, %v9413
        %v9422 = vlaneseq
        %v9423 = vshrl.u32 %v9422, 7
        %v9424 = vsub.s32 0, %v9423
        %v9425 = vrot.slane %v9053, %v9424
        %v9426 = vlaneseq
        %v9427 = vshrl.u32 %v9426, 7
        %v9428 = vsub.s32 0, %v9427
        %v9429 = vrot.slane %v9117, %v9428
        %v9430 = vsel %vm9174, %v9429, %v9425
        %9431 = vrot.lane.b32.xlu0 %v9430, 8
        %v9432 = vpop.permute.xlu0 %9431
        %v9436 = vlaneseq
        %v9437 = vshrl.u32 %v9436, 7
        %v9438 = vsub.s32 0, %v9437
        %v9439 = vrot.slane %v9054, %v9438
        %v9440 = vlaneseq
        %v9441 = vshrl.u32 %v9440, 7
        %v9442 = vsub.s32 0, %v9441
        %v9443 = vrot.slane %v9118, %v9442
        %v9444 = vsel %vm9174, %v9443, %v9439
        %9445 = vrot.lane.b32.xlu0 %v9444, 16
        %v9446 = vpop.permute.xlu0 %9445
        %v9450 = vlaneseq
        %v9451 = vshrl.u32 %v9450, 7
        %v9452 = vsub.s32 0, %v9451
        %v9453 = vrot.slane %v9055, %v9452
        %v9454 = vlaneseq
        %v9455 = vshrl.u32 %v9454, 7
        %v9456 = vsub.s32 0, %v9455
        %v9457 = vrot.slane %v9119, %v9456
        %v9458 = vsel %vm9174, %v9457, %v9453
        %9459 = vrot.lane.b32.xlu0 %v9458, 24
        %v9460 = vpop.permute.xlu0 %9459
        %v9464 = vlaneseq
        %v9465 = vshrl.u32 %v9464, 7
        %v9466 = vsub.s32 0, %v9465
        %v9467 = vrot.slane %v9056, %v9466
        %v9468 = vlaneseq
        %v9469 = vshrl.u32 %v9468, 7
        %v9470 = vsub.s32 0, %v9469
        %v9471 = vrot.slane %v9120, %v9470
        %v9472 = vsel %vm9174, %v9471, %v9467
        %9473 = vrot.lane.b32.xlu0 %v9472, 32
        %v9474 = vpop.permute.xlu0 %9473
        %v9478 = vlaneseq
        %v9479 = vshrl.u32 %v9478, 7
        %v9480 = vsub.s32 0, %v9479
        %v9481 = vrot.slane %v9057, %v9480
        %v9482 = vlaneseq
        %v9483 = vshrl.u32 %v9482, 7
        %v9484 = vsub.s32 0, %v9483
        %v9485 = vrot.slane %v9121, %v9484
        %v9486 = vsel %vm9174, %v9485, %v9481
        %9487 = vrot.lane.b32.xlu0 %v9486, 40
        %v9488 = vpop.permute.xlu0 %9487
        %v9492 = vlaneseq
        %v9493 = vshrl.u32 %v9492, 7
        %v9494 = vsub.s32 0, %v9493
        %v9495 = vrot.slane %v9058, %v9494
        %v9496 = vlaneseq
        %v9497 = vshrl.u32 %v9496, 7
        %v9498 = vsub.s32 0, %v9497
        %v9499 = vrot.slane %v9122, %v9498
        %v9500 = vsel %vm9174, %v9499, %v9495
        %9501 = vrot.lane.b32.xlu0 %v9500, 48
        %v9502 = vpop.permute.xlu0 %9501
        %v9506 = vlaneseq
        %v9507 = vshrl.u32 %v9506, 7
        %v9508 = vsub.s32 0, %v9507
        %v9509 = vrot.slane %v9059, %v9508
        %v9510 = vlaneseq
        %v9511 = vshrl.u32 %v9510, 7
        %v9512 = vsub.s32 0, %v9511
        %v9513 = vrot.slane %v9123, %v9512
        %v9514 = vsel %vm9174, %v9513, %v9509
        %9515 = vrot.lane.b32.xlu0 %v9514, 56
        %v9516 = vpop.permute.xlu0 %9515
        %v9520 = vlaneseq
        %v9521 = vshrl.u32 %v9520, 7
        %v9522 = vsub.s32 0, %v9521
        %v9523 = vrot.slane %v9060, %v9522
        %v9524 = vlaneseq
        %v9525 = vshrl.u32 %v9524, 7
        %v9526 = vsub.s32 0, %v9525
        %v9527 = vrot.slane %v9124, %v9526
        %v9528 = vsel %vm9174, %v9527, %v9523
        %9529 = vrot.lane.b32.xlu0 %v9528, 64
        %v9530 = vpop.permute.xlu0 %9529
        %v9534 = vlaneseq
        %v9535 = vshrl.u32 %v9534, 7
        %v9536 = vsub.s32 0, %v9535
        %v9537 = vrot.slane %v9061, %v9536
        %v9538 = vlaneseq
        %v9539 = vshrl.u32 %v9538, 7
        %v9540 = vsub.s32 0, %v9539
        %v9541 = vrot.slane %v9125, %v9540
        %v9542 = vsel %vm9174, %v9541, %v9537
        %9543 = vrot.lane.b32.xlu0 %v9542, 72
        %v9544 = vpop.permute.xlu0 %9543
        %v9548 = vlaneseq
        %v9549 = vshrl.u32 %v9548, 7
        %v9550 = vsub.s32 0, %v9549
        %v9551 = vrot.slane %v9062, %v9550
        %v9552 = vlaneseq
        %v9553 = vshrl.u32 %v9552, 7
        %v9554 = vsub.s32 0, %v9553
        %v9555 = vrot.slane %v9126, %v9554
        %v9556 = vsel %vm9174, %v9555, %v9551
        %9557 = vrot.lane.b32.xlu0 %v9556, 80
        %v9558 = vpop.permute.xlu0 %9557
        %v9562 = vlaneseq
        %v9563 = vshrl.u32 %v9562, 7
        %v9564 = vsub.s32 0, %v9563
        %v9565 = vrot.slane %v9063, %v9564
        %v9566 = vlaneseq
        %v9567 = vshrl.u32 %v9566, 7
        %v9568 = vsub.s32 0, %v9567
        %v9569 = vrot.slane %v9127, %v9568
        %v9570 = vsel %vm9174, %v9569, %v9565
        %9571 = vrot.lane.b32.xlu0 %v9570, 88
        %v9572 = vpop.permute.xlu0 %9571
        %v9576 = vlaneseq
        %v9577 = vshrl.u32 %v9576, 7
        %v9578 = vsub.s32 0, %v9577
        %v9579 = vrot.slane %v9064, %v9578
        %v9580 = vlaneseq
        %v9581 = vshrl.u32 %v9580, 7
        %v9582 = vsub.s32 0, %v9581
        %v9583 = vrot.slane %v9128, %v9582
        %v9584 = vsel %vm9174, %v9583, %v9579
        %9585 = vrot.lane.b32.xlu0 %v9584, 96
        %v9586 = vpop.permute.xlu0 %9585
        %v9590 = vlaneseq
        %v9591 = vshrl.u32 %v9590, 7
        %v9592 = vsub.s32 0, %v9591
        %v9593 = vrot.slane %v9065, %v9592
        %v9594 = vlaneseq
        %v9595 = vshrl.u32 %v9594, 7
        %v9596 = vsub.s32 0, %v9595
        %v9597 = vrot.slane %v9129, %v9596
        %v9598 = vsel %vm9174, %v9597, %v9593
        %9599 = vrot.lane.b32.xlu0 %v9598, 104
        %v9600 = vpop.permute.xlu0 %9599
        %v9604 = vlaneseq
        %v9605 = vshrl.u32 %v9604, 7
        %v9606 = vsub.s32 0, %v9605
        %v9607 = vrot.slane %v9066, %v9606
        %v9608 = vlaneseq
        %v9609 = vshrl.u32 %v9608, 7
        %v9610 = vsub.s32 0, %v9609
        %v9611 = vrot.slane %v9130, %v9610
        %v9612 = vsel %vm9174, %v9611, %v9607
        %9613 = vrot.lane.b32.xlu0 %v9612, 112
        %v9614 = vpop.permute.xlu0 %9613
        %v9618 = vlaneseq
        %v9619 = vshrl.u32 %v9618, 7
        %v9620 = vsub.s32 0, %v9619
        %v9621 = vrot.slane %v9067, %v9620
        %v9622 = vlaneseq
        %v9623 = vshrl.u32 %v9622, 7
        %v9624 = vsub.s32 0, %v9623
        %v9625 = vrot.slane %v9131, %v9624
        %v9626 = vsel %vm9174, %v9625, %v9621
        %9627 = vrot.lane.b32.xlu0 %v9626, 120
        %v9628 = vpop.permute.xlu0 %9627
        %v9630 = vsel %vm6684, %v9418, %v9432
        %v9631 = vsel %vm6746, %v9630, %v9446
        %v9632 = vsel %vm6808, %v9631, %v9460
        %v9633 = vsel %vm6873, %v9632, %v9474
        %v9634 = vsel %vm6938, %v9633, %v9488
        %v9635 = vsel %vm7003, %v9634, %v9502
        %v9636 = vsel %vm7068, %v9635, %v9516
        %v9637 = vsel %vm7133, %v9636, %v9530
        %v9638 = vsel %vm7204, %v9637, %v9544
        %v9639 = vsel %vm9396, %v9638, %v9558
        %v9640 = vsel %vm9398, %v9639, %v9572
        %v9641 = vsel %vm9400, %v9640, %v9586
        %v9642 = vsel %vm9402, %v9641, %v9600
        %v9643 = vsel %vm9404, %v9642, %v9614
        %v9644 = vsel %vm9406, %v9643, %v9628
        %v9647 = vlaneseq
        %v9648 = vshrl.u32 %v9647, 7
        %v9649 = vsub.s32 0, %v9648
        %v9650 = vrot.slane %v9068, %v9649
        %v9651 = vlaneseq
        %v9652 = vshrl.u32 %v9651, 7
        %v9653 = vsub.s32 0, %v9652
        %v9654 = vrot.slane %v9132, %v9653
        %v9655 = vsel %vm9174, %v9654, %v9650
        %v9659 = vlaneseq
        %v9660 = vshrl.u32 %v9659, 7
        %v9661 = vsub.s32 0, %v9660
        %v9662 = vrot.slane %v9069, %v9661
        %v9663 = vlaneseq
        %v9664 = vshrl.u32 %v9663, 7
        %v9665 = vsub.s32 0, %v9664
        %v9666 = vrot.slane %v9133, %v9665
        %v9667 = vsel %vm9174, %v9666, %v9662
        %9668 = vrot.lane.b32.xlu0 %v9667, 8
        %v9669 = vpop.permute.xlu0 %9668
        %v9673 = vlaneseq
        %v9674 = vshrl.u32 %v9673, 7
        %v9675 = vsub.s32 0, %v9674
        %v9676 = vrot.slane %v9070, %v9675
        %v9677 = vlaneseq
        %v9678 = vshrl.u32 %v9677, 7
        %v9679 = vsub.s32 0, %v9678
        %v9680 = vrot.slane %v9134, %v9679
        %v9681 = vsel %vm9174, %v9680, %v9676
        %9682 = vrot.lane.b32.xlu0 %v9681, 16
        %v9683 = vpop.permute.xlu0 %9682
        %v9687 = vlaneseq
        %v9688 = vshrl.u32 %v9687, 7
        %v9689 = vsub.s32 0, %v9688
        %v9690 = vrot.slane %v9071, %v9689
        %v9691 = vlaneseq
        %v9692 = vshrl.u32 %v9691, 7
        %v9693 = vsub.s32 0, %v9692
        %v9694 = vrot.slane %v9135, %v9693
        %v9695 = vsel %vm9174, %v9694, %v9690
        %9696 = vrot.lane.b32.xlu0 %v9695, 24
        %v9697 = vpop.permute.xlu0 %9696
        %v9701 = vlaneseq
        %v9702 = vshrl.u32 %v9701, 7
        %v9703 = vsub.s32 0, %v9702
        %v9704 = vrot.slane %v9072, %v9703
        %v9705 = vlaneseq
        %v9706 = vshrl.u32 %v9705, 7
        %v9707 = vsub.s32 0, %v9706
        %v9708 = vrot.slane %v9136, %v9707
        %v9709 = vsel %vm9174, %v9708, %v9704
        %9710 = vrot.lane.b32.xlu0 %v9709, 32
        %v9711 = vpop.permute.xlu0 %9710
        %v9715 = vlaneseq
        %v9716 = vshrl.u32 %v9715, 7
        %v9717 = vsub.s32 0, %v9716
        %v9718 = vrot.slane %v9073, %v9717
        %v9719 = vlaneseq
        %v9720 = vshrl.u32 %v9719, 7
        %v9721 = vsub.s32 0, %v9720
        %v9722 = vrot.slane %v9137, %v9721
        %v9723 = vsel %vm9174, %v9722, %v9718
        %9724 = vrot.lane.b32.xlu0 %v9723, 40
        %v9725 = vpop.permute.xlu0 %9724
        %v9729 = vlaneseq
        %v9730 = vshrl.u32 %v9729, 7
        %v9731 = vsub.s32 0, %v9730
        %v9732 = vrot.slane %v9074, %v9731
        %v9733 = vlaneseq
        %v9734 = vshrl.u32 %v9733, 7
        %v9735 = vsub.s32 0, %v9734
        %v9736 = vrot.slane %v9138, %v9735
        %v9737 = vsel %vm9174, %v9736, %v9732
        %9738 = vrot.lane.b32.xlu0 %v9737, 48
        %v9739 = vpop.permute.xlu0 %9738
        %v9743 = vlaneseq
        %v9744 = vshrl.u32 %v9743, 7
        %v9745 = vsub.s32 0, %v9744
        %v9746 = vrot.slane %v9075, %v9745
        %v9747 = vlaneseq
        %v9748 = vshrl.u32 %v9747, 7
        %v9749 = vsub.s32 0, %v9748
        %v9750 = vrot.slane %v9139, %v9749
        %v9751 = vsel %vm9174, %v9750, %v9746
        %9752 = vrot.lane.b32.xlu0 %v9751, 56
        %v9753 = vpop.permute.xlu0 %9752
        %v9757 = vlaneseq
        %v9758 = vshrl.u32 %v9757, 7
        %v9759 = vsub.s32 0, %v9758
        %v9760 = vrot.slane %v9076, %v9759
        %v9761 = vlaneseq
        %v9762 = vshrl.u32 %v9761, 7
        %v9763 = vsub.s32 0, %v9762
        %v9764 = vrot.slane %v9140, %v9763
        %v9765 = vsel %vm9174, %v9764, %v9760
        %9766 = vrot.lane.b32.xlu0 %v9765, 64
        %v9767 = vpop.permute.xlu0 %9766
        %v9771 = vlaneseq
        %v9772 = vshrl.u32 %v9771, 7
        %v9773 = vsub.s32 0, %v9772
        %v9774 = vrot.slane %v9077, %v9773
        %v9775 = vlaneseq
        %v9776 = vshrl.u32 %v9775, 7
        %v9777 = vsub.s32 0, %v9776
        %v9778 = vrot.slane %v9141, %v9777
        %v9779 = vsel %vm9174, %v9778, %v9774
        %9780 = vrot.lane.b32.xlu0 %v9779, 72
        %v9781 = vpop.permute.xlu0 %9780
        %v9785 = vlaneseq
        %v9786 = vshrl.u32 %v9785, 7
        %v9787 = vsub.s32 0, %v9786
        %v9788 = vrot.slane %v9078, %v9787
        %v9789 = vlaneseq
        %v9790 = vshrl.u32 %v9789, 7
        %v9791 = vsub.s32 0, %v9790
        %v9792 = vrot.slane %v9142, %v9791
        %v9793 = vsel %vm9174, %v9792, %v9788
        %9794 = vrot.lane.b32.xlu0 %v9793, 80
        %v9795 = vpop.permute.xlu0 %9794
        %v9799 = vlaneseq
        %v9800 = vshrl.u32 %v9799, 7
        %v9801 = vsub.s32 0, %v9800
        %v9802 = vrot.slane %v9079, %v9801
        %v9803 = vlaneseq
        %v9804 = vshrl.u32 %v9803, 7
        %v9805 = vsub.s32 0, %v9804
        %v9806 = vrot.slane %v9143, %v9805
        %v9807 = vsel %vm9174, %v9806, %v9802
        %9808 = vrot.lane.b32.xlu0 %v9807, 88
        %v9809 = vpop.permute.xlu0 %9808
        %v9813 = vlaneseq
        %v9814 = vshrl.u32 %v9813, 7
        %v9815 = vsub.s32 0, %v9814
        %v9816 = vrot.slane %v9080, %v9815
        %v9817 = vlaneseq
        %v9818 = vshrl.u32 %v9817, 7
        %v9819 = vsub.s32 0, %v9818
        %v9820 = vrot.slane %v9144, %v9819
        %v9821 = vsel %vm9174, %v9820, %v9816
        %9822 = vrot.lane.b32.xlu0 %v9821, 96
        %v9823 = vpop.permute.xlu0 %9822
        %v9827 = vlaneseq
        %v9828 = vshrl.u32 %v9827, 7
        %v9829 = vsub.s32 0, %v9828
        %v9830 = vrot.slane %v9081, %v9829
        %v9831 = vlaneseq
        %v9832 = vshrl.u32 %v9831, 7
        %v9833 = vsub.s32 0, %v9832
        %v9834 = vrot.slane %v9145, %v9833
        %v9835 = vsel %vm9174, %v9834, %v9830
        %9836 = vrot.lane.b32.xlu0 %v9835, 104
        %v9837 = vpop.permute.xlu0 %9836
        %v9841 = vlaneseq
        %v9842 = vshrl.u32 %v9841, 7
        %v9843 = vsub.s32 0, %v9842
        %v9844 = vrot.slane %v9082, %v9843
        %v9845 = vlaneseq
        %v9846 = vshrl.u32 %v9845, 7
        %v9847 = vsub.s32 0, %v9846
        %v9848 = vrot.slane %v9146, %v9847
        %v9849 = vsel %vm9174, %v9848, %v9844
        %9850 = vrot.lane.b32.xlu0 %v9849, 112
        %v9851 = vpop.permute.xlu0 %9850
        %v9855 = vlaneseq
        %v9856 = vshrl.u32 %v9855, 7
        %v9857 = vsub.s32 0, %v9856
        %v9858 = vrot.slane %v9083, %v9857
        %v9859 = vlaneseq
        %v9860 = vshrl.u32 %v9859, 7
        %v9861 = vsub.s32 0, %v9860
        %v9862 = vrot.slane %v9147, %v9861
        %v9863 = vsel %vm9174, %v9862, %v9858
        %9864 = vrot.lane.b32.xlu0 %v9863, 120
        %v9865 = vpop.permute.xlu0 %9864
        %v9867 = vsel %vm6684, %v9655, %v9669
        %v9868 = vsel %vm6746, %v9867, %v9683
        %v9869 = vsel %vm6808, %v9868, %v9697
        %v9870 = vsel %vm6873, %v9869, %v9711
        %v9871 = vsel %vm6938, %v9870, %v9725
        %v9872 = vsel %vm7003, %v9871, %v9739
        %v9873 = vsel %vm7068, %v9872, %v9753
        %v9874 = vsel %vm7133, %v9873, %v9767
        %v9875 = vsel %vm7204, %v9874, %v9781
        %v9876 = vsel %vm9396, %v9875, %v9795
        %v9877 = vsel %vm9398, %v9876, %v9809
        %v9878 = vsel %vm9400, %v9877, %v9823
        %v9879 = vsel %vm9402, %v9878, %v9837
        %v9880 = vsel %vm9404, %v9879, %v9851
        %v9881 = vsel %vm9406, %v9880, %v9865
        %v9884 = vlaneseq
        %v9885 = vshrl.u32 %v9884, 7
        %v9886 = vsub.s32 0, %v9885
        %v9887 = vrot.slane %v9084, %v9886
        %v9888 = vlaneseq
        %v9889 = vshrl.u32 %v9888, 7
        %v9890 = vsub.s32 0, %v9889
        %v9891 = vrot.slane %v9148, %v9890
        %v9892 = vsel %vm9174, %v9891, %v9887
        %v9896 = vlaneseq
        %v9897 = vshrl.u32 %v9896, 7
        %v9898 = vsub.s32 0, %v9897
        %v9899 = vrot.slane %v9085, %v9898
        %v9900 = vlaneseq
        %v9901 = vshrl.u32 %v9900, 7
        %v9902 = vsub.s32 0, %v9901
        %v9903 = vrot.slane %v9149, %v9902
        %v9904 = vsel %vm9174, %v9903, %v9899
        %9905 = vrot.lane.b32.xlu0 %v9904, 8
        %v9906 = vpop.permute.xlu0 %9905
        %v9910 = vlaneseq
        %v9911 = vshrl.u32 %v9910, 7
        %v9912 = vsub.s32 0, %v9911
        %v9913 = vrot.slane %v9086, %v9912
        %v9914 = vlaneseq
        %v9915 = vshrl.u32 %v9914, 7
        %v9916 = vsub.s32 0, %v9915
        %v9917 = vrot.slane %v9150, %v9916
        %v9918 = vsel %vm9174, %v9917, %v9913
        %9919 = vrot.lane.b32.xlu0 %v9918, 16
        %v9920 = vpop.permute.xlu0 %9919
        %v9924 = vlaneseq
        %v9925 = vshrl.u32 %v9924, 7
        %v9926 = vsub.s32 0, %v9925
        %v9927 = vrot.slane %v9087, %v9926
        %v9928 = vlaneseq
        %v9929 = vshrl.u32 %v9928, 7
        %v9930 = vsub.s32 0, %v9929
        %v9931 = vrot.slane %v9151, %v9930
        %v9932 = vsel %vm9174, %v9931, %v9927
        %9933 = vrot.lane.b32.xlu0 %v9932, 24
        %v9934 = vpop.permute.xlu0 %9933
        %v9938 = vlaneseq
        %v9939 = vshrl.u32 %v9938, 7
        %v9940 = vsub.s32 0, %v9939
        %v9941 = vrot.slane %v9088, %v9940
        %v9942 = vlaneseq
        %v9943 = vshrl.u32 %v9942, 7
        %v9944 = vsub.s32 0, %v9943
        %v9945 = vrot.slane %v9152, %v9944
        %v9946 = vsel %vm9174, %v9945, %v9941
        %9947 = vrot.lane.b32.xlu0 %v9946, 32
        %v9948 = vpop.permute.xlu0 %9947
        %v9952 = vlaneseq
        %v9953 = vshrl.u32 %v9952, 7
        %v9954 = vsub.s32 0, %v9953
        %v9955 = vrot.slane %v9089, %v9954
        %v9956 = vlaneseq
        %v9957 = vshrl.u32 %v9956, 7
        %v9958 = vsub.s32 0, %v9957
        %v9959 = vrot.slane %v9153, %v9958
        %v9960 = vsel %vm9174, %v9959, %v9955
        %9961 = vrot.lane.b32.xlu0 %v9960, 40
        %v9962 = vpop.permute.xlu0 %9961
        %v9966 = vlaneseq
        %v9967 = vshrl.u32 %v9966, 7
        %v9968 = vsub.s32 0, %v9967
        %v9969 = vrot.slane %v9090, %v9968
        %v9970 = vlaneseq
        %v9971 = vshrl.u32 %v9970, 7
        %v9972 = vsub.s32 0, %v9971
        %v9973 = vrot.slane %v9154, %v9972
        %v9974 = vsel %vm9174, %v9973, %v9969
        %9975 = vrot.lane.b32.xlu0 %v9974, 48
        %v9976 = vpop.permute.xlu0 %9975
        %v9980 = vlaneseq
        %v9981 = vshrl.u32 %v9980, 7
        %v9982 = vsub.s32 0, %v9981
        %v9983 = vrot.slane %v9091, %v9982
        %v9984 = vlaneseq
        %v9985 = vshrl.u32 %v9984, 7
        %v9986 = vsub.s32 0, %v9985
        %v9987 = vrot.slane %v9155, %v9986
        %v9988 = vsel %vm9174, %v9987, %v9983
        %9989 = vrot.lane.b32.xlu0 %v9988, 56
        %v9990 = vpop.permute.xlu0 %9989
        %v9994 = vlaneseq
        %v9995 = vshrl.u32 %v9994, 7
        %v9996 = vsub.s32 0, %v9995
        %v9997 = vrot.slane %v9092, %v9996
        %v9998 = vlaneseq
        %v9999 = vshrl.u32 %v9998, 7
        %v10000 = vsub.s32 0, %v9999
        %v10001 = vrot.slane %v9156, %v10000
        %v10002 = vsel %vm9174, %v10001, %v9997
        %10003 = vrot.lane.b32.xlu0 %v10002, 64
        %v10004 = vpop.permute.xlu0 %10003
        %v10008 = vlaneseq
        %v10009 = vshrl.u32 %v10008, 7
        %v10010 = vsub.s32 0, %v10009
        %v10011 = vrot.slane %v9093, %v10010
        %v10012 = vlaneseq
        %v10013 = vshrl.u32 %v10012, 7
        %v10014 = vsub.s32 0, %v10013
        %v10015 = vrot.slane %v9157, %v10014
        %v10016 = vsel %vm9174, %v10015, %v10011
        %10017 = vrot.lane.b32.xlu0 %v10016, 72
        %v10018 = vpop.permute.xlu0 %10017
        %v10022 = vlaneseq
        %v10023 = vshrl.u32 %v10022, 7
        %v10024 = vsub.s32 0, %v10023
        %v10025 = vrot.slane %v9094, %v10024
        %v10026 = vlaneseq
        %v10027 = vshrl.u32 %v10026, 7
        %v10028 = vsub.s32 0, %v10027
        %v10029 = vrot.slane %v9158, %v10028
        %v10030 = vsel %vm9174, %v10029, %v10025
        %10031 = vrot.lane.b32.xlu0 %v10030, 80
        %v10032 = vpop.permute.xlu0 %10031
        %v10036 = vlaneseq
        %v10037 = vshrl.u32 %v10036, 7
        %v10038 = vsub.s32 0, %v10037
        %v10039 = vrot.slane %v9095, %v10038
        %v10040 = vlaneseq
        %v10041 = vshrl.u32 %v10040, 7
        %v10042 = vsub.s32 0, %v10041
        %v10043 = vrot.slane %v9159, %v10042
        %v10044 = vsel %vm9174, %v10043, %v10039
        %10045 = vrot.lane.b32.xlu0 %v10044, 88
        %v10046 = vpop.permute.xlu0 %10045
        %v10050 = vlaneseq
        %v10051 = vshrl.u32 %v10050, 7
        %v10052 = vsub.s32 0, %v10051
        %v10053 = vrot.slane %v9096, %v10052
        %v10054 = vlaneseq
        %v10055 = vshrl.u32 %v10054, 7
        %v10056 = vsub.s32 0, %v10055
        %v10057 = vrot.slane %v9160, %v10056
        %v10058 = vsel %vm9174, %v10057, %v10053
        %10059 = vrot.lane.b32.xlu0 %v10058, 96
        %v10060 = vpop.permute.xlu0 %10059
        %v10064 = vlaneseq
        %v10065 = vshrl.u32 %v10064, 7
        %v10066 = vsub.s32 0, %v10065
        %v10067 = vrot.slane %v9097, %v10066
        %v10068 = vlaneseq
        %v10069 = vshrl.u32 %v10068, 7
        %v10070 = vsub.s32 0, %v10069
        %v10071 = vrot.slane %v9161, %v10070
        %v10072 = vsel %vm9174, %v10071, %v10067
        %10073 = vrot.lane.b32.xlu0 %v10072, 104
        %v10074 = vpop.permute.xlu0 %10073
        %v10078 = vlaneseq
        %v10079 = vshrl.u32 %v10078, 7
        %v10080 = vsub.s32 0, %v10079
        %v10081 = vrot.slane %v9098, %v10080
        %v10082 = vlaneseq
        %v10083 = vshrl.u32 %v10082, 7
        %v10084 = vsub.s32 0, %v10083
        %v10085 = vrot.slane %v9162, %v10084
        %v10086 = vsel %vm9174, %v10085, %v10081
        %10087 = vrot.lane.b32.xlu0 %v10086, 112
        %v10088 = vpop.permute.xlu0 %10087
        %v10092 = vlaneseq
        %v10093 = vshrl.u32 %v10092, 7
        %v10094 = vsub.s32 0, %v10093
        %v10095 = vrot.slane %v9099, %v10094
        %v10096 = vlaneseq
        %v10097 = vshrl.u32 %v10096, 7
        %v10098 = vsub.s32 0, %v10097
        %v10099 = vrot.slane %v9163, %v10098
        %v10100 = vsel %vm9174, %v10099, %v10095
        %10101 = vrot.lane.b32.xlu0 %v10100, 120
        %v10102 = vpop.permute.xlu0 %10101
        %v10104 = vsel %vm6684, %v9892, %v9906
        %v10105 = vsel %vm6746, %v10104, %v9920
        %v10106 = vsel %vm6808, %v10105, %v9934
        %v10107 = vsel %vm6873, %v10106, %v9948
        %v10108 = vsel %vm6938, %v10107, %v9962
        %v10109 = vsel %vm7003, %v10108, %v9976
        %v10110 = vsel %vm7068, %v10109, %v9990
        %v10111 = vsel %vm7133, %v10110, %v10004
        %v10112 = vsel %vm7204, %v10111, %v10018
        %v10113 = vsel %vm9396, %v10112, %v10032
        %v10114 = vsel %vm9398, %v10113, %v10046
        %v10115 = vsel %vm9400, %v10114, %v10060
        %v10116 = vsel %vm9402, %v10115, %v10074
        %v10117 = vsel %vm9404, %v10116, %v10088
        %v10118 = vsel %vm9406, %v10117, %v10102
        %v10120 = vlaneseq
        %v10121 = vshrl.u32 %v10120, 7
        %v10122 = vsub.s32 0, %v10121
        %v10123 = vrot.slane %v7910, %v10122
        %10125 = vmatprep.subr.mxu0 0.0
        %10126 = vmatpush1.msra.mxu0 %v7861
        %10127 = vmatprep.subr.mxu0 0.0
        %10128 = vmatpush1.msra.mxu0 %v7860
        %10129 = vmatprep.subr.mxu0 0.0
        %10130 = vmatpush1.msra.mxu0 %v7859
        %10131 = vmatprep.subr.mxu0 0.0
        %10132 = vmatpush1.msra.mxu0 %v7858
        %10133 = vmatprep.subr.mxu0 0.0
        %10134 = vmatpush1.msra.mxu0 %v7857
        %10135 = vmatprep.subr.mxu0 0.0
        %10136 = vmatpush1.msra.mxu0 %v7856
        %10137 = vmatprep.subr.mxu0 0.0
        %10138 = vmatpush1.msra.mxu0 %v7855
        %10139 = vmatprep.subr.mxu0 0.0
        %10140 = vmatpush1.msra.mxu0 %v7854
        %10141 = vmatprep.subr.mxu0 0.0
        %10142 = vmatpush1.msra.mxu0 %v7853
        %10143 = vmatprep.subr.mxu0 0.0
        %10144 = vmatpush1.msra.mxu0 %v7852
        %10145 = vmatprep.subr.mxu0 0.0
        %10146 = vmatpush1.msra.mxu0 %v7851
        %10147 = vmatprep.subr.mxu0 0.0
        %10148 = vmatpush1.msra.mxu0 %v7850
        %10149 = vmatprep.subr.mxu0 0.0
        %10150 = vmatpush1.msra.mxu0 %v7849
        %10151 = vmatprep.subr.mxu0 0.0
        %10152 = vmatpush1.msra.mxu0 %v7848
        %10153 = vmatprep.subr.mxu0 0.0
        %10154 = vmatpush1.msra.mxu0 %v7847
        %10155 = vmatprep.subr.mxu0 0.0
        %10156 = vmatpush1.msra.mxu0 %v7846
        %10157 = vmatprep.subr.mxu0 0.0
        %10158 = vmatpush2.msra.mxu0 %v7877
        %10159 = vmatprep.subr.mxu0 0.0
        %10160 = vmatpush2.msra.mxu0 %v7876
        %10161 = vmatprep.subr.mxu0 0.0
        %10162 = vmatpush2.msra.mxu0 %v7875
        %10163 = vmatprep.subr.mxu0 0.0
        %10164 = vmatpush2.msra.mxu0 %v7874
        %10165 = vmatprep.subr.mxu0 0.0
        %10166 = vmatpush2.msra.mxu0 %v7873
        %10167 = vmatprep.subr.mxu0 0.0
        %10168 = vmatpush2.msra.mxu0 %v7872
        %10169 = vmatprep.subr.mxu0 0.0
        %10170 = vmatpush2.msra.mxu0 %v7871
        %10171 = vmatprep.subr.mxu0 0.0
        %10172 = vmatpush2.msra.mxu0 %v7870
        %10173 = vmatprep.subr.mxu0 0.0
        %10174 = vmatpush2.msra.mxu0 %v7869
        %10175 = vmatprep.subr.mxu0 0.0
        %10176 = vmatpush2.msra.mxu0 %v7868
        %10177 = vmatprep.subr.mxu0 0.0
        %10178 = vmatpush2.msra.mxu0 %v7867
        %10179 = vmatprep.subr.mxu0 0.0
        %10180 = vmatpush2.msra.mxu0 %v7866
        %10181 = vmatprep.subr.mxu0 0.0
        %10182 = vmatpush2.msra.mxu0 %v7865
        %10183 = vmatprep.subr.mxu0 0.0
        %10184 = vmatpush2.msra.mxu0 %v7864
        %10185 = vmatprep.subr.mxu0 0.0
        %10186 = vmatpush2.msra.mxu0 %v7863
        %10187 = vmatprep.subr.mxu0 0.0
        %10188 = vmatpush2.msra.mxu0 %v7862
        %10189 = vmatprep.mubr.f32.mxu0 %v9644
        %10190 = vmatmul.mubr.f32.gmra.mxu0 %v9407
        %v10191 = vpop.f32.mrf.mxu0
        %v10192 = vadd.f32 %v10123, %v10191
        %v10193 = vpop.f32.mrf.mxu0
        %10194 = vdwg.mxu0
        %10195 = vmatprep.subr.mxu0 0.0
        %10196 = vmatpush1.msra.mxu0 %v7893
        %10197 = vmatprep.subr.mxu0 0.0
        %10198 = vmatpush1.msra.mxu0 %v7892
        %10199 = vmatprep.subr.mxu0 0.0
        %10200 = vmatpush1.msra.mxu0 %v7891
        %10201 = vmatprep.subr.mxu0 0.0
        %10202 = vmatpush1.msra.mxu0 %v7890
        %10203 = vmatprep.subr.mxu0 0.0
        %10204 = vmatpush1.msra.mxu0 %v7889
        %10205 = vmatprep.subr.mxu0 0.0
        %10206 = vmatpush1.msra.mxu0 %v7888
        %10207 = vmatprep.subr.mxu0 0.0
        %10208 = vmatpush1.msra.mxu0 %v7887
        %10209 = vmatprep.subr.mxu0 0.0
        %10210 = vmatpush1.msra.mxu0 %v7886
        %10211 = vmatprep.subr.mxu0 0.0
        %10212 = vmatpush1.msra.mxu0 %v7885
        %10213 = vmatprep.subr.mxu0 0.0
        %10214 = vmatpush1.msra.mxu0 %v7884
        %10215 = vmatprep.subr.mxu0 0.0
        %10216 = vmatpush1.msra.mxu0 %v7883
        %10217 = vmatprep.subr.mxu0 0.0
        %10218 = vmatpush1.msra.mxu0 %v7882
        %10219 = vmatprep.subr.mxu0 0.0
        %10220 = vmatpush1.msra.mxu0 %v7881
        %10221 = vmatprep.subr.mxu0 0.0
        %10222 = vmatpush1.msra.mxu0 %v7880
        %10223 = vmatprep.subr.mxu0 0.0
        %10224 = vmatpush1.msra.mxu0 %v7879
        %10225 = vmatprep.subr.mxu0 0.0
        %10226 = vmatpush1.msra.mxu0 %v7878
        %10227 = vmatprep.subr.mxu0 0.0
        %10228 = vmatpush2.msra.mxu0 %v7909
        %10229 = vmatprep.subr.mxu0 0.0
        %10230 = vmatpush2.msra.mxu0 %v7908
        %10231 = vmatprep.subr.mxu0 0.0
        %10232 = vmatpush2.msra.mxu0 %v7907
        %10233 = vmatprep.subr.mxu0 0.0
        %10234 = vmatpush2.msra.mxu0 %v7906
        %10235 = vmatprep.subr.mxu0 0.0
        %10236 = vmatpush2.msra.mxu0 %v7905
        %10237 = vmatprep.subr.mxu0 0.0
        %10238 = vmatpush2.msra.mxu0 %v7904
        %10239 = vmatprep.subr.mxu0 0.0
        %10240 = vmatpush2.msra.mxu0 %v7903
        %10241 = vmatprep.subr.mxu0 0.0
        %10242 = vmatpush2.msra.mxu0 %v7902
        %10243 = vmatprep.subr.mxu0 0.0
        %10244 = vmatpush2.msra.mxu0 %v7901
        %10245 = vmatprep.subr.mxu0 0.0
        %10246 = vmatpush2.msra.mxu0 %v7900
        %10247 = vmatprep.subr.mxu0 0.0
        %10248 = vmatpush2.msra.mxu0 %v7899
        %10249 = vmatprep.subr.mxu0 0.0
        %10250 = vmatpush2.msra.mxu0 %v7898
        %10251 = vmatprep.subr.mxu0 0.0
        %10252 = vmatpush2.msra.mxu0 %v7897
        %10253 = vmatprep.subr.mxu0 0.0
        %10254 = vmatpush2.msra.mxu0 %v7896
        %10255 = vmatprep.subr.mxu0 0.0
        %10256 = vmatpush2.msra.mxu0 %v7895
        %10257 = vmatprep.subr.mxu0 0.0
        %10258 = vmatpush2.msra.mxu0 %v7894
        %10259 = vmatprep.mubr.f32.mxu0 %v10118
        %10260 = vmatmul.mubr.f32.gmra.mxu0 %v9881
        %v10261 = vpop.f32.mrf.mxu0
        %v10262 = vadd.f32 %v10192, %v10261
        %v10263 = vpop.f32.mrf.mxu0
        %10264 = vdwg.mxu0
        %v10265 = vmax.f32 %v10262, 0.0
        %v10267 = vlaneseq
        %v10268 = vshrl.u32 %v10267, 7
        %v10269 = vsub.s32 0, %v10268
        %v10270 = vrot.slane %v7915, %v10269
        %v10273 = vsel %vm6873, %v10265, 0
        %10275 = vmatprep.subr.mxu0 0.0
        %10276 = vmatpush1.msra.mxu0 0.0
        %10277 = vmatprep.subr.mxu0 0.0
        %10278 = vmatpush1.msra.mxu0 0.0
        %10279 = vmatprep.subr.mxu0 0.0
        %10280 = vmatpush1.msra.mxu0 0.0
        %10281 = vmatprep.subr.mxu0 0.0
        %10282 = vmatpush1.msra.mxu0 0.0
        %10283 = vmatprep.subr.mxu0 0.0
        %10284 = vmatpush1.msra.mxu0 0.0
        %10285 = vmatprep.subr.mxu0 0.0
        %10286 = vmatpush1.msra.mxu0 0.0
        %10287 = vmatprep.subr.mxu0 0.0
        %10288 = vmatpush1.msra.mxu0 0.0
        %10289 = vmatprep.subr.mxu0 0.0
        %10290 = vmatpush1.msra.mxu0 0.0
        %10291 = vmatprep.subr.mxu0 0.0
        %10292 = vmatpush1.msra.mxu0 0.0
        %10293 = vmatprep.subr.mxu0 0.0
        %10294 = vmatpush1.msra.mxu0 0.0
        %10295 = vmatprep.subr.mxu0 0.0
        %10296 = vmatpush1.msra.mxu0 0.0
        %10297 = vmatprep.subr.mxu0 0.0
        %10298 = vmatpush1.msra.mxu0 0.0
        %10299 = vmatprep.subr.mxu0 0.0
        %10300 = vmatpush1.msra.mxu0 %v7914
        %10301 = vmatprep.subr.mxu0 0.0
        %10302 = vmatpush1.msra.mxu0 %v7913
        %10303 = vmatprep.subr.mxu0 0.0
        %10304 = vmatpush1.msra.mxu0 %v7912
        %10305 = vmatprep.subr.mxu0 0.0
        %10306 = vmatpush1.msra.mxu0 %v7911
        %10307 = vmatprep.subr.mxu0 0.0
        %10308 = vmatpush2.msra.mxu0 0.0
        %10309 = vmatprep.subr.mxu0 0.0
        %10310 = vmatpush2.msra.mxu0 0.0
        %10311 = vmatprep.subr.mxu0 0.0
        %10312 = vmatpush2.msra.mxu0 0.0
        %10313 = vmatprep.subr.mxu0 0.0
        %10314 = vmatpush2.msra.mxu0 0.0
        %10315 = vmatprep.subr.mxu0 0.0
        %10316 = vmatpush2.msra.mxu0 0.0
        %10317 = vmatprep.subr.mxu0 0.0
        %10318 = vmatpush2.msra.mxu0 0.0
        %10319 = vmatprep.subr.mxu0 0.0
        %10320 = vmatpush2.msra.mxu0 0.0
        %10321 = vmatprep.subr.mxu0 0.0
        %10322 = vmatpush2.msra.mxu0 0.0
        %10323 = vmatprep.subr.mxu0 0.0
        %10324 = vmatpush2.msra.mxu0 0.0
        %10325 = vmatprep.subr.mxu0 0.0
        %10326 = vmatpush2.msra.mxu0 0.0
        %10327 = vmatprep.subr.mxu0 0.0
        %10328 = vmatpush2.msra.mxu0 0.0
        %10329 = vmatprep.subr.mxu0 0.0
        %10330 = vmatpush2.msra.mxu0 0.0
        %10331 = vmatprep.subr.mxu0 0.0
        %10332 = vmatpush2.msra.mxu0 0.0
        %10333 = vmatprep.subr.mxu0 0.0
        %10334 = vmatpush2.msra.mxu0 0.0
        %10335 = vmatprep.subr.mxu0 0.0
        %10336 = vmatpush2.msra.mxu0 0.0
        %10337 = vmatprep.subr.mxu0 0.0
        %10338 = vmatpush2.msra.mxu0 0.0
        %10339 = vmatprep.mubr.f32.mxu0 0.0
        %10340 = vmatmul.mubr.f32.gmra.mxu0 %v10273
        %v10341 = vpop.f32.mrf.mxu0
        %v10342 = vadd.f32 %v10270, %v10341
        %v10343 = vpop.f32.mrf.mxu0
        %10344 = vdwg.mxu0
        %10345 = vst [vmem:[%s325] sm:$0x3] %v10342
        %s10346 = sand.u32 %s225, 1
        %s10347 = scalar_lea.sflag [#allocation3], %s10346
        %s10348 = sand.u32 %s225, 1
        %s10349 = smul.addr %s10348, 2
        %s10350 = scalar_lea.vmem [#allocation2], %s10349
        // Predicated region
        $region57: #{tpu_custom_call.1} parent=55 // pred_check
          %p10351 = pneg %p235
        $region58: #{tpu_custom_call.1} parent=55 // pred_check_branch
          %10353 = sbr.rel (%p10351) target = $region60
        $region59: #{tpu_custom_call.1} parent=55 // pred_region
          %s10355 = ssub.s32 32, 32
          %10356 = vsyncadd %s10347, %s10355
          %s10357 = smul.addr %s23, 32
          %s10358 = scalar_lea.hbm %s9, %s10357
          %s10360 = sshll.u32 %s10350, 4
          %s10361 = int_to_ptr.vmem [resolvable:$true] %s10360
          %10363 = dma.vmem_to_hbm [thread:$0]  %s10361, 32, %s10358, %s10347
        $region60: #{tpu_custom_call.1} parent=55 // pred_fallthru
          _
      $region56: #{tpu_custom_call.1} parent=5 // pred_fallthru
        _
      %p10364 = scmp.le.s32.totalorder 2, %s18
      // Predicated region
      $region61: #{tpu_custom_call.1} parent=5 // pred_check
        %p10365 = pneg %p10364
      $region62: #{tpu_custom_call.1} parent=5 // pred_check_branch
        %10367 = sbr.rel (%p10365) target = $region64
      $region63: #{tpu_custom_call.1} parent=5 // pred_region
        %s10368 = ssub.s32 %s18, 2
        // Predicated region
        $region65: #{tpu_custom_call.1} parent=63 // pred_check
          %p10369 = pneg %p241
        $region66: #{tpu_custom_call.1} parent=63 // pred_check_branch
          %10371 = sbr.rel (%p10369) target = $region68
        $region67: #{tpu_custom_call.1} parent=63 // pred_region
          %s10372 = sand.u32 %s226, 1
          %s10373 = scalar_lea.sflag [#allocation3], %s10372
          %s10374 = sand.u32 %s226, 1
          %s10375 = smul.addr %s10374, 2
          %s10376 = scalar_lea.vmem [#allocation2], %s10375
          %10377 = dma.done %s10373, 32
        $region68: #{tpu_custom_call.1} parent=63 // pred_fallthru
          _
      $region64: #{tpu_custom_call.1} parent=5 // pred_fallthru
        _
    $region6: #{tpu_custom_call.1} parent=1 // loop_footer
      %s22 = sadd.s32 1, %s18
    $region7: #{tpu_custom_call.1} parent=1 // loop_footer_branch
      %17 = sbr.rel target = $region3
    $region8: #{tpu_custom_call.1} parent=1 // loop_exit
      _
    %10378 = vsyncpa [#allocation3], 1
    %s10379 = scalar_lea.sflag [#allocation3], 1
    %10380 = vsyncpa %s10379, 1

</llo_original>
